<compile_context>
chip_gen: v7x
topology: tpu7x:2x2x1
jax: 0.10.0
libtpu: 0.0.40
codegen_flags: <defaults>
</compile_context>

<pallas_src>
import jax
import jax.numpy as jnp
from jax import lax
from jax.experimental import pallas as pl
from jax.experimental.pallas import tpu as pltpu

BN_EPS = 1e-5
LN_EPS = 1e-5


# ----------------------------------------------------------------------------- kernel
def mlp_kernel(x_ref,
               w1, p1,      # block 1: Linear(256,1024) weights + packed [bias; bn_scale; bn_shift]
               w2, p2,      # block 2: Linear(1024,512) (LN1 affine pre-folded into w2/b2)
               w3, p3,      # block 3: Linear(512,256)  (LN2 affine pre-folded)
               w4, b4,      # block 4: Linear(256,128->256 zero-padded) (LN3 affine pre-folded)
               w5, b5,      # head:    Linear(128->256 zero-padded, 256) (BN4 affine pre-folded)
               o_ref):
    h = x_ref[...]  # (TILE_B, 256) f32

    # blocks 1-3: Linear -> ReLU -> folded-BN (FMA) -> Dropout(identity) -> LN (no affine)
    for w_ref, p_ref in ((w1, p1), (w2, p2), (w3, p3)):
        bias  = p_ref[pl.ds(0, 1), :]   # row loads straight from the ref (no slab slicing)
        scale = p_ref[pl.ds(1, 1), :]
        shift = p_ref[pl.ds(2, 1), :]
        h = jnp.dot(h.astype(w_ref.dtype), w_ref[...],
                    preferred_element_type=jnp.float32) + bias
        h = jnp.maximum(h, 0.0)
        h = h * scale + shift                      # eval-mode BatchNorm1d, pre-folded
        # LayerNorm (affine folded into next Linear); reuse (h - mu) for var + normalize
        mu = jnp.mean(h, axis=-1, keepdims=True)
        diff = h - mu
        var = jnp.mean(diff * diff, axis=-1, keepdims=True)
        h = diff * lax.rsqrt(var + LN_EPS)

    # block 4: Linear -> ReLU  (output zero-padded to 256; its BN affine folded into head)
    h = jnp.dot(h.astype(w4.dtype), w4[...],
                preferred_element_type=jnp.float32) + b4[...]
    h = jnp.maximum(h, 0.0)

    # head
    o_ref[...] = (jnp.dot(h.astype(w5.dtype), w5[...],
                          preferred_element_type=jnp.float32) + b5[...]
                  ).astype(o_ref.dtype)


# ----------------------------------------------------------------------------- wrapper
def _round_up(n, m):
    return ((n + m - 1) // m) * m


def _choose_tiling(B, *, max_tile=1024, min_tile=256):
    """Pick (tile_b, padded_b, n_tiles): tiles sized to the real batch (<=7 wasted
    rows), capped at max_tile for VMEM, and split into up to 4 tiles (>=min_tile
    rows each) so both v7x TensorCores get pipelined work."""
    n_tiles = max(1, -(-B // max_tile))
    while n_tiles < 4 and -(-B // (n_tiles + 1)) >= min_tile:
        n_tiles += 1
    tile_b = _round_up(-(-B // n_tiles), 8)
    padded_b = n_tiles * tile_b
    return tile_b, padded_b, n_tiles


def regression_model_forward(x, folded_params, *, max_tile=1024, min_tile=256):
    """x: [B, 256] float32 -> [B, 256] float32."""
    B, din = x.shape
    assert din == 256
    tile_b, padded_b, n_tiles = _choose_tiling(B, max_tile=max_tile, min_tile=min_tile)
    if padded_b != B:
        x = jnp.pad(x, ((0, padded_b - B), (0, 0)))

    def _const_spec(arr):
        # Constant block index -> DMA'd once, stays resident; single buffer is enough.
        return pl.BlockSpec(arr.shape, lambda i: (0, 0),
                            pipeline_mode=pl.Buffered(1))

    in_specs = [pl.BlockSpec((tile_b, 256), lambda i: (i, 0))]
    in_specs += [_const_spec(p) for p in folded_params]
    out_spec = pl.BlockSpec((tile_b, 256), lambda i: (i, 0))

    out = pl.pallas_call(
        mlp_kernel,
        out_shape=jax.ShapeDtypeStruct((padded_b, 256), jnp.float32),
        grid=(n_tiles,),
        in_specs=in_specs,
        out_specs=out_spec,
        compiler_params=pltpu.CompilerParams(
            dimension_semantics=("parallel",),       # megacore sharding on v7x
            vmem_limit_bytes=48 * 1024 * 1024),      # fits v7x 64 MiB, raises v5e/v6e cap
    )(x, *folded_params)
    return out[:B]


# ----------------------------------------------------------------------------- params
def init_raw_params(key):
    """Deterministic synthetic parameters matching the PyTorch module's shapes.

    Linear weights are stored pre-transposed as [in_features, out_features]."""
    dims = [(256, 1024), (1024, 512), (512, 256), (256, 128), (128, 256)]
    keys = jax.random.split(key, 32)
    it = iter(keys)

    def linear(din, dout):
        bound = 1.0 / (din ** 0.5)
        w = jax.random.uniform(next(it), (din, dout), jnp.float32, -bound, bound)
        b = jax.random.uniform(next(it), (1, dout), jnp.float32, -bound, bound)
        return w, b

    def bn(d):
        gamma = 1.0 + 0.1 * jax.random.normal(next(it), (1, d), jnp.float32)
        beta = 0.1 * jax.random.normal(next(it), (1, d), jnp.float32)
        mean = 0.1 * jax.random.normal(next(it), (1, d), jnp.float32)
        var = jax.random.uniform(next(it), (1, d), jnp.float32, 0.5, 1.5)
        return gamma, beta, mean, var

    def ln(d):
        gamma = 1.0 + 0.1 * jax.random.normal(next(it), (1, d), jnp.float32)
        beta = 0.1 * jax.random.normal(next(it), (1, d), jnp.float32)
        return gamma, beta

    raw = {}
    for k, (din, dout) in enumerate(dims[:3]):
        raw[f"w{k+1}"], raw[f"b{k+1}"] = linear(din, dout)
        raw[f"bn{k+1}"] = bn(dout)
        raw[f"ln{k+1}"] = ln(dout)
    raw["w4"], raw["b4"] = linear(*dims[3])
    raw["bn4"] = bn(dims[3][1])
    raw["w5"], raw["b5"] = linear(*dims[4])
    return raw


def fold_params(raw, compute_dtype=jnp.bfloat16):
    """Exact algebraic folding (done once, in f32) of:
       - eval-mode BN -> (scale, shift)
       - LN affine of block k -> Linear of block k+1
       - BN4 affine -> head Linear
       plus MXU-width zero padding of the narrow tail layers:
       w4:(256,128)->(256,256) zero cols, b4:(1,128)->(1,256) zeros,
       w5:(128,256)->(256,256) zero rows  (exact: ReLU(0)=0, zero rows add nothing).
       Returns [w1, p1, w2, p2, w3, p3, w4, b4, w5, b5]; p_k = [bias; scale; shift]."""
    def bn_scale_shift(bn):
        g, be, m, v = bn
        scale = g * lax.rsqrt(v + BN_EPS)
        shift = be - m * scale
        return scale, shift

    folded = []
    prev_g = prev_b = None  # LN affine of the previous block
    for k in (1, 2, 3):
        w, b = raw[f"w{k}"], raw[f"b{k}"]
        if prev_g is not None:
            b = prev_b @ w + b
            w = prev_g.reshape(-1, 1) * w
        s, sh = bn_scale_shift(raw[f"bn{k}"])
        folded.append(w.astype(compute_dtype))
        folded.append(jnp.concatenate([b, s, sh], axis=0))  # (3, dout) f32
        prev_g, prev_b = raw[f"ln{k}"]

    # block 4: fold LN3 affine in, then zero-pad N: 128 -> 256
    w4, b4 = raw["w4"], raw["b4"]
    b4 = prev_b @ w4 + b4
    w4 = prev_g.reshape(-1, 1) * w4
    pad_n = 256 - w4.shape[1]
    w4 = jnp.pad(w4, ((0, 0), (0, pad_n)))
    b4 = jnp.pad(b4, ((0, 0), (0, pad_n)))                   # exact zeros -> ReLU stays 0
    folded.append(w4.astype(compute_dtype))
    folded.append(b4)                                        # (1, 256) f32

    # head: fold BN4 affine in, then zero-pad K: 128 -> 256
    s4, sh4 = bn_scale_shift(raw["bn4"])
    w5, b5 = raw["w5"], raw["b5"]
    b5 = sh4 @ w5 + b5
    w5 = s4.reshape(-1, 1) * w5
    pad_k = 256 - w5.shape[0]
    w5 = jnp.pad(w5, ((0, pad_k), (0, 0)))                   # zero rows: padded cols of h ignored
    folded.append(w5.astype(compute_dtype))
    folded.append(b5)                                        # (1, 256) f32
    return folded


# ----------------------------------------------------------------------------- references
def reference_forward(x, raw):
    """Plain-JAX f32 reference with the ORIGINAL (unfolded) formulation."""
    h = x
    for k in (1, 2, 3):
        w, b = raw[f"w{k}"], raw[f"b{k}"]
        g, be, m, v = raw[f"bn{k}"]
        lg, lb = raw[f"ln{k}"]
        h = jnp.maximum(h @ w + b, 0.0)
        h = (h - m) * lax.rsqrt(v + BN_EPS) * g + be
        mu = jnp.mean(h, axis=-1, keepdims=True)
        var = jnp.mean(jnp.square(h - mu), axis=-1, keepdims=True)
        h = (h - mu) * lax.rsqrt(var + LN_EPS) * lg + lb
    w, b = raw["w4"], raw["b4"]
    g, be, m, v = raw["bn4"]
    h = jnp.maximum(h @ w + b, 0.0)
    h = (h - m) * lax.rsqrt(v + BN_EPS) * g + be
    return h @ raw["w5"] + raw["b5"]


def reference_forward_folded(x, folded):
    """Plain-JAX reference using exactly the kernel's folded math/precision."""
    w1, p1, w2, p2, w3, p3, w4, b4, w5, b5 = folded
    h = x
    for w, p in ((w1, p1), (w2, p2), (w3, p3)):
        b, s, sh = p[0:1], p[1:2], p[2:3]
        h = jnp.dot(h.astype(w.dtype), w, preferred_element_type=jnp.float32) + b
        h = jnp.maximum(h, 0.0)
        h = h * s + sh
        mu = jnp.mean(h, axis=-1, keepdims=True)
        diff = h - mu
        var = jnp.mean(diff * diff, axis=-1, keepdims=True)
        h = diff * lax.rsqrt(var + LN_EPS)
    h = jnp.dot(h.astype(w4.dtype), w4, preferred_element_type=jnp.float32) + b4
    h = jnp.maximum(h, 0.0)
    return jnp.dot(h.astype(w5.dtype), w5, preferred_element_type=jnp.float32) + b5


# ----------------------------------------------------------------------------- main
if __name__ == "__main__":
    key = jax.random.PRNGKey(0)
    kx, kp = jax.random.split(key)
    B = 100  # deliberately not a multiple of 8 to exercise the adaptive tiling/padding
    x = jax.random.normal(kx, (B, 256), jnp.float32)
    raw = init_raw_params(kp)

    # 1) Verify the folding algebra (incl. MXU zero-padding) is exact in f32.
    folded_f32 = fold_params(raw, compute_dtype=jnp.float32)
    ref_orig = reference_forward(x, raw)
    ref_fold_f32 = reference_forward_folded(x, folded_f32)
    assert jnp.allclose(ref_fold_f32, ref_orig, atol=1e-4, rtol=1e-4), "fold mismatch"

    # 2) Run the Pallas kernel (bf16 weights, f32 accumulation / elementwise).
    folded = fold_params(raw, compute_dtype=jnp.bfloat16)
    out = regression_model_forward(x, folded)          # single right-sized tile (104 rows)
    out = jax.block_until_ready(out)
    assert out.shape == (B, 256)

    # 3) Kernel matches a plain-JAX reference of identical folded math/precision.
    ref_fold_bf16 = reference_forward_folded(x, folded)
    assert jnp.allclose(out, ref_fold_bf16, atol=5e-3, rtol=5e-3), "kernel mismatch"

    # 4) Smoke-test the multi-tile / megacore path (grid > 1) as well.
    B2 = 520
    x2 = jax.random.normal(jax.random.PRNGKey(1), (B2, 256), jnp.float32)
    out2 = jax.block_until_ready(regression_model_forward(x2, folded))
    ref2 = reference_forward_folded(x2, folded)
    assert out2.shape == (B2, 256)
    assert jnp.allclose(out2, ref2, atol=5e-3, rtol=5e-3), "multi-tile kernel mismatch"

    print("KERNEL_OK")
</pallas_src>

<mosaic_0001>
module attributes {stable_mosaic.version = 11 : i64} {
  func.func @mlp_kernel(%arg0: i32, %arg1: memref<104x256xf32, #tpu.memory_space<vmem>>, %arg2: memref<256x1024xbf16, #tpu.memory_space<vmem>>, %arg3: memref<3x1024xf32, #tpu.memory_space<vmem>>, %arg4: memref<1024x512xbf16, #tpu.memory_space<vmem>>, %arg5: memref<3x512xf32, #tpu.memory_space<vmem>>, %arg6: memref<512x256xbf16, #tpu.memory_space<vmem>>, %arg7: memref<3x256xf32, #tpu.memory_space<vmem>>, %arg8: memref<256x256xbf16, #tpu.memory_space<vmem>>, %arg9: memref<1x256xf32, #tpu.memory_space<vmem>>, %arg10: memref<256x256xbf16, #tpu.memory_space<vmem>>, %arg11: memref<1x256xf32, #tpu.memory_space<vmem>>, %arg12: memref<104x256xf32, #tpu.memory_space<vmem>>) attributes {dimension_semantics = [#tpu.dimension_semantics<parallel>], iteration_bounds = array<i64: 1>, scalar_prefetch = 0 : i64, scratch_operands = 0 : i64, tpu.core_type = #tpu.core_type<tc>, window_params = [{transform_indices = @transform_0, window_bounds = array<i64: 104, 256>}, {pipeline_mode = #tpu.pipeline_mode<synchronous>, transform_indices = @transform_1, window_bounds = array<i64: 256, 1024>}, {pipeline_mode = #tpu.pipeline_mode<synchronous>, transform_indices = @transform_2, window_bounds = array<i64: 3, 1024>}, {pipeline_mode = #tpu.pipeline_mode<synchronous>, transform_indices = @transform_3, window_bounds = array<i64: 1024, 512>}, {pipeline_mode = #tpu.pipeline_mode<synchronous>, transform_indices = @transform_4, window_bounds = array<i64: 3, 512>}, {pipeline_mode = #tpu.pipeline_mode<synchronous>, transform_indices = @transform_5, window_bounds = array<i64: 512, 256>}, {pipeline_mode = #tpu.pipeline_mode<synchronous>, transform_indices = @transform_6, window_bounds = array<i64: 3, 256>}, {pipeline_mode = #tpu.pipeline_mode<synchronous>, transform_indices = @transform_7, window_bounds = array<i64: 256, 256>}, {pipeline_mode = #tpu.pipeline_mode<synchronous>, transform_indices = @transform_8, window_bounds = array<i64: 1, 256>}, {pipeline_mode = #tpu.pipeline_mode<synchronous>, transform_indices = @transform_9, window_bounds = array<i64: 256, 256>}, {pipeline_mode = #tpu.pipeline_mode<synchronous>, transform_indices = @transform_10, window_bounds = array<i64: 1, 256>}, {transform_indices = @transform_11, window_bounds = array<i64: 104, 256>}]} {
    %c0 = arith.constant 0 : index
    %c0_0 = arith.constant 0 : index
    %0 = vector.load %arg1[%c0, %c0_0] : memref<104x256xf32, #tpu.memory_space<vmem>>, vector<104x256xf32>
    %c0_1 = arith.constant 0 : index
    %c0_2 = arith.constant 0 : index
    %1 = vector.load %arg3[%c0_1, %c0_2] : memref<3x1024xf32, #tpu.memory_space<vmem>>, vector<1x1024xf32>
    %c1 = arith.constant 1 : index
    %c0_3 = arith.constant 0 : index
    %2 = vector.load %arg3[%c1, %c0_3] : memref<3x1024xf32, #tpu.memory_space<vmem>>, vector<1x1024xf32>
    %c2 = arith.constant 2 : index
    %c0_4 = arith.constant 0 : index
    %3 = vector.load %arg3[%c2, %c0_4] : memref<3x1024xf32, #tpu.memory_space<vmem>>, vector<1x1024xf32>
    %4 = arith.truncf %0 : vector<104x256xf32> to vector<104x256xbf16>
    %c0_5 = arith.constant 0 : index
    %c0_6 = arith.constant 0 : index
    %5 = vector.load %arg2[%c0_5, %c0_6] : memref<256x1024xbf16, #tpu.memory_space<vmem>>, vector<256x1024xbf16>
    %cst = arith.constant dense<0.000000e+00> : vector<104x1024xf32>
    %6 = tpu.matmul %4, %5, %cst {dimension_numbers = #tpu.dot_dimension_numbers<[1], [0], [0], [1], [0, 0, 1, 1], [], []>} : vector<104x256xbf16>, vector<256x1024xbf16>, vector<104x1024xf32> -> vector<104x1024xf32>
    %7 = vector.broadcast %1 : vector<1x1024xf32> to vector<104x1024xf32>
    %8 = arith.addf %6, %7 : vector<104x1024xf32>
    %cst_7 = arith.constant 0.000000e+00 : f32
    %9 = vector.broadcast %cst_7 : f32 to vector<104x1024xf32>
    %10 = arith.maximumf %8, %9 : vector<104x1024xf32>
    %11 = vector.broadcast %2 : vector<1x1024xf32> to vector<104x1024xf32>
    %12 = arith.mulf %10, %11 : vector<104x1024xf32>
    %13 = vector.broadcast %3 : vector<1x1024xf32> to vector<104x1024xf32>
    %14 = arith.addf %12, %13 : vector<104x1024xf32>
    %cst_8 = arith.constant dense<0.000000e+00> : vector<104xf32>
    %15 = vector.multi_reduction <add>, %14, %cst_8 [1] : vector<104x1024xf32> to vector<104xf32>
    %16 = vector.shape_cast %15 : vector<104xf32> to vector<104x1xf32>
    %cst_9 = arith.constant 1.024000e+03 : f32
    %17 = vector.broadcast %cst_9 : f32 to vector<104x1xf32>
    %18 = arith.divf %16, %17 : vector<104x1xf32>
    %19 = vector.broadcast %18 : vector<104x1xf32> to vector<104x1024xf32>
    %20 = arith.subf %14, %19 : vector<104x1024xf32>
    %21 = arith.mulf %20, %20 : vector<104x1024xf32>
    %cst_10 = arith.constant dense<0.000000e+00> : vector<104xf32>
    %22 = vector.multi_reduction <add>, %21, %cst_10 [1] : vector<104x1024xf32> to vector<104xf32>
    %23 = vector.shape_cast %22 : vector<104xf32> to vector<104x1xf32>
    %cst_11 = arith.constant 1.024000e+03 : f32
    %24 = vector.broadcast %cst_11 : f32 to vector<104x1xf32>
    %25 = arith.divf %23, %24 : vector<104x1xf32>
    %cst_12 = arith.constant 9.99999974E-6 : f32
    %26 = vector.broadcast %cst_12 : f32 to vector<104x1xf32>
    %27 = arith.addf %25, %26 : vector<104x1xf32>
    %28 = math.rsqrt %27 : vector<104x1xf32>
    %29 = vector.broadcast %28 : vector<104x1xf32> to vector<104x1024xf32>
    %30 = arith.mulf %20, %29 : vector<104x1024xf32>
    %c0_13 = arith.constant 0 : index
    %c0_14 = arith.constant 0 : index
    %31 = vector.load %arg5[%c0_13, %c0_14] : memref<3x512xf32, #tpu.memory_space<vmem>>, vector<1x512xf32>
    %c1_15 = arith.constant 1 : index
    %c0_16 = arith.constant 0 : index
    %32 = vector.load %arg5[%c1_15, %c0_16] : memref<3x512xf32, #tpu.memory_space<vmem>>, vector<1x512xf32>
    %c2_17 = arith.constant 2 : index
    %c0_18 = arith.constant 0 : index
    %33 = vector.load %arg5[%c2_17, %c0_18] : memref<3x512xf32, #tpu.memory_space<vmem>>, vector<1x512xf32>
    %34 = arith.truncf %30 : vector<104x1024xf32> to vector<104x1024xbf16>
    %c0_19 = arith.constant 0 : index
    %c0_20 = arith.constant 0 : index
    %35 = vector.load %arg4[%c0_19, %c0_20] : memref<1024x512xbf16, #tpu.memory_space<vmem>>, vector<1024x512xbf16>
    %cst_21 = arith.constant dense<0.000000e+00> : vector<104x512xf32>
    %36 = tpu.matmul %34, %35, %cst_21 {dimension_numbers = #tpu.dot_dimension_numbers<[1], [0], [0], [1], [0, 0, 1, 1], [], []>} : vector<104x1024xbf16>, vector<1024x512xbf16>, vector<104x512xf32> -> vector<104x512xf32>
    %37 = vector.broadcast %31 : vector<1x512xf32> to vector<104x512xf32>
    %38 = arith.addf %36, %37 : vector<104x512xf32>
    %cst_22 = arith.constant 0.000000e+00 : f32
    %39 = vector.broadcast %cst_22 : f32 to vector<104x512xf32>
    %40 = arith.maximumf %38, %39 : vector<104x512xf32>
    %41 = vector.broadcast %32 : vector<1x512xf32> to vector<104x512xf32>
    %42 = arith.mulf %40, %41 : vector<104x512xf32>
    %43 = vector.broadcast %33 : vector<1x512xf32> to vector<104x512xf32>
    %44 = arith.addf %42, %43 : vector<104x512xf32>
    %cst_23 = arith.constant dense<0.000000e+00> : vector<104xf32>
    %45 = vector.multi_reduction <add>, %44, %cst_23 [1] : vector<104x512xf32> to vector<104xf32>
    %46 = vector.shape_cast %45 : vector<104xf32> to vector<104x1xf32>
    %cst_24 = arith.constant 5.120000e+02 : f32
    %47 = vector.broadcast %cst_24 : f32 to vector<104x1xf32>
    %48 = arith.divf %46, %47 : vector<104x1xf32>
    %49 = vector.broadcast %48 : vector<104x1xf32> to vector<104x512xf32>
    %50 = arith.subf %44, %49 : vector<104x512xf32>
    %51 = arith.mulf %50, %50 : vector<104x512xf32>
    %cst_25 = arith.constant dense<0.000000e+00> : vector<104xf32>
    %52 = vector.multi_reduction <add>, %51, %cst_25 [1] : vector<104x512xf32> to vector<104xf32>
    %53 = vector.shape_cast %52 : vector<104xf32> to vector<104x1xf32>
    %cst_26 = arith.constant 5.120000e+02 : f32
    %54 = vector.broadcast %cst_26 : f32 to vector<104x1xf32>
    %55 = arith.divf %53, %54 : vector<104x1xf32>
    %cst_27 = arith.constant 9.99999974E-6 : f32
    %56 = vector.broadcast %cst_27 : f32 to vector<104x1xf32>
    %57 = arith.addf %55, %56 : vector<104x1xf32>
    %58 = math.rsqrt %57 : vector<104x1xf32>
    %59 = vector.broadcast %58 : vector<104x1xf32> to vector<104x512xf32>
    %60 = arith.mulf %50, %59 : vector<104x512xf32>
    %c0_28 = arith.constant 0 : index
    %c0_29 = arith.constant 0 : index
    %61 = vector.load %arg7[%c0_28, %c0_29] : memref<3x256xf32, #tpu.memory_space<vmem>>, vector<1x256xf32>
    %c1_30 = arith.constant 1 : index
    %c0_31 = arith.constant 0 : index
    %62 = vector.load %arg7[%c1_30, %c0_31] : memref<3x256xf32, #tpu.memory_space<vmem>>, vector<1x256xf32>
    %c2_32 = arith.constant 2 : index
    %c0_33 = arith.constant 0 : index
    %63 = vector.load %arg7[%c2_32, %c0_33] : memref<3x256xf32, #tpu.memory_space<vmem>>, vector<1x256xf32>
    %64 = arith.truncf %60 : vector<104x512xf32> to vector<104x512xbf16>
    %c0_34 = arith.constant 0 : index
    %c0_35 = arith.constant 0 : index
    %65 = vector.load %arg6[%c0_34, %c0_35] : memref<512x256xbf16, #tpu.memory_space<vmem>>, vector<512x256xbf16>
    %cst_36 = arith.constant dense<0.000000e+00> : vector<104x256xf32>
    %66 = tpu.matmul %64, %65, %cst_36 {dimension_numbers = #tpu.dot_dimension_numbers<[1], [0], [0], [1], [0, 0, 1, 1], [], []>} : vector<104x512xbf16>, vector<512x256xbf16>, vector<104x256xf32> -> vector<104x256xf32>
    %67 = vector.broadcast %61 : vector<1x256xf32> to vector<104x256xf32>
    %68 = arith.addf %66, %67 : vector<104x256xf32>
    %cst_37 = arith.constant 0.000000e+00 : f32
    %69 = vector.broadcast %cst_37 : f32 to vector<104x256xf32>
    %70 = arith.maximumf %68, %69 : vector<104x256xf32>
    %71 = vector.broadcast %62 : vector<1x256xf32> to vector<104x256xf32>
    %72 = arith.mulf %70, %71 : vector<104x256xf32>
    %73 = vector.broadcast %63 : vector<1x256xf32> to vector<104x256xf32>
    %74 = arith.addf %72, %73 : vector<104x256xf32>
    %cst_38 = arith.constant dense<0.000000e+00> : vector<104xf32>
    %75 = vector.multi_reduction <add>, %74, %cst_38 [1] : vector<104x256xf32> to vector<104xf32>
    %76 = vector.shape_cast %75 : vector<104xf32> to vector<104x1xf32>
    %cst_39 = arith.constant 2.560000e+02 : f32
    %77 = vector.broadcast %cst_39 : f32 to vector<104x1xf32>
    %78 = arith.divf %76, %77 : vector<104x1xf32>
    %79 = vector.broadcast %78 : vector<104x1xf32> to vector<104x256xf32>
    %80 = arith.subf %74, %79 : vector<104x256xf32>
    %81 = arith.mulf %80, %80 : vector<104x256xf32>
    %cst_40 = arith.constant dense<0.000000e+00> : vector<104xf32>
    %82 = vector.multi_reduction <add>, %81, %cst_40 [1] : vector<104x256xf32> to vector<104xf32>
    %83 = vector.shape_cast %82 : vector<104xf32> to vector<104x1xf32>
    %cst_41 = arith.constant 2.560000e+02 : f32
    %84 = vector.broadcast %cst_41 : f32 to vector<104x1xf32>
    %85 = arith.divf %83, %84 : vector<104x1xf32>
    %cst_42 = arith.constant 9.99999974E-6 : f32
    %86 = vector.broadcast %cst_42 : f32 to vector<104x1xf32>
    %87 = arith.addf %85, %86 : vector<104x1xf32>
    %88 = math.rsqrt %87 : vector<104x1xf32>
    %89 = vector.broadcast %88 : vector<104x1xf32> to vector<104x256xf32>
    %90 = arith.mulf %80, %89 : vector<104x256xf32>
    %91 = arith.truncf %90 : vector<104x256xf32> to vector<104x256xbf16>
    %c0_43 = arith.constant 0 : index
    %c0_44 = arith.constant 0 : index
    %92 = vector.load %arg8[%c0_43, %c0_44] : memref<256x256xbf16, #tpu.memory_space<vmem>>, vector<256x256xbf16>
    %cst_45 = arith.constant dense<0.000000e+00> : vector<104x256xf32>
    %93 = tpu.matmul %91, %92, %cst_45 {dimension_numbers = #tpu.dot_dimension_numbers<[1], [0], [0], [1], [0, 0, 1, 1], [], []>} : vector<104x256xbf16>, vector<256x256xbf16>, vector<104x256xf32> -> vector<104x256xf32>
    %c0_46 = arith.constant 0 : index
    %c0_47 = arith.constant 0 : index
    %94 = vector.load %arg9[%c0_46, %c0_47] : memref<1x256xf32, #tpu.memory_space<vmem>>, vector<1x256xf32>
    %95 = vector.broadcast %94 : vector<1x256xf32> to vector<104x256xf32>
    %96 = arith.addf %93, %95 : vector<104x256xf32>
    %cst_48 = arith.constant 0.000000e+00 : f32
    %97 = vector.broadcast %cst_48 : f32 to vector<104x256xf32>
    %98 = arith.maximumf %96, %97 : vector<104x256xf32>
    %99 = arith.truncf %98 : vector<104x256xf32> to vector<104x256xbf16>
    %c0_49 = arith.constant 0 : index
    %c0_50 = arith.constant 0 : index
    %100 = vector.load %arg10[%c0_49, %c0_50] : memref<256x256xbf16, #tpu.memory_space<vmem>>, vector<256x256xbf16>
    %cst_51 = arith.constant dense<0.000000e+00> : vector<104x256xf32>
    %101 = tpu.matmul %99, %100, %cst_51 {dimension_numbers = #tpu.dot_dimension_numbers<[1], [0], [0], [1], [0, 0, 1, 1], [], []>} : vector<104x256xbf16>, vector<256x256xbf16>, vector<104x256xf32> -> vector<104x256xf32>
    %c0_52 = arith.constant 0 : index
    %c0_53 = arith.constant 0 : index
    %102 = vector.load %arg11[%c0_52, %c0_53] : memref<1x256xf32, #tpu.memory_space<vmem>>, vector<1x256xf32>
    %103 = vector.broadcast %102 : vector<1x256xf32> to vector<104x256xf32>
    %104 = arith.addf %101, %103 : vector<104x256xf32>
    %c0_54 = arith.constant 0 : index
    %c0_55 = arith.constant 0 : index
    %105 = vector.load %arg12[%c0_54, %c0_55] : memref<104x256xf32, #tpu.memory_space<vmem>>, vector<104x256xf32>
    tpu.vector_store %arg12[%c0_54, %c0_55], %104 {strides = array<i32>} : memref<104x256xf32, #tpu.memory_space<vmem>>, vector<104x256xf32>,
    return
  }
  func.func @transform_0(%arg0: i32) -> (i32, i32) {
    %c0_i32 = arith.constant 0 : i32
    %c0_i32_0 = arith.constant 0 : i32
    return %arg0, %c0_i32 : i32, i32
  }
  func.func @transform_1(%arg0: i32) -> (i32, i32) {
    %c0_i32 = arith.constant 0 : i32
    %c0_i32_0 = arith.constant 0 : i32
    %c0_i32_1 = arith.constant 0 : i32
    return %c0_i32, %c0_i32_0 : i32, i32
  }
  func.func @transform_2(%arg0: i32) -> (i32, i32) {
    %c0_i32 = arith.constant 0 : i32
    %c0_i32_0 = arith.constant 0 : i32
    %c0_i32_1 = arith.constant 0 : i32
    return %c0_i32, %c0_i32_0 : i32, i32
  }
  func.func @transform_3(%arg0: i32) -> (i32, i32) {
    %c0_i32 = arith.constant 0 : i32
    %c0_i32_0 = arith.constant 0 : i32
    %c0_i32_1 = arith.constant 0 : i32
    return %c0_i32, %c0_i32_0 : i32, i32
  }
  func.func @transform_4(%arg0: i32) -> (i32, i32) {
    %c0_i32 = arith.constant 0 : i32
    %c0_i32_0 = arith.constant 0 : i32
    %c0_i32_1 = arith.constant 0 : i32
    return %c0_i32, %c0_i32_0 : i32, i32
  }
  func.func @transform_5(%arg0: i32) -> (i32, i32) {
    %c0_i32 = arith.constant 0 : i32
    %c0_i32_0 = arith.constant 0 : i32
    %c0_i32_1 = arith.constant 0 : i32
    return %c0_i32, %c0_i32_0 : i32, i32
  }
  func.func @transform_6(%arg0: i32) -> (i32, i32) {
    %c0_i32 = arith.constant 0 : i32
    %c0_i32_0 = arith.constant 0 : i32
    %c0_i32_1 = arith.constant 0 : i32
    return %c0_i32, %c0_i32_0 : i32, i32
  }
  func.func @transform_7(%arg0: i32) -> (i32, i32) {
    %c0_i32 = arith.constant 0 : i32
    %c0_i32_0 = arith.constant 0 : i32
    %c0_i32_1 = arith.constant 0 : i32
    return %c0_i32, %c0_i32_0 : i32, i32
  }
  func.func @transform_8(%arg0: i32) -> (i32, i32) {
    %c0_i32 = arith.constant 0 : i32
    %c0_i32_0 = arith.constant 0 : i32
    %c0_i32_1 = arith.constant 0 : i32
    return %c0_i32, %c0_i32_0 : i32, i32
  }
  func.func @transform_9(%arg0: i32) -> (i32, i32) {
    %c0_i32 = arith.constant 0 : i32
    %c0_i32_0 = arith.constant 0 : i32
    %c0_i32_1 = arith.constant 0 : i32
    return %c0_i32, %c0_i32_0 : i32, i32
  }
  func.func @transform_10(%arg0: i32) -> (i32, i32) {
    %c0_i32 = arith.constant 0 : i32
    %c0_i32_0 = arith.constant 0 : i32
    %c0_i32_1 = arith.constant 0 : i32
    return %c0_i32, %c0_i32_0 : i32, i32
  }
  func.func @transform_11(%arg0: i32) -> (i32, i32) {
    %c0_i32 = arith.constant 0 : i32
    %c0_i32_0 = arith.constant 0 : i32
    return %arg0, %c0_i32 : i32, i32
  }
}

</mosaic_0001>

<llo_original>
// kernel: tpu_custom_call.1
$region0: #{tpu_custom_call.1}
  #allocation0 [shape = 'u32[]', space=smem, size = 0x4, offset = 0x4, fixed_abs, tag = 'smem constant byte address 0x4 - core index']
  #allocation1 [shape = 'u32[144,128]{1,0:T(1,128)}', space=vmem, size = 0x12000, scoped, tag = 'internal scratch']
  %s0 = inlined_call_operand.hbm [shape: f32[104,256], index: 0, kind: input, shape index: {}]
  %s1 = inlined_call_operand.hbm [shape: bf16[256,1024], index: 1, kind: input, shape index: {}]
  %s2 = inlined_call_operand.hbm [shape: f32[3,1024], index: 2, kind: input, shape index: {}]
  %s3 = inlined_call_operand.hbm [shape: bf16[1024,512], index: 3, kind: input, shape index: {}]
  %s4 = inlined_call_operand.hbm [shape: f32[3,512], index: 4, kind: input, shape index: {}]
  %s5 = inlined_call_operand.hbm [shape: bf16[512,256], index: 5, kind: input, shape index: {}]
  %s6 = inlined_call_operand.vmem [shape: f32[3,256], index: 6, kind: input, shape index: {}]
  %s7 = inlined_call_operand.hbm [shape: bf16[256,256], index: 7, kind: input, shape index: {}]
  %s8 = inlined_call_operand.vmem [shape: f32[1,256], index: 8, kind: input, shape index: {}]
  %s9 = inlined_call_operand.hbm [shape: bf16[256,256], index: 9, kind: input, shape index: {}]
  %s10 = inlined_call_operand.vmem [shape: f32[1,256], index: 10, kind: input, shape index: {}]
  %s11 = inlined_call_operand.hbm [shape: f32[104,256], index: 11, kind: output, shape index: {}]
  %s12 = sld [smem:[#allocation0]]
  $region86: #{tpu_custom_call.1} parent=0
    _
  %s14 = ssub.s32 1, %s12
  %s15 = scalar_select 0, %s14, %s12
  $region1: #{tpu_custom_call.1} parent=0
    #allocation2 [shape = 'u8[106496]{0}', space=vmem, size = 0x1a000, scoped, tag = 'input window, operand 0, single buffered']
    #allocation3 [shape = 's32[1]{0}', space=sflag, size = 0x4, scoped, tag = 'scoped memory for tpu_custom_call.1']
    #allocation4 [shape = 's32[1]{0}', space=sflag, size = 0x4, scoped, tag = 'scoped memory for tpu_custom_call.1']
    #allocation5 [shape = 'u8[524288]{0}', space=vmem, size = 0x80000, scoped, tag = 'input window, operand 1, single buffered']
    #allocation6 [shape = 's32[1]{0}', space=sflag, size = 0x4, scoped, tag = 'scoped memory for tpu_custom_call.1']
    #allocation7 [shape = 'u8[16384]{0}', space=vmem, size = 0x4000, scoped, tag = 'input window, operand 2, single buffered']
    #allocation8 [shape = 'u8[1048576]{0}', space=vmem, size = 0x100000, scoped, tag = 'input window, operand 3, single buffered']
    #allocation9 [shape = 's32[1]{0}', space=sflag, size = 0x4, scoped, tag = 'scoped memory for tpu_custom_call.1']
    #allocation10 [shape = 'u8[8192]{0}', space=vmem, size = 0x2000, scoped, tag = 'input window, operand 4, single buffered']
    #allocation11 [shape = 'u8[262144]{0}', space=vmem, size = 0x40000, scoped, tag = 'input window, operand 5, single buffered']
    #allocation12 [shape = 's32[1]{0}', space=sflag, size = 0x4, scoped, tag = 'scoped memory for tpu_custom_call.1']
    #allocation13 [shape = 'u8[131072]{0}', space=vmem, size = 0x20000, scoped, tag = 'input window, operand 7, single buffered']
    #allocation14 [shape = 'u8[131072]{0}', space=vmem, size = 0x20000, scoped, tag = 'input window, operand 9, single buffered']
    #allocation15 [shape = 's32[1]{0}', space=sflag, size = 0x4, scoped, tag = 'scoped memory for tpu_custom_call.1']
    #allocation16 [shape = 'u8[106496]{0}', space=vmem, size = 0x1a000, scoped, tag = 'output window, operand 0, single buffered']
    %16 = vsyncpa [#allocation3], 0
    %17 = vsyncpa [#allocation6], 0
    %18 = vsyncpa [#allocation9], 0
    %19 = vsyncpa [#allocation12], 0
    %20 = vsyncpa [#allocation15], 0
    %21 = vsyncpa [#allocation4], 0
    // Predicated region
    $region2: #{tpu_custom_call.1} parent=1 // pred_check
      _
    $region3: #{tpu_custom_call.1} parent=1 // pred_check_branch
      %23 = sbr.rel (0) target = $region5
    $region4: #{tpu_custom_call.1} parent=1 // pred_region
      %s25 = ssub.s32 3328, 3328
      %26 = vsyncadd [#allocation3], %s25
      %s27 = sshll.u32 [#allocation2], 4
      %s28 = int_to_ptr.vmem [resolvable:$true] %s27
      %33 = dma.hbm_to_vmem [thread:$0]  %s0, 3328, %s28, [#allocation3], 256, 256, 16
    $region5: #{tpu_custom_call.1} parent=1 // pred_fallthru
      _
    // Predicated region
    $region6: #{tpu_custom_call.1} parent=1 // pred_check
      _
    $region7: #{tpu_custom_call.1} parent=1 // pred_check_branch
      %35 = sbr.rel (0) target = $region9
    $region8: #{tpu_custom_call.1} parent=1 // pred_region
      %s37 = ssub.s32 16384, 16384
      %38 = vsyncadd [#allocation6], %s37
      %s39 = sshll.u32 [#allocation5], 4
      %s40 = int_to_ptr.vmem [resolvable:$true] %s39
      %45 = dma.hbm_to_vmem [thread:$0]  %s1, 16384, %s40, [#allocation6], 512, 512, 32
    $region9: #{tpu_custom_call.1} parent=1 // pred_fallthru
      _
    // Predicated region
    $region10: #{tpu_custom_call.1} parent=1 // pred_check
      _
    $region11: #{tpu_custom_call.1} parent=1 // pred_check_branch
      %47 = sbr.rel (0) target = $region13
    $region12: #{tpu_custom_call.1} parent=1 // pred_region
      %s49 = ssub.s32 512, 512
      %50 = vsyncadd [#allocation6], %s49
      %s52 = sshll.u32 [#allocation7], 4
      %s53 = int_to_ptr.vmem [resolvable:$true] %s52
      %55 = dma.hbm_to_vmem [thread:$0]  %s2, 512, %s53, [#allocation6]
    $region13: #{tpu_custom_call.1} parent=1 // pred_fallthru
      _
    // Predicated region
    $region14: #{tpu_custom_call.1} parent=1 // pred_check
      _
    $region15: #{tpu_custom_call.1} parent=1 // pred_check_branch
      %57 = sbr.rel (0) target = $region17
    $region16: #{tpu_custom_call.1} parent=1 // pred_region
      %s59 = ssub.s32 32768, 32768
      %60 = vsyncadd [#allocation9], %s59
      %s61 = sshll.u32 [#allocation8], 4
      %s62 = int_to_ptr.vmem [resolvable:$true] %s61
      %67 = dma.hbm_to_vmem [thread:$0]  %s3, 32768, %s62, [#allocation9], 256, 256, 16
    $region17: #{tpu_custom_call.1} parent=1 // pred_fallthru
      _
    // Predicated region
    $region18: #{tpu_custom_call.1} parent=1 // pred_check
      _
    $region19: #{tpu_custom_call.1} parent=1 // pred_check_branch
      %69 = sbr.rel (0) target = $region21
    $region20: #{tpu_custom_call.1} parent=1 // pred_region
      %s71 = ssub.s32 256, 256
      %72 = vsyncadd [#allocation9], %s71
      %s74 = sshll.u32 [#allocation10], 4
      %s75 = int_to_ptr.vmem [resolvable:$true] %s74
      %77 = dma.hbm_to_vmem [thread:$0]  %s4, 256, %s75, [#allocation9]
    $region21: #{tpu_custom_call.1} parent=1 // pred_fallthru
      _
    // Predicated region
    $region22: #{tpu_custom_call.1} parent=1 // pred_check
      _
    $region23: #{tpu_custom_call.1} parent=1 // pred_check_branch
      %79 = sbr.rel (0) target = $region25
    $region24: #{tpu_custom_call.1} parent=1 // pred_region
      %s81 = ssub.s32 8192, 8192
      %82 = vsyncadd [#allocation12], %s81
      %s83 = sshll.u32 [#allocation11], 4
      %s84 = int_to_ptr.vmem [resolvable:$true] %s83
      %89 = dma.hbm_to_vmem [thread:$0]  %s5, 8192, %s84, [#allocation12], 128, 128, 8
    $region25: #{tpu_custom_call.1} parent=1 // pred_fallthru
      _
    // Predicated region
    $region26: #{tpu_custom_call.1} parent=1 // pred_check
      _
    $region27: #{tpu_custom_call.1} parent=1 // pred_check_branch
      %91 = sbr.rel (0) target = $region29
    $region28: #{tpu_custom_call.1} parent=1 // pred_region
      _
    $region29: #{tpu_custom_call.1} parent=1 // pred_fallthru
      _
    // Predicated region
    $region30: #{tpu_custom_call.1} parent=1 // pred_check
      _
    $region31: #{tpu_custom_call.1} parent=1 // pred_check_branch
      %93 = sbr.rel (0) target = $region33
    $region32: #{tpu_custom_call.1} parent=1 // pred_region
      %s95 = ssub.s32 4096, 4096
      %96 = vsyncadd [#allocation12], %s95
      %s97 = sshll.u32 [#allocation13], 4
      %s98 = int_to_ptr.vmem [resolvable:$true] %s97
      %103 = dma.hbm_to_vmem [thread:$0]  %s7, 4096, %s98, [#allocation12], 128, 128, 8
    $region33: #{tpu_custom_call.1} parent=1 // pred_fallthru
      _
    // Predicated region
    $region34: #{tpu_custom_call.1} parent=1 // pred_check
      _
    $region35: #{tpu_custom_call.1} parent=1 // pred_check_branch
      %105 = sbr.rel (0) target = $region37
    $region36: #{tpu_custom_call.1} parent=1 // pred_region
      _
    $region37: #{tpu_custom_call.1} parent=1 // pred_fallthru
      _
    // Predicated region
    $region38: #{tpu_custom_call.1} parent=1 // pred_check
      _
    $region39: #{tpu_custom_call.1} parent=1 // pred_check_branch
      %107 = sbr.rel (0) target = $region41
    $region40: #{tpu_custom_call.1} parent=1 // pred_region
      %s109 = ssub.s32 4096, 4096
      %110 = vsyncadd [#allocation15], %s109
      %s111 = sshll.u32 [#allocation14], 4
      %s112 = int_to_ptr.vmem [resolvable:$true] %s111
      %117 = dma.hbm_to_vmem [thread:$0]  %s9, 4096, %s112, [#allocation15], 128, 128, 8
    $region41: #{tpu_custom_call.1} parent=1 // pred_fallthru
      _
    // Predicated region
    $region42: #{tpu_custom_call.1} parent=1 // pred_check
      _
    $region43: #{tpu_custom_call.1} parent=1 // pred_check_branch
      %119 = sbr.rel (0) target = $region45
    $region44: #{tpu_custom_call.1} parent=1 // pred_region
      _
    $region45: #{tpu_custom_call.1} parent=1 // pred_fallthru
      _
    // Predicated region
    $region46: #{tpu_custom_call.1} parent=1 // pred_check
      _
    $region47: #{tpu_custom_call.1} parent=1 // pred_check_branch
      %121 = sbr.rel (0) target = $region49
    $region48: #{tpu_custom_call.1} parent=1 // pred_region
      %122 = dma.done [#allocation3], 3328
    $region49: #{tpu_custom_call.1} parent=1 // pred_fallthru
      _
    // Predicated region
    $region50: #{tpu_custom_call.1} parent=1 // pred_check
      _
    $region51: #{tpu_custom_call.1} parent=1 // pred_check_branch
      %124 = sbr.rel (0) target = $region53
    $region52: #{tpu_custom_call.1} parent=1 // pred_region
      %125 = dma.done [#allocation6], 16384
    $region53: #{tpu_custom_call.1} parent=1 // pred_fallthru
      _
    // Predicated region
    $region54: #{tpu_custom_call.1} parent=1 // pred_check
      _
    $region55: #{tpu_custom_call.1} parent=1 // pred_check_branch
      %127 = sbr.rel (0) target = $region57
    $region56: #{tpu_custom_call.1} parent=1 // pred_region
      %128 = dma.done [#allocation6], 512
    $region57: #{tpu_custom_call.1} parent=1 // pred_fallthru
      _
    // Predicated region
    $region58: #{tpu_custom_call.1} parent=1 // pred_check
      _
    $region59: #{tpu_custom_call.1} parent=1 // pred_check_branch
      %130 = sbr.rel (0) target = $region61
    $region60: #{tpu_custom_call.1} parent=1 // pred_region
      %131 = dma.done [#allocation9], 32768
    $region61: #{tpu_custom_call.1} parent=1 // pred_fallthru
      _
    // Predicated region
    $region62: #{tpu_custom_call.1} parent=1 // pred_check
      _
    $region63: #{tpu_custom_call.1} parent=1 // pred_check_branch
      %133 = sbr.rel (0) target = $region65
    $region64: #{tpu_custom_call.1} parent=1 // pred_region
      %134 = dma.done [#allocation9], 256
    $region65: #{tpu_custom_call.1} parent=1 // pred_fallthru
      _
    // Predicated region
    $region66: #{tpu_custom_call.1} parent=1 // pred_check
      _
    $region67: #{tpu_custom_call.1} parent=1 // pred_check_branch
      %136 = sbr.rel (0) target = $region69
    $region68: #{tpu_custom_call.1} parent=1 // pred_region
      %137 = dma.done [#allocation12], 8192
    $region69: #{tpu_custom_call.1} parent=1 // pred_fallthru
      _
    // Predicated region
    $region70: #{tpu_custom_call.1} parent=1 // pred_check
      _
    $region71: #{tpu_custom_call.1} parent=1 // pred_check_branch
      %139 = sbr.rel (0) target = $region73
    $region72: #{tpu_custom_call.1} parent=1 // pred_region
      %140 = dma.done [#allocation12], 4096
    $region73: #{tpu_custom_call.1} parent=1 // pred_fallthru
      _
    // Predicated region
    $region74: #{tpu_custom_call.1} parent=1 // pred_check
      _
    $region75: #{tpu_custom_call.1} parent=1 // pred_check_branch
      %142 = sbr.rel (0) target = $region77
    $region76: #{tpu_custom_call.1} parent=1 // pred_region
      %143 = dma.done [#allocation15], 4096
    $region77: #{tpu_custom_call.1} parent=1 // pred_fallthru
      _
    %v144 = vld [vmem:[#allocation2] sm:$0xff]
    %v145 = vld [vmem:[#allocation2 + $0x8] sm:$0xff]
    %v146 = vld [vmem:[#allocation2 + $0x10] sm:$0xff]
    %v147 = vld [vmem:[#allocation2 + $0x18] sm:$0xff]
    %v148 = vld [vmem:[#allocation2 + $0x20] sm:$0xff]
    %v149 = vld [vmem:[#allocation2 + $0x28] sm:$0xff]
    %v150 = vld [vmem:[#allocation2 + $0x30] sm:$0xff]
    %v151 = vld [vmem:[#allocation2 + $0x38] sm:$0xff]
    %v152 = vld [vmem:[#allocation2 + $0x40] sm:$0xff]
    %v153 = vld [vmem:[#allocation2 + $0x48] sm:$0xff]
    %v154 = vld [vmem:[#allocation2 + $0x50] sm:$0xff]
    %v155 = vld [vmem:[#allocation2 + $0x58] sm:$0xff]
    %v156 = vld [vmem:[#allocation2 + $0x60] sm:$0xff]
    %v157 = vld [vmem:[#allocation2 + $0x68] sm:$0xff]
    %v158 = vld [vmem:[#allocation2 + $0x70] sm:$0xff]
    %v159 = vld [vmem:[#allocation2 + $0x78] sm:$0xff]
    %v160 = vld [vmem:[#allocation2 + $0x80] sm:$0xff]
    %v161 = vld [vmem:[#allocation2 + $0x88] sm:$0xff]
    %v162 = vld [vmem:[#allocation2 + $0x90] sm:$0xff]
    %v163 = vld [vmem:[#allocation2 + $0x98] sm:$0xff]
    %v164 = vld [vmem:[#allocation2 + $0xa0] sm:$0xff]
    %v165 = vld [vmem:[#allocation2 + $0xa8] sm:$0xff]
    %v166 = vld [vmem:[#allocation2 + $0xb0] sm:$0xff]
    %v167 = vld [vmem:[#allocation2 + $0xb8] sm:$0xff]
    %v168 = vld [vmem:[#allocation2 + $0xc0] sm:$0xff]
    %v169 = vld [vmem:[#allocation2 + $0xc8] sm:$0xff]
    %v170 = vld [vmem:[#allocation7] ss:$4 sm:$0xff]
    %s171 = scalar_lea.vmem [#allocation7], 1
    %v172 = vld [vmem:[%s171] ss:$4 sm:$0xff]
    %s173 = scalar_lea.vmem [#allocation7], 2
    %v174 = vld [vmem:[%s173] ss:$4 sm:$0xff]
    %v175 = vpack.c.bf16 %v146, %v144
    %v176 = vpack.c.bf16 %v147, %v145
    %v177 = vpack.c.bf16 %v150, %v148
    %v178 = vpack.c.bf16 %v151, %v149
    %v179 = vpack.c.bf16 %v154, %v152
    %v180 = vpack.c.bf16 %v155, %v153
    %v181 = vpack.c.bf16 %v158, %v156
    %v182 = vpack.c.bf16 %v159, %v157
    %v183 = vpack.c.bf16 %v162, %v160
    %v184 = vpack.c.bf16 %v163, %v161
    %v185 = vpack.c.bf16 %v166, %v164
    %v186 = vpack.c.bf16 %v167, %v165
    %v187 = vpack.c.bf16 %v168, %v168
    %v188 = vpack.c.bf16 %v169, %v169
    %v189 = vld [vmem:[#allocation5] sm:$0xff]
    %v190 = vld [vmem:[#allocation5 + $0x8] sm:$0xff]
    %v191 = vld [vmem:[#allocation5 + $0x10] sm:$0xff]
    %v192 = vld [vmem:[#allocation5 + $0x18] sm:$0xff]
    %v193 = vld [vmem:[#allocation5 + $0x20] sm:$0xff]
    %v194 = vld [vmem:[#allocation5 + $0x28] sm:$0xff]
    %v195 = vld [vmem:[#allocation5 + $0x30] sm:$0xff]
    %v196 = vld [vmem:[#allocation5 + $0x38] sm:$0xff]
    %v197 = vld [vmem:[#allocation5 + $0x40] sm:$0xff]
    %v198 = vld [vmem:[#allocation5 + $0x48] sm:$0xff]
    %v199 = vld [vmem:[#allocation5 + $0x50] sm:$0xff]
    %v200 = vld [vmem:[#allocation5 + $0x58] sm:$0xff]
    %v201 = vld [vmem:[#allocation5 + $0x60] sm:$0xff]
    %v202 = vld [vmem:[#allocation5 + $0x68] sm:$0xff]
    %v203 = vld [vmem:[#allocation5 + $0x70] sm:$0xff]
    %v204 = vld [vmem:[#allocation5 + $0x78] sm:$0xff]
    %v205 = vld [vmem:[#allocation5 + $0x80] sm:$0xff]
    %v206 = vld [vmem:[#allocation5 + $0x88] sm:$0xff]
    %v207 = vld [vmem:[#allocation5 + $0x90] sm:$0xff]
    %v208 = vld [vmem:[#allocation5 + $0x98] sm:$0xff]
    %v209 = vld [vmem:[#allocation5 + $0xa0] sm:$0xff]
    %v210 = vld [vmem:[#allocation5 + $0xa8] sm:$0xff]
    %v211 = vld [vmem:[#allocation5 + $0xb0] sm:$0xff]
    %v212 = vld [vmem:[#allocation5 + $0xb8] sm:$0xff]
    %v213 = vld [vmem:[#allocation5 + $0xc0] sm:$0xff]
    %v214 = vld [vmem:[#allocation5 + $0xc8] sm:$0xff]
    %v215 = vld [vmem:[#allocation5 + $0xd0] sm:$0xff]
    %v216 = vld [vmem:[#allocation5 + $0xd8] sm:$0xff]
    %v217 = vld [vmem:[#allocation5 + $0xe0] sm:$0xff]
    %v218 = vld [vmem:[#allocation5 + $0xe8] sm:$0xff]
    %v219 = vld [vmem:[#allocation5 + $0xf0] sm:$0xff]
    %v220 = vld [vmem:[#allocation5 + $0xf8] sm:$0xff]
    %v221 = vld [vmem:[#allocation5 + $0x100] sm:$0xff]
    %v222 = vld [vmem:[#allocation5 + $0x108] sm:$0xff]
    %v223 = vld [vmem:[#allocation5 + $0x110] sm:$0xff]
    %v224 = vld [vmem:[#allocation5 + $0x118] sm:$0xff]
    %v225 = vld [vmem:[#allocation5 + $0x120] sm:$0xff]
    %v226 = vld [vmem:[#allocation5 + $0x128] sm:$0xff]
    %v227 = vld [vmem:[#allocation5 + $0x130] sm:$0xff]
    %v228 = vld [vmem:[#allocation5 + $0x138] sm:$0xff]
    %v229 = vld [vmem:[#allocation5 + $0x140] sm:$0xff]
    %v230 = vld [vmem:[#allocation5 + $0x148] sm:$0xff]
    %v231 = vld [vmem:[#allocation5 + $0x150] sm:$0xff]
    %v232 = vld [vmem:[#allocation5 + $0x158] sm:$0xff]
    %v233 = vld [vmem:[#allocation5 + $0x160] sm:$0xff]
    %v234 = vld [vmem:[#allocation5 + $0x168] sm:$0xff]
    %v235 = vld [vmem:[#allocation5 + $0x170] sm:$0xff]
    %v236 = vld [vmem:[#allocation5 + $0x178] sm:$0xff]
    %v237 = vld [vmem:[#allocation5 + $0x180] sm:$0xff]
    %v238 = vld [vmem:[#allocation5 + $0x188] sm:$0xff]
    %v239 = vld [vmem:[#allocation5 + $0x190] sm:$0xff]
    %v240 = vld [vmem:[#allocation5 + $0x198] sm:$0xff]
    %v241 = vld [vmem:[#allocation5 + $0x1a0] sm:$0xff]
    %v242 = vld [vmem:[#allocation5 + $0x1a8] sm:$0xff]
    %v243 = vld [vmem:[#allocation5 + $0x1b0] sm:$0xff]
    %v244 = vld [vmem:[#allocation5 + $0x1b8] sm:$0xff]
    %v245 = vld [vmem:[#allocation5 + $0x1c0] sm:$0xff]
    %v246 = vld [vmem:[#allocation5 + $0x1c8] sm:$0xff]
    %v247 = vld [vmem:[#allocation5 + $0x1d0] sm:$0xff]
    %v248 = vld [vmem:[#allocation5 + $0x1d8] sm:$0xff]
    %v249 = vld [vmem:[#allocation5 + $0x1e0] sm:$0xff]
    %v250 = vld [vmem:[#allocation5 + $0x1e8] sm:$0xff]
    %v251 = vld [vmem:[#allocation5 + $0x1f0] sm:$0xff]
    %v252 = vld [vmem:[#allocation5 + $0x1f8] sm:$0xff]
    %v253 = vld [vmem:[#allocation5 + $0x200] sm:$0xff]
    %v254 = vld [vmem:[#allocation5 + $0x208] sm:$0xff]
    %v255 = vld [vmem:[#allocation5 + $0x210] sm:$0xff]
    %v256 = vld [vmem:[#allocation5 + $0x218] sm:$0xff]
    %v257 = vld [vmem:[#allocation5 + $0x220] sm:$0xff]
    %v258 = vld [vmem:[#allocation5 + $0x228] sm:$0xff]
    %v259 = vld [vmem:[#allocation5 + $0x230] sm:$0xff]
    %v260 = vld [vmem:[#allocation5 + $0x238] sm:$0xff]
    %v261 = vld [vmem:[#allocation5 + $0x240] sm:$0xff]
    %v262 = vld [vmem:[#allocation5 + $0x248] sm:$0xff]
    %v263 = vld [vmem:[#allocation5 + $0x250] sm:$0xff]
    %v264 = vld [vmem:[#allocation5 + $0x258] sm:$0xff]
    %v265 = vld [vmem:[#allocation5 + $0x260] sm:$0xff]
    %v266 = vld [vmem:[#allocation5 + $0x268] sm:$0xff]
    %v267 = vld [vmem:[#allocation5 + $0x270] sm:$0xff]
    %v268 = vld [vmem:[#allocation5 + $0x278] sm:$0xff]
    %v269 = vld [vmem:[#allocation5 + $0x280] sm:$0xff]
    %v270 = vld [vmem:[#allocation5 + $0x288] sm:$0xff]
    %v271 = vld [vmem:[#allocation5 + $0x290] sm:$0xff]
    %v272 = vld [vmem:[#allocation5 + $0x298] sm:$0xff]
    %v273 = vld [vmem:[#allocation5 + $0x2a0] sm:$0xff]
    %v274 = vld [vmem:[#allocation5 + $0x2a8] sm:$0xff]
    %v275 = vld [vmem:[#allocation5 + $0x2b0] sm:$0xff]
    %v276 = vld [vmem:[#allocation5 + $0x2b8] sm:$0xff]
    %v277 = vld [vmem:[#allocation5 + $0x2c0] sm:$0xff]
    %v278 = vld [vmem:[#allocation5 + $0x2c8] sm:$0xff]
    %v279 = vld [vmem:[#allocation5 + $0x2d0] sm:$0xff]
    %v280 = vld [vmem:[#allocation5 + $0x2d8] sm:$0xff]
    %v281 = vld [vmem:[#allocation5 + $0x2e0] sm:$0xff]
    %v282 = vld [vmem:[#allocation5 + $0x2e8] sm:$0xff]
    %v283 = vld [vmem:[#allocation5 + $0x2f0] sm:$0xff]
    %v284 = vld [vmem:[#allocation5 + $0x2f8] sm:$0xff]
    %v285 = vld [vmem:[#allocation5 + $0x300] sm:$0xff]
    %v286 = vld [vmem:[#allocation5 + $0x308] sm:$0xff]
    %v287 = vld [vmem:[#allocation5 + $0x310] sm:$0xff]
    %v288 = vld [vmem:[#allocation5 + $0x318] sm:$0xff]
    %v289 = vld [vmem:[#allocation5 + $0x320] sm:$0xff]
    %v290 = vld [vmem:[#allocation5 + $0x328] sm:$0xff]
    %v291 = vld [vmem:[#allocation5 + $0x330] sm:$0xff]
    %v292 = vld [vmem:[#allocation5 + $0x338] sm:$0xff]
    %v293 = vld [vmem:[#allocation5 + $0x340] sm:$0xff]
    %v294 = vld [vmem:[#allocation5 + $0x348] sm:$0xff]
    %v295 = vld [vmem:[#allocation5 + $0x350] sm:$0xff]
    %v296 = vld [vmem:[#allocation5 + $0x358] sm:$0xff]
    %v297 = vld [vmem:[#allocation5 + $0x360] sm:$0xff]
    %v298 = vld [vmem:[#allocation5 + $0x368] sm:$0xff]
    %v299 = vld [vmem:[#allocation5 + $0x370] sm:$0xff]
    %v300 = vld [vmem:[#allocation5 + $0x378] sm:$0xff]
    %v301 = vld [vmem:[#allocation5 + $0x380] sm:$0xff]
    %v302 = vld [vmem:[#allocation5 + $0x388] sm:$0xff]
    %v303 = vld [vmem:[#allocation5 + $0x390] sm:$0xff]
    %v304 = vld [vmem:[#allocation5 + $0x398] sm:$0xff]
    %v305 = vld [vmem:[#allocation5 + $0x3a0] sm:$0xff]
    %v306 = vld [vmem:[#allocation5 + $0x3a8] sm:$0xff]
    %v307 = vld [vmem:[#allocation5 + $0x3b0] sm:$0xff]
    %v308 = vld [vmem:[#allocation5 + $0x3b8] sm:$0xff]
    %v309 = vld [vmem:[#allocation5 + $0x3c0] sm:$0xff]
    %v310 = vld [vmem:[#allocation5 + $0x3c8] sm:$0xff]
    %v311 = vld [vmem:[#allocation5 + $0x3d0] sm:$0xff]
    %v312 = vld [vmem:[#allocation5 + $0x3d8] sm:$0xff]
    %v313 = vld [vmem:[#allocation5 + $0x3e0] sm:$0xff]
    %v314 = vld [vmem:[#allocation5 + $0x3e8] sm:$0xff]
    %v315 = vld [vmem:[#allocation5 + $0x3f0] sm:$0xff]
    %v316 = vld [vmem:[#allocation5 + $0x3f8] sm:$0xff]
    %v318 = vlaneseq
    %v319 = vshrl.u32 %v318, 7
    %v320 = vsub.s32 0, %v319
    %v321 = vrot.slane %v170, %v320
    %v322 = vlaneseq
    %v323 = vshrl.u32 %v322, 7
    %v324 = vsub.s32 1, %v323
    %v325 = vrot.slane %v170, %v324
    %v326 = vlaneseq
    %v327 = vshrl.u32 %v326, 7
    %v328 = vsub.s32 2, %v327
    %v329 = vrot.slane %v170, %v328
    %v330 = vlaneseq
    %v331 = vshrl.u32 %v330, 7
    %v332 = vsub.s32 3, %v331
    %v333 = vrot.slane %v170, %v332
    %v334 = vlaneseq
    %v335 = vshrl.u32 %v334, 7
    %v336 = vsub.s32 4, %v335
    %v337 = vrot.slane %v170, %v336
    %v338 = vlaneseq
    %v339 = vshrl.u32 %v338, 7
    %v340 = vsub.s32 5, %v339
    %v341 = vrot.slane %v170, %v340
    %v342 = vlaneseq
    %v343 = vshrl.u32 %v342, 7
    %v344 = vsub.s32 6, %v343
    %v345 = vrot.slane %v170, %v344
    %v346 = vlaneseq
    %v347 = vshrl.u32 %v346, 7
    %v348 = vsub.s32 7, %v347
    %v349 = vrot.slane %v170, %v348
    %v486 = vunpack.c.l.b16 %v189
    %v487 = vunpack.c.h.b16 %v189
    %v488 = vunpack.c.l.b16 %v190
    %v489 = vunpack.c.h.b16 %v190
    %v490 = vunpack.c.l.b16 %v191
    %v491 = vunpack.c.h.b16 %v191
    %v492 = vunpack.c.l.b16 %v192
    %v493 = vunpack.c.h.b16 %v192
    %v494 = vunpack.c.l.b16 %v193
    %v495 = vunpack.c.h.b16 %v193
    %v496 = vunpack.c.l.b16 %v194
    %v497 = vunpack.c.h.b16 %v194
    %v498 = vunpack.c.l.b16 %v195
    %v499 = vunpack.c.h.b16 %v195
    %v500 = vunpack.c.l.b16 %v196
    %v501 = vunpack.c.h.b16 %v196
    %v502 = vunpack.c.l.b16 %v197
    %v503 = vunpack.c.h.b16 %v197
    %v504 = vunpack.c.l.b16 %v198
    %v505 = vunpack.c.h.b16 %v198
    %v506 = vunpack.c.l.b16 %v199
    %v507 = vunpack.c.h.b16 %v199
    %v508 = vunpack.c.l.b16 %v200
    %v509 = vunpack.c.h.b16 %v200
    %v510 = vunpack.c.l.b16 %v201
    %v511 = vunpack.c.h.b16 %v201
    %v512 = vunpack.c.l.b16 %v202
    %v513 = vunpack.c.h.b16 %v202
    %v514 = vunpack.c.l.b16 %v203
    %v515 = vunpack.c.h.b16 %v203
    %v516 = vunpack.c.l.b16 %v204
    %v517 = vunpack.c.h.b16 %v204
    %v518 = vunpack.c.l.b16 %v205
    %v519 = vunpack.c.h.b16 %v205
    %v520 = vunpack.c.l.b16 %v206
    %v521 = vunpack.c.h.b16 %v206
    %v522 = vunpack.c.l.b16 %v207
    %v523 = vunpack.c.h.b16 %v207
    %v524 = vunpack.c.l.b16 %v208
    %v525 = vunpack.c.h.b16 %v208
    %v526 = vunpack.c.l.b16 %v209
    %v527 = vunpack.c.h.b16 %v209
    %v528 = vunpack.c.l.b16 %v210
    %v529 = vunpack.c.h.b16 %v210
    %v530 = vunpack.c.l.b16 %v211
    %v531 = vunpack.c.h.b16 %v211
    %v532 = vunpack.c.l.b16 %v212
    %v533 = vunpack.c.h.b16 %v212
    %v534 = vunpack.c.l.b16 %v213
    %v535 = vunpack.c.h.b16 %v213
    %v536 = vunpack.c.l.b16 %v214
    %v537 = vunpack.c.h.b16 %v214
    %v538 = vunpack.c.l.b16 %v215
    %v539 = vunpack.c.h.b16 %v215
    %v540 = vunpack.c.l.b16 %v216
    %v541 = vunpack.c.h.b16 %v216
    %v542 = vunpack.c.l.b16 %v217
    %v543 = vunpack.c.h.b16 %v217
    %v544 = vunpack.c.l.b16 %v218
    %v545 = vunpack.c.h.b16 %v218
    %v546 = vunpack.c.l.b16 %v219
    %v547 = vunpack.c.h.b16 %v219
    %v548 = vunpack.c.l.b16 %v220
    %v549 = vunpack.c.h.b16 %v220
    %v550 = vunpack.c.l.b16 %v221
    %v551 = vunpack.c.h.b16 %v221
    %v552 = vunpack.c.l.b16 %v222
    %v553 = vunpack.c.h.b16 %v222
    %v554 = vunpack.c.l.b16 %v223
    %v555 = vunpack.c.h.b16 %v223
    %v556 = vunpack.c.l.b16 %v224
    %v557 = vunpack.c.h.b16 %v224
    %v558 = vunpack.c.l.b16 %v225
    %v559 = vunpack.c.h.b16 %v225
    %v560 = vunpack.c.l.b16 %v226
    %v561 = vunpack.c.h.b16 %v226
    %v562 = vunpack.c.l.b16 %v227
    %v563 = vunpack.c.h.b16 %v227
    %v564 = vunpack.c.l.b16 %v228
    %v565 = vunpack.c.h.b16 %v228
    %v566 = vunpack.c.l.b16 %v229
    %v567 = vunpack.c.h.b16 %v229
    %v568 = vunpack.c.l.b16 %v230
    %v569 = vunpack.c.h.b16 %v230
    %v570 = vunpack.c.l.b16 %v231
    %v571 = vunpack.c.h.b16 %v231
    %v572 = vunpack.c.l.b16 %v232
    %v573 = vunpack.c.h.b16 %v232
    %v574 = vunpack.c.l.b16 %v233
    %v575 = vunpack.c.h.b16 %v233
    %v576 = vunpack.c.l.b16 %v234
    %v577 = vunpack.c.h.b16 %v234
    %v578 = vunpack.c.l.b16 %v235
    %v579 = vunpack.c.h.b16 %v235
    %v580 = vunpack.c.l.b16 %v236
    %v581 = vunpack.c.h.b16 %v236
    %v582 = vunpack.c.l.b16 %v237
    %v583 = vunpack.c.h.b16 %v237
    %v584 = vunpack.c.l.b16 %v238
    %v585 = vunpack.c.h.b16 %v238
    %v586 = vunpack.c.l.b16 %v239
    %v587 = vunpack.c.h.b16 %v239
    %v588 = vunpack.c.l.b16 %v240
    %v589 = vunpack.c.h.b16 %v240
    %v590 = vunpack.c.l.b16 %v241
    %v591 = vunpack.c.h.b16 %v241
    %v592 = vunpack.c.l.b16 %v242
    %v593 = vunpack.c.h.b16 %v242
    %v594 = vunpack.c.l.b16 %v243
    %v595 = vunpack.c.h.b16 %v243
    %v596 = vunpack.c.l.b16 %v244
    %v597 = vunpack.c.h.b16 %v244
    %v598 = vunpack.c.l.b16 %v245
    %v599 = vunpack.c.h.b16 %v245
    %v600 = vunpack.c.l.b16 %v246
    %v601 = vunpack.c.h.b16 %v246
    %v602 = vunpack.c.l.b16 %v247
    %v603 = vunpack.c.h.b16 %v247
    %v604 = vunpack.c.l.b16 %v248
    %v605 = vunpack.c.h.b16 %v248
    %v606 = vunpack.c.l.b16 %v249
    %v607 = vunpack.c.h.b16 %v249
    %v608 = vunpack.c.l.b16 %v250
    %v609 = vunpack.c.h.b16 %v250
    %v610 = vunpack.c.l.b16 %v251
    %v611 = vunpack.c.h.b16 %v251
    %v612 = vunpack.c.l.b16 %v252
    %v613 = vunpack.c.h.b16 %v252
    %v614 = vunpack.c.l.b16 %v253
    %v615 = vunpack.c.h.b16 %v253
    %v616 = vunpack.c.l.b16 %v254
    %v617 = vunpack.c.h.b16 %v254
    %v618 = vunpack.c.l.b16 %v255
    %v619 = vunpack.c.h.b16 %v255
    %v620 = vunpack.c.l.b16 %v256
    %v621 = vunpack.c.h.b16 %v256
    %v622 = vunpack.c.l.b16 %v257
    %v623 = vunpack.c.h.b16 %v257
    %v624 = vunpack.c.l.b16 %v258
    %v625 = vunpack.c.h.b16 %v258
    %v626 = vunpack.c.l.b16 %v259
    %v627 = vunpack.c.h.b16 %v259
    %v628 = vunpack.c.l.b16 %v260
    %v629 = vunpack.c.h.b16 %v260
    %v630 = vunpack.c.l.b16 %v261
    %v631 = vunpack.c.h.b16 %v261
    %v632 = vunpack.c.l.b16 %v262
    %v633 = vunpack.c.h.b16 %v262
    %v634 = vunpack.c.l.b16 %v263
    %v635 = vunpack.c.h.b16 %v263
    %v636 = vunpack.c.l.b16 %v264
    %v637 = vunpack.c.h.b16 %v264
    %v638 = vunpack.c.l.b16 %v265
    %v639 = vunpack.c.h.b16 %v265
    %v640 = vunpack.c.l.b16 %v266
    %v641 = vunpack.c.h.b16 %v266
    %v642 = vunpack.c.l.b16 %v267
    %v643 = vunpack.c.h.b16 %v267
    %v644 = vunpack.c.l.b16 %v268
    %v645 = vunpack.c.h.b16 %v268
    %v646 = vunpack.c.l.b16 %v269
    %v647 = vunpack.c.h.b16 %v269
    %v648 = vunpack.c.l.b16 %v270
    %v649 = vunpack.c.h.b16 %v270
    %v650 = vunpack.c.l.b16 %v271
    %v651 = vunpack.c.h.b16 %v271
    %v652 = vunpack.c.l.b16 %v272
    %v653 = vunpack.c.h.b16 %v272
    %v654 = vunpack.c.l.b16 %v273
    %v655 = vunpack.c.h.b16 %v273
    %v656 = vunpack.c.l.b16 %v274
    %v657 = vunpack.c.h.b16 %v274
    %v658 = vunpack.c.l.b16 %v275
    %v659 = vunpack.c.h.b16 %v275
    %v660 = vunpack.c.l.b16 %v276
    %v661 = vunpack.c.h.b16 %v276
    %v662 = vunpack.c.l.b16 %v277
    %v663 = vunpack.c.h.b16 %v277
    %v664 = vunpack.c.l.b16 %v278
    %v665 = vunpack.c.h.b16 %v278
    %v666 = vunpack.c.l.b16 %v279
    %v667 = vunpack.c.h.b16 %v279
    %v668 = vunpack.c.l.b16 %v280
    %v669 = vunpack.c.h.b16 %v280
    %v670 = vunpack.c.l.b16 %v281
    %v671 = vunpack.c.h.b16 %v281
    %v672 = vunpack.c.l.b16 %v282
    %v673 = vunpack.c.h.b16 %v282
    %v674 = vunpack.c.l.b16 %v283
    %v675 = vunpack.c.h.b16 %v283
    %v676 = vunpack.c.l.b16 %v284
    %v677 = vunpack.c.h.b16 %v284
    %v678 = vunpack.c.l.b16 %v285
    %v679 = vunpack.c.h.b16 %v285
    %v680 = vunpack.c.l.b16 %v286
    %v681 = vunpack.c.h.b16 %v286
    %v682 = vunpack.c.l.b16 %v287
    %v683 = vunpack.c.h.b16 %v287
    %v684 = vunpack.c.l.b16 %v288
    %v685 = vunpack.c.h.b16 %v288
    %v686 = vunpack.c.l.b16 %v289
    %v687 = vunpack.c.h.b16 %v289
    %v688 = vunpack.c.l.b16 %v290
    %v689 = vunpack.c.h.b16 %v290
    %v690 = vunpack.c.l.b16 %v291
    %v691 = vunpack.c.h.b16 %v291
    %v692 = vunpack.c.l.b16 %v292
    %v693 = vunpack.c.h.b16 %v292
    %v694 = vunpack.c.l.b16 %v293
    %v695 = vunpack.c.h.b16 %v293
    %v696 = vunpack.c.l.b16 %v294
    %v697 = vunpack.c.h.b16 %v294
    %v698 = vunpack.c.l.b16 %v295
    %v699 = vunpack.c.h.b16 %v295
    %v700 = vunpack.c.l.b16 %v296
    %v701 = vunpack.c.h.b16 %v296
    %v702 = vunpack.c.l.b16 %v297
    %v703 = vunpack.c.h.b16 %v297
    %v704 = vunpack.c.l.b16 %v298
    %v705 = vunpack.c.h.b16 %v298
    %v706 = vunpack.c.l.b16 %v299
    %v707 = vunpack.c.h.b16 %v299
    %v708 = vunpack.c.l.b16 %v300
    %v709 = vunpack.c.h.b16 %v300
    %v710 = vunpack.c.l.b16 %v301
    %v711 = vunpack.c.h.b16 %v301
    %v712 = vunpack.c.l.b16 %v302
    %v713 = vunpack.c.h.b16 %v302
    %v714 = vunpack.c.l.b16 %v303
    %v715 = vunpack.c.h.b16 %v303
    %v716 = vunpack.c.l.b16 %v304
    %v717 = vunpack.c.h.b16 %v304
    %v718 = vunpack.c.l.b16 %v305
    %v719 = vunpack.c.h.b16 %v305
    %v720 = vunpack.c.l.b16 %v306
    %v721 = vunpack.c.h.b16 %v306
    %v722 = vunpack.c.l.b16 %v307
    %v723 = vunpack.c.h.b16 %v307
    %v724 = vunpack.c.l.b16 %v308
    %v725 = vunpack.c.h.b16 %v308
    %v726 = vunpack.c.l.b16 %v309
    %v727 = vunpack.c.h.b16 %v309
    %v728 = vunpack.c.l.b16 %v310
    %v729 = vunpack.c.h.b16 %v310
    %v730 = vunpack.c.l.b16 %v311
    %v731 = vunpack.c.h.b16 %v311
    %v732 = vunpack.c.l.b16 %v312
    %v733 = vunpack.c.h.b16 %v312
    %v734 = vunpack.c.l.b16 %v313
    %v735 = vunpack.c.h.b16 %v313
    %v736 = vunpack.c.l.b16 %v314
    %v737 = vunpack.c.h.b16 %v314
    %v738 = vunpack.c.l.b16 %v315
    %v739 = vunpack.c.h.b16 %v315
    %v740 = vunpack.c.l.b16 %v316
    %v741 = vunpack.c.h.b16 %v316
    %v742 = vpack.c.b16 %v494, %v486
    %v743 = vpack.c.b16 %v495, %v487
    %v744 = vpack.c.b16 %v496, %v488
    %v745 = vpack.c.b16 %v497, %v489
    %v746 = vpack.c.b16 %v498, %v490
    %v747 = vpack.c.b16 %v499, %v491
    %v748 = vpack.c.b16 %v500, %v492
    %v749 = vpack.c.b16 %v501, %v493
    %v750 = vpack.c.b16 %v510, %v502
    %v751 = vpack.c.b16 %v511, %v503
    %v752 = vpack.c.b16 %v512, %v504
    %v753 = vpack.c.b16 %v513, %v505
    %v754 = vpack.c.b16 %v514, %v506
    %v755 = vpack.c.b16 %v515, %v507
    %v756 = vpack.c.b16 %v516, %v508
    %v757 = vpack.c.b16 %v517, %v509
    %v758 = vpack.c.b16 %v526, %v518
    %v759 = vpack.c.b16 %v527, %v519
    %v760 = vpack.c.b16 %v528, %v520
    %v761 = vpack.c.b16 %v529, %v521
    %v762 = vpack.c.b16 %v530, %v522
    %v763 = vpack.c.b16 %v531, %v523
    %v764 = vpack.c.b16 %v532, %v524
    %v765 = vpack.c.b16 %v533, %v525
    %v766 = vpack.c.b16 %v542, %v534
    %v767 = vpack.c.b16 %v543, %v535
    %v768 = vpack.c.b16 %v544, %v536
    %v769 = vpack.c.b16 %v545, %v537
    %v770 = vpack.c.b16 %v546, %v538
    %v771 = vpack.c.b16 %v547, %v539
    %v772 = vpack.c.b16 %v548, %v540
    %v773 = vpack.c.b16 %v549, %v541
    %v774 = vpack.c.b16 %v558, %v550
    %v775 = vpack.c.b16 %v559, %v551
    %v776 = vpack.c.b16 %v560, %v552
    %v777 = vpack.c.b16 %v561, %v553
    %v778 = vpack.c.b16 %v562, %v554
    %v779 = vpack.c.b16 %v563, %v555
    %v780 = vpack.c.b16 %v564, %v556
    %v781 = vpack.c.b16 %v565, %v557
    %v782 = vpack.c.b16 %v574, %v566
    %v783 = vpack.c.b16 %v575, %v567
    %v784 = vpack.c.b16 %v576, %v568
    %v785 = vpack.c.b16 %v577, %v569
    %v786 = vpack.c.b16 %v578, %v570
    %v787 = vpack.c.b16 %v579, %v571
    %v788 = vpack.c.b16 %v580, %v572
    %v789 = vpack.c.b16 %v581, %v573
    %v790 = vpack.c.b16 %v590, %v582
    %v791 = vpack.c.b16 %v591, %v583
    %v792 = vpack.c.b16 %v592, %v584
    %v793 = vpack.c.b16 %v593, %v585
    %v794 = vpack.c.b16 %v594, %v586
    %v795 = vpack.c.b16 %v595, %v587
    %v796 = vpack.c.b16 %v596, %v588
    %v797 = vpack.c.b16 %v597, %v589
    %v798 = vpack.c.b16 %v606, %v598
    %v799 = vpack.c.b16 %v607, %v599
    %v800 = vpack.c.b16 %v608, %v600
    %v801 = vpack.c.b16 %v609, %v601
    %v802 = vpack.c.b16 %v610, %v602
    %v803 = vpack.c.b16 %v611, %v603
    %v804 = vpack.c.b16 %v612, %v604
    %v805 = vpack.c.b16 %v613, %v605
    %v806 = vpack.c.b16 %v622, %v614
    %v807 = vpack.c.b16 %v623, %v615
    %v808 = vpack.c.b16 %v624, %v616
    %v809 = vpack.c.b16 %v625, %v617
    %v810 = vpack.c.b16 %v626, %v618
    %v811 = vpack.c.b16 %v627, %v619
    %v812 = vpack.c.b16 %v628, %v620
    %v813 = vpack.c.b16 %v629, %v621
    %v814 = vpack.c.b16 %v638, %v630
    %v815 = vpack.c.b16 %v639, %v631
    %v816 = vpack.c.b16 %v640, %v632
    %v817 = vpack.c.b16 %v641, %v633
    %v818 = vpack.c.b16 %v642, %v634
    %v819 = vpack.c.b16 %v643, %v635
    %v820 = vpack.c.b16 %v644, %v636
    %v821 = vpack.c.b16 %v645, %v637
    %v822 = vpack.c.b16 %v654, %v646
    %v823 = vpack.c.b16 %v655, %v647
    %v824 = vpack.c.b16 %v656, %v648
    %v825 = vpack.c.b16 %v657, %v649
    %v826 = vpack.c.b16 %v658, %v650
    %v827 = vpack.c.b16 %v659, %v651
    %v828 = vpack.c.b16 %v660, %v652
    %v829 = vpack.c.b16 %v661, %v653
    %v830 = vpack.c.b16 %v670, %v662
    %v831 = vpack.c.b16 %v671, %v663
    %v832 = vpack.c.b16 %v672, %v664
    %v833 = vpack.c.b16 %v673, %v665
    %v834 = vpack.c.b16 %v674, %v666
    %v835 = vpack.c.b16 %v675, %v667
    %v836 = vpack.c.b16 %v676, %v668
    %v837 = vpack.c.b16 %v677, %v669
    %v838 = vpack.c.b16 %v686, %v678
    %v839 = vpack.c.b16 %v687, %v679
    %v840 = vpack.c.b16 %v688, %v680
    %v841 = vpack.c.b16 %v689, %v681
    %v842 = vpack.c.b16 %v690, %v682
    %v843 = vpack.c.b16 %v691, %v683
    %v844 = vpack.c.b16 %v692, %v684
    %v845 = vpack.c.b16 %v693, %v685
    %v846 = vpack.c.b16 %v702, %v694
    %v847 = vpack.c.b16 %v703, %v695
    %v848 = vpack.c.b16 %v704, %v696
    %v849 = vpack.c.b16 %v705, %v697
    %v850 = vpack.c.b16 %v706, %v698
    %v851 = vpack.c.b16 %v707, %v699
    %v852 = vpack.c.b16 %v708, %v700
    %v853 = vpack.c.b16 %v709, %v701
    %v854 = vpack.c.b16 %v718, %v710
    %v855 = vpack.c.b16 %v719, %v711
    %v856 = vpack.c.b16 %v720, %v712
    %v857 = vpack.c.b16 %v721, %v713
    %v858 = vpack.c.b16 %v722, %v714
    %v859 = vpack.c.b16 %v723, %v715
    %v860 = vpack.c.b16 %v724, %v716
    %v861 = vpack.c.b16 %v725, %v717
    %v862 = vpack.c.b16 %v734, %v726
    %v863 = vpack.c.b16 %v735, %v727
    %v864 = vpack.c.b16 %v736, %v728
    %v865 = vpack.c.b16 %v737, %v729
    %v866 = vpack.c.b16 %v738, %v730
    %v867 = vpack.c.b16 %v739, %v731
    %v868 = vpack.c.b16 %v740, %v732
    %v869 = vpack.c.b16 %v741, %v733
    %998 = vmatprep.subr.bf16.mxu0 %v743
    %999 = vmatpush1.bf16.msra.mxu0 %v742
    %1000 = vmatprep.subr.bf16.mxu0 %v751
    %1001 = vmatpush1.bf16.msra.mxu0 %v750
    %1002 = vmatprep.subr.bf16.mxu0 %v759
    %1003 = vmatpush1.bf16.msra.mxu0 %v758
    %1004 = vmatprep.subr.bf16.mxu0 %v767
    %1005 = vmatpush1.bf16.msra.mxu0 %v766
    %1006 = vmatprep.subr.bf16.mxu0 %v775
    %1007 = vmatpush1.bf16.msra.mxu0 %v774
    %1008 = vmatprep.subr.bf16.mxu0 %v783
    %1009 = vmatpush1.bf16.msra.mxu0 %v782
    %1010 = vmatprep.subr.bf16.mxu0 %v791
    %1011 = vmatpush1.bf16.msra.mxu0 %v790
    %1012 = vmatprep.subr.bf16.mxu0 %v799
    %1013 = vmatpush1.bf16.msra.mxu0 %v798
    %1014 = vmatprep.subr.bf16.mxu0 %v807
    %1015 = vmatpush1.bf16.msra.mxu0 %v806
    %1016 = vmatprep.subr.bf16.mxu0 %v815
    %1017 = vmatpush1.bf16.msra.mxu0 %v814
    %1018 = vmatprep.subr.bf16.mxu0 %v823
    %1019 = vmatpush1.bf16.msra.mxu0 %v822
    %1020 = vmatprep.subr.bf16.mxu0 %v831
    %1021 = vmatpush1.bf16.msra.mxu0 %v830
    %1022 = vmatprep.subr.bf16.mxu0 %v839
    %1023 = vmatpush1.bf16.msra.mxu0 %v838
    %1024 = vmatprep.subr.bf16.mxu0 %v847
    %1025 = vmatpush1.bf16.msra.mxu0 %v846
    %1026 = vmatprep.subr.bf16.mxu0 %v855
    %1027 = vmatpush1.bf16.msra.mxu0 %v854
    %1028 = vmatprep.subr.bf16.mxu0 %v863
    %1029 = vmatpush1.bf16.msra.mxu0 %v862
    %1030 = vmatprep.mubr.bf16.mxu0 %v176
    %1031 = vmatmul.mubr.bf16.gmra.mrb[0].mxu0 %v175
    %v1032 = vpop.f32.mrb[0].mxu0
    %v1033 = vadd.f32 %v321, %v1032
    %v1034 = vpop.f32.mrb[0].mxu0
    %v1035 = vadd.f32 %v325, %v1034
    %v1036 = vpop.f32.mrb[0].mxu0
    %v1037 = vadd.f32 %v321, %v1036
    %v1038 = vpop.f32.mrb[0].mxu0
    %v1039 = vadd.f32 %v325, %v1038
    %1040 = vmatprep.mubr.bf16.mxu0 %v178
    %1041 = vmatmul.mubr.bf16.gmra.mrb[0].mxu0 %v177
    %v1042 = vpop.f32.mrb[0].mxu0
    %v1043 = vadd.f32 %v321, %v1042
    %v1044 = vpop.f32.mrb[0].mxu0
    %v1045 = vadd.f32 %v325, %v1044
    %v1046 = vpop.f32.mrb[0].mxu0
    %v1047 = vadd.f32 %v321, %v1046
    %v1048 = vpop.f32.mrb[0].mxu0
    %v1049 = vadd.f32 %v325, %v1048
    %1050 = vmatprep.mubr.bf16.mxu0 %v180
    %1051 = vmatmul.mubr.bf16.gmra.mrb[0].mxu0 %v179
    %v1052 = vpop.f32.mrb[0].mxu0
    %v1053 = vadd.f32 %v321, %v1052
    %v1054 = vpop.f32.mrb[0].mxu0
    %v1055 = vadd.f32 %v325, %v1054
    %v1056 = vpop.f32.mrb[0].mxu0
    %v1057 = vadd.f32 %v321, %v1056
    %v1058 = vpop.f32.mrb[0].mxu0
    %v1059 = vadd.f32 %v325, %v1058
    %1060 = vmatprep.mubr.bf16.mxu0 %v182
    %1061 = vmatmul.mubr.bf16.gmra.mrb[0].mxu0 %v181
    %v1062 = vpop.f32.mrb[0].mxu0
    %v1063 = vadd.f32 %v321, %v1062
    %v1064 = vpop.f32.mrb[0].mxu0
    %v1065 = vadd.f32 %v325, %v1064
    %v1066 = vpop.f32.mrb[0].mxu0
    %v1067 = vadd.f32 %v321, %v1066
    %v1068 = vpop.f32.mrb[0].mxu0
    %v1069 = vadd.f32 %v325, %v1068
    %1070 = vmatprep.mubr.bf16.mxu0 %v184
    %1071 = vmatmul.mubr.bf16.gmra.mrb[0].mxu0 %v183
    %v1072 = vpop.f32.mrb[0].mxu0
    %v1073 = vadd.f32 %v321, %v1072
    %v1074 = vpop.f32.mrb[0].mxu0
    %v1075 = vadd.f32 %v325, %v1074
    %v1076 = vpop.f32.mrb[0].mxu0
    %v1077 = vadd.f32 %v321, %v1076
    %v1078 = vpop.f32.mrb[0].mxu0
    %v1079 = vadd.f32 %v325, %v1078
    %1080 = vmatprep.mubr.bf16.mxu0 %v186
    %1081 = vmatmul.mubr.bf16.gmra.mrb[0].mxu0 %v185
    %v1082 = vpop.f32.mrb[0].mxu0
    %v1083 = vadd.f32 %v321, %v1082
    %v1084 = vpop.f32.mrb[0].mxu0
    %v1085 = vadd.f32 %v325, %v1084
    %v1086 = vpop.f32.mrb[0].mxu0
    %v1087 = vadd.f32 %v321, %v1086
    %v1088 = vpop.f32.mrb[0].mxu0
    %v1089 = vadd.f32 %v325, %v1088
    %1090 = vmatprep.mubr.bf16.mxu0 %v188
    %1091 = vmatmul.mubr.bf16.gmra.mrb[0].mxu0 %v187
    %v1092 = vpop.f32.mrb[0].mxu0
    %v1093 = vadd.f32 %v321, %v1092
    %v1094 = vpop.f32.mrb[0].mxu0
    %v1095 = vadd.f32 %v325, %v1094
    %v1096 = vpop.f32.mrb[0].mxu0
    %v1097 = vpop.f32.mrb[0].mxu0
    %1098 = vdwg.mxu0
    %1099 = vmatprep.subr.bf16.mxu0 %v745
    %1100 = vmatpush1.bf16.msra.mxu0 %v744
    %1101 = vmatprep.subr.bf16.mxu0 %v753
    %1102 = vmatpush1.bf16.msra.mxu0 %v752
    %1103 = vmatprep.subr.bf16.mxu0 %v761
    %1104 = vmatpush1.bf16.msra.mxu0 %v760
    %1105 = vmatprep.subr.bf16.mxu0 %v769
    %1106 = vmatpush1.bf16.msra.mxu0 %v768
    %1107 = vmatprep.subr.bf16.mxu0 %v777
    %1108 = vmatpush1.bf16.msra.mxu0 %v776
    %1109 = vmatprep.subr.bf16.mxu0 %v785
    %1110 = vmatpush1.bf16.msra.mxu0 %v784
    %1111 = vmatprep.subr.bf16.mxu0 %v793
    %1112 = vmatpush1.bf16.msra.mxu0 %v792
    %1113 = vmatprep.subr.bf16.mxu0 %v801
    %1114 = vmatpush1.bf16.msra.mxu0 %v800
    %1115 = vmatprep.subr.bf16.mxu0 %v809
    %1116 = vmatpush1.bf16.msra.mxu0 %v808
    %1117 = vmatprep.subr.bf16.mxu0 %v817
    %1118 = vmatpush1.bf16.msra.mxu0 %v816
    %1119 = vmatprep.subr.bf16.mxu0 %v825
    %1120 = vmatpush1.bf16.msra.mxu0 %v824
    %1121 = vmatprep.subr.bf16.mxu0 %v833
    %1122 = vmatpush1.bf16.msra.mxu0 %v832
    %1123 = vmatprep.subr.bf16.mxu0 %v841
    %1124 = vmatpush1.bf16.msra.mxu0 %v840
    %1125 = vmatprep.subr.bf16.mxu0 %v849
    %1126 = vmatpush1.bf16.msra.mxu0 %v848
    %1127 = vmatprep.subr.bf16.mxu0 %v857
    %1128 = vmatpush1.bf16.msra.mxu0 %v856
    %1129 = vmatprep.subr.bf16.mxu0 %v865
    %1130 = vmatpush1.bf16.msra.mxu0 %v864
    %1131 = vmatprep.mubr.bf16.mxu0 %v176
    %1132 = vmatmul.mubr.bf16.gmra.mrb[0].mxu0 %v175
    %v1133 = vpop.f32.mrb[0].mxu0
    %v1134 = vadd.f32 %v329, %v1133
    %v1135 = vpop.f32.mrb[0].mxu0
    %v1136 = vadd.f32 %v333, %v1135
    %v1137 = vpop.f32.mrb[0].mxu0
    %v1138 = vadd.f32 %v329, %v1137
    %v1139 = vpop.f32.mrb[0].mxu0
    %v1140 = vadd.f32 %v333, %v1139
    %1141 = vmatprep.mubr.bf16.mxu0 %v178
    %1142 = vmatmul.mubr.bf16.gmra.mrb[0].mxu0 %v177
    %v1143 = vpop.f32.mrb[0].mxu0
    %v1144 = vadd.f32 %v329, %v1143
    %v1145 = vpop.f32.mrb[0].mxu0
    %v1146 = vadd.f32 %v333, %v1145
    %v1147 = vpop.f32.mrb[0].mxu0
    %v1148 = vadd.f32 %v329, %v1147
    %v1149 = vpop.f32.mrb[0].mxu0
    %v1150 = vadd.f32 %v333, %v1149
    %1151 = vmatprep.mubr.bf16.mxu0 %v180
    %1152 = vmatmul.mubr.bf16.gmra.mrb[0].mxu0 %v179
    %v1153 = vpop.f32.mrb[0].mxu0
    %v1154 = vadd.f32 %v329, %v1153
    %v1155 = vpop.f32.mrb[0].mxu0
    %v1156 = vadd.f32 %v333, %v1155
    %v1157 = vpop.f32.mrb[0].mxu0
    %v1158 = vadd.f32 %v329, %v1157
    %v1159 = vpop.f32.mrb[0].mxu0
    %v1160 = vadd.f32 %v333, %v1159
    %1161 = vmatprep.mubr.bf16.mxu0 %v182
    %1162 = vmatmul.mubr.bf16.gmra.mrb[0].mxu0 %v181
    %v1163 = vpop.f32.mrb[0].mxu0
    %v1164 = vadd.f32 %v329, %v1163
    %v1165 = vpop.f32.mrb[0].mxu0
    %v1166 = vadd.f32 %v333, %v1165
    %v1167 = vpop.f32.mrb[0].mxu0
    %v1168 = vadd.f32 %v329, %v1167
    %v1169 = vpop.f32.mrb[0].mxu0
    %v1170 = vadd.f32 %v333, %v1169
    %1171 = vmatprep.mubr.bf16.mxu0 %v184
    %1172 = vmatmul.mubr.bf16.gmra.mrb[0].mxu0 %v183
    %v1173 = vpop.f32.mrb[0].mxu0
    %v1174 = vadd.f32 %v329, %v1173
    %v1175 = vpop.f32.mrb[0].mxu0
    %v1176 = vadd.f32 %v333, %v1175
    %v1177 = vpop.f32.mrb[0].mxu0
    %v1178 = vadd.f32 %v329, %v1177
    %v1179 = vpop.f32.mrb[0].mxu0
    %v1180 = vadd.f32 %v333, %v1179
    %1181 = vmatprep.mubr.bf16.mxu0 %v186
    %1182 = vmatmul.mubr.bf16.gmra.mrb[0].mxu0 %v185
    %v1183 = vpop.f32.mrb[0].mxu0
    %v1184 = vadd.f32 %v329, %v1183
    %v1185 = vpop.f32.mrb[0].mxu0
    %v1186 = vadd.f32 %v333, %v1185
    %v1187 = vpop.f32.mrb[0].mxu0
    %v1188 = vadd.f32 %v329, %v1187
    %v1189 = vpop.f32.mrb[0].mxu0
    %v1190 = vadd.f32 %v333, %v1189
    %1191 = vmatprep.mubr.bf16.mxu0 %v188
    %1192 = vmatmul.mubr.bf16.gmra.mrb[0].mxu0 %v187
    %v1193 = vpop.f32.mrb[0].mxu0
    %v1194 = vadd.f32 %v329, %v1193
    %v1195 = vpop.f32.mrb[0].mxu0
    %v1196 = vadd.f32 %v333, %v1195
    %v1197 = vpop.f32.mrb[0].mxu0
    %v1198 = vpop.f32.mrb[0].mxu0
    %1199 = vdwg.mxu0
    %1200 = vmatprep.subr.bf16.mxu0 %v747
    %1201 = vmatpush1.bf16.msra.mxu0 %v746
    %1202 = vmatprep.subr.bf16.mxu0 %v755
    %1203 = vmatpush1.bf16.msra.mxu0 %v754
    %1204 = vmatprep.subr.bf16.mxu0 %v763
    %1205 = vmatpush1.bf16.msra.mxu0 %v762
    %1206 = vmatprep.subr.bf16.mxu0 %v771
    %1207 = vmatpush1.bf16.msra.mxu0 %v770
    %1208 = vmatprep.subr.bf16.mxu0 %v779
    %1209 = vmatpush1.bf16.msra.mxu0 %v778
    %1210 = vmatprep.subr.bf16.mxu0 %v787
    %1211 = vmatpush1.bf16.msra.mxu0 %v786
    %1212 = vmatprep.subr.bf16.mxu0 %v795
    %1213 = vmatpush1.bf16.msra.mxu0 %v794
    %1214 = vmatprep.subr.bf16.mxu0 %v803
    %1215 = vmatpush1.bf16.msra.mxu0 %v802
    %1216 = vmatprep.subr.bf16.mxu0 %v811
    %1217 = vmatpush1.bf16.msra.mxu0 %v810
    %1218 = vmatprep.subr.bf16.mxu0 %v819
    %1219 = vmatpush1.bf16.msra.mxu0 %v818
    %1220 = vmatprep.subr.bf16.mxu0 %v827
    %1221 = vmatpush1.bf16.msra.mxu0 %v826
    %1222 = vmatprep.subr.bf16.mxu0 %v835
    %1223 = vmatpush1.bf16.msra.mxu0 %v834
    %1224 = vmatprep.subr.bf16.mxu0 %v843
    %1225 = vmatpush1.bf16.msra.mxu0 %v842
    %1226 = vmatprep.subr.bf16.mxu0 %v851
    %1227 = vmatpush1.bf16.msra.mxu0 %v850
    %1228 = vmatprep.subr.bf16.mxu0 %v859
    %1229 = vmatpush1.bf16.msra.mxu0 %v858
    %1230 = vmatprep.subr.bf16.mxu0 %v867
    %1231 = vmatpush1.bf16.msra.mxu0 %v866
    %1232 = vmatprep.mubr.bf16.mxu0 %v176
    %1233 = vmatmul.mubr.bf16.gmra.mrb[0].mxu0 %v175
    %v1234 = vpop.f32.mrb[0].mxu0
    %v1235 = vadd.f32 %v337, %v1234
    %v1236 = vpop.f32.mrb[0].mxu0
    %v1237 = vadd.f32 %v341, %v1236
    %v1238 = vpop.f32.mrb[0].mxu0
    %v1239 = vadd.f32 %v337, %v1238
    %v1240 = vpop.f32.mrb[0].mxu0
    %v1241 = vadd.f32 %v341, %v1240
    %1242 = vmatprep.mubr.bf16.mxu0 %v178
    %1243 = vmatmul.mubr.bf16.gmra.mrb[0].mxu0 %v177
    %v1244 = vpop.f32.mrb[0].mxu0
    %v1245 = vadd.f32 %v337, %v1244
    %v1246 = vpop.f32.mrb[0].mxu0
    %v1247 = vadd.f32 %v341, %v1246
    %v1248 = vpop.f32.mrb[0].mxu0
    %v1249 = vadd.f32 %v337, %v1248
    %v1250 = vpop.f32.mrb[0].mxu0
    %v1251 = vadd.f32 %v341, %v1250
    %1252 = vmatprep.mubr.bf16.mxu0 %v180
    %1253 = vmatmul.mubr.bf16.gmra.mrb[0].mxu0 %v179
    %v1254 = vpop.f32.mrb[0].mxu0
    %v1255 = vadd.f32 %v337, %v1254
    %v1256 = vpop.f32.mrb[0].mxu0
    %v1257 = vadd.f32 %v341, %v1256
    %v1258 = vpop.f32.mrb[0].mxu0
    %v1259 = vadd.f32 %v337, %v1258
    %v1260 = vpop.f32.mrb[0].mxu0
    %v1261 = vadd.f32 %v341, %v1260
    %1262 = vmatprep.mubr.bf16.mxu0 %v182
    %1263 = vmatmul.mubr.bf16.gmra.mrb[0].mxu0 %v181
    %v1264 = vpop.f32.mrb[0].mxu0
    %v1265 = vadd.f32 %v337, %v1264
    %v1266 = vpop.f32.mrb[0].mxu0
    %v1267 = vadd.f32 %v341, %v1266
    %v1268 = vpop.f32.mrb[0].mxu0
    %v1269 = vadd.f32 %v337, %v1268
    %v1270 = vpop.f32.mrb[0].mxu0
    %v1271 = vadd.f32 %v341, %v1270
    %1272 = vmatprep.mubr.bf16.mxu0 %v184
    %1273 = vmatmul.mubr.bf16.gmra.mrb[0].mxu0 %v183
    %v1274 = vpop.f32.mrb[0].mxu0
    %v1275 = vadd.f32 %v337, %v1274
    %v1276 = vpop.f32.mrb[0].mxu0
    %v1277 = vadd.f32 %v341, %v1276
    %v1278 = vpop.f32.mrb[0].mxu0
    %v1279 = vadd.f32 %v337, %v1278
    %v1280 = vpop.f32.mrb[0].mxu0
    %v1281 = vadd.f32 %v341, %v1280
    %1282 = vmatprep.mubr.bf16.mxu0 %v186
    %1283 = vmatmul.mubr.bf16.gmra.mrb[0].mxu0 %v185
    %v1284 = vpop.f32.mrb[0].mxu0
    %v1285 = vadd.f32 %v337, %v1284
    %v1286 = vpop.f32.mrb[0].mxu0
    %v1287 = vadd.f32 %v341, %v1286
    %v1288 = vpop.f32.mrb[0].mxu0
    %v1289 = vadd.f32 %v337, %v1288
    %v1290 = vpop.f32.mrb[0].mxu0
    %v1291 = vadd.f32 %v341, %v1290
    %1292 = vmatprep.mubr.bf16.mxu0 %v188
    %1293 = vmatmul.mubr.bf16.gmra.mrb[0].mxu0 %v187
    %v1294 = vpop.f32.mrb[0].mxu0
    %v1295 = vadd.f32 %v337, %v1294
    %v1296 = vpop.f32.mrb[0].mxu0
    %v1297 = vadd.f32 %v341, %v1296
    %v1298 = vpop.f32.mrb[0].mxu0
    %v1299 = vpop.f32.mrb[0].mxu0
    %1300 = vdwg.mxu0
    %1301 = vmatprep.subr.bf16.mxu0 %v749
    %1302 = vmatpush1.bf16.msra.mxu0 %v748
    %1303 = vmatprep.subr.bf16.mxu0 %v757
    %1304 = vmatpush1.bf16.msra.mxu0 %v756
    %1305 = vmatprep.subr.bf16.mxu0 %v765
    %1306 = vmatpush1.bf16.msra.mxu0 %v764
    %1307 = vmatprep.subr.bf16.mxu0 %v773
    %1308 = vmatpush1.bf16.msra.mxu0 %v772
    %1309 = vmatprep.subr.bf16.mxu0 %v781
    %1310 = vmatpush1.bf16.msra.mxu0 %v780
    %1311 = vmatprep.subr.bf16.mxu0 %v789
    %1312 = vmatpush1.bf16.msra.mxu0 %v788
    %1313 = vmatprep.subr.bf16.mxu0 %v797
    %1314 = vmatpush1.bf16.msra.mxu0 %v796
    %1315 = vmatprep.subr.bf16.mxu0 %v805
    %1316 = vmatpush1.bf16.msra.mxu0 %v804
    %1317 = vmatprep.subr.bf16.mxu0 %v813
    %1318 = vmatpush1.bf16.msra.mxu0 %v812
    %1319 = vmatprep.subr.bf16.mxu0 %v821
    %1320 = vmatpush1.bf16.msra.mxu0 %v820
    %1321 = vmatprep.subr.bf16.mxu0 %v829
    %1322 = vmatpush1.bf16.msra.mxu0 %v828
    %1323 = vmatprep.subr.bf16.mxu0 %v837
    %1324 = vmatpush1.bf16.msra.mxu0 %v836
    %1325 = vmatprep.subr.bf16.mxu0 %v845
    %1326 = vmatpush1.bf16.msra.mxu0 %v844
    %1327 = vmatprep.subr.bf16.mxu0 %v853
    %1328 = vmatpush1.bf16.msra.mxu0 %v852
    %1329 = vmatprep.subr.bf16.mxu0 %v861
    %1330 = vmatpush1.bf16.msra.mxu0 %v860
    %1331 = vmatprep.subr.bf16.mxu0 %v869
    %1332 = vmatpush1.bf16.msra.mxu0 %v868
    %1333 = vmatprep.mubr.bf16.mxu0 %v176
    %1334 = vmatmul.mubr.bf16.gmra.mrb[0].mxu0 %v175
    %v1335 = vpop.f32.mrb[0].mxu0
    %v1336 = vadd.f32 %v345, %v1335
    %v1337 = vpop.f32.mrb[0].mxu0
    %v1338 = vadd.f32 %v349, %v1337
    %v1339 = vpop.f32.mrb[0].mxu0
    %v1340 = vadd.f32 %v345, %v1339
    %v1341 = vpop.f32.mrb[0].mxu0
    %v1342 = vadd.f32 %v349, %v1341
    %1343 = vmatprep.mubr.bf16.mxu0 %v178
    %1344 = vmatmul.mubr.bf16.gmra.mrb[0].mxu0 %v177
    %v1345 = vpop.f32.mrb[0].mxu0
    %v1346 = vadd.f32 %v345, %v1345
    %v1347 = vpop.f32.mrb[0].mxu0
    %v1348 = vadd.f32 %v349, %v1347
    %v1349 = vpop.f32.mrb[0].mxu0
    %v1350 = vadd.f32 %v345, %v1349
    %v1351 = vpop.f32.mrb[0].mxu0
    %v1352 = vadd.f32 %v349, %v1351
    %1353 = vmatprep.mubr.bf16.mxu0 %v180
    %1354 = vmatmul.mubr.bf16.gmra.mrb[0].mxu0 %v179
    %v1355 = vpop.f32.mrb[0].mxu0
    %v1356 = vadd.f32 %v345, %v1355
    %v1357 = vpop.f32.mrb[0].mxu0
    %v1358 = vadd.f32 %v349, %v1357
    %v1359 = vpop.f32.mrb[0].mxu0
    %v1360 = vadd.f32 %v345, %v1359
    %v1361 = vpop.f32.mrb[0].mxu0
    %v1362 = vadd.f32 %v349, %v1361
    %1363 = vmatprep.mubr.bf16.mxu0 %v182
    %1364 = vmatmul.mubr.bf16.gmra.mrb[0].mxu0 %v181
    %v1365 = vpop.f32.mrb[0].mxu0
    %v1366 = vadd.f32 %v345, %v1365
    %v1367 = vpop.f32.mrb[0].mxu0
    %v1368 = vadd.f32 %v349, %v1367
    %v1369 = vpop.f32.mrb[0].mxu0
    %v1370 = vadd.f32 %v345, %v1369
    %v1371 = vpop.f32.mrb[0].mxu0
    %v1372 = vadd.f32 %v349, %v1371
    %1373 = vmatprep.mubr.bf16.mxu0 %v184
    %1374 = vmatmul.mubr.bf16.gmra.mrb[0].mxu0 %v183
    %v1375 = vpop.f32.mrb[0].mxu0
    %v1376 = vadd.f32 %v345, %v1375
    %v1377 = vpop.f32.mrb[0].mxu0
    %v1378 = vadd.f32 %v349, %v1377
    %v1379 = vpop.f32.mrb[0].mxu0
    %v1380 = vadd.f32 %v345, %v1379
    %v1381 = vpop.f32.mrb[0].mxu0
    %v1382 = vadd.f32 %v349, %v1381
    %1383 = vmatprep.mubr.bf16.mxu0 %v186
    %1384 = vmatmul.mubr.bf16.gmra.mrb[0].mxu0 %v185
    %v1385 = vpop.f32.mrb[0].mxu0
    %v1386 = vadd.f32 %v345, %v1385
    %v1387 = vpop.f32.mrb[0].mxu0
    %v1388 = vadd.f32 %v349, %v1387
    %v1389 = vpop.f32.mrb[0].mxu0
    %v1390 = vadd.f32 %v345, %v1389
    %v1391 = vpop.f32.mrb[0].mxu0
    %v1392 = vadd.f32 %v349, %v1391
    %1393 = vmatprep.mubr.bf16.mxu0 %v188
    %1394 = vmatmul.mubr.bf16.gmra.mrb[0].mxu0 %v187
    %v1395 = vpop.f32.mrb[0].mxu0
    %v1396 = vadd.f32 %v345, %v1395
    %v1397 = vpop.f32.mrb[0].mxu0
    %v1398 = vadd.f32 %v349, %v1397
    %v1399 = vpop.f32.mrb[0].mxu0
    %v1400 = vpop.f32.mrb[0].mxu0
    %1401 = vdwg.mxu0
    %v1402 = vmax.f32 %v1033, 0.0
    %v1403 = vmax.f32 %v1035, 0.0
    %v1404 = vmax.f32 %v1134, 0.0
    %v1405 = vmax.f32 %v1136, 0.0
    %v1406 = vmax.f32 %v1235, 0.0
    %v1407 = vmax.f32 %v1237, 0.0
    %v1408 = vmax.f32 %v1336, 0.0
    %v1409 = vmax.f32 %v1338, 0.0
    %v1410 = vmax.f32 %v1037, 0.0
    %v1411 = vmax.f32 %v1039, 0.0
    %v1412 = vmax.f32 %v1138, 0.0
    %v1413 = vmax.f32 %v1140, 0.0
    %v1414 = vmax.f32 %v1239, 0.0
    %v1415 = vmax.f32 %v1241, 0.0
    %v1416 = vmax.f32 %v1340, 0.0
    %v1417 = vmax.f32 %v1342, 0.0
    %v1418 = vmax.f32 %v1043, 0.0
    %v1419 = vmax.f32 %v1045, 0.0
    %v1420 = vmax.f32 %v1144, 0.0
    %v1421 = vmax.f32 %v1146, 0.0
    %v1422 = vmax.f32 %v1245, 0.0
    %v1423 = vmax.f32 %v1247, 0.0
    %v1424 = vmax.f32 %v1346, 0.0
    %v1425 = vmax.f32 %v1348, 0.0
    %v1426 = vmax.f32 %v1047, 0.0
    %v1427 = vmax.f32 %v1049, 0.0
    %v1428 = vmax.f32 %v1148, 0.0
    %v1429 = vmax.f32 %v1150, 0.0
    %v1430 = vmax.f32 %v1249, 0.0
    %v1431 = vmax.f32 %v1251, 0.0
    %v1432 = vmax.f32 %v1350, 0.0
    %v1433 = vmax.f32 %v1352, 0.0
    %v1434 = vmax.f32 %v1053, 0.0
    %v1435 = vmax.f32 %v1055, 0.0
    %v1436 = vmax.f32 %v1154, 0.0
    %v1437 = vmax.f32 %v1156, 0.0
    %v1438 = vmax.f32 %v1255, 0.0
    %v1439 = vmax.f32 %v1257, 0.0
    %v1440 = vmax.f32 %v1356, 0.0
    %v1441 = vmax.f32 %v1358, 0.0
    %v1442 = vmax.f32 %v1057, 0.0
    %v1443 = vmax.f32 %v1059, 0.0
    %v1444 = vmax.f32 %v1158, 0.0
    %v1445 = vmax.f32 %v1160, 0.0
    %v1446 = vmax.f32 %v1259, 0.0
    %v1447 = vmax.f32 %v1261, 0.0
    %v1448 = vmax.f32 %v1360, 0.0
    %v1449 = vmax.f32 %v1362, 0.0
    %v1450 = vmax.f32 %v1063, 0.0
    %v1451 = vmax.f32 %v1065, 0.0
    %v1452 = vmax.f32 %v1164, 0.0
    %v1453 = vmax.f32 %v1166, 0.0
    %v1454 = vmax.f32 %v1265, 0.0
    %v1455 = vmax.f32 %v1267, 0.0
    %v1456 = vmax.f32 %v1366, 0.0
    %v1457 = vmax.f32 %v1368, 0.0
    %v1458 = vmax.f32 %v1067, 0.0
    %v1459 = vmax.f32 %v1069, 0.0
    %v1460 = vmax.f32 %v1168, 0.0
    %v1461 = vmax.f32 %v1170, 0.0
    %v1462 = vmax.f32 %v1269, 0.0
    %v1463 = vmax.f32 %v1271, 0.0
    %v1464 = vmax.f32 %v1370, 0.0
    %v1465 = vmax.f32 %v1372, 0.0
    %v1466 = vmax.f32 %v1073, 0.0
    %v1467 = vmax.f32 %v1075, 0.0
    %v1468 = vmax.f32 %v1174, 0.0
    %v1469 = vmax.f32 %v1176, 0.0
    %v1470 = vmax.f32 %v1275, 0.0
    %v1471 = vmax.f32 %v1277, 0.0
    %v1472 = vmax.f32 %v1376, 0.0
    %v1473 = vmax.f32 %v1378, 0.0
    %v1474 = vmax.f32 %v1077, 0.0
    %v1475 = vmax.f32 %v1079, 0.0
    %v1476 = vmax.f32 %v1178, 0.0
    %v1477 = vmax.f32 %v1180, 0.0
    %v1478 = vmax.f32 %v1279, 0.0
    %v1479 = vmax.f32 %v1281, 0.0
    %v1480 = vmax.f32 %v1380, 0.0
    %v1481 = vmax.f32 %v1382, 0.0
    %v1482 = vmax.f32 %v1083, 0.0
    %v1483 = vmax.f32 %v1085, 0.0
    %v1484 = vmax.f32 %v1184, 0.0
    %v1485 = vmax.f32 %v1186, 0.0
    %v1486 = vmax.f32 %v1285, 0.0
    %v1487 = vmax.f32 %v1287, 0.0
    %v1488 = vmax.f32 %v1386, 0.0
    %v1489 = vmax.f32 %v1388, 0.0
    %v1490 = vmax.f32 %v1087, 0.0
    %v1491 = vmax.f32 %v1089, 0.0
    %v1492 = vmax.f32 %v1188, 0.0
    %v1493 = vmax.f32 %v1190, 0.0
    %v1494 = vmax.f32 %v1289, 0.0
    %v1495 = vmax.f32 %v1291, 0.0
    %v1496 = vmax.f32 %v1390, 0.0
    %v1497 = vmax.f32 %v1392, 0.0
    %v1498 = vmax.f32 %v1093, 0.0
    %v1499 = vmax.f32 %v1095, 0.0
    %v1500 = vmax.f32 %v1194, 0.0
    %v1501 = vmax.f32 %v1196, 0.0
    %v1502 = vmax.f32 %v1295, 0.0
    %v1503 = vmax.f32 %v1297, 0.0
    %v1504 = vmax.f32 %v1396, 0.0
    %v1505 = vmax.f32 %v1398, 0.0
    %v1507 = vlaneseq
    %v1508 = vshrl.u32 %v1507, 7
    %v1509 = vsub.s32 0, %v1508
    %v1510 = vrot.slane %v172, %v1509
    %v1511 = vlaneseq
    %v1512 = vshrl.u32 %v1511, 7
    %v1513 = vsub.s32 1, %v1512
    %v1514 = vrot.slane %v172, %v1513
    %v1515 = vlaneseq
    %v1516 = vshrl.u32 %v1515, 7
    %v1517 = vsub.s32 2, %v1516
    %v1518 = vrot.slane %v172, %v1517
    %v1519 = vlaneseq
    %v1520 = vshrl.u32 %v1519, 7
    %v1521 = vsub.s32 3, %v1520
    %v1522 = vrot.slane %v172, %v1521
    %v1523 = vlaneseq
    %v1524 = vshrl.u32 %v1523, 7
    %v1525 = vsub.s32 4, %v1524
    %v1526 = vrot.slane %v172, %v1525
    %v1527 = vlaneseq
    %v1528 = vshrl.u32 %v1527, 7
    %v1529 = vsub.s32 5, %v1528
    %v1530 = vrot.slane %v172, %v1529
    %v1531 = vlaneseq
    %v1532 = vshrl.u32 %v1531, 7
    %v1533 = vsub.s32 6, %v1532
    %v1534 = vrot.slane %v172, %v1533
    %v1535 = vlaneseq
    %v1536 = vshrl.u32 %v1535, 7
    %v1537 = vsub.s32 7, %v1536
    %v1538 = vrot.slane %v172, %v1537
    %v1547 = vmul.f32 %v1402, %v1510
    %v1548 = vmul.f32 %v1403, %v1514
    %v1549 = vmul.f32 %v1404, %v1518
    %v1550 = vmul.f32 %v1405, %v1522
    %v1551 = vmul.f32 %v1406, %v1526
    %v1552 = vmul.f32 %v1407, %v1530
    %v1553 = vmul.f32 %v1408, %v1534
    %v1554 = vmul.f32 %v1409, %v1538
    %v1555 = vmul.f32 %v1410, %v1510
    %v1556 = vmul.f32 %v1411, %v1514
    %v1557 = vmul.f32 %v1412, %v1518
    %v1558 = vmul.f32 %v1413, %v1522
    %v1559 = vmul.f32 %v1414, %v1526
    %v1560 = vmul.f32 %v1415, %v1530
    %v1561 = vmul.f32 %v1416, %v1534
    %v1562 = vmul.f32 %v1417, %v1538
    %v1563 = vmul.f32 %v1418, %v1510
    %v1564 = vmul.f32 %v1419, %v1514
    %v1565 = vmul.f32 %v1420, %v1518
    %v1566 = vmul.f32 %v1421, %v1522
    %v1567 = vmul.f32 %v1422, %v1526
    %v1568 = vmul.f32 %v1423, %v1530
    %v1569 = vmul.f32 %v1424, %v1534
    %v1570 = vmul.f32 %v1425, %v1538
    %v1571 = vmul.f32 %v1426, %v1510
    %v1572 = vmul.f32 %v1427, %v1514
    %v1573 = vmul.f32 %v1428, %v1518
    %v1574 = vmul.f32 %v1429, %v1522
    %v1575 = vmul.f32 %v1430, %v1526
    %v1576 = vmul.f32 %v1431, %v1530
    %v1577 = vmul.f32 %v1432, %v1534
    %v1578 = vmul.f32 %v1433, %v1538
    %v1579 = vmul.f32 %v1434, %v1510
    %v1580 = vmul.f32 %v1435, %v1514
    %v1581 = vmul.f32 %v1436, %v1518
    %v1582 = vmul.f32 %v1437, %v1522
    %v1583 = vmul.f32 %v1438, %v1526
    %v1584 = vmul.f32 %v1439, %v1530
    %v1585 = vmul.f32 %v1440, %v1534
    %v1586 = vmul.f32 %v1441, %v1538
    %v1587 = vmul.f32 %v1442, %v1510
    %v1588 = vmul.f32 %v1443, %v1514
    %v1589 = vmul.f32 %v1444, %v1518
    %v1590 = vmul.f32 %v1445, %v1522
    %v1591 = vmul.f32 %v1446, %v1526
    %v1592 = vmul.f32 %v1447, %v1530
    %v1593 = vmul.f32 %v1448, %v1534
    %v1594 = vmul.f32 %v1449, %v1538
    %v1595 = vmul.f32 %v1450, %v1510
    %v1596 = vmul.f32 %v1451, %v1514
    %v1597 = vmul.f32 %v1452, %v1518
    %v1598 = vmul.f32 %v1453, %v1522
    %v1599 = vmul.f32 %v1454, %v1526
    %v1600 = vmul.f32 %v1455, %v1530
    %v1601 = vmul.f32 %v1456, %v1534
    %v1602 = vmul.f32 %v1457, %v1538
    %v1603 = vmul.f32 %v1458, %v1510
    %v1604 = vmul.f32 %v1459, %v1514
    %v1605 = vmul.f32 %v1460, %v1518
    %v1606 = vmul.f32 %v1461, %v1522
    %v1607 = vmul.f32 %v1462, %v1526
    %v1608 = vmul.f32 %v1463, %v1530
    %v1609 = vmul.f32 %v1464, %v1534
    %v1610 = vmul.f32 %v1465, %v1538
    %v1611 = vmul.f32 %v1466, %v1510
    %v1612 = vmul.f32 %v1467, %v1514
    %v1613 = vmul.f32 %v1468, %v1518
    %v1614 = vmul.f32 %v1469, %v1522
    %v1615 = vmul.f32 %v1470, %v1526
    %v1616 = vmul.f32 %v1471, %v1530
    %v1617 = vmul.f32 %v1472, %v1534
    %v1618 = vmul.f32 %v1473, %v1538
    %v1619 = vmul.f32 %v1474, %v1510
    %v1620 = vmul.f32 %v1475, %v1514
    %v1621 = vmul.f32 %v1476, %v1518
    %v1622 = vmul.f32 %v1477, %v1522
    %v1623 = vmul.f32 %v1478, %v1526
    %v1624 = vmul.f32 %v1479, %v1530
    %v1625 = vmul.f32 %v1480, %v1534
    %v1626 = vmul.f32 %v1481, %v1538
    %v1627 = vmul.f32 %v1482, %v1510
    %v1628 = vmul.f32 %v1483, %v1514
    %v1629 = vmul.f32 %v1484, %v1518
    %v1630 = vmul.f32 %v1485, %v1522
    %v1631 = vmul.f32 %v1486, %v1526
    %v1632 = vmul.f32 %v1487, %v1530
    %v1633 = vmul.f32 %v1488, %v1534
    %v1634 = vmul.f32 %v1489, %v1538
    %v1635 = vmul.f32 %v1490, %v1510
    %v1636 = vmul.f32 %v1491, %v1514
    %v1637 = vmul.f32 %v1492, %v1518
    %v1638 = vmul.f32 %v1493, %v1522
    %v1639 = vmul.f32 %v1494, %v1526
    %v1640 = vmul.f32 %v1495, %v1530
    %v1641 = vmul.f32 %v1496, %v1534
    %v1642 = vmul.f32 %v1497, %v1538
    %v1643 = vmul.f32 %v1498, %v1510
    %v1644 = vmul.f32 %v1499, %v1514
    %v1645 = vmul.f32 %v1500, %v1518
    %v1646 = vmul.f32 %v1501, %v1522
    %v1647 = vmul.f32 %v1502, %v1526
    %v1648 = vmul.f32 %v1503, %v1530
    %v1649 = vmul.f32 %v1504, %v1534
    %v1650 = vmul.f32 %v1505, %v1538
    %v1652 = vlaneseq
    %v1653 = vshrl.u32 %v1652, 7
    %v1654 = vsub.s32 0, %v1653
    %v1655 = vrot.slane %v174, %v1654
    %v1656 = vlaneseq
    %v1657 = vshrl.u32 %v1656, 7
    %v1658 = vsub.s32 1, %v1657
    %v1659 = vrot.slane %v174, %v1658
    %v1660 = vlaneseq
    %v1661 = vshrl.u32 %v1660, 7
    %v1662 = vsub.s32 2, %v1661
    %v1663 = vrot.slane %v174, %v1662
    %v1664 = vlaneseq
    %v1665 = vshrl.u32 %v1664, 7
    %v1666 = vsub.s32 3, %v1665
    %v1667 = vrot.slane %v174, %v1666
    %v1668 = vlaneseq
    %v1669 = vshrl.u32 %v1668, 7
    %v1670 = vsub.s32 4, %v1669
    %v1671 = vrot.slane %v174, %v1670
    %v1672 = vlaneseq
    %v1673 = vshrl.u32 %v1672, 7
    %v1674 = vsub.s32 5, %v1673
    %v1675 = vrot.slane %v174, %v1674
    %v1676 = vlaneseq
    %v1677 = vshrl.u32 %v1676, 7
    %v1678 = vsub.s32 6, %v1677
    %v1679 = vrot.slane %v174, %v1678
    %v1680 = vlaneseq
    %v1681 = vshrl.u32 %v1680, 7
    %v1682 = vsub.s32 7, %v1681
    %v1683 = vrot.slane %v174, %v1682
    %v1692 = vadd.f32 %v1547, %v1655
    %v1693 = vadd.f32 %v1548, %v1659
    %v1694 = vadd.f32 %v1549, %v1663
    %v1695 = vadd.f32 %v1550, %v1667
    %v1696 = vadd.f32 %v1551, %v1671
    %v1697 = vadd.f32 %v1552, %v1675
    %v1698 = vadd.f32 %v1553, %v1679
    %v1699 = vadd.f32 %v1554, %v1683
    %v1700 = vadd.f32 %v1555, %v1655
    %v1701 = vadd.f32 %v1556, %v1659
    %v1702 = vadd.f32 %v1557, %v1663
    %v1703 = vadd.f32 %v1558, %v1667
    %v1704 = vadd.f32 %v1559, %v1671
    %v1705 = vadd.f32 %v1560, %v1675
    %v1706 = vadd.f32 %v1561, %v1679
    %v1707 = vadd.f32 %v1562, %v1683
    %v1708 = vadd.f32 %v1563, %v1655
    %v1709 = vadd.f32 %v1564, %v1659
    %v1710 = vadd.f32 %v1565, %v1663
    %v1711 = vadd.f32 %v1566, %v1667
    %v1712 = vadd.f32 %v1567, %v1671
    %v1713 = vadd.f32 %v1568, %v1675
    %v1714 = vadd.f32 %v1569, %v1679
    %v1715 = vadd.f32 %v1570, %v1683
    %v1716 = vadd.f32 %v1571, %v1655
    %v1717 = vadd.f32 %v1572, %v1659
    %v1718 = vadd.f32 %v1573, %v1663
    %v1719 = vadd.f32 %v1574, %v1667
    %v1720 = vadd.f32 %v1575, %v1671
    %v1721 = vadd.f32 %v1576, %v1675
    %v1722 = vadd.f32 %v1577, %v1679
    %v1723 = vadd.f32 %v1578, %v1683
    %v1724 = vadd.f32 %v1579, %v1655
    %v1725 = vadd.f32 %v1580, %v1659
    %v1726 = vadd.f32 %v1581, %v1663
    %v1727 = vadd.f32 %v1582, %v1667
    %v1728 = vadd.f32 %v1583, %v1671
    %v1729 = vadd.f32 %v1584, %v1675
    %v1730 = vadd.f32 %v1585, %v1679
    %v1731 = vadd.f32 %v1586, %v1683
    %v1732 = vadd.f32 %v1587, %v1655
    %v1733 = vadd.f32 %v1588, %v1659
    %v1734 = vadd.f32 %v1589, %v1663
    %v1735 = vadd.f32 %v1590, %v1667
    %v1736 = vadd.f32 %v1591, %v1671
    %v1737 = vadd.f32 %v1592, %v1675
    %v1738 = vadd.f32 %v1593, %v1679
    %v1739 = vadd.f32 %v1594, %v1683
    %v1740 = vadd.f32 %v1595, %v1655
    %v1741 = vadd.f32 %v1596, %v1659
    %v1742 = vadd.f32 %v1597, %v1663
    %v1743 = vadd.f32 %v1598, %v1667
    %v1744 = vadd.f32 %v1599, %v1671
    %v1745 = vadd.f32 %v1600, %v1675
    %v1746 = vadd.f32 %v1601, %v1679
    %v1747 = vadd.f32 %v1602, %v1683
    %v1748 = vadd.f32 %v1603, %v1655
    %v1749 = vadd.f32 %v1604, %v1659
    %v1750 = vadd.f32 %v1605, %v1663
    %v1751 = vadd.f32 %v1606, %v1667
    %v1752 = vadd.f32 %v1607, %v1671
    %v1753 = vadd.f32 %v1608, %v1675
    %v1754 = vadd.f32 %v1609, %v1679
    %v1755 = vadd.f32 %v1610, %v1683
    %v1756 = vadd.f32 %v1611, %v1655
    %v1757 = vadd.f32 %v1612, %v1659
    %v1758 = vadd.f32 %v1613, %v1663
    %v1759 = vadd.f32 %v1614, %v1667
    %v1760 = vadd.f32 %v1615, %v1671
    %v1761 = vadd.f32 %v1616, %v1675
    %v1762 = vadd.f32 %v1617, %v1679
    %v1763 = vadd.f32 %v1618, %v1683
    %v1764 = vadd.f32 %v1619, %v1655
    %v1765 = vadd.f32 %v1620, %v1659
    %v1766 = vadd.f32 %v1621, %v1663
    %v1767 = vadd.f32 %v1622, %v1667
    %v1768 = vadd.f32 %v1623, %v1671
    %v1769 = vadd.f32 %v1624, %v1675
    %v1770 = vadd.f32 %v1625, %v1679
    %v1771 = vadd.f32 %v1626, %v1683
    %v1772 = vadd.f32 %v1627, %v1655
    %v1773 = vadd.f32 %v1628, %v1659
    %v1774 = vadd.f32 %v1629, %v1663
    %v1775 = vadd.f32 %v1630, %v1667
    %v1776 = vadd.f32 %v1631, %v1671
    %v1777 = vadd.f32 %v1632, %v1675
    %v1778 = vadd.f32 %v1633, %v1679
    %v1779 = vadd.f32 %v1634, %v1683
    %v1780 = vadd.f32 %v1635, %v1655
    %v1781 = vadd.f32 %v1636, %v1659
    %v1782 = vadd.f32 %v1637, %v1663
    %v1783 = vadd.f32 %v1638, %v1667
    %v1784 = vadd.f32 %v1639, %v1671
    %v1785 = vadd.f32 %v1640, %v1675
    %v1786 = vadd.f32 %v1641, %v1679
    %v1787 = vadd.f32 %v1642, %v1683
    %v1788 = vadd.f32 %v1643, %v1655
    %v1789 = vadd.f32 %v1644, %v1659
    %v1790 = vadd.f32 %v1645, %v1663
    %v1791 = vadd.f32 %v1646, %v1667
    %v1792 = vadd.f32 %v1647, %v1671
    %v1793 = vadd.f32 %v1648, %v1675
    %v1794 = vadd.f32 %v1649, %v1679
    %v1795 = vadd.f32 %v1650, %v1683
    %v1796 = vadd.f32 %v1692, %v1693
    %v1797 = vadd.f32 %v1796, %v1694
    %v1798 = vadd.f32 %v1797, %v1695
    %v1799 = vadd.f32 %v1798, %v1696
    %v1800 = vadd.f32 %v1799, %v1697
    %v1801 = vadd.f32 %v1800, %v1698
    %v1802 = vadd.f32 %v1801, %v1699
    %1803 = vadd.xlane.f32.xlu0 %v1802
    %v1804 = vpop.xlane.xlu0 %1803
    %v1805 = vadd.f32 %v1700, %v1701
    %v1806 = vadd.f32 %v1805, %v1702
    %v1807 = vadd.f32 %v1806, %v1703
    %v1808 = vadd.f32 %v1807, %v1704
    %v1809 = vadd.f32 %v1808, %v1705
    %v1810 = vadd.f32 %v1809, %v1706
    %v1811 = vadd.f32 %v1810, %v1707
    %1812 = vadd.xlane.f32.xlu0 %v1811
    %v1813 = vpop.xlane.xlu0 %1812
    %v1814 = vadd.f32 %v1708, %v1709
    %v1815 = vadd.f32 %v1814, %v1710
    %v1816 = vadd.f32 %v1815, %v1711
    %v1817 = vadd.f32 %v1816, %v1712
    %v1818 = vadd.f32 %v1817, %v1713
    %v1819 = vadd.f32 %v1818, %v1714
    %v1820 = vadd.f32 %v1819, %v1715
    %1821 = vadd.xlane.f32.xlu0 %v1820
    %v1822 = vpop.xlane.xlu0 %1821
    %v1823 = vadd.f32 %v1716, %v1717
    %v1824 = vadd.f32 %v1823, %v1718
    %v1825 = vadd.f32 %v1824, %v1719
    %v1826 = vadd.f32 %v1825, %v1720
    %v1827 = vadd.f32 %v1826, %v1721
    %v1828 = vadd.f32 %v1827, %v1722
    %v1829 = vadd.f32 %v1828, %v1723
    %1830 = vadd.xlane.f32.xlu0 %v1829
    %v1831 = vpop.xlane.xlu0 %1830
    %v1832 = vadd.f32 %v1724, %v1725
    %v1833 = vadd.f32 %v1832, %v1726
    %v1834 = vadd.f32 %v1833, %v1727
    %v1835 = vadd.f32 %v1834, %v1728
    %v1836 = vadd.f32 %v1835, %v1729
    %v1837 = vadd.f32 %v1836, %v1730
    %v1838 = vadd.f32 %v1837, %v1731
    %1839 = vadd.xlane.f32.xlu0 %v1838
    %v1840 = vpop.xlane.xlu0 %1839
    %v1841 = vadd.f32 %v1732, %v1733
    %v1842 = vadd.f32 %v1841, %v1734
    %v1843 = vadd.f32 %v1842, %v1735
    %v1844 = vadd.f32 %v1843, %v1736
    %v1845 = vadd.f32 %v1844, %v1737
    %v1846 = vadd.f32 %v1845, %v1738
    %v1847 = vadd.f32 %v1846, %v1739
    %1848 = vadd.xlane.f32.xlu0 %v1847
    %v1849 = vpop.xlane.xlu0 %1848
    %v1850 = vadd.f32 %v1740, %v1741
    %v1851 = vadd.f32 %v1850, %v1742
    %v1852 = vadd.f32 %v1851, %v1743
    %v1853 = vadd.f32 %v1852, %v1744
    %v1854 = vadd.f32 %v1853, %v1745
    %v1855 = vadd.f32 %v1854, %v1746
    %v1856 = vadd.f32 %v1855, %v1747
    %1857 = vadd.xlane.f32.xlu0 %v1856
    %v1858 = vpop.xlane.xlu0 %1857
    %v1859 = vadd.f32 %v1748, %v1749
    %v1860 = vadd.f32 %v1859, %v1750
    %v1861 = vadd.f32 %v1860, %v1751
    %v1862 = vadd.f32 %v1861, %v1752
    %v1863 = vadd.f32 %v1862, %v1753
    %v1864 = vadd.f32 %v1863, %v1754
    %v1865 = vadd.f32 %v1864, %v1755
    %1866 = vadd.xlane.f32.xlu0 %v1865
    %v1867 = vpop.xlane.xlu0 %1866
    %v1868 = vadd.f32 %v1756, %v1757
    %v1869 = vadd.f32 %v1868, %v1758
    %v1870 = vadd.f32 %v1869, %v1759
    %v1871 = vadd.f32 %v1870, %v1760
    %v1872 = vadd.f32 %v1871, %v1761
    %v1873 = vadd.f32 %v1872, %v1762
    %v1874 = vadd.f32 %v1873, %v1763
    %1875 = vadd.xlane.f32.xlu0 %v1874
    %v1876 = vpop.xlane.xlu0 %1875
    %v1877 = vadd.f32 %v1764, %v1765
    %v1878 = vadd.f32 %v1877, %v1766
    %v1879 = vadd.f32 %v1878, %v1767
    %v1880 = vadd.f32 %v1879, %v1768
    %v1881 = vadd.f32 %v1880, %v1769
    %v1882 = vadd.f32 %v1881, %v1770
    %v1883 = vadd.f32 %v1882, %v1771
    %1884 = vadd.xlane.f32.xlu0 %v1883
    %v1885 = vpop.xlane.xlu0 %1884
    %v1886 = vadd.f32 %v1772, %v1773
    %v1887 = vadd.f32 %v1886, %v1774
    %v1888 = vadd.f32 %v1887, %v1775
    %v1889 = vadd.f32 %v1888, %v1776
    %v1890 = vadd.f32 %v1889, %v1777
    %v1891 = vadd.f32 %v1890, %v1778
    %v1892 = vadd.f32 %v1891, %v1779
    %1893 = vadd.xlane.f32.xlu0 %v1892
    %v1894 = vpop.xlane.xlu0 %1893
    %v1895 = vadd.f32 %v1780, %v1781
    %v1896 = vadd.f32 %v1895, %v1782
    %v1897 = vadd.f32 %v1896, %v1783
    %v1898 = vadd.f32 %v1897, %v1784
    %v1899 = vadd.f32 %v1898, %v1785
    %v1900 = vadd.f32 %v1899, %v1786
    %v1901 = vadd.f32 %v1900, %v1787
    %1902 = vadd.xlane.f32.xlu0 %v1901
    %v1903 = vpop.xlane.xlu0 %1902
    %v1904 = vadd.f32 %v1788, %v1789
    %v1905 = vadd.f32 %v1904, %v1790
    %v1906 = vadd.f32 %v1905, %v1791
    %v1907 = vadd.f32 %v1906, %v1792
    %v1908 = vadd.f32 %v1907, %v1793
    %v1909 = vadd.f32 %v1908, %v1794
    %v1910 = vadd.f32 %v1909, %v1795
    %1911 = vadd.xlane.f32.xlu0 %v1910
    %v1912 = vpop.xlane.xlu0 %1911
    %v1913 = vrcp.pop 1024.0
    %v1914 = vmul.f32 %v1804, %v1913
    %v1915 = vmul.f32 %v1813, %v1913
    %v1916 = vmul.f32 %v1822, %v1913
    %v1917 = vmul.f32 %v1831, %v1913
    %v1918 = vmul.f32 %v1840, %v1913
    %v1919 = vmul.f32 %v1849, %v1913
    %v1920 = vmul.f32 %v1858, %v1913
    %v1921 = vmul.f32 %v1867, %v1913
    %v1922 = vmul.f32 %v1876, %v1913
    %v1923 = vmul.f32 %v1885, %v1913
    %v1924 = vmul.f32 %v1894, %v1913
    %v1925 = vmul.f32 %v1903, %v1913
    %v1926 = vmul.f32 %v1912, %v1913
    %v1927 = vsub.f32 %v1692, %v1914
    %v1928 = vsub.f32 %v1693, %v1914
    %v1929 = vsub.f32 %v1694, %v1914
    %v1930 = vsub.f32 %v1695, %v1914
    %v1931 = vsub.f32 %v1696, %v1914
    %v1932 = vsub.f32 %v1697, %v1914
    %v1933 = vsub.f32 %v1698, %v1914
    %v1934 = vsub.f32 %v1699, %v1914
    %v1935 = vsub.f32 %v1700, %v1915
    %v1936 = vsub.f32 %v1701, %v1915
    %v1937 = vsub.f32 %v1702, %v1915
    %v1938 = vsub.f32 %v1703, %v1915
    %v1939 = vsub.f32 %v1704, %v1915
    %v1940 = vsub.f32 %v1705, %v1915
    %v1941 = vsub.f32 %v1706, %v1915
    %v1942 = vsub.f32 %v1707, %v1915
    %v1943 = vsub.f32 %v1708, %v1916
    %v1944 = vsub.f32 %v1709, %v1916
    %v1945 = vsub.f32 %v1710, %v1916
    %v1946 = vsub.f32 %v1711, %v1916
    %v1947 = vsub.f32 %v1712, %v1916
    %v1948 = vsub.f32 %v1713, %v1916
    %v1949 = vsub.f32 %v1714, %v1916
    %v1950 = vsub.f32 %v1715, %v1916
    %v1951 = vsub.f32 %v1716, %v1917
    %v1952 = vsub.f32 %v1717, %v1917
    %v1953 = vsub.f32 %v1718, %v1917
    %v1954 = vsub.f32 %v1719, %v1917
    %v1955 = vsub.f32 %v1720, %v1917
    %v1956 = vsub.f32 %v1721, %v1917
    %v1957 = vsub.f32 %v1722, %v1917
    %v1958 = vsub.f32 %v1723, %v1917
    %v1959 = vsub.f32 %v1724, %v1918
    %v1960 = vsub.f32 %v1725, %v1918
    %v1961 = vsub.f32 %v1726, %v1918
    %v1962 = vsub.f32 %v1727, %v1918
    %v1963 = vsub.f32 %v1728, %v1918
    %v1964 = vsub.f32 %v1729, %v1918
    %v1965 = vsub.f32 %v1730, %v1918
    %v1966 = vsub.f32 %v1731, %v1918
    %v1967 = vsub.f32 %v1732, %v1919
    %v1968 = vsub.f32 %v1733, %v1919
    %v1969 = vsub.f32 %v1734, %v1919
    %v1970 = vsub.f32 %v1735, %v1919
    %v1971 = vsub.f32 %v1736, %v1919
    %v1972 = vsub.f32 %v1737, %v1919
    %v1973 = vsub.f32 %v1738, %v1919
    %v1974 = vsub.f32 %v1739, %v1919
    %v1975 = vsub.f32 %v1740, %v1920
    %v1976 = vsub.f32 %v1741, %v1920
    %v1977 = vsub.f32 %v1742, %v1920
    %v1978 = vsub.f32 %v1743, %v1920
    %v1979 = vsub.f32 %v1744, %v1920
    %v1980 = vsub.f32 %v1745, %v1920
    %v1981 = vsub.f32 %v1746, %v1920
    %v1982 = vsub.f32 %v1747, %v1920
    %v1983 = vsub.f32 %v1748, %v1921
    %v1984 = vsub.f32 %v1749, %v1921
    %v1985 = vsub.f32 %v1750, %v1921
    %v1986 = vsub.f32 %v1751, %v1921
    %v1987 = vsub.f32 %v1752, %v1921
    %v1988 = vsub.f32 %v1753, %v1921
    %v1989 = vsub.f32 %v1754, %v1921
    %v1990 = vsub.f32 %v1755, %v1921
    %v1991 = vsub.f32 %v1756, %v1922
    %v1992 = vsub.f32 %v1757, %v1922
    %v1993 = vsub.f32 %v1758, %v1922
    %v1994 = vsub.f32 %v1759, %v1922
    %v1995 = vsub.f32 %v1760, %v1922
    %v1996 = vsub.f32 %v1761, %v1922
    %v1997 = vsub.f32 %v1762, %v1922
    %v1998 = vsub.f32 %v1763, %v1922
    %v1999 = vsub.f32 %v1764, %v1923
    %v2000 = vsub.f32 %v1765, %v1923
    %v2001 = vsub.f32 %v1766, %v1923
    %v2002 = vsub.f32 %v1767, %v1923
    %v2003 = vsub.f32 %v1768, %v1923
    %v2004 = vsub.f32 %v1769, %v1923
    %v2005 = vsub.f32 %v1770, %v1923
    %v2006 = vsub.f32 %v1771, %v1923
    %v2007 = vsub.f32 %v1772, %v1924
    %v2008 = vsub.f32 %v1773, %v1924
    %v2009 = vsub.f32 %v1774, %v1924
    %v2010 = vsub.f32 %v1775, %v1924
    %v2011 = vsub.f32 %v1776, %v1924
    %v2012 = vsub.f32 %v1777, %v1924
    %v2013 = vsub.f32 %v1778, %v1924
    %v2014 = vsub.f32 %v1779, %v1924
    %v2015 = vsub.f32 %v1780, %v1925
    %v2016 = vsub.f32 %v1781, %v1925
    %v2017 = vsub.f32 %v1782, %v1925
    %v2018 = vsub.f32 %v1783, %v1925
    %v2019 = vsub.f32 %v1784, %v1925
    %v2020 = vsub.f32 %v1785, %v1925
    %v2021 = vsub.f32 %v1786, %v1925
    %v2022 = vsub.f32 %v1787, %v1925
    %v2023 = vsub.f32 %v1788, %v1926
    %v2024 = vsub.f32 %v1789, %v1926
    %v2025 = vsub.f32 %v1790, %v1926
    %v2026 = vsub.f32 %v1791, %v1926
    %v2027 = vsub.f32 %v1792, %v1926
    %v2028 = vsub.f32 %v1793, %v1926
    %v2029 = vsub.f32 %v1794, %v1926
    %v2030 = vsub.f32 %v1795, %v1926
    %v2031 = vmul.f32 %v1927, %v1927
    %v2032 = vmul.f32 %v1928, %v1928
    %v2033 = vmul.f32 %v1929, %v1929
    %v2034 = vmul.f32 %v1930, %v1930
    %v2035 = vmul.f32 %v1931, %v1931
    %v2036 = vmul.f32 %v1932, %v1932
    %v2037 = vmul.f32 %v1933, %v1933
    %v2038 = vmul.f32 %v1934, %v1934
    %v2039 = vmul.f32 %v1935, %v1935
    %v2040 = vmul.f32 %v1936, %v1936
    %v2041 = vmul.f32 %v1937, %v1937
    %v2042 = vmul.f32 %v1938, %v1938
    %v2043 = vmul.f32 %v1939, %v1939
    %v2044 = vmul.f32 %v1940, %v1940
    %v2045 = vmul.f32 %v1941, %v1941
    %v2046 = vmul.f32 %v1942, %v1942
    %v2047 = vmul.f32 %v1943, %v1943
    %v2048 = vmul.f32 %v1944, %v1944
    %v2049 = vmul.f32 %v1945, %v1945
    %v2050 = vmul.f32 %v1946, %v1946
    %v2051 = vmul.f32 %v1947, %v1947
    %v2052 = vmul.f32 %v1948, %v1948
    %v2053 = vmul.f32 %v1949, %v1949
    %v2054 = vmul.f32 %v1950, %v1950
    %v2055 = vmul.f32 %v1951, %v1951
    %v2056 = vmul.f32 %v1952, %v1952
    %v2057 = vmul.f32 %v1953, %v1953
    %v2058 = vmul.f32 %v1954, %v1954
    %v2059 = vmul.f32 %v1955, %v1955
    %v2060 = vmul.f32 %v1956, %v1956
    %v2061 = vmul.f32 %v1957, %v1957
    %v2062 = vmul.f32 %v1958, %v1958
    %v2063 = vmul.f32 %v1959, %v1959
    %v2064 = vmul.f32 %v1960, %v1960
    %v2065 = vmul.f32 %v1961, %v1961
    %v2066 = vmul.f32 %v1962, %v1962
    %v2067 = vmul.f32 %v1963, %v1963
    %v2068 = vmul.f32 %v1964, %v1964
    %v2069 = vmul.f32 %v1965, %v1965
    %v2070 = vmul.f32 %v1966, %v1966
    %v2071 = vmul.f32 %v1967, %v1967
    %v2072 = vmul.f32 %v1968, %v1968
    %v2073 = vmul.f32 %v1969, %v1969
    %v2074 = vmul.f32 %v1970, %v1970
    %v2075 = vmul.f32 %v1971, %v1971
    %v2076 = vmul.f32 %v1972, %v1972
    %v2077 = vmul.f32 %v1973, %v1973
    %v2078 = vmul.f32 %v1974, %v1974
    %v2079 = vmul.f32 %v1975, %v1975
    %v2080 = vmul.f32 %v1976, %v1976
    %v2081 = vmul.f32 %v1977, %v1977
    %v2082 = vmul.f32 %v1978, %v1978
    %v2083 = vmul.f32 %v1979, %v1979
    %v2084 = vmul.f32 %v1980, %v1980
    %v2085 = vmul.f32 %v1981, %v1981
    %v2086 = vmul.f32 %v1982, %v1982
    %v2087 = vmul.f32 %v1983, %v1983
    %v2088 = vmul.f32 %v1984, %v1984
    %v2089 = vmul.f32 %v1985, %v1985
    %v2090 = vmul.f32 %v1986, %v1986
    %v2091 = vmul.f32 %v1987, %v1987
    %v2092 = vmul.f32 %v1988, %v1988
    %v2093 = vmul.f32 %v1989, %v1989
    %v2094 = vmul.f32 %v1990, %v1990
    %v2095 = vmul.f32 %v1991, %v1991
    %v2096 = vmul.f32 %v1992, %v1992
    %v2097 = vmul.f32 %v1993, %v1993
    %v2098 = vmul.f32 %v1994, %v1994
    %v2099 = vmul.f32 %v1995, %v1995
    %v2100 = vmul.f32 %v1996, %v1996
    %v2101 = vmul.f32 %v1997, %v1997
    %v2102 = vmul.f32 %v1998, %v1998
    %v2103 = vmul.f32 %v1999, %v1999
    %v2104 = vmul.f32 %v2000, %v2000
    %v2105 = vmul.f32 %v2001, %v2001
    %v2106 = vmul.f32 %v2002, %v2002
    %v2107 = vmul.f32 %v2003, %v2003
    %v2108 = vmul.f32 %v2004, %v2004
    %v2109 = vmul.f32 %v2005, %v2005
    %v2110 = vmul.f32 %v2006, %v2006
    %v2111 = vmul.f32 %v2007, %v2007
    %v2112 = vmul.f32 %v2008, %v2008
    %v2113 = vmul.f32 %v2009, %v2009
    %v2114 = vmul.f32 %v2010, %v2010
    %v2115 = vmul.f32 %v2011, %v2011
    %v2116 = vmul.f32 %v2012, %v2012
    %v2117 = vmul.f32 %v2013, %v2013
    %v2118 = vmul.f32 %v2014, %v2014
    %v2119 = vmul.f32 %v2015, %v2015
    %v2120 = vmul.f32 %v2016, %v2016
    %v2121 = vmul.f32 %v2017, %v2017
    %v2122 = vmul.f32 %v2018, %v2018
    %v2123 = vmul.f32 %v2019, %v2019
    %v2124 = vmul.f32 %v2020, %v2020
    %v2125 = vmul.f32 %v2021, %v2021
    %v2126 = vmul.f32 %v2022, %v2022
    %v2127 = vmul.f32 %v2023, %v2023
    %v2128 = vmul.f32 %v2024, %v2024
    %v2129 = vmul.f32 %v2025, %v2025
    %v2130 = vmul.f32 %v2026, %v2026
    %v2131 = vmul.f32 %v2027, %v2027
    %v2132 = vmul.f32 %v2028, %v2028
    %v2133 = vmul.f32 %v2029, %v2029
    %v2134 = vmul.f32 %v2030, %v2030
    %v2135 = vadd.f32 %v2031, %v2032
    %v2136 = vadd.f32 %v2135, %v2033
    %v2137 = vadd.f32 %v2136, %v2034
    %v2138 = vadd.f32 %v2137, %v2035
    %v2139 = vadd.f32 %v2138, %v2036
    %v2140 = vadd.f32 %v2139, %v2037
    %v2141 = vadd.f32 %v2140, %v2038
    %2142 = vadd.xlane.f32.xlu0 %v2141
    %v2143 = vpop.xlane.xlu0 %2142
    %v2144 = vadd.f32 %v2039, %v2040
    %v2145 = vadd.f32 %v2144, %v2041
    %v2146 = vadd.f32 %v2145, %v2042
    %v2147 = vadd.f32 %v2146, %v2043
    %v2148 = vadd.f32 %v2147, %v2044
    %v2149 = vadd.f32 %v2148, %v2045
    %v2150 = vadd.f32 %v2149, %v2046
    %2151 = vadd.xlane.f32.xlu0 %v2150
    %v2152 = vpop.xlane.xlu0 %2151
    %v2153 = vadd.f32 %v2047, %v2048
    %v2154 = vadd.f32 %v2153, %v2049
    %v2155 = vadd.f32 %v2154, %v2050
    %v2156 = vadd.f32 %v2155, %v2051
    %v2157 = vadd.f32 %v2156, %v2052
    %v2158 = vadd.f32 %v2157, %v2053
    %v2159 = vadd.f32 %v2158, %v2054
    %2160 = vadd.xlane.f32.xlu0 %v2159
    %v2161 = vpop.xlane.xlu0 %2160
    %v2162 = vadd.f32 %v2055, %v2056
    %v2163 = vadd.f32 %v2162, %v2057
    %v2164 = vadd.f32 %v2163, %v2058
    %v2165 = vadd.f32 %v2164, %v2059
    %v2166 = vadd.f32 %v2165, %v2060
    %v2167 = vadd.f32 %v2166, %v2061
    %v2168 = vadd.f32 %v2167, %v2062
    %2169 = vadd.xlane.f32.xlu0 %v2168
    %v2170 = vpop.xlane.xlu0 %2169
    %v2171 = vadd.f32 %v2063, %v2064
    %v2172 = vadd.f32 %v2171, %v2065
    %v2173 = vadd.f32 %v2172, %v2066
    %v2174 = vadd.f32 %v2173, %v2067
    %v2175 = vadd.f32 %v2174, %v2068
    %v2176 = vadd.f32 %v2175, %v2069
    %v2177 = vadd.f32 %v2176, %v2070
    %2178 = vadd.xlane.f32.xlu0 %v2177
    %v2179 = vpop.xlane.xlu0 %2178
    %v2180 = vadd.f32 %v2071, %v2072
    %v2181 = vadd.f32 %v2180, %v2073
    %v2182 = vadd.f32 %v2181, %v2074
    %v2183 = vadd.f32 %v2182, %v2075
    %v2184 = vadd.f32 %v2183, %v2076
    %v2185 = vadd.f32 %v2184, %v2077
    %v2186 = vadd.f32 %v2185, %v2078
    %2187 = vadd.xlane.f32.xlu0 %v2186
    %v2188 = vpop.xlane.xlu0 %2187
    %v2189 = vadd.f32 %v2079, %v2080
    %v2190 = vadd.f32 %v2189, %v2081
    %v2191 = vadd.f32 %v2190, %v2082
    %v2192 = vadd.f32 %v2191, %v2083
    %v2193 = vadd.f32 %v2192, %v2084
    %v2194 = vadd.f32 %v2193, %v2085
    %v2195 = vadd.f32 %v2194, %v2086
    %2196 = vadd.xlane.f32.xlu0 %v2195
    %v2197 = vpop.xlane.xlu0 %2196
    %v2198 = vadd.f32 %v2087, %v2088
    %v2199 = vadd.f32 %v2198, %v2089
    %v2200 = vadd.f32 %v2199, %v2090
    %v2201 = vadd.f32 %v2200, %v2091
    %v2202 = vadd.f32 %v2201, %v2092
    %v2203 = vadd.f32 %v2202, %v2093
    %v2204 = vadd.f32 %v2203, %v2094
    %2205 = vadd.xlane.f32.xlu0 %v2204
    %v2206 = vpop.xlane.xlu0 %2205
    %v2207 = vadd.f32 %v2095, %v2096
    %v2208 = vadd.f32 %v2207, %v2097
    %v2209 = vadd.f32 %v2208, %v2098
    %v2210 = vadd.f32 %v2209, %v2099
    %v2211 = vadd.f32 %v2210, %v2100
    %v2212 = vadd.f32 %v2211, %v2101
    %v2213 = vadd.f32 %v2212, %v2102
    %2214 = vadd.xlane.f32.xlu0 %v2213
    %v2215 = vpop.xlane.xlu0 %2214
    %v2216 = vadd.f32 %v2103, %v2104
    %v2217 = vadd.f32 %v2216, %v2105
    %v2218 = vadd.f32 %v2217, %v2106
    %v2219 = vadd.f32 %v2218, %v2107
    %v2220 = vadd.f32 %v2219, %v2108
    %v2221 = vadd.f32 %v2220, %v2109
    %v2222 = vadd.f32 %v2221, %v2110
    %2223 = vadd.xlane.f32.xlu0 %v2222
    %v2224 = vpop.xlane.xlu0 %2223
    %v2225 = vadd.f32 %v2111, %v2112
    %v2226 = vadd.f32 %v2225, %v2113
    %v2227 = vadd.f32 %v2226, %v2114
    %v2228 = vadd.f32 %v2227, %v2115
    %v2229 = vadd.f32 %v2228, %v2116
    %v2230 = vadd.f32 %v2229, %v2117
    %v2231 = vadd.f32 %v2230, %v2118
    %2232 = vadd.xlane.f32.xlu0 %v2231
    %v2233 = vpop.xlane.xlu0 %2232
    %v2234 = vadd.f32 %v2119, %v2120
    %v2235 = vadd.f32 %v2234, %v2121
    %v2236 = vadd.f32 %v2235, %v2122
    %v2237 = vadd.f32 %v2236, %v2123
    %v2238 = vadd.f32 %v2237, %v2124
    %v2239 = vadd.f32 %v2238, %v2125
    %v2240 = vadd.f32 %v2239, %v2126
    %2241 = vadd.xlane.f32.xlu0 %v2240
    %v2242 = vpop.xlane.xlu0 %2241
    %v2243 = vadd.f32 %v2127, %v2128
    %v2244 = vadd.f32 %v2243, %v2129
    %v2245 = vadd.f32 %v2244, %v2130
    %v2246 = vadd.f32 %v2245, %v2131
    %v2247 = vadd.f32 %v2246, %v2132
    %v2248 = vadd.f32 %v2247, %v2133
    %v2249 = vadd.f32 %v2248, %v2134
    %2250 = vadd.xlane.f32.xlu0 %v2249
    %v2251 = vpop.xlane.xlu0 %2250
    %v2252 = vmul.f32 %v2143, %v1913
    %v2253 = vmul.f32 %v2152, %v1913
    %v2254 = vmul.f32 %v2161, %v1913
    %v2255 = vmul.f32 %v2170, %v1913
    %v2256 = vmul.f32 %v2179, %v1913
    %v2257 = vmul.f32 %v2188, %v1913
    %v2258 = vmul.f32 %v2197, %v1913
    %v2259 = vmul.f32 %v2206, %v1913
    %v2260 = vmul.f32 %v2215, %v1913
    %v2261 = vmul.f32 %v2224, %v1913
    %v2262 = vmul.f32 %v2233, %v1913
    %v2263 = vmul.f32 %v2242, %v1913
    %v2264 = vmul.f32 %v2251, %v1913
    %v2265 = vadd.f32 %v2252, 1e-05
    %v2266 = vadd.f32 %v2253, 1e-05
    %v2267 = vadd.f32 %v2254, 1e-05
    %v2268 = vadd.f32 %v2255, 1e-05
    %v2269 = vadd.f32 %v2256, 1e-05
    %v2270 = vadd.f32 %v2257, 1e-05
    %v2271 = vadd.f32 %v2258, 1e-05
    %v2272 = vadd.f32 %v2259, 1e-05
    %v2273 = vadd.f32 %v2260, 1e-05
    %v2274 = vadd.f32 %v2261, 1e-05
    %v2275 = vadd.f32 %v2262, 1e-05
    %v2276 = vadd.f32 %v2263, 1e-05
    %v2277 = vadd.f32 %v2264, 1e-05
    %v2278 = vrsqrt.pop %v2265
    %v2279 = vrsqrt.pop %v2266
    %v2280 = vrsqrt.pop %v2267
    %v2281 = vrsqrt.pop %v2268
    %v2282 = vrsqrt.pop %v2269
    %v2283 = vrsqrt.pop %v2270
    %v2284 = vrsqrt.pop %v2271
    %v2285 = vrsqrt.pop %v2272
    %v2286 = vrsqrt.pop %v2273
    %v2287 = vrsqrt.pop %v2274
    %v2288 = vrsqrt.pop %v2275
    %v2289 = vrsqrt.pop %v2276
    %v2290 = vrsqrt.pop %v2277
    %v2291 = vmul.f32 %v1927, %v2278
    %v2292 = vmul.f32 %v1928, %v2278
    %v2293 = vmul.f32 %v1929, %v2278
    %v2294 = vmul.f32 %v1930, %v2278
    %v2295 = vmul.f32 %v1931, %v2278
    %v2296 = vmul.f32 %v1932, %v2278
    %v2297 = vmul.f32 %v1933, %v2278
    %v2298 = vmul.f32 %v1934, %v2278
    %v2299 = vmul.f32 %v1935, %v2279
    %v2300 = vmul.f32 %v1936, %v2279
    %v2301 = vmul.f32 %v1937, %v2279
    %v2302 = vmul.f32 %v1938, %v2279
    %v2303 = vmul.f32 %v1939, %v2279
    %v2304 = vmul.f32 %v1940, %v2279
    %v2305 = vmul.f32 %v1941, %v2279
    %v2306 = vmul.f32 %v1942, %v2279
    %v2307 = vmul.f32 %v1943, %v2280
    %v2308 = vmul.f32 %v1944, %v2280
    %v2309 = vmul.f32 %v1945, %v2280
    %v2310 = vmul.f32 %v1946, %v2280
    %v2311 = vmul.f32 %v1947, %v2280
    %v2312 = vmul.f32 %v1948, %v2280
    %v2313 = vmul.f32 %v1949, %v2280
    %v2314 = vmul.f32 %v1950, %v2280
    %v2315 = vmul.f32 %v1951, %v2281
    %v2316 = vmul.f32 %v1952, %v2281
    %v2317 = vmul.f32 %v1953, %v2281
    %v2318 = vmul.f32 %v1954, %v2281
    %v2319 = vmul.f32 %v1955, %v2281
    %v2320 = vmul.f32 %v1956, %v2281
    %v2321 = vmul.f32 %v1957, %v2281
    %v2322 = vmul.f32 %v1958, %v2281
    %v2323 = vmul.f32 %v1959, %v2282
    %v2324 = vmul.f32 %v1960, %v2282
    %v2325 = vmul.f32 %v1961, %v2282
    %v2326 = vmul.f32 %v1962, %v2282
    %v2327 = vmul.f32 %v1963, %v2282
    %v2328 = vmul.f32 %v1964, %v2282
    %v2329 = vmul.f32 %v1965, %v2282
    %v2330 = vmul.f32 %v1966, %v2282
    %v2331 = vmul.f32 %v1967, %v2283
    %v2332 = vmul.f32 %v1968, %v2283
    %v2333 = vmul.f32 %v1969, %v2283
    %v2334 = vmul.f32 %v1970, %v2283
    %v2335 = vmul.f32 %v1971, %v2283
    %v2336 = vmul.f32 %v1972, %v2283
    %v2337 = vmul.f32 %v1973, %v2283
    %v2338 = vmul.f32 %v1974, %v2283
    %v2339 = vmul.f32 %v1975, %v2284
    %v2340 = vmul.f32 %v1976, %v2284
    %v2341 = vmul.f32 %v1977, %v2284
    %v2342 = vmul.f32 %v1978, %v2284
    %v2343 = vmul.f32 %v1979, %v2284
    %v2344 = vmul.f32 %v1980, %v2284
    %v2345 = vmul.f32 %v1981, %v2284
    %v2346 = vmul.f32 %v1982, %v2284
    %v2347 = vmul.f32 %v1983, %v2285
    %v2348 = vmul.f32 %v1984, %v2285
    %v2349 = vmul.f32 %v1985, %v2285
    %v2350 = vmul.f32 %v1986, %v2285
    %v2351 = vmul.f32 %v1987, %v2285
    %v2352 = vmul.f32 %v1988, %v2285
    %v2353 = vmul.f32 %v1989, %v2285
    %v2354 = vmul.f32 %v1990, %v2285
    %v2355 = vmul.f32 %v1991, %v2286
    %v2356 = vmul.f32 %v1992, %v2286
    %v2357 = vmul.f32 %v1993, %v2286
    %v2358 = vmul.f32 %v1994, %v2286
    %v2359 = vmul.f32 %v1995, %v2286
    %v2360 = vmul.f32 %v1996, %v2286
    %v2361 = vmul.f32 %v1997, %v2286
    %v2362 = vmul.f32 %v1998, %v2286
    %v2363 = vmul.f32 %v1999, %v2287
    %v2364 = vmul.f32 %v2000, %v2287
    %v2365 = vmul.f32 %v2001, %v2287
    %v2366 = vmul.f32 %v2002, %v2287
    %v2367 = vmul.f32 %v2003, %v2287
    %v2368 = vmul.f32 %v2004, %v2287
    %v2369 = vmul.f32 %v2005, %v2287
    %v2370 = vmul.f32 %v2006, %v2287
    %v2371 = vmul.f32 %v2007, %v2288
    %v2372 = vmul.f32 %v2008, %v2288
    %v2373 = vmul.f32 %v2009, %v2288
    %v2374 = vmul.f32 %v2010, %v2288
    %v2375 = vmul.f32 %v2011, %v2288
    %v2376 = vmul.f32 %v2012, %v2288
    %v2377 = vmul.f32 %v2013, %v2288
    %v2378 = vmul.f32 %v2014, %v2288
    %v2379 = vmul.f32 %v2015, %v2289
    %v2380 = vmul.f32 %v2016, %v2289
    %v2381 = vmul.f32 %v2017, %v2289
    %v2382 = vmul.f32 %v2018, %v2289
    %v2383 = vmul.f32 %v2019, %v2289
    %v2384 = vmul.f32 %v2020, %v2289
    %v2385 = vmul.f32 %v2021, %v2289
    %v2386 = vmul.f32 %v2022, %v2289
    %v2387 = vmul.f32 %v2023, %v2290
    %v2388 = vmul.f32 %v2024, %v2290
    %v2389 = vmul.f32 %v2025, %v2290
    %v2390 = vmul.f32 %v2026, %v2290
    %v2391 = vmul.f32 %v2027, %v2290
    %v2392 = vmul.f32 %v2028, %v2290
    %v2393 = vmul.f32 %v2029, %v2290
    %v2394 = vmul.f32 %v2030, %v2290
    %v2395 = vld [vmem:[#allocation10] ss:$4 sm:$0xf]
    %s2396 = scalar_lea.vmem [#allocation10], 1
    %v2397 = vld [vmem:[%s2396] ss:$4 sm:$0xf]
    %s2398 = scalar_lea.vmem [#allocation10], 2
    %v2399 = vld [vmem:[%s2398] ss:$4 sm:$0xf]
    %v2400 = vpack.c.bf16 %v2299, %v2291
    %v2401 = vpack.c.bf16 %v2300, %v2292
    %v2402 = vpack.c.bf16 %v2301, %v2293
    %v2403 = vpack.c.bf16 %v2302, %v2294
    %v2404 = vpack.c.bf16 %v2303, %v2295
    %v2405 = vpack.c.bf16 %v2304, %v2296
    %v2406 = vpack.c.bf16 %v2305, %v2297
    %v2407 = vpack.c.bf16 %v2306, %v2298
    %v2408 = vpack.c.bf16 %v2315, %v2307
    %v2409 = vpack.c.bf16 %v2316, %v2308
    %v2410 = vpack.c.bf16 %v2317, %v2309
    %v2411 = vpack.c.bf16 %v2318, %v2310
    %v2412 = vpack.c.bf16 %v2319, %v2311
    %v2413 = vpack.c.bf16 %v2320, %v2312
    %v2414 = vpack.c.bf16 %v2321, %v2313
    %v2415 = vpack.c.bf16 %v2322, %v2314
    %v2416 = vpack.c.bf16 %v2331, %v2323
    %v2417 = vpack.c.bf16 %v2332, %v2324
    %v2418 = vpack.c.bf16 %v2333, %v2325
    %v2419 = vpack.c.bf16 %v2334, %v2326
    %v2420 = vpack.c.bf16 %v2335, %v2327
    %v2421 = vpack.c.bf16 %v2336, %v2328
    %v2422 = vpack.c.bf16 %v2337, %v2329
    %v2423 = vpack.c.bf16 %v2338, %v2330
    %v2424 = vpack.c.bf16 %v2347, %v2339
    %v2425 = vpack.c.bf16 %v2348, %v2340
    %v2426 = vpack.c.bf16 %v2349, %v2341
    %v2427 = vpack.c.bf16 %v2350, %v2342
    %v2428 = vpack.c.bf16 %v2351, %v2343
    %v2429 = vpack.c.bf16 %v2352, %v2344
    %v2430 = vpack.c.bf16 %v2353, %v2345
    %v2431 = vpack.c.bf16 %v2354, %v2346
    %v2432 = vpack.c.bf16 %v2363, %v2355
    %v2433 = vpack.c.bf16 %v2364, %v2356
    %v2434 = vpack.c.bf16 %v2365, %v2357
    %v2435 = vpack.c.bf16 %v2366, %v2358
    %v2436 = vpack.c.bf16 %v2367, %v2359
    %v2437 = vpack.c.bf16 %v2368, %v2360
    %v2438 = vpack.c.bf16 %v2369, %v2361
    %v2439 = vpack.c.bf16 %v2370, %v2362
    %v2440 = vpack.c.bf16 %v2379, %v2371
    %v2441 = vpack.c.bf16 %v2380, %v2372
    %v2442 = vpack.c.bf16 %v2381, %v2373
    %v2443 = vpack.c.bf16 %v2382, %v2374
    %v2444 = vpack.c.bf16 %v2383, %v2375
    %v2445 = vpack.c.bf16 %v2384, %v2376
    %v2446 = vpack.c.bf16 %v2385, %v2377
    %v2447 = vpack.c.bf16 %v2386, %v2378
    %v2448 = vpack.c.bf16 %v2387, %v2387
    %v2449 = vpack.c.bf16 %v2388, %v2388
    %v2450 = vpack.c.bf16 %v2389, %v2389
    %v2451 = vpack.c.bf16 %v2390, %v2390
    %v2452 = vpack.c.bf16 %v2391, %v2391
    %v2453 = vpack.c.bf16 %v2392, %v2392
    %v2454 = vpack.c.bf16 %v2393, %v2393
    %v2455 = vpack.c.bf16 %v2394, %v2394
    %v2456 = vld [vmem:[#allocation8] sm:$0xff]
    %v2457 = vld [vmem:[#allocation8 + $0x8] sm:$0xff]
    %v2458 = vld [vmem:[#allocation8 + $0x10] sm:$0xff]
    %v2459 = vld [vmem:[#allocation8 + $0x18] sm:$0xff]
    %v2460 = vld [vmem:[#allocation8 + $0x20] sm:$0xff]
    %v2461 = vld [vmem:[#allocation8 + $0x28] sm:$0xff]
    %v2462 = vld [vmem:[#allocation8 + $0x30] sm:$0xff]
    %v2463 = vld [vmem:[#allocation8 + $0x38] sm:$0xff]
    %v2464 = vld [vmem:[#allocation8 + $0x40] sm:$0xff]
    %v2465 = vld [vmem:[#allocation8 + $0x48] sm:$0xff]
    %v2466 = vld [vmem:[#allocation8 + $0x50] sm:$0xff]
    %v2467 = vld [vmem:[#allocation8 + $0x58] sm:$0xff]
    %v2468 = vld [vmem:[#allocation8 + $0x60] sm:$0xff]
    %v2469 = vld [vmem:[#allocation8 + $0x68] sm:$0xff]
    %v2470 = vld [vmem:[#allocation8 + $0x70] sm:$0xff]
    %v2471 = vld [vmem:[#allocation8 + $0x78] sm:$0xff]
    %v2472 = vld [vmem:[#allocation8 + $0x80] sm:$0xff]
    %v2473 = vld [vmem:[#allocation8 + $0x88] sm:$0xff]
    %v2474 = vld [vmem:[#allocation8 + $0x90] sm:$0xff]
    %v2475 = vld [vmem:[#allocation8 + $0x98] sm:$0xff]
    %v2476 = vld [vmem:[#allocation8 + $0xa0] sm:$0xff]
    %v2477 = vld [vmem:[#allocation8 + $0xa8] sm:$0xff]
    %v2478 = vld [vmem:[#allocation8 + $0xb0] sm:$0xff]
    %v2479 = vld [vmem:[#allocation8 + $0xb8] sm:$0xff]
    %v2480 = vld [vmem:[#allocation8 + $0xc0] sm:$0xff]
    %v2481 = vld [vmem:[#allocation8 + $0xc8] sm:$0xff]
    %v2482 = vld [vmem:[#allocation8 + $0xd0] sm:$0xff]
    %v2483 = vld [vmem:[#allocation8 + $0xd8] sm:$0xff]
    %v2484 = vld [vmem:[#allocation8 + $0xe0] sm:$0xff]
    %v2485 = vld [vmem:[#allocation8 + $0xe8] sm:$0xff]
    %v2486 = vld [vmem:[#allocation8 + $0xf0] sm:$0xff]
    %v2487 = vld [vmem:[#allocation8 + $0xf8] sm:$0xff]
    %v2488 = vld [vmem:[#allocation8 + $0x100] sm:$0xff]
    %v2489 = vld [vmem:[#allocation8 + $0x108] sm:$0xff]
    %v2490 = vld [vmem:[#allocation8 + $0x110] sm:$0xff]
    %v2491 = vld [vmem:[#allocation8 + $0x118] sm:$0xff]
    %v2492 = vld [vmem:[#allocation8 + $0x120] sm:$0xff]
    %v2493 = vld [vmem:[#allocation8 + $0x128] sm:$0xff]
    %v2494 = vld [vmem:[#allocation8 + $0x130] sm:$0xff]
    %v2495 = vld [vmem:[#allocation8 + $0x138] sm:$0xff]
    %v2496 = vld [vmem:[#allocation8 + $0x140] sm:$0xff]
    %v2497 = vld [vmem:[#allocation8 + $0x148] sm:$0xff]
    %v2498 = vld [vmem:[#allocation8 + $0x150] sm:$0xff]
    %v2499 = vld [vmem:[#allocation8 + $0x158] sm:$0xff]
    %v2500 = vld [vmem:[#allocation8 + $0x160] sm:$0xff]
    %v2501 = vld [vmem:[#allocation8 + $0x168] sm:$0xff]
    %v2502 = vld [vmem:[#allocation8 + $0x170] sm:$0xff]
    %v2503 = vld [vmem:[#allocation8 + $0x178] sm:$0xff]
    %v2504 = vld [vmem:[#allocation8 + $0x180] sm:$0xff]
    %v2505 = vld [vmem:[#allocation8 + $0x188] sm:$0xff]
    %v2506 = vld [vmem:[#allocation8 + $0x190] sm:$0xff]
    %v2507 = vld [vmem:[#allocation8 + $0x198] sm:$0xff]
    %v2508 = vld [vmem:[#allocation8 + $0x1a0] sm:$0xff]
    %v2509 = vld [vmem:[#allocation8 + $0x1a8] sm:$0xff]
    %v2510 = vld [vmem:[#allocation8 + $0x1b0] sm:$0xff]
    %v2511 = vld [vmem:[#allocation8 + $0x1b8] sm:$0xff]
    %v2512 = vld [vmem:[#allocation8 + $0x1c0] sm:$0xff]
    %v2513 = vld [vmem:[#allocation8 + $0x1c8] sm:$0xff]
    %v2514 = vld [vmem:[#allocation8 + $0x1d0] sm:$0xff]
    %v2515 = vld [vmem:[#allocation8 + $0x1d8] sm:$0xff]
    %v2516 = vld [vmem:[#allocation8 + $0x1e0] sm:$0xff]
    %v2517 = vld [vmem:[#allocation8 + $0x1e8] sm:$0xff]
    %v2518 = vld [vmem:[#allocation8 + $0x1f0] sm:$0xff]
    %v2519 = vld [vmem:[#allocation8 + $0x1f8] sm:$0xff]
    %v2520 = vld [vmem:[#allocation8 + $0x200] sm:$0xff]
    %v2521 = vld [vmem:[#allocation8 + $0x208] sm:$0xff]
    %v2522 = vld [vmem:[#allocation8 + $0x210] sm:$0xff]
    %v2523 = vld [vmem:[#allocation8 + $0x218] sm:$0xff]
    %v2524 = vld [vmem:[#allocation8 + $0x220] sm:$0xff]
    %v2525 = vld [vmem:[#allocation8 + $0x228] sm:$0xff]
    %v2526 = vld [vmem:[#allocation8 + $0x230] sm:$0xff]
    %v2527 = vld [vmem:[#allocation8 + $0x238] sm:$0xff]
    %v2528 = vld [vmem:[#allocation8 + $0x240] sm:$0xff]
    %v2529 = vld [vmem:[#allocation8 + $0x248] sm:$0xff]
    %v2530 = vld [vmem:[#allocation8 + $0x250] sm:$0xff]
    %v2531 = vld [vmem:[#allocation8 + $0x258] sm:$0xff]
    %v2532 = vld [vmem:[#allocation8 + $0x260] sm:$0xff]
    %v2533 = vld [vmem:[#allocation8 + $0x268] sm:$0xff]
    %v2534 = vld [vmem:[#allocation8 + $0x270] sm:$0xff]
    %v2535 = vld [vmem:[#allocation8 + $0x278] sm:$0xff]
    %v2536 = vld [vmem:[#allocation8 + $0x280] sm:$0xff]
    %v2537 = vld [vmem:[#allocation8 + $0x288] sm:$0xff]
    %v2538 = vld [vmem:[#allocation8 + $0x290] sm:$0xff]
    %v2539 = vld [vmem:[#allocation8 + $0x298] sm:$0xff]
    %v2540 = vld [vmem:[#allocation8 + $0x2a0] sm:$0xff]
    %v2541 = vld [vmem:[#allocation8 + $0x2a8] sm:$0xff]
    %v2542 = vld [vmem:[#allocation8 + $0x2b0] sm:$0xff]
    %v2543 = vld [vmem:[#allocation8 + $0x2b8] sm:$0xff]
    %v2544 = vld [vmem:[#allocation8 + $0x2c0] sm:$0xff]
    %v2545 = vld [vmem:[#allocation8 + $0x2c8] sm:$0xff]
    %v2546 = vld [vmem:[#allocation8 + $0x2d0] sm:$0xff]
    %v2547 = vld [vmem:[#allocation8 + $0x2d8] sm:$0xff]
    %v2548 = vld [vmem:[#allocation8 + $0x2e0] sm:$0xff]
    %v2549 = vld [vmem:[#allocation8 + $0x2e8] sm:$0xff]
    %v2550 = vld [vmem:[#allocation8 + $0x2f0] sm:$0xff]
    %v2551 = vld [vmem:[#allocation8 + $0x2f8] sm:$0xff]
    %v2552 = vld [vmem:[#allocation8 + $0x300] sm:$0xff]
    %v2553 = vld [vmem:[#allocation8 + $0x308] sm:$0xff]
    %v2554 = vld [vmem:[#allocation8 + $0x310] sm:$0xff]
    %v2555 = vld [vmem:[#allocation8 + $0x318] sm:$0xff]
    %v2556 = vld [vmem:[#allocation8 + $0x320] sm:$0xff]
    %v2557 = vld [vmem:[#allocation8 + $0x328] sm:$0xff]
    %v2558 = vld [vmem:[#allocation8 + $0x330] sm:$0xff]
    %v2559 = vld [vmem:[#allocation8 + $0x338] sm:$0xff]
    %v2560 = vld [vmem:[#allocation8 + $0x340] sm:$0xff]
    %v2561 = vld [vmem:[#allocation8 + $0x348] sm:$0xff]
    %v2562 = vld [vmem:[#allocation8 + $0x350] sm:$0xff]
    %v2563 = vld [vmem:[#allocation8 + $0x358] sm:$0xff]
    %v2564 = vld [vmem:[#allocation8 + $0x360] sm:$0xff]
    %v2565 = vld [vmem:[#allocation8 + $0x368] sm:$0xff]
    %v2566 = vld [vmem:[#allocation8 + $0x370] sm:$0xff]
    %v2567 = vld [vmem:[#allocation8 + $0x378] sm:$0xff]
    %v2568 = vld [vmem:[#allocation8 + $0x380] sm:$0xff]
    %v2569 = vld [vmem:[#allocation8 + $0x388] sm:$0xff]
    %v2570 = vld [vmem:[#allocation8 + $0x390] sm:$0xff]
    %v2571 = vld [vmem:[#allocation8 + $0x398] sm:$0xff]
    %v2572 = vld [vmem:[#allocation8 + $0x3a0] sm:$0xff]
    %v2573 = vld [vmem:[#allocation8 + $0x3a8] sm:$0xff]
    %v2574 = vld [vmem:[#allocation8 + $0x3b0] sm:$0xff]
    %v2575 = vld [vmem:[#allocation8 + $0x3b8] sm:$0xff]
    %v2576 = vld [vmem:[#allocation8 + $0x3c0] sm:$0xff]
    %v2577 = vld [vmem:[#allocation8 + $0x3c8] sm:$0xff]
    %v2578 = vld [vmem:[#allocation8 + $0x3d0] sm:$0xff]
    %v2579 = vld [vmem:[#allocation8 + $0x3d8] sm:$0xff]
    %v2580 = vld [vmem:[#allocation8 + $0x3e0] sm:$0xff]
    %v2581 = vld [vmem:[#allocation8 + $0x3e8] sm:$0xff]
    %v2582 = vld [vmem:[#allocation8 + $0x3f0] sm:$0xff]
    %v2583 = vld [vmem:[#allocation8 + $0x3f8] sm:$0xff]
    %v2584 = vld [vmem:[#allocation8 + $0x400] sm:$0xff]
    %v2585 = vld [vmem:[#allocation8 + $0x408] sm:$0xff]
    %v2586 = vld [vmem:[#allocation8 + $0x410] sm:$0xff]
    %v2587 = vld [vmem:[#allocation8 + $0x418] sm:$0xff]
    %v2588 = vld [vmem:[#allocation8 + $0x420] sm:$0xff]
    %v2589 = vld [vmem:[#allocation8 + $0x428] sm:$0xff]
    %v2590 = vld [vmem:[#allocation8 + $0x430] sm:$0xff]
    %v2591 = vld [vmem:[#allocation8 + $0x438] sm:$0xff]
    %v2592 = vld [vmem:[#allocation8 + $0x440] sm:$0xff]
    %v2593 = vld [vmem:[#allocation8 + $0x448] sm:$0xff]
    %v2594 = vld [vmem:[#allocation8 + $0x450] sm:$0xff]
    %v2595 = vld [vmem:[#allocation8 + $0x458] sm:$0xff]
    %v2596 = vld [vmem:[#allocation8 + $0x460] sm:$0xff]
    %v2597 = vld [vmem:[#allocation8 + $0x468] sm:$0xff]
    %v2598 = vld [vmem:[#allocation8 + $0x470] sm:$0xff]
    %v2599 = vld [vmem:[#allocation8 + $0x478] sm:$0xff]
    %v2600 = vld [vmem:[#allocation8 + $0x480] sm:$0xff]
    %v2601 = vld [vmem:[#allocation8 + $0x488] sm:$0xff]
    %v2602 = vld [vmem:[#allocation8 + $0x490] sm:$0xff]
    %v2603 = vld [vmem:[#allocation8 + $0x498] sm:$0xff]
    %v2604 = vld [vmem:[#allocation8 + $0x4a0] sm:$0xff]
    %v2605 = vld [vmem:[#allocation8 + $0x4a8] sm:$0xff]
    %v2606 = vld [vmem:[#allocation8 + $0x4b0] sm:$0xff]
    %v2607 = vld [vmem:[#allocation8 + $0x4b8] sm:$0xff]
    %v2608 = vld [vmem:[#allocation8 + $0x4c0] sm:$0xff]
    %v2609 = vld [vmem:[#allocation8 + $0x4c8] sm:$0xff]
    %v2610 = vld [vmem:[#allocation8 + $0x4d0] sm:$0xff]
    %v2611 = vld [vmem:[#allocation8 + $0x4d8] sm:$0xff]
    %v2612 = vld [vmem:[#allocation8 + $0x4e0] sm:$0xff]
    %v2613 = vld [vmem:[#allocation8 + $0x4e8] sm:$0xff]
    %v2614 = vld [vmem:[#allocation8 + $0x4f0] sm:$0xff]
    %v2615 = vld [vmem:[#allocation8 + $0x4f8] sm:$0xff]
    %v2616 = vld [vmem:[#allocation8 + $0x500] sm:$0xff]
    %v2617 = vld [vmem:[#allocation8 + $0x508] sm:$0xff]
    %v2618 = vld [vmem:[#allocation8 + $0x510] sm:$0xff]
    %v2619 = vld [vmem:[#allocation8 + $0x518] sm:$0xff]
    %v2620 = vld [vmem:[#allocation8 + $0x520] sm:$0xff]
    %v2621 = vld [vmem:[#allocation8 + $0x528] sm:$0xff]
    %v2622 = vld [vmem:[#allocation8 + $0x530] sm:$0xff]
    %v2623 = vld [vmem:[#allocation8 + $0x538] sm:$0xff]
    %v2624 = vld [vmem:[#allocation8 + $0x540] sm:$0xff]
    %v2625 = vld [vmem:[#allocation8 + $0x548] sm:$0xff]
    %v2626 = vld [vmem:[#allocation8 + $0x550] sm:$0xff]
    %v2627 = vld [vmem:[#allocation8 + $0x558] sm:$0xff]
    %v2628 = vld [vmem:[#allocation8 + $0x560] sm:$0xff]
    %v2629 = vld [vmem:[#allocation8 + $0x568] sm:$0xff]
    %v2630 = vld [vmem:[#allocation8 + $0x570] sm:$0xff]
    %v2631 = vld [vmem:[#allocation8 + $0x578] sm:$0xff]
    %v2632 = vld [vmem:[#allocation8 + $0x580] sm:$0xff]
    %v2633 = vld [vmem:[#allocation8 + $0x588] sm:$0xff]
    %v2634 = vld [vmem:[#allocation8 + $0x590] sm:$0xff]
    %v2635 = vld [vmem:[#allocation8 + $0x598] sm:$0xff]
    %v2636 = vld [vmem:[#allocation8 + $0x5a0] sm:$0xff]
    %v2637 = vld [vmem:[#allocation8 + $0x5a8] sm:$0xff]
    %v2638 = vld [vmem:[#allocation8 + $0x5b0] sm:$0xff]
    %v2639 = vld [vmem:[#allocation8 + $0x5b8] sm:$0xff]
    %v2640 = vld [vmem:[#allocation8 + $0x5c0] sm:$0xff]
    %v2641 = vld [vmem:[#allocation8 + $0x5c8] sm:$0xff]
    %v2642 = vld [vmem:[#allocation8 + $0x5d0] sm:$0xff]
    %v2643 = vld [vmem:[#allocation8 + $0x5d8] sm:$0xff]
    %v2644 = vld [vmem:[#allocation8 + $0x5e0] sm:$0xff]
    %v2645 = vld [vmem:[#allocation8 + $0x5e8] sm:$0xff]
    %v2646 = vld [vmem:[#allocation8 + $0x5f0] sm:$0xff]
    %v2647 = vld [vmem:[#allocation8 + $0x5f8] sm:$0xff]
    %v2648 = vld [vmem:[#allocation8 + $0x600] sm:$0xff]
    %v2649 = vld [vmem:[#allocation8 + $0x608] sm:$0xff]
    %v2650 = vld [vmem:[#allocation8 + $0x610] sm:$0xff]
    %v2651 = vld [vmem:[#allocation8 + $0x618] sm:$0xff]
    %v2652 = vld [vmem:[#allocation8 + $0x620] sm:$0xff]
    %v2653 = vld [vmem:[#allocation8 + $0x628] sm:$0xff]
    %v2654 = vld [vmem:[#allocation8 + $0x630] sm:$0xff]
    %v2655 = vld [vmem:[#allocation8 + $0x638] sm:$0xff]
    %v2656 = vld [vmem:[#allocation8 + $0x640] sm:$0xff]
    %v2657 = vld [vmem:[#allocation8 + $0x648] sm:$0xff]
    %v2658 = vld [vmem:[#allocation8 + $0x650] sm:$0xff]
    %v2659 = vld [vmem:[#allocation8 + $0x658] sm:$0xff]
    %v2660 = vld [vmem:[#allocation8 + $0x660] sm:$0xff]
    %v2661 = vld [vmem:[#allocation8 + $0x668] sm:$0xff]
    %v2662 = vld [vmem:[#allocation8 + $0x670] sm:$0xff]
    %v2663 = vld [vmem:[#allocation8 + $0x678] sm:$0xff]
    %v2664 = vld [vmem:[#allocation8 + $0x680] sm:$0xff]
    %v2665 = vld [vmem:[#allocation8 + $0x688] sm:$0xff]
    %v2666 = vld [vmem:[#allocation8 + $0x690] sm:$0xff]
    %v2667 = vld [vmem:[#allocation8 + $0x698] sm:$0xff]
    %v2668 = vld [vmem:[#allocation8 + $0x6a0] sm:$0xff]
    %v2669 = vld [vmem:[#allocation8 + $0x6a8] sm:$0xff]
    %v2670 = vld [vmem:[#allocation8 + $0x6b0] sm:$0xff]
    %v2671 = vld [vmem:[#allocation8 + $0x6b8] sm:$0xff]
    %v2672 = vld [vmem:[#allocation8 + $0x6c0] sm:$0xff]
    %v2673 = vld [vmem:[#allocation8 + $0x6c8] sm:$0xff]
    %v2674 = vld [vmem:[#allocation8 + $0x6d0] sm:$0xff]
    %v2675 = vld [vmem:[#allocation8 + $0x6d8] sm:$0xff]
    %v2676 = vld [vmem:[#allocation8 + $0x6e0] sm:$0xff]
    %v2677 = vld [vmem:[#allocation8 + $0x6e8] sm:$0xff]
    %v2678 = vld [vmem:[#allocation8 + $0x6f0] sm:$0xff]
    %v2679 = vld [vmem:[#allocation8 + $0x6f8] sm:$0xff]
    %v2680 = vld [vmem:[#allocation8 + $0x700] sm:$0xff]
    %v2681 = vld [vmem:[#allocation8 + $0x708] sm:$0xff]
    %v2682 = vld [vmem:[#allocation8 + $0x710] sm:$0xff]
    %v2683 = vld [vmem:[#allocation8 + $0x718] sm:$0xff]
    %v2684 = vld [vmem:[#allocation8 + $0x720] sm:$0xff]
    %v2685 = vld [vmem:[#allocation8 + $0x728] sm:$0xff]
    %v2686 = vld [vmem:[#allocation8 + $0x730] sm:$0xff]
    %v2687 = vld [vmem:[#allocation8 + $0x738] sm:$0xff]
    %v2688 = vld [vmem:[#allocation8 + $0x740] sm:$0xff]
    %v2689 = vld [vmem:[#allocation8 + $0x748] sm:$0xff]
    %v2690 = vld [vmem:[#allocation8 + $0x750] sm:$0xff]
    %v2691 = vld [vmem:[#allocation8 + $0x758] sm:$0xff]
    %v2692 = vld [vmem:[#allocation8 + $0x760] sm:$0xff]
    %v2693 = vld [vmem:[#allocation8 + $0x768] sm:$0xff]
    %v2694 = vld [vmem:[#allocation8 + $0x770] sm:$0xff]
    %v2695 = vld [vmem:[#allocation8 + $0x778] sm:$0xff]
    %v2696 = vld [vmem:[#allocation8 + $0x780] sm:$0xff]
    %v2697 = vld [vmem:[#allocation8 + $0x788] sm:$0xff]
    %v2698 = vld [vmem:[#allocation8 + $0x790] sm:$0xff]
    %v2699 = vld [vmem:[#allocation8 + $0x798] sm:$0xff]
    %v2700 = vld [vmem:[#allocation8 + $0x7a0] sm:$0xff]
    %v2701 = vld [vmem:[#allocation8 + $0x7a8] sm:$0xff]
    %v2702 = vld [vmem:[#allocation8 + $0x7b0] sm:$0xff]
    %v2703 = vld [vmem:[#allocation8 + $0x7b8] sm:$0xff]
    %v2704 = vld [vmem:[#allocation8 + $0x7c0] sm:$0xff]
    %v2705 = vld [vmem:[#allocation8 + $0x7c8] sm:$0xff]
    %v2706 = vld [vmem:[#allocation8 + $0x7d0] sm:$0xff]
    %v2707 = vld [vmem:[#allocation8 + $0x7d8] sm:$0xff]
    %v2708 = vld [vmem:[#allocation8 + $0x7e0] sm:$0xff]
    %v2709 = vld [vmem:[#allocation8 + $0x7e8] sm:$0xff]
    %v2710 = vld [vmem:[#allocation8 + $0x7f0] sm:$0xff]
    %v2711 = vld [vmem:[#allocation8 + $0x7f8] sm:$0xff]
    %v2713 = vlaneseq
    %v2714 = vshrl.u32 %v2713, 7
    %v2715 = vsub.s32 0, %v2714
    %v2716 = vrot.slane %v2395, %v2715
    %v2717 = vlaneseq
    %v2718 = vshrl.u32 %v2717, 7
    %v2719 = vsub.s32 1, %v2718
    %v2720 = vrot.slane %v2395, %v2719
    %v2721 = vlaneseq
    %v2722 = vshrl.u32 %v2721, 7
    %v2723 = vsub.s32 2, %v2722
    %v2724 = vrot.slane %v2395, %v2723
    %v2725 = vlaneseq
    %v2726 = vshrl.u32 %v2725, 7
    %v2727 = vsub.s32 3, %v2726
    %v2728 = vrot.slane %v2395, %v2727
    %v2989 = vunpack.c.l.b16 %v2456
    %v2990 = vunpack.c.h.b16 %v2456
    %v2991 = vunpack.c.l.b16 %v2457
    %v2992 = vunpack.c.h.b16 %v2457
    %v2993 = vunpack.c.l.b16 %v2458
    %v2994 = vunpack.c.h.b16 %v2458
    %v2995 = vunpack.c.l.b16 %v2459
    %v2996 = vunpack.c.h.b16 %v2459
    %v2997 = vunpack.c.l.b16 %v2460
    %v2998 = vunpack.c.h.b16 %v2460
    %v2999 = vunpack.c.l.b16 %v2461
    %v3000 = vunpack.c.h.b16 %v2461
    %v3001 = vunpack.c.l.b16 %v2462
    %v3002 = vunpack.c.h.b16 %v2462
    %v3003 = vunpack.c.l.b16 %v2463
    %v3004 = vunpack.c.h.b16 %v2463
    %v3005 = vunpack.c.l.b16 %v2464
    %v3006 = vunpack.c.h.b16 %v2464
    %v3007 = vunpack.c.l.b16 %v2465
    %v3008 = vunpack.c.h.b16 %v2465
    %v3009 = vunpack.c.l.b16 %v2466
    %v3010 = vunpack.c.h.b16 %v2466
    %v3011 = vunpack.c.l.b16 %v2467
    %v3012 = vunpack.c.h.b16 %v2467
    %v3013 = vunpack.c.l.b16 %v2468
    %v3014 = vunpack.c.h.b16 %v2468
    %v3015 = vunpack.c.l.b16 %v2469
    %v3016 = vunpack.c.h.b16 %v2469
    %v3017 = vunpack.c.l.b16 %v2470
    %v3018 = vunpack.c.h.b16 %v2470
    %v3019 = vunpack.c.l.b16 %v2471
    %v3020 = vunpack.c.h.b16 %v2471
    %v3021 = vunpack.c.l.b16 %v2472
    %v3022 = vunpack.c.h.b16 %v2472
    %v3023 = vunpack.c.l.b16 %v2473
    %v3024 = vunpack.c.h.b16 %v2473
    %v3025 = vunpack.c.l.b16 %v2474
    %v3026 = vunpack.c.h.b16 %v2474
    %v3027 = vunpack.c.l.b16 %v2475
    %v3028 = vunpack.c.h.b16 %v2475
    %v3029 = vunpack.c.l.b16 %v2476
    %v3030 = vunpack.c.h.b16 %v2476
    %v3031 = vunpack.c.l.b16 %v2477
    %v3032 = vunpack.c.h.b16 %v2477
    %v3033 = vunpack.c.l.b16 %v2478
    %v3034 = vunpack.c.h.b16 %v2478
    %v3035 = vunpack.c.l.b16 %v2479
    %v3036 = vunpack.c.h.b16 %v2479
    %v3037 = vunpack.c.l.b16 %v2480
    %v3038 = vunpack.c.h.b16 %v2480
    %v3039 = vunpack.c.l.b16 %v2481
    %v3040 = vunpack.c.h.b16 %v2481
    %v3041 = vunpack.c.l.b16 %v2482
    %v3042 = vunpack.c.h.b16 %v2482
    %v3043 = vunpack.c.l.b16 %v2483
    %v3044 = vunpack.c.h.b16 %v2483
    %v3045 = vunpack.c.l.b16 %v2484
    %v3046 = vunpack.c.h.b16 %v2484
    %v3047 = vunpack.c.l.b16 %v2485
    %v3048 = vunpack.c.h.b16 %v2485
    %v3049 = vunpack.c.l.b16 %v2486
    %v3050 = vunpack.c.h.b16 %v2486
    %v3051 = vunpack.c.l.b16 %v2487
    %v3052 = vunpack.c.h.b16 %v2487
    %v3053 = vunpack.c.l.b16 %v2488
    %v3054 = vunpack.c.h.b16 %v2488
    %v3055 = vunpack.c.l.b16 %v2489
    %v3056 = vunpack.c.h.b16 %v2489
    %v3057 = vunpack.c.l.b16 %v2490
    %v3058 = vunpack.c.h.b16 %v2490
    %v3059 = vunpack.c.l.b16 %v2491
    %v3060 = vunpack.c.h.b16 %v2491
    %v3061 = vunpack.c.l.b16 %v2492
    %v3062 = vunpack.c.h.b16 %v2492
    %v3063 = vunpack.c.l.b16 %v2493
    %v3064 = vunpack.c.h.b16 %v2493
    %v3065 = vunpack.c.l.b16 %v2494
    %v3066 = vunpack.c.h.b16 %v2494
    %v3067 = vunpack.c.l.b16 %v2495
    %v3068 = vunpack.c.h.b16 %v2495
    %v3069 = vunpack.c.l.b16 %v2496
    %v3070 = vunpack.c.h.b16 %v2496
    %v3071 = vunpack.c.l.b16 %v2497
    %v3072 = vunpack.c.h.b16 %v2497
    %v3073 = vunpack.c.l.b16 %v2498
    %v3074 = vunpack.c.h.b16 %v2498
    %v3075 = vunpack.c.l.b16 %v2499
    %v3076 = vunpack.c.h.b16 %v2499
    %v3077 = vunpack.c.l.b16 %v2500
    %v3078 = vunpack.c.h.b16 %v2500
    %v3079 = vunpack.c.l.b16 %v2501
    %v3080 = vunpack.c.h.b16 %v2501
    %v3081 = vunpack.c.l.b16 %v2502
    %v3082 = vunpack.c.h.b16 %v2502
    %v3083 = vunpack.c.l.b16 %v2503
    %v3084 = vunpack.c.h.b16 %v2503
    %v3085 = vunpack.c.l.b16 %v2504
    %v3086 = vunpack.c.h.b16 %v2504
    %v3087 = vunpack.c.l.b16 %v2505
    %v3088 = vunpack.c.h.b16 %v2505
    %v3089 = vunpack.c.l.b16 %v2506
    %v3090 = vunpack.c.h.b16 %v2506
    %v3091 = vunpack.c.l.b16 %v2507
    %v3092 = vunpack.c.h.b16 %v2507
    %v3093 = vunpack.c.l.b16 %v2508
    %v3094 = vunpack.c.h.b16 %v2508
    %v3095 = vunpack.c.l.b16 %v2509
    %v3096 = vunpack.c.h.b16 %v2509
    %v3097 = vunpack.c.l.b16 %v2510
    %v3098 = vunpack.c.h.b16 %v2510
    %v3099 = vunpack.c.l.b16 %v2511
    %v3100 = vunpack.c.h.b16 %v2511
    %v3101 = vunpack.c.l.b16 %v2512
    %v3102 = vunpack.c.h.b16 %v2512
    %v3103 = vunpack.c.l.b16 %v2513
    %v3104 = vunpack.c.h.b16 %v2513
    %v3105 = vunpack.c.l.b16 %v2514
    %v3106 = vunpack.c.h.b16 %v2514
    %v3107 = vunpack.c.l.b16 %v2515
    %v3108 = vunpack.c.h.b16 %v2515
    %v3109 = vunpack.c.l.b16 %v2516
    %v3110 = vunpack.c.h.b16 %v2516
    %v3111 = vunpack.c.l.b16 %v2517
    %v3112 = vunpack.c.h.b16 %v2517
    %v3113 = vunpack.c.l.b16 %v2518
    %v3114 = vunpack.c.h.b16 %v2518
    %v3115 = vunpack.c.l.b16 %v2519
    %v3116 = vunpack.c.h.b16 %v2519
    %v3117 = vunpack.c.l.b16 %v2520
    %v3118 = vunpack.c.h.b16 %v2520
    %v3119 = vunpack.c.l.b16 %v2521
    %v3120 = vunpack.c.h.b16 %v2521
    %v3121 = vunpack.c.l.b16 %v2522
    %v3122 = vunpack.c.h.b16 %v2522
    %v3123 = vunpack.c.l.b16 %v2523
    %v3124 = vunpack.c.h.b16 %v2523
    %v3125 = vunpack.c.l.b16 %v2524
    %v3126 = vunpack.c.h.b16 %v2524
    %v3127 = vunpack.c.l.b16 %v2525
    %v3128 = vunpack.c.h.b16 %v2525
    %v3129 = vunpack.c.l.b16 %v2526
    %v3130 = vunpack.c.h.b16 %v2526
    %v3131 = vunpack.c.l.b16 %v2527
    %v3132 = vunpack.c.h.b16 %v2527
    %v3133 = vunpack.c.l.b16 %v2528
    %v3134 = vunpack.c.h.b16 %v2528
    %v3135 = vunpack.c.l.b16 %v2529
    %v3136 = vunpack.c.h.b16 %v2529
    %v3137 = vunpack.c.l.b16 %v2530
    %v3138 = vunpack.c.h.b16 %v2530
    %v3139 = vunpack.c.l.b16 %v2531
    %v3140 = vunpack.c.h.b16 %v2531
    %v3141 = vunpack.c.l.b16 %v2532
    %v3142 = vunpack.c.h.b16 %v2532
    %v3143 = vunpack.c.l.b16 %v2533
    %v3144 = vunpack.c.h.b16 %v2533
    %v3145 = vunpack.c.l.b16 %v2534
    %v3146 = vunpack.c.h.b16 %v2534
    %v3147 = vunpack.c.l.b16 %v2535
    %v3148 = vunpack.c.h.b16 %v2535
    %v3149 = vunpack.c.l.b16 %v2536
    %v3150 = vunpack.c.h.b16 %v2536
    %v3151 = vunpack.c.l.b16 %v2537
    %v3152 = vunpack.c.h.b16 %v2537
    %v3153 = vunpack.c.l.b16 %v2538
    %v3154 = vunpack.c.h.b16 %v2538
    %v3155 = vunpack.c.l.b16 %v2539
    %v3156 = vunpack.c.h.b16 %v2539
    %v3157 = vunpack.c.l.b16 %v2540
    %v3158 = vunpack.c.h.b16 %v2540
    %v3159 = vunpack.c.l.b16 %v2541
    %v3160 = vunpack.c.h.b16 %v2541
    %v3161 = vunpack.c.l.b16 %v2542
    %v3162 = vunpack.c.h.b16 %v2542
    %v3163 = vunpack.c.l.b16 %v2543
    %v3164 = vunpack.c.h.b16 %v2543
    %v3165 = vunpack.c.l.b16 %v2544
    %v3166 = vunpack.c.h.b16 %v2544
    %v3167 = vunpack.c.l.b16 %v2545
    %v3168 = vunpack.c.h.b16 %v2545
    %v3169 = vunpack.c.l.b16 %v2546
    %v3170 = vunpack.c.h.b16 %v2546
    %v3171 = vunpack.c.l.b16 %v2547
    %v3172 = vunpack.c.h.b16 %v2547
    %v3173 = vunpack.c.l.b16 %v2548
    %v3174 = vunpack.c.h.b16 %v2548
    %v3175 = vunpack.c.l.b16 %v2549
    %v3176 = vunpack.c.h.b16 %v2549
    %v3177 = vunpack.c.l.b16 %v2550
    %v3178 = vunpack.c.h.b16 %v2550
    %v3179 = vunpack.c.l.b16 %v2551
    %v3180 = vunpack.c.h.b16 %v2551
    %v3181 = vunpack.c.l.b16 %v2552
    %v3182 = vunpack.c.h.b16 %v2552
    %v3183 = vunpack.c.l.b16 %v2553
    %v3184 = vunpack.c.h.b16 %v2553
    %v3185 = vunpack.c.l.b16 %v2554
    %v3186 = vunpack.c.h.b16 %v2554
    %v3187 = vunpack.c.l.b16 %v2555
    %v3188 = vunpack.c.h.b16 %v2555
    %v3189 = vunpack.c.l.b16 %v2556
    %v3190 = vunpack.c.h.b16 %v2556
    %v3191 = vunpack.c.l.b16 %v2557
    %v3192 = vunpack.c.h.b16 %v2557
    %v3193 = vunpack.c.l.b16 %v2558
    %v3194 = vunpack.c.h.b16 %v2558
    %v3195 = vunpack.c.l.b16 %v2559
    %v3196 = vunpack.c.h.b16 %v2559
    %v3197 = vunpack.c.l.b16 %v2560
    %v3198 = vunpack.c.h.b16 %v2560
    %v3199 = vunpack.c.l.b16 %v2561
    %v3200 = vunpack.c.h.b16 %v2561
    %v3201 = vunpack.c.l.b16 %v2562
    %v3202 = vunpack.c.h.b16 %v2562
    %v3203 = vunpack.c.l.b16 %v2563
    %v3204 = vunpack.c.h.b16 %v2563
    %v3205 = vunpack.c.l.b16 %v2564
    %v3206 = vunpack.c.h.b16 %v2564
    %v3207 = vunpack.c.l.b16 %v2565
    %v3208 = vunpack.c.h.b16 %v2565
    %v3209 = vunpack.c.l.b16 %v2566
    %v3210 = vunpack.c.h.b16 %v2566
    %v3211 = vunpack.c.l.b16 %v2567
    %v3212 = vunpack.c.h.b16 %v2567
    %v3213 = vunpack.c.l.b16 %v2568
    %v3214 = vunpack.c.h.b16 %v2568
    %v3215 = vunpack.c.l.b16 %v2569
    %v3216 = vunpack.c.h.b16 %v2569
    %v3217 = vunpack.c.l.b16 %v2570
    %v3218 = vunpack.c.h.b16 %v2570
    %v3219 = vunpack.c.l.b16 %v2571
    %v3220 = vunpack.c.h.b16 %v2571
    %v3221 = vunpack.c.l.b16 %v2572
    %v3222 = vunpack.c.h.b16 %v2572
    %v3223 = vunpack.c.l.b16 %v2573
    %v3224 = vunpack.c.h.b16 %v2573
    %v3225 = vunpack.c.l.b16 %v2574
    %v3226 = vunpack.c.h.b16 %v2574
    %v3227 = vunpack.c.l.b16 %v2575
    %v3228 = vunpack.c.h.b16 %v2575
    %v3229 = vunpack.c.l.b16 %v2576
    %v3230 = vunpack.c.h.b16 %v2576
    %v3231 = vunpack.c.l.b16 %v2577
    %v3232 = vunpack.c.h.b16 %v2577
    %v3233 = vunpack.c.l.b16 %v2578
    %v3234 = vunpack.c.h.b16 %v2578
    %v3235 = vunpack.c.l.b16 %v2579
    %v3236 = vunpack.c.h.b16 %v2579
    %v3237 = vunpack.c.l.b16 %v2580
    %v3238 = vunpack.c.h.b16 %v2580
    %v3239 = vunpack.c.l.b16 %v2581
    %v3240 = vunpack.c.h.b16 %v2581
    %v3241 = vunpack.c.l.b16 %v2582
    %v3242 = vunpack.c.h.b16 %v2582
    %v3243 = vunpack.c.l.b16 %v2583
    %v3244 = vunpack.c.h.b16 %v2583
    %v3245 = vunpack.c.l.b16 %v2584
    %v3246 = vunpack.c.h.b16 %v2584
    %v3247 = vunpack.c.l.b16 %v2585
    %v3248 = vunpack.c.h.b16 %v2585
    %v3249 = vunpack.c.l.b16 %v2586
    %v3250 = vunpack.c.h.b16 %v2586
    %v3251 = vunpack.c.l.b16 %v2587
    %v3252 = vunpack.c.h.b16 %v2587
    %v3253 = vunpack.c.l.b16 %v2588
    %v3254 = vunpack.c.h.b16 %v2588
    %v3255 = vunpack.c.l.b16 %v2589
    %v3256 = vunpack.c.h.b16 %v2589
    %v3257 = vunpack.c.l.b16 %v2590
    %v3258 = vunpack.c.h.b16 %v2590
    %v3259 = vunpack.c.l.b16 %v2591
    %v3260 = vunpack.c.h.b16 %v2591
    %v3261 = vunpack.c.l.b16 %v2592
    %v3262 = vunpack.c.h.b16 %v2592
    %v3263 = vunpack.c.l.b16 %v2593
    %v3264 = vunpack.c.h.b16 %v2593
    %v3265 = vunpack.c.l.b16 %v2594
    %v3266 = vunpack.c.h.b16 %v2594
    %v3267 = vunpack.c.l.b16 %v2595
    %v3268 = vunpack.c.h.b16 %v2595
    %v3269 = vunpack.c.l.b16 %v2596
    %v3270 = vunpack.c.h.b16 %v2596
    %v3271 = vunpack.c.l.b16 %v2597
    %v3272 = vunpack.c.h.b16 %v2597
    %v3273 = vunpack.c.l.b16 %v2598
    %v3274 = vunpack.c.h.b16 %v2598
    %v3275 = vunpack.c.l.b16 %v2599
    %v3276 = vunpack.c.h.b16 %v2599
    %v3277 = vunpack.c.l.b16 %v2600
    %v3278 = vunpack.c.h.b16 %v2600
    %v3279 = vunpack.c.l.b16 %v2601
    %v3280 = vunpack.c.h.b16 %v2601
    %v3281 = vunpack.c.l.b16 %v2602
    %v3282 = vunpack.c.h.b16 %v2602
    %v3283 = vunpack.c.l.b16 %v2603
    %v3284 = vunpack.c.h.b16 %v2603
    %v3285 = vunpack.c.l.b16 %v2604
    %v3286 = vunpack.c.h.b16 %v2604
    %v3287 = vunpack.c.l.b16 %v2605
    %v3288 = vunpack.c.h.b16 %v2605
    %v3289 = vunpack.c.l.b16 %v2606
    %v3290 = vunpack.c.h.b16 %v2606
    %v3291 = vunpack.c.l.b16 %v2607
    %v3292 = vunpack.c.h.b16 %v2607
    %v3293 = vunpack.c.l.b16 %v2608
    %v3294 = vunpack.c.h.b16 %v2608
    %v3295 = vunpack.c.l.b16 %v2609
    %v3296 = vunpack.c.h.b16 %v2609
    %v3297 = vunpack.c.l.b16 %v2610
    %v3298 = vunpack.c.h.b16 %v2610
    %v3299 = vunpack.c.l.b16 %v2611
    %v3300 = vunpack.c.h.b16 %v2611
    %v3301 = vunpack.c.l.b16 %v2612
    %v3302 = vunpack.c.h.b16 %v2612
    %v3303 = vunpack.c.l.b16 %v2613
    %v3304 = vunpack.c.h.b16 %v2613
    %v3305 = vunpack.c.l.b16 %v2614
    %v3306 = vunpack.c.h.b16 %v2614
    %v3307 = vunpack.c.l.b16 %v2615
    %v3308 = vunpack.c.h.b16 %v2615
    %v3309 = vunpack.c.l.b16 %v2616
    %v3310 = vunpack.c.h.b16 %v2616
    %v3311 = vunpack.c.l.b16 %v2617
    %v3312 = vunpack.c.h.b16 %v2617
    %v3313 = vunpack.c.l.b16 %v2618
    %v3314 = vunpack.c.h.b16 %v2618
    %v3315 = vunpack.c.l.b16 %v2619
    %v3316 = vunpack.c.h.b16 %v2619
    %v3317 = vunpack.c.l.b16 %v2620
    %v3318 = vunpack.c.h.b16 %v2620
    %v3319 = vunpack.c.l.b16 %v2621
    %v3320 = vunpack.c.h.b16 %v2621
    %v3321 = vunpack.c.l.b16 %v2622
    %v3322 = vunpack.c.h.b16 %v2622
    %v3323 = vunpack.c.l.b16 %v2623
    %v3324 = vunpack.c.h.b16 %v2623
    %v3325 = vunpack.c.l.b16 %v2624
    %v3326 = vunpack.c.h.b16 %v2624
    %v3327 = vunpack.c.l.b16 %v2625
    %v3328 = vunpack.c.h.b16 %v2625
    %v3329 = vunpack.c.l.b16 %v2626
    %v3330 = vunpack.c.h.b16 %v2626
    %v3331 = vunpack.c.l.b16 %v2627
    %v3332 = vunpack.c.h.b16 %v2627
    %v3333 = vunpack.c.l.b16 %v2628
    %v3334 = vunpack.c.h.b16 %v2628
    %v3335 = vunpack.c.l.b16 %v2629
    %v3336 = vunpack.c.h.b16 %v2629
    %v3337 = vunpack.c.l.b16 %v2630
    %v3338 = vunpack.c.h.b16 %v2630
    %v3339 = vunpack.c.l.b16 %v2631
    %v3340 = vunpack.c.h.b16 %v2631
    %v3341 = vunpack.c.l.b16 %v2632
    %v3342 = vunpack.c.h.b16 %v2632
    %v3343 = vunpack.c.l.b16 %v2633
    %v3344 = vunpack.c.h.b16 %v2633
    %v3345 = vunpack.c.l.b16 %v2634
    %v3346 = vunpack.c.h.b16 %v2634
    %v3347 = vunpack.c.l.b16 %v2635
    %v3348 = vunpack.c.h.b16 %v2635
    %v3349 = vunpack.c.l.b16 %v2636
    %v3350 = vunpack.c.h.b16 %v2636
    %v3351 = vunpack.c.l.b16 %v2637
    %v3352 = vunpack.c.h.b16 %v2637
    %v3353 = vunpack.c.l.b16 %v2638
    %v3354 = vunpack.c.h.b16 %v2638
    %v3355 = vunpack.c.l.b16 %v2639
    %v3356 = vunpack.c.h.b16 %v2639
    %v3357 = vunpack.c.l.b16 %v2640
    %v3358 = vunpack.c.h.b16 %v2640
    %v3359 = vunpack.c.l.b16 %v2641
    %v3360 = vunpack.c.h.b16 %v2641
    %v3361 = vunpack.c.l.b16 %v2642
    %v3362 = vunpack.c.h.b16 %v2642
    %v3363 = vunpack.c.l.b16 %v2643
    %v3364 = vunpack.c.h.b16 %v2643
    %v3365 = vunpack.c.l.b16 %v2644
    %v3366 = vunpack.c.h.b16 %v2644
    %v3367 = vunpack.c.l.b16 %v2645
    %v3368 = vunpack.c.h.b16 %v2645
    %v3369 = vunpack.c.l.b16 %v2646
    %v3370 = vunpack.c.h.b16 %v2646
    %v3371 = vunpack.c.l.b16 %v2647
    %v3372 = vunpack.c.h.b16 %v2647
    %v3373 = vunpack.c.l.b16 %v2648
    %v3374 = vunpack.c.h.b16 %v2648
    %v3375 = vunpack.c.l.b16 %v2649
    %v3376 = vunpack.c.h.b16 %v2649
    %v3377 = vunpack.c.l.b16 %v2650
    %v3378 = vunpack.c.h.b16 %v2650
    %v3379 = vunpack.c.l.b16 %v2651
    %v3380 = vunpack.c.h.b16 %v2651
    %v3381 = vunpack.c.l.b16 %v2652
    %v3382 = vunpack.c.h.b16 %v2652
    %v3383 = vunpack.c.l.b16 %v2653
    %v3384 = vunpack.c.h.b16 %v2653
    %v3385 = vunpack.c.l.b16 %v2654
    %v3386 = vunpack.c.h.b16 %v2654
    %v3387 = vunpack.c.l.b16 %v2655
    %v3388 = vunpack.c.h.b16 %v2655
    %v3389 = vunpack.c.l.b16 %v2656
    %v3390 = vunpack.c.h.b16 %v2656
    %v3391 = vunpack.c.l.b16 %v2657
    %v3392 = vunpack.c.h.b16 %v2657
    %v3393 = vunpack.c.l.b16 %v2658
    %v3394 = vunpack.c.h.b16 %v2658
    %v3395 = vunpack.c.l.b16 %v2659
    %v3396 = vunpack.c.h.b16 %v2659
    %v3397 = vunpack.c.l.b16 %v2660
    %v3398 = vunpack.c.h.b16 %v2660
    %v3399 = vunpack.c.l.b16 %v2661
    %v3400 = vunpack.c.h.b16 %v2661
    %v3401 = vunpack.c.l.b16 %v2662
    %v3402 = vunpack.c.h.b16 %v2662
    %v3403 = vunpack.c.l.b16 %v2663
    %v3404 = vunpack.c.h.b16 %v2663
    %v3405 = vunpack.c.l.b16 %v2664
    %v3406 = vunpack.c.h.b16 %v2664
    %v3407 = vunpack.c.l.b16 %v2665
    %v3408 = vunpack.c.h.b16 %v2665
    %v3409 = vunpack.c.l.b16 %v2666
    %v3410 = vunpack.c.h.b16 %v2666
    %v3411 = vunpack.c.l.b16 %v2667
    %v3412 = vunpack.c.h.b16 %v2667
    %v3413 = vunpack.c.l.b16 %v2668
    %v3414 = vunpack.c.h.b16 %v2668
    %v3415 = vunpack.c.l.b16 %v2669
    %v3416 = vunpack.c.h.b16 %v2669
    %v3417 = vunpack.c.l.b16 %v2670
    %v3418 = vunpack.c.h.b16 %v2670
    %v3419 = vunpack.c.l.b16 %v2671
    %v3420 = vunpack.c.h.b16 %v2671
    %v3421 = vunpack.c.l.b16 %v2672
    %v3422 = vunpack.c.h.b16 %v2672
    %v3423 = vunpack.c.l.b16 %v2673
    %v3424 = vunpack.c.h.b16 %v2673
    %v3425 = vunpack.c.l.b16 %v2674
    %v3426 = vunpack.c.h.b16 %v2674
    %v3427 = vunpack.c.l.b16 %v2675
    %v3428 = vunpack.c.h.b16 %v2675
    %v3429 = vunpack.c.l.b16 %v2676
    %v3430 = vunpack.c.h.b16 %v2676
    %v3431 = vunpack.c.l.b16 %v2677
    %v3432 = vunpack.c.h.b16 %v2677
    %v3433 = vunpack.c.l.b16 %v2678
    %v3434 = vunpack.c.h.b16 %v2678
    %v3435 = vunpack.c.l.b16 %v2679
    %v3436 = vunpack.c.h.b16 %v2679
    %v3437 = vunpack.c.l.b16 %v2680
    %v3438 = vunpack.c.h.b16 %v2680
    %v3439 = vunpack.c.l.b16 %v2681
    %v3440 = vunpack.c.h.b16 %v2681
    %v3441 = vunpack.c.l.b16 %v2682
    %v3442 = vunpack.c.h.b16 %v2682
    %v3443 = vunpack.c.l.b16 %v2683
    %v3444 = vunpack.c.h.b16 %v2683
    %v3445 = vunpack.c.l.b16 %v2684
    %v3446 = vunpack.c.h.b16 %v2684
    %v3447 = vunpack.c.l.b16 %v2685
    %v3448 = vunpack.c.h.b16 %v2685
    %v3449 = vunpack.c.l.b16 %v2686
    %v3450 = vunpack.c.h.b16 %v2686
    %v3451 = vunpack.c.l.b16 %v2687
    %v3452 = vunpack.c.h.b16 %v2687
    %v3453 = vunpack.c.l.b16 %v2688
    %v3454 = vunpack.c.h.b16 %v2688
    %v3455 = vunpack.c.l.b16 %v2689
    %v3456 = vunpack.c.h.b16 %v2689
    %v3457 = vunpack.c.l.b16 %v2690
    %v3458 = vunpack.c.h.b16 %v2690
    %v3459 = vunpack.c.l.b16 %v2691
    %v3460 = vunpack.c.h.b16 %v2691
    %v3461 = vunpack.c.l.b16 %v2692
    %v3462 = vunpack.c.h.b16 %v2692
    %v3463 = vunpack.c.l.b16 %v2693
    %v3464 = vunpack.c.h.b16 %v2693
    %v3465 = vunpack.c.l.b16 %v2694
    %v3466 = vunpack.c.h.b16 %v2694
    %v3467 = vunpack.c.l.b16 %v2695
    %v3468 = vunpack.c.h.b16 %v2695
    %v3469 = vunpack.c.l.b16 %v2696
    %v3470 = vunpack.c.h.b16 %v2696
    %v3471 = vunpack.c.l.b16 %v2697
    %v3472 = vunpack.c.h.b16 %v2697
    %v3473 = vunpack.c.l.b16 %v2698
    %v3474 = vunpack.c.h.b16 %v2698
    %v3475 = vunpack.c.l.b16 %v2699
    %v3476 = vunpack.c.h.b16 %v2699
    %v3477 = vunpack.c.l.b16 %v2700
    %v3478 = vunpack.c.h.b16 %v2700
    %v3479 = vunpack.c.l.b16 %v2701
    %v3480 = vunpack.c.h.b16 %v2701
    %v3481 = vunpack.c.l.b16 %v2702
    %v3482 = vunpack.c.h.b16 %v2702
    %v3483 = vunpack.c.l.b16 %v2703
    %v3484 = vunpack.c.h.b16 %v2703
    %v3485 = vunpack.c.l.b16 %v2704
    %v3486 = vunpack.c.h.b16 %v2704
    %v3487 = vunpack.c.l.b16 %v2705
    %v3488 = vunpack.c.h.b16 %v2705
    %v3489 = vunpack.c.l.b16 %v2706
    %v3490 = vunpack.c.h.b16 %v2706
    %v3491 = vunpack.c.l.b16 %v2707
    %v3492 = vunpack.c.h.b16 %v2707
    %v3493 = vunpack.c.l.b16 %v2708
    %v3494 = vunpack.c.h.b16 %v2708
    %v3495 = vunpack.c.l.b16 %v2709
    %v3496 = vunpack.c.h.b16 %v2709
    %v3497 = vunpack.c.l.b16 %v2710
    %v3498 = vunpack.c.h.b16 %v2710
    %v3499 = vunpack.c.l.b16 %v2711
    %v3500 = vunpack.c.h.b16 %v2711
    %v3501 = vpack.c.b16 %v2993, %v2989
    %v3502 = vpack.c.b16 %v2994, %v2990
    %v3503 = vpack.c.b16 %v2995, %v2991
    %v3504 = vpack.c.b16 %v2996, %v2992
    %v3505 = vpack.c.b16 %v3001, %v2997
    %v3506 = vpack.c.b16 %v3002, %v2998
    %v3507 = vpack.c.b16 %v3003, %v2999
    %v3508 = vpack.c.b16 %v3004, %v3000
    %v3509 = vpack.c.b16 %v3009, %v3005
    %v3510 = vpack.c.b16 %v3010, %v3006
    %v3511 = vpack.c.b16 %v3011, %v3007
    %v3512 = vpack.c.b16 %v3012, %v3008
    %v3513 = vpack.c.b16 %v3017, %v3013
    %v3514 = vpack.c.b16 %v3018, %v3014
    %v3515 = vpack.c.b16 %v3019, %v3015
    %v3516 = vpack.c.b16 %v3020, %v3016
    %v3517 = vpack.c.b16 %v3025, %v3021
    %v3518 = vpack.c.b16 %v3026, %v3022
    %v3519 = vpack.c.b16 %v3027, %v3023
    %v3520 = vpack.c.b16 %v3028, %v3024
    %v3521 = vpack.c.b16 %v3033, %v3029
    %v3522 = vpack.c.b16 %v3034, %v3030
    %v3523 = vpack.c.b16 %v3035, %v3031
    %v3524 = vpack.c.b16 %v3036, %v3032
    %v3525 = vpack.c.b16 %v3041, %v3037
    %v3526 = vpack.c.b16 %v3042, %v3038
    %v3527 = vpack.c.b16 %v3043, %v3039
    %v3528 = vpack.c.b16 %v3044, %v3040
    %v3529 = vpack.c.b16 %v3049, %v3045
    %v3530 = vpack.c.b16 %v3050, %v3046
    %v3531 = vpack.c.b16 %v3051, %v3047
    %v3532 = vpack.c.b16 %v3052, %v3048
    %v3533 = vpack.c.b16 %v3057, %v3053
    %v3534 = vpack.c.b16 %v3058, %v3054
    %v3535 = vpack.c.b16 %v3059, %v3055
    %v3536 = vpack.c.b16 %v3060, %v3056
    %v3537 = vpack.c.b16 %v3065, %v3061
    %v3538 = vpack.c.b16 %v3066, %v3062
    %v3539 = vpack.c.b16 %v3067, %v3063
    %v3540 = vpack.c.b16 %v3068, %v3064
    %v3541 = vpack.c.b16 %v3073, %v3069
    %v3542 = vpack.c.b16 %v3074, %v3070
    %v3543 = vpack.c.b16 %v3075, %v3071
    %v3544 = vpack.c.b16 %v3076, %v3072
    %v3545 = vpack.c.b16 %v3081, %v3077
    %v3546 = vpack.c.b16 %v3082, %v3078
    %v3547 = vpack.c.b16 %v3083, %v3079
    %v3548 = vpack.c.b16 %v3084, %v3080
    %v3549 = vpack.c.b16 %v3089, %v3085
    %v3550 = vpack.c.b16 %v3090, %v3086
    %v3551 = vpack.c.b16 %v3091, %v3087
    %v3552 = vpack.c.b16 %v3092, %v3088
    %v3553 = vpack.c.b16 %v3097, %v3093
    %v3554 = vpack.c.b16 %v3098, %v3094
    %v3555 = vpack.c.b16 %v3099, %v3095
    %v3556 = vpack.c.b16 %v3100, %v3096
    %v3557 = vpack.c.b16 %v3105, %v3101
    %v3558 = vpack.c.b16 %v3106, %v3102
    %v3559 = vpack.c.b16 %v3107, %v3103
    %v3560 = vpack.c.b16 %v3108, %v3104
    %v3561 = vpack.c.b16 %v3113, %v3109
    %v3562 = vpack.c.b16 %v3114, %v3110
    %v3563 = vpack.c.b16 %v3115, %v3111
    %v3564 = vpack.c.b16 %v3116, %v3112
    %v3565 = vpack.c.b16 %v3121, %v3117
    %v3566 = vpack.c.b16 %v3122, %v3118
    %v3567 = vpack.c.b16 %v3123, %v3119
    %v3568 = vpack.c.b16 %v3124, %v3120
    %v3569 = vpack.c.b16 %v3129, %v3125
    %v3570 = vpack.c.b16 %v3130, %v3126
    %v3571 = vpack.c.b16 %v3131, %v3127
    %v3572 = vpack.c.b16 %v3132, %v3128
    %v3573 = vpack.c.b16 %v3137, %v3133
    %v3574 = vpack.c.b16 %v3138, %v3134
    %v3575 = vpack.c.b16 %v3139, %v3135
    %v3576 = vpack.c.b16 %v3140, %v3136
    %v3577 = vpack.c.b16 %v3145, %v3141
    %v3578 = vpack.c.b16 %v3146, %v3142
    %v3579 = vpack.c.b16 %v3147, %v3143
    %v3580 = vpack.c.b16 %v3148, %v3144
    %v3581 = vpack.c.b16 %v3153, %v3149
    %v3582 = vpack.c.b16 %v3154, %v3150
    %v3583 = vpack.c.b16 %v3155, %v3151
    %v3584 = vpack.c.b16 %v3156, %v3152
    %v3585 = vpack.c.b16 %v3161, %v3157
    %v3586 = vpack.c.b16 %v3162, %v3158
    %v3587 = vpack.c.b16 %v3163, %v3159
    %v3588 = vpack.c.b16 %v3164, %v3160
    %v3589 = vpack.c.b16 %v3169, %v3165
    %v3590 = vpack.c.b16 %v3170, %v3166
    %v3591 = vpack.c.b16 %v3171, %v3167
    %v3592 = vpack.c.b16 %v3172, %v3168
    %v3593 = vpack.c.b16 %v3177, %v3173
    %v3594 = vpack.c.b16 %v3178, %v3174
    %v3595 = vpack.c.b16 %v3179, %v3175
    %v3596 = vpack.c.b16 %v3180, %v3176
    %v3597 = vpack.c.b16 %v3185, %v3181
    %v3598 = vpack.c.b16 %v3186, %v3182
    %v3599 = vpack.c.b16 %v3187, %v3183
    %v3600 = vpack.c.b16 %v3188, %v3184
    %v3601 = vpack.c.b16 %v3193, %v3189
    %v3602 = vpack.c.b16 %v3194, %v3190
    %v3603 = vpack.c.b16 %v3195, %v3191
    %v3604 = vpack.c.b16 %v3196, %v3192
    %v3605 = vpack.c.b16 %v3201, %v3197
    %v3606 = vpack.c.b16 %v3202, %v3198
    %v3607 = vpack.c.b16 %v3203, %v3199
    %v3608 = vpack.c.b16 %v3204, %v3200
    %v3609 = vpack.c.b16 %v3209, %v3205
    %v3610 = vpack.c.b16 %v3210, %v3206
    %v3611 = vpack.c.b16 %v3211, %v3207
    %v3612 = vpack.c.b16 %v3212, %v3208
    %v3613 = vpack.c.b16 %v3217, %v3213
    %v3614 = vpack.c.b16 %v3218, %v3214
    %v3615 = vpack.c.b16 %v3219, %v3215
    %v3616 = vpack.c.b16 %v3220, %v3216
    %v3617 = vpack.c.b16 %v3225, %v3221
    %v3618 = vpack.c.b16 %v3226, %v3222
    %v3619 = vpack.c.b16 %v3227, %v3223
    %v3620 = vpack.c.b16 %v3228, %v3224
    %v3621 = vpack.c.b16 %v3233, %v3229
    %v3622 = vpack.c.b16 %v3234, %v3230
    %v3623 = vpack.c.b16 %v3235, %v3231
    %v3624 = vpack.c.b16 %v3236, %v3232
    %v3625 = vpack.c.b16 %v3241, %v3237
    %v3626 = vpack.c.b16 %v3242, %v3238
    %v3627 = vpack.c.b16 %v3243, %v3239
    %v3628 = vpack.c.b16 %v3244, %v3240
    %v3629 = vpack.c.b16 %v3249, %v3245
    %v3630 = vpack.c.b16 %v3250, %v3246
    %v3631 = vpack.c.b16 %v3251, %v3247
    %v3632 = vpack.c.b16 %v3252, %v3248
    %v3633 = vpack.c.b16 %v3257, %v3253
    %v3634 = vpack.c.b16 %v3258, %v3254
    %v3635 = vpack.c.b16 %v3259, %v3255
    %v3636 = vpack.c.b16 %v3260, %v3256
    %v3637 = vpack.c.b16 %v3265, %v3261
    %v3638 = vpack.c.b16 %v3266, %v3262
    %v3639 = vpack.c.b16 %v3267, %v3263
    %v3640 = vpack.c.b16 %v3268, %v3264
    %v3641 = vpack.c.b16 %v3273, %v3269
    %v3642 = vpack.c.b16 %v3274, %v3270
    %v3643 = vpack.c.b16 %v3275, %v3271
    %v3644 = vpack.c.b16 %v3276, %v3272
    %v3645 = vpack.c.b16 %v3281, %v3277
    %v3646 = vpack.c.b16 %v3282, %v3278
    %v3647 = vpack.c.b16 %v3283, %v3279
    %v3648 = vpack.c.b16 %v3284, %v3280
    %v3649 = vpack.c.b16 %v3289, %v3285
    %v3650 = vpack.c.b16 %v3290, %v3286
    %v3651 = vpack.c.b16 %v3291, %v3287
    %v3652 = vpack.c.b16 %v3292, %v3288
    %v3653 = vpack.c.b16 %v3297, %v3293
    %v3654 = vpack.c.b16 %v3298, %v3294
    %v3655 = vpack.c.b16 %v3299, %v3295
    %v3656 = vpack.c.b16 %v3300, %v3296
    %v3657 = vpack.c.b16 %v3305, %v3301
    %v3658 = vpack.c.b16 %v3306, %v3302
    %v3659 = vpack.c.b16 %v3307, %v3303
    %v3660 = vpack.c.b16 %v3308, %v3304
    %v3661 = vpack.c.b16 %v3313, %v3309
    %v3662 = vpack.c.b16 %v3314, %v3310
    %v3663 = vpack.c.b16 %v3315, %v3311
    %v3664 = vpack.c.b16 %v3316, %v3312
    %v3665 = vpack.c.b16 %v3321, %v3317
    %v3666 = vpack.c.b16 %v3322, %v3318
    %v3667 = vpack.c.b16 %v3323, %v3319
    %v3668 = vpack.c.b16 %v3324, %v3320
    %v3669 = vpack.c.b16 %v3329, %v3325
    %v3670 = vpack.c.b16 %v3330, %v3326
    %v3671 = vpack.c.b16 %v3331, %v3327
    %v3672 = vpack.c.b16 %v3332, %v3328
    %v3673 = vpack.c.b16 %v3337, %v3333
    %v3674 = vpack.c.b16 %v3338, %v3334
    %v3675 = vpack.c.b16 %v3339, %v3335
    %v3676 = vpack.c.b16 %v3340, %v3336
    %v3677 = vpack.c.b16 %v3345, %v3341
    %v3678 = vpack.c.b16 %v3346, %v3342
    %v3679 = vpack.c.b16 %v3347, %v3343
    %v3680 = vpack.c.b16 %v3348, %v3344
    %v3681 = vpack.c.b16 %v3353, %v3349
    %v3682 = vpack.c.b16 %v3354, %v3350
    %v3683 = vpack.c.b16 %v3355, %v3351
    %v3684 = vpack.c.b16 %v3356, %v3352
    %v3685 = vpack.c.b16 %v3361, %v3357
    %v3686 = vpack.c.b16 %v3362, %v3358
    %v3687 = vpack.c.b16 %v3363, %v3359
    %v3688 = vpack.c.b16 %v3364, %v3360
    %v3689 = vpack.c.b16 %v3369, %v3365
    %v3690 = vpack.c.b16 %v3370, %v3366
    %v3691 = vpack.c.b16 %v3371, %v3367
    %v3692 = vpack.c.b16 %v3372, %v3368
    %v3693 = vpack.c.b16 %v3377, %v3373
    %v3694 = vpack.c.b16 %v3378, %v3374
    %v3695 = vpack.c.b16 %v3379, %v3375
    %v3696 = vpack.c.b16 %v3380, %v3376
    %v3697 = vpack.c.b16 %v3385, %v3381
    %v3698 = vpack.c.b16 %v3386, %v3382
    %v3699 = vpack.c.b16 %v3387, %v3383
    %v3700 = vpack.c.b16 %v3388, %v3384
    %v3701 = vpack.c.b16 %v3393, %v3389
    %v3702 = vpack.c.b16 %v3394, %v3390
    %v3703 = vpack.c.b16 %v3395, %v3391
    %v3704 = vpack.c.b16 %v3396, %v3392
    %v3705 = vpack.c.b16 %v3401, %v3397
    %v3706 = vpack.c.b16 %v3402, %v3398
    %v3707 = vpack.c.b16 %v3403, %v3399
    %v3708 = vpack.c.b16 %v3404, %v3400
    %v3709 = vpack.c.b16 %v3409, %v3405
    %v3710 = vpack.c.b16 %v3410, %v3406
    %v3711 = vpack.c.b16 %v3411, %v3407
    %v3712 = vpack.c.b16 %v3412, %v3408
    %v3713 = vpack.c.b16 %v3417, %v3413
    %v3714 = vpack.c.b16 %v3418, %v3414
    %v3715 = vpack.c.b16 %v3419, %v3415
    %v3716 = vpack.c.b16 %v3420, %v3416
    %v3717 = vpack.c.b16 %v3425, %v3421
    %v3718 = vpack.c.b16 %v3426, %v3422
    %v3719 = vpack.c.b16 %v3427, %v3423
    %v3720 = vpack.c.b16 %v3428, %v3424
    %v3721 = vpack.c.b16 %v3433, %v3429
    %v3722 = vpack.c.b16 %v3434, %v3430
    %v3723 = vpack.c.b16 %v3435, %v3431
    %v3724 = vpack.c.b16 %v3436, %v3432
    %v3725 = vpack.c.b16 %v3441, %v3437
    %v3726 = vpack.c.b16 %v3442, %v3438
    %v3727 = vpack.c.b16 %v3443, %v3439
    %v3728 = vpack.c.b16 %v3444, %v3440
    %v3729 = vpack.c.b16 %v3449, %v3445
    %v3730 = vpack.c.b16 %v3450, %v3446
    %v3731 = vpack.c.b16 %v3451, %v3447
    %v3732 = vpack.c.b16 %v3452, %v3448
    %v3733 = vpack.c.b16 %v3457, %v3453
    %v3734 = vpack.c.b16 %v3458, %v3454
    %v3735 = vpack.c.b16 %v3459, %v3455
    %v3736 = vpack.c.b16 %v3460, %v3456
    %v3737 = vpack.c.b16 %v3465, %v3461
    %v3738 = vpack.c.b16 %v3466, %v3462
    %v3739 = vpack.c.b16 %v3467, %v3463
    %v3740 = vpack.c.b16 %v3468, %v3464
    %v3741 = vpack.c.b16 %v3473, %v3469
    %v3742 = vpack.c.b16 %v3474, %v3470
    %v3743 = vpack.c.b16 %v3475, %v3471
    %v3744 = vpack.c.b16 %v3476, %v3472
    %v3745 = vpack.c.b16 %v3481, %v3477
    %v3746 = vpack.c.b16 %v3482, %v3478
    %v3747 = vpack.c.b16 %v3483, %v3479
    %v3748 = vpack.c.b16 %v3484, %v3480
    %v3749 = vpack.c.b16 %v3489, %v3485
    %v3750 = vpack.c.b16 %v3490, %v3486
    %v3751 = vpack.c.b16 %v3491, %v3487
    %v3752 = vpack.c.b16 %v3492, %v3488
    %v3753 = vpack.c.b16 %v3497, %v3493
    %v3754 = vpack.c.b16 %v3498, %v3494
    %v3755 = vpack.c.b16 %v3499, %v3495
    %v3756 = vpack.c.b16 %v3500, %v3496
    %4013 = vmatprep.subr.bf16.mxu0 %v3502
    %4014 = vmatpush1.bf16.msra.mxu0 %v3501
    %4015 = vmatprep.subr.bf16.mxu0 %v3506
    %4016 = vmatpush1.bf16.msra.mxu0 %v3505
    %4017 = vmatprep.subr.bf16.mxu0 %v3510
    %4018 = vmatpush1.bf16.msra.mxu0 %v3509
    %4019 = vmatprep.subr.bf16.mxu0 %v3514
    %4020 = vmatpush1.bf16.msra.mxu0 %v3513
    %4021 = vmatprep.subr.bf16.mxu0 %v3518
    %4022 = vmatpush1.bf16.msra.mxu0 %v3517
    %4023 = vmatprep.subr.bf16.mxu0 %v3522
    %4024 = vmatpush1.bf16.msra.mxu0 %v3521
    %4025 = vmatprep.subr.bf16.mxu0 %v3526
    %4026 = vmatpush1.bf16.msra.mxu0 %v3525
    %4027 = vmatprep.subr.bf16.mxu0 %v3530
    %4028 = vmatpush1.bf16.msra.mxu0 %v3529
    %4029 = vmatprep.subr.bf16.mxu0 %v3534
    %4030 = vmatpush1.bf16.msra.mxu0 %v3533
    %4031 = vmatprep.subr.bf16.mxu0 %v3538
    %4032 = vmatpush1.bf16.msra.mxu0 %v3537
    %4033 = vmatprep.subr.bf16.mxu0 %v3542
    %4034 = vmatpush1.bf16.msra.mxu0 %v3541
    %4035 = vmatprep.subr.bf16.mxu0 %v3546
    %4036 = vmatpush1.bf16.msra.mxu0 %v3545
    %4037 = vmatprep.subr.bf16.mxu0 %v3550
    %4038 = vmatpush1.bf16.msra.mxu0 %v3549
    %4039 = vmatprep.subr.bf16.mxu0 %v3554
    %4040 = vmatpush1.bf16.msra.mxu0 %v3553
    %4041 = vmatprep.subr.bf16.mxu0 %v3558
    %4042 = vmatpush1.bf16.msra.mxu0 %v3557
    %4043 = vmatprep.subr.bf16.mxu0 %v3562
    %4044 = vmatpush1.bf16.msra.mxu0 %v3561
    %4045 = vmatprep.mubr.bf16.mxu0 %v2401
    %4046 = vmatmul.mubr.bf16.gmra.mrb[0].mxu0 %v2400
    %v4047 = vpop.f32.mrb[0].mxu0
    %v4048 = vadd.f32 %v2716, %v4047
    %v4049 = vpop.f32.mrb[0].mxu0
    %v4050 = vadd.f32 %v2720, %v4049
    %v4051 = vpop.f32.mrb[0].mxu0
    %v4052 = vadd.f32 %v2716, %v4051
    %v4053 = vpop.f32.mrb[0].mxu0
    %v4054 = vadd.f32 %v2720, %v4053
    %4055 = vmatprep.mubr.bf16.mxu0 %v2409
    %4056 = vmatmul.mubr.bf16.gmra.mrb[0].mxu0 %v2408
    %v4057 = vpop.f32.mrb[0].mxu0
    %v4058 = vadd.f32 %v2716, %v4057
    %v4059 = vpop.f32.mrb[0].mxu0
    %v4060 = vadd.f32 %v2720, %v4059
    %v4061 = vpop.f32.mrb[0].mxu0
    %v4062 = vadd.f32 %v2716, %v4061
    %v4063 = vpop.f32.mrb[0].mxu0
    %v4064 = vadd.f32 %v2720, %v4063
    %4065 = vmatprep.mubr.bf16.mxu0 %v2417
    %4066 = vmatmul.mubr.bf16.gmra.mrb[0].mxu0 %v2416
    %v4067 = vpop.f32.mrb[0].mxu0
    %v4068 = vadd.f32 %v2716, %v4067
    %v4069 = vpop.f32.mrb[0].mxu0
    %v4070 = vadd.f32 %v2720, %v4069
    %v4071 = vpop.f32.mrb[0].mxu0
    %v4072 = vadd.f32 %v2716, %v4071
    %v4073 = vpop.f32.mrb[0].mxu0
    %v4074 = vadd.f32 %v2720, %v4073
    %4075 = vmatprep.mubr.bf16.mxu0 %v2425
    %4076 = vmatmul.mubr.bf16.gmra.mrb[0].mxu0 %v2424
    %v4077 = vpop.f32.mrb[0].mxu0
    %v4078 = vadd.f32 %v2716, %v4077
    %v4079 = vpop.f32.mrb[0].mxu0
    %v4080 = vadd.f32 %v2720, %v4079
    %v4081 = vpop.f32.mrb[0].mxu0
    %v4082 = vadd.f32 %v2716, %v4081
    %v4083 = vpop.f32.mrb[0].mxu0
    %v4084 = vadd.f32 %v2720, %v4083
    %4085 = vmatprep.mubr.bf16.mxu0 %v2433
    %4086 = vmatmul.mubr.bf16.gmra.mrb[0].mxu0 %v2432
    %v4087 = vpop.f32.mrb[0].mxu0
    %v4088 = vadd.f32 %v2716, %v4087
    %v4089 = vpop.f32.mrb[0].mxu0
    %v4090 = vadd.f32 %v2720, %v4089
    %v4091 = vpop.f32.mrb[0].mxu0
    %v4092 = vadd.f32 %v2716, %v4091
    %v4093 = vpop.f32.mrb[0].mxu0
    %v4094 = vadd.f32 %v2720, %v4093
    %4095 = vmatprep.mubr.bf16.mxu0 %v2441
    %4096 = vmatmul.mubr.bf16.gmra.mrb[0].mxu0 %v2440
    %v4097 = vpop.f32.mrb[0].mxu0
    %v4098 = vadd.f32 %v2716, %v4097
    %v4099 = vpop.f32.mrb[0].mxu0
    %v4100 = vadd.f32 %v2720, %v4099
    %v4101 = vpop.f32.mrb[0].mxu0
    %v4102 = vadd.f32 %v2716, %v4101
    %v4103 = vpop.f32.mrb[0].mxu0
    %v4104 = vadd.f32 %v2720, %v4103
    %4105 = vmatprep.mubr.bf16.mxu0 %v2449
    %4106 = vmatmul.mubr.bf16.gmra.mrb[0].mxu0 %v2448
    %v4107 = vpop.f32.mrb[0].mxu0
    %v4108 = vadd.f32 %v2716, %v4107
    %v4109 = vpop.f32.mrb[0].mxu0
    %v4110 = vadd.f32 %v2720, %v4109
    %v4111 = vpop.f32.mrb[0].mxu0
    %v4112 = vpop.f32.mrb[0].mxu0
    %4113 = vdwg.mxu0
    %4114 = vmatprep.subr.bf16.mxu0 %v3566
    %4115 = vmatpush1.bf16.msra.mxu0 %v3565
    %4116 = vmatprep.subr.bf16.mxu0 %v3570
    %4117 = vmatpush1.bf16.msra.mxu0 %v3569
    %4118 = vmatprep.subr.bf16.mxu0 %v3574
    %4119 = vmatpush1.bf16.msra.mxu0 %v3573
    %4120 = vmatprep.subr.bf16.mxu0 %v3578
    %4121 = vmatpush1.bf16.msra.mxu0 %v3577
    %4122 = vmatprep.subr.bf16.mxu0 %v3582
    %4123 = vmatpush1.bf16.msra.mxu0 %v3581
    %4124 = vmatprep.subr.bf16.mxu0 %v3586
    %4125 = vmatpush1.bf16.msra.mxu0 %v3585
    %4126 = vmatprep.subr.bf16.mxu0 %v3590
    %4127 = vmatpush1.bf16.msra.mxu0 %v3589
    %4128 = vmatprep.subr.bf16.mxu0 %v3594
    %4129 = vmatpush1.bf16.msra.mxu0 %v3593
    %4130 = vmatprep.subr.bf16.mxu0 %v3598
    %4131 = vmatpush1.bf16.msra.mxu0 %v3597
    %4132 = vmatprep.subr.bf16.mxu0 %v3602
    %4133 = vmatpush1.bf16.msra.mxu0 %v3601
    %4134 = vmatprep.subr.bf16.mxu0 %v3606
    %4135 = vmatpush1.bf16.msra.mxu0 %v3605
    %4136 = vmatprep.subr.bf16.mxu0 %v3610
    %4137 = vmatpush1.bf16.msra.mxu0 %v3609
    %4138 = vmatprep.subr.bf16.mxu0 %v3614
    %4139 = vmatpush1.bf16.msra.mxu0 %v3613
    %4140 = vmatprep.subr.bf16.mxu0 %v3618
    %4141 = vmatpush1.bf16.msra.mxu0 %v3617
    %4142 = vmatprep.subr.bf16.mxu0 %v3622
    %4143 = vmatpush1.bf16.msra.mxu0 %v3621
    %4144 = vmatprep.subr.bf16.mxu0 %v3626
    %4145 = vmatpush1.bf16.msra.mxu0 %v3625
    %4146 = vmatprep.mubr.bf16.mxu0 %v2403
    %4147 = vmatmul.mubr.bf16.gmra.mrb[0].mxu0 %v2402
    %v4148 = vpop.f32.mrb[0].mxu0
    %v4149 = vadd.f32 %v4048, %v4148
    %v4150 = vpop.f32.mrb[0].mxu0
    %v4151 = vadd.f32 %v4050, %v4150
    %v4152 = vpop.f32.mrb[0].mxu0
    %v4153 = vadd.f32 %v4052, %v4152
    %v4154 = vpop.f32.mrb[0].mxu0
    %v4155 = vadd.f32 %v4054, %v4154
    %4156 = vmatprep.mubr.bf16.mxu0 %v2411
    %4157 = vmatmul.mubr.bf16.gmra.mrb[0].mxu0 %v2410
    %v4158 = vpop.f32.mrb[0].mxu0
    %v4159 = vadd.f32 %v4058, %v4158
    %v4160 = vpop.f32.mrb[0].mxu0
    %v4161 = vadd.f32 %v4060, %v4160
    %v4162 = vpop.f32.mrb[0].mxu0
    %v4163 = vadd.f32 %v4062, %v4162
    %v4164 = vpop.f32.mrb[0].mxu0
    %v4165 = vadd.f32 %v4064, %v4164
    %4166 = vmatprep.mubr.bf16.mxu0 %v2419
    %4167 = vmatmul.mubr.bf16.gmra.mrb[0].mxu0 %v2418
    %v4168 = vpop.f32.mrb[0].mxu0
    %v4169 = vadd.f32 %v4068, %v4168
    %v4170 = vpop.f32.mrb[0].mxu0
    %v4171 = vadd.f32 %v4070, %v4170
    %v4172 = vpop.f32.mrb[0].mxu0
    %v4173 = vadd.f32 %v4072, %v4172
    %v4174 = vpop.f32.mrb[0].mxu0
    %v4175 = vadd.f32 %v4074, %v4174
    %4176 = vmatprep.mubr.bf16.mxu0 %v2427
    %4177 = vmatmul.mubr.bf16.gmra.mrb[0].mxu0 %v2426
    %v4178 = vpop.f32.mrb[0].mxu0
    %v4179 = vadd.f32 %v4078, %v4178
    %v4180 = vpop.f32.mrb[0].mxu0
    %v4181 = vadd.f32 %v4080, %v4180
    %v4182 = vpop.f32.mrb[0].mxu0
    %v4183 = vadd.f32 %v4082, %v4182
    %v4184 = vpop.f32.mrb[0].mxu0
    %v4185 = vadd.f32 %v4084, %v4184
    %4186 = vmatprep.mubr.bf16.mxu0 %v2435
    %4187 = vmatmul.mubr.bf16.gmra.mrb[0].mxu0 %v2434
    %v4188 = vpop.f32.mrb[0].mxu0
    %v4189 = vadd.f32 %v4088, %v4188
    %v4190 = vpop.f32.mrb[0].mxu0
    %v4191 = vadd.f32 %v4090, %v4190
    %v4192 = vpop.f32.mrb[0].mxu0
    %v4193 = vadd.f32 %v4092, %v4192
    %v4194 = vpop.f32.mrb[0].mxu0
    %v4195 = vadd.f32 %v4094, %v4194
    %4196 = vmatprep.mubr.bf16.mxu0 %v2443
    %4197 = vmatmul.mubr.bf16.gmra.mrb[0].mxu0 %v2442
    %v4198 = vpop.f32.mrb[0].mxu0
    %v4199 = vadd.f32 %v4098, %v4198
    %v4200 = vpop.f32.mrb[0].mxu0
    %v4201 = vadd.f32 %v4100, %v4200
    %v4202 = vpop.f32.mrb[0].mxu0
    %v4203 = vadd.f32 %v4102, %v4202
    %v4204 = vpop.f32.mrb[0].mxu0
    %v4205 = vadd.f32 %v4104, %v4204
    %4206 = vmatprep.mubr.bf16.mxu0 %v2451
    %4207 = vmatmul.mubr.bf16.gmra.mrb[0].mxu0 %v2450
    %v4208 = vpop.f32.mrb[0].mxu0
    %v4209 = vadd.f32 %v4108, %v4208
    %v4210 = vpop.f32.mrb[0].mxu0
    %v4211 = vadd.f32 %v4110, %v4210
    %v4212 = vpop.f32.mrb[0].mxu0
    %v4213 = vpop.f32.mrb[0].mxu0
    %4214 = vdwg.mxu0
    %4215 = vmatprep.subr.bf16.mxu0 %v3630
    %4216 = vmatpush1.bf16.msra.mxu0 %v3629
    %4217 = vmatprep.subr.bf16.mxu0 %v3634
    %4218 = vmatpush1.bf16.msra.mxu0 %v3633
    %4219 = vmatprep.subr.bf16.mxu0 %v3638
    %4220 = vmatpush1.bf16.msra.mxu0 %v3637
    %4221 = vmatprep.subr.bf16.mxu0 %v3642
    %4222 = vmatpush1.bf16.msra.mxu0 %v3641
    %4223 = vmatprep.subr.bf16.mxu0 %v3646
    %4224 = vmatpush1.bf16.msra.mxu0 %v3645
    %4225 = vmatprep.subr.bf16.mxu0 %v3650
    %4226 = vmatpush1.bf16.msra.mxu0 %v3649
    %4227 = vmatprep.subr.bf16.mxu0 %v3654
    %4228 = vmatpush1.bf16.msra.mxu0 %v3653
    %4229 = vmatprep.subr.bf16.mxu0 %v3658
    %4230 = vmatpush1.bf16.msra.mxu0 %v3657
    %4231 = vmatprep.subr.bf16.mxu0 %v3662
    %4232 = vmatpush1.bf16.msra.mxu0 %v3661
    %4233 = vmatprep.subr.bf16.mxu0 %v3666
    %4234 = vmatpush1.bf16.msra.mxu0 %v3665
    %4235 = vmatprep.subr.bf16.mxu0 %v3670
    %4236 = vmatpush1.bf16.msra.mxu0 %v3669
    %4237 = vmatprep.subr.bf16.mxu0 %v3674
    %4238 = vmatpush1.bf16.msra.mxu0 %v3673
    %4239 = vmatprep.subr.bf16.mxu0 %v3678
    %4240 = vmatpush1.bf16.msra.mxu0 %v3677
    %4241 = vmatprep.subr.bf16.mxu0 %v3682
    %4242 = vmatpush1.bf16.msra.mxu0 %v3681
    %4243 = vmatprep.subr.bf16.mxu0 %v3686
    %4244 = vmatpush1.bf16.msra.mxu0 %v3685
    %4245 = vmatprep.subr.bf16.mxu0 %v3690
    %4246 = vmatpush1.bf16.msra.mxu0 %v3689
    %4247 = vmatprep.mubr.bf16.mxu0 %v2405
    %4248 = vmatmul.mubr.bf16.gmra.mrb[0].mxu0 %v2404
    %v4249 = vpop.f32.mrb[0].mxu0
    %v4250 = vadd.f32 %v4149, %v4249
    %v4251 = vpop.f32.mrb[0].mxu0
    %v4252 = vadd.f32 %v4151, %v4251
    %v4253 = vpop.f32.mrb[0].mxu0
    %v4254 = vadd.f32 %v4153, %v4253
    %v4255 = vpop.f32.mrb[0].mxu0
    %v4256 = vadd.f32 %v4155, %v4255
    %4257 = vmatprep.mubr.bf16.mxu0 %v2413
    %4258 = vmatmul.mubr.bf16.gmra.mrb[0].mxu0 %v2412
    %v4259 = vpop.f32.mrb[0].mxu0
    %v4260 = vadd.f32 %v4159, %v4259
    %v4261 = vpop.f32.mrb[0].mxu0
    %v4262 = vadd.f32 %v4161, %v4261
    %v4263 = vpop.f32.mrb[0].mxu0
    %v4264 = vadd.f32 %v4163, %v4263
    %v4265 = vpop.f32.mrb[0].mxu0
    %v4266 = vadd.f32 %v4165, %v4265
    %4267 = vmatprep.mubr.bf16.mxu0 %v2421
    %4268 = vmatmul.mubr.bf16.gmra.mrb[0].mxu0 %v2420
    %v4269 = vpop.f32.mrb[0].mxu0
    %v4270 = vadd.f32 %v4169, %v4269
    %v4271 = vpop.f32.mrb[0].mxu0
    %v4272 = vadd.f32 %v4171, %v4271
    %v4273 = vpop.f32.mrb[0].mxu0
    %v4274 = vadd.f32 %v4173, %v4273
    %v4275 = vpop.f32.mrb[0].mxu0
    %v4276 = vadd.f32 %v4175, %v4275
    %4277 = vmatprep.mubr.bf16.mxu0 %v2429
    %4278 = vmatmul.mubr.bf16.gmra.mrb[0].mxu0 %v2428
    %v4279 = vpop.f32.mrb[0].mxu0
    %v4280 = vadd.f32 %v4179, %v4279
    %v4281 = vpop.f32.mrb[0].mxu0
    %v4282 = vadd.f32 %v4181, %v4281
    %v4283 = vpop.f32.mrb[0].mxu0
    %v4284 = vadd.f32 %v4183, %v4283
    %v4285 = vpop.f32.mrb[0].mxu0
    %v4286 = vadd.f32 %v4185, %v4285
    %4287 = vmatprep.mubr.bf16.mxu0 %v2437
    %4288 = vmatmul.mubr.bf16.gmra.mrb[0].mxu0 %v2436
    %v4289 = vpop.f32.mrb[0].mxu0
    %v4290 = vadd.f32 %v4189, %v4289
    %v4291 = vpop.f32.mrb[0].mxu0
    %v4292 = vadd.f32 %v4191, %v4291
    %v4293 = vpop.f32.mrb[0].mxu0
    %v4294 = vadd.f32 %v4193, %v4293
    %v4295 = vpop.f32.mrb[0].mxu0
    %v4296 = vadd.f32 %v4195, %v4295
    %4297 = vmatprep.mubr.bf16.mxu0 %v2445
    %4298 = vmatmul.mubr.bf16.gmra.mrb[0].mxu0 %v2444
    %v4299 = vpop.f32.mrb[0].mxu0
    %v4300 = vadd.f32 %v4199, %v4299
    %v4301 = vpop.f32.mrb[0].mxu0
    %v4302 = vadd.f32 %v4201, %v4301
    %v4303 = vpop.f32.mrb[0].mxu0
    %v4304 = vadd.f32 %v4203, %v4303
    %v4305 = vpop.f32.mrb[0].mxu0
    %v4306 = vadd.f32 %v4205, %v4305
    %4307 = vmatprep.mubr.bf16.mxu0 %v2453
    %4308 = vmatmul.mubr.bf16.gmra.mrb[0].mxu0 %v2452
    %v4309 = vpop.f32.mrb[0].mxu0
    %v4310 = vadd.f32 %v4209, %v4309
    %v4311 = vpop.f32.mrb[0].mxu0
    %v4312 = vadd.f32 %v4211, %v4311
    %v4313 = vpop.f32.mrb[0].mxu0
    %v4314 = vpop.f32.mrb[0].mxu0
    %4315 = vdwg.mxu0
    %4316 = vmatprep.subr.bf16.mxu0 %v3694
    %4317 = vmatpush1.bf16.msra.mxu0 %v3693
    %4318 = vmatprep.subr.bf16.mxu0 %v3698
    %4319 = vmatpush1.bf16.msra.mxu0 %v3697
    %4320 = vmatprep.subr.bf16.mxu0 %v3702
    %4321 = vmatpush1.bf16.msra.mxu0 %v3701
    %4322 = vmatprep.subr.bf16.mxu0 %v3706
    %4323 = vmatpush1.bf16.msra.mxu0 %v3705
    %4324 = vmatprep.subr.bf16.mxu0 %v3710
    %4325 = vmatpush1.bf16.msra.mxu0 %v3709
    %4326 = vmatprep.subr.bf16.mxu0 %v3714
    %4327 = vmatpush1.bf16.msra.mxu0 %v3713
    %4328 = vmatprep.subr.bf16.mxu0 %v3718
    %4329 = vmatpush1.bf16.msra.mxu0 %v3717
    %4330 = vmatprep.subr.bf16.mxu0 %v3722
    %4331 = vmatpush1.bf16.msra.mxu0 %v3721
    %4332 = vmatprep.subr.bf16.mxu0 %v3726
    %4333 = vmatpush1.bf16.msra.mxu0 %v3725
    %4334 = vmatprep.subr.bf16.mxu0 %v3730
    %4335 = vmatpush1.bf16.msra.mxu0 %v3729
    %4336 = vmatprep.subr.bf16.mxu0 %v3734
    %4337 = vmatpush1.bf16.msra.mxu0 %v3733
    %4338 = vmatprep.subr.bf16.mxu0 %v3738
    %4339 = vmatpush1.bf16.msra.mxu0 %v3737
    %4340 = vmatprep.subr.bf16.mxu0 %v3742
    %4341 = vmatpush1.bf16.msra.mxu0 %v3741
    %4342 = vmatprep.subr.bf16.mxu0 %v3746
    %4343 = vmatpush1.bf16.msra.mxu0 %v3745
    %4344 = vmatprep.subr.bf16.mxu0 %v3750
    %4345 = vmatpush1.bf16.msra.mxu0 %v3749
    %4346 = vmatprep.subr.bf16.mxu0 %v3754
    %4347 = vmatpush1.bf16.msra.mxu0 %v3753
    %4348 = vmatprep.mubr.bf16.mxu0 %v2407
    %4349 = vmatmul.mubr.bf16.gmra.mrb[0].mxu0 %v2406
    %v4350 = vpop.f32.mrb[0].mxu0
    %v4351 = vadd.f32 %v4250, %v4350
    %v4352 = vpop.f32.mrb[0].mxu0
    %v4353 = vadd.f32 %v4252, %v4352
    %v4354 = vpop.f32.mrb[0].mxu0
    %v4355 = vadd.f32 %v4254, %v4354
    %v4356 = vpop.f32.mrb[0].mxu0
    %v4357 = vadd.f32 %v4256, %v4356
    %4358 = vmatprep.mubr.bf16.mxu0 %v2415
    %4359 = vmatmul.mubr.bf16.gmra.mrb[0].mxu0 %v2414
    %v4360 = vpop.f32.mrb[0].mxu0
    %v4361 = vadd.f32 %v4260, %v4360
    %v4362 = vpop.f32.mrb[0].mxu0
    %v4363 = vadd.f32 %v4262, %v4362
    %v4364 = vpop.f32.mrb[0].mxu0
    %v4365 = vadd.f32 %v4264, %v4364
    %v4366 = vpop.f32.mrb[0].mxu0
    %v4367 = vadd.f32 %v4266, %v4366
    %4368 = vmatprep.mubr.bf16.mxu0 %v2423
    %4369 = vmatmul.mubr.bf16.gmra.mrb[0].mxu0 %v2422
    %v4370 = vpop.f32.mrb[0].mxu0
    %v4371 = vadd.f32 %v4270, %v4370
    %v4372 = vpop.f32.mrb[0].mxu0
    %v4373 = vadd.f32 %v4272, %v4372
    %v4374 = vpop.f32.mrb[0].mxu0
    %v4375 = vadd.f32 %v4274, %v4374
    %v4376 = vpop.f32.mrb[0].mxu0
    %v4377 = vadd.f32 %v4276, %v4376
    %4378 = vmatprep.mubr.bf16.mxu0 %v2431
    %4379 = vmatmul.mubr.bf16.gmra.mrb[0].mxu0 %v2430
    %v4380 = vpop.f32.mrb[0].mxu0
    %v4381 = vadd.f32 %v4280, %v4380
    %v4382 = vpop.f32.mrb[0].mxu0
    %v4383 = vadd.f32 %v4282, %v4382
    %v4384 = vpop.f32.mrb[0].mxu0
    %v4385 = vadd.f32 %v4284, %v4384
    %v4386 = vpop.f32.mrb[0].mxu0
    %v4387 = vadd.f32 %v4286, %v4386
    %4388 = vmatprep.mubr.bf16.mxu0 %v2439
    %4389 = vmatmul.mubr.bf16.gmra.mrb[0].mxu0 %v2438
    %v4390 = vpop.f32.mrb[0].mxu0
    %v4391 = vadd.f32 %v4290, %v4390
    %v4392 = vpop.f32.mrb[0].mxu0
    %v4393 = vadd.f32 %v4292, %v4392
    %v4394 = vpop.f32.mrb[0].mxu0
    %v4395 = vadd.f32 %v4294, %v4394
    %v4396 = vpop.f32.mrb[0].mxu0
    %v4397 = vadd.f32 %v4296, %v4396
    %4398 = vmatprep.mubr.bf16.mxu0 %v2447
    %4399 = vmatmul.mubr.bf16.gmra.mrb[0].mxu0 %v2446
    %v4400 = vpop.f32.mrb[0].mxu0
    %v4401 = vadd.f32 %v4300, %v4400
    %v4402 = vpop.f32.mrb[0].mxu0
    %v4403 = vadd.f32 %v4302, %v4402
    %v4404 = vpop.f32.mrb[0].mxu0
    %v4405 = vadd.f32 %v4304, %v4404
    %v4406 = vpop.f32.mrb[0].mxu0
    %v4407 = vadd.f32 %v4306, %v4406
    %4408 = vmatprep.mubr.bf16.mxu0 %v2455
    %4409 = vmatmul.mubr.bf16.gmra.mrb[0].mxu0 %v2454
    %v4410 = vpop.f32.mrb[0].mxu0
    %v4411 = vadd.f32 %v4310, %v4410
    %v4412 = vpop.f32.mrb[0].mxu0
    %v4413 = vadd.f32 %v4312, %v4412
    %v4414 = vpop.f32.mrb[0].mxu0
    %v4415 = vpop.f32.mrb[0].mxu0
    %4416 = vdwg.mxu0
    %4417 = vmatprep.subr.bf16.mxu0 %v3504
    %4418 = vmatpush1.bf16.msra.mxu0 %v3503
    %4419 = vmatprep.subr.bf16.mxu0 %v3508
    %4420 = vmatpush1.bf16.msra.mxu0 %v3507
    %4421 = vmatprep.subr.bf16.mxu0 %v3512
    %4422 = vmatpush1.bf16.msra.mxu0 %v3511
    %4423 = vmatprep.subr.bf16.mxu0 %v3516
    %4424 = vmatpush1.bf16.msra.mxu0 %v3515
    %4425 = vmatprep.subr.bf16.mxu0 %v3520
    %4426 = vmatpush1.bf16.msra.mxu0 %v3519
    %4427 = vmatprep.subr.bf16.mxu0 %v3524
    %4428 = vmatpush1.bf16.msra.mxu0 %v3523
    %4429 = vmatprep.subr.bf16.mxu0 %v3528
    %4430 = vmatpush1.bf16.msra.mxu0 %v3527
    %4431 = vmatprep.subr.bf16.mxu0 %v3532
    %4432 = vmatpush1.bf16.msra.mxu0 %v3531
    %4433 = vmatprep.subr.bf16.mxu0 %v3536
    %4434 = vmatpush1.bf16.msra.mxu0 %v3535
    %4435 = vmatprep.subr.bf16.mxu0 %v3540
    %4436 = vmatpush1.bf16.msra.mxu0 %v3539
    %4437 = vmatprep.subr.bf16.mxu0 %v3544
    %4438 = vmatpush1.bf16.msra.mxu0 %v3543
    %4439 = vmatprep.subr.bf16.mxu0 %v3548
    %4440 = vmatpush1.bf16.msra.mxu0 %v3547
    %4441 = vmatprep.subr.bf16.mxu0 %v3552
    %4442 = vmatpush1.bf16.msra.mxu0 %v3551
    %4443 = vmatprep.subr.bf16.mxu0 %v3556
    %4444 = vmatpush1.bf16.msra.mxu0 %v3555
    %4445 = vmatprep.subr.bf16.mxu0 %v3560
    %4446 = vmatpush1.bf16.msra.mxu0 %v3559
    %4447 = vmatprep.subr.bf16.mxu0 %v3564
    %4448 = vmatpush1.bf16.msra.mxu0 %v3563
    %4449 = vmatprep.mubr.bf16.mxu0 %v2401
    %4450 = vmatmul.mubr.bf16.gmra.mrb[0].mxu0 %v2400
    %v4451 = vpop.f32.mrb[0].mxu0
    %v4452 = vadd.f32 %v2724, %v4451
    %v4453 = vpop.f32.mrb[0].mxu0
    %v4454 = vadd.f32 %v2728, %v4453
    %v4455 = vpop.f32.mrb[0].mxu0
    %v4456 = vadd.f32 %v2724, %v4455
    %v4457 = vpop.f32.mrb[0].mxu0
    %v4458 = vadd.f32 %v2728, %v4457
    %4459 = vmatprep.mubr.bf16.mxu0 %v2409
    %4460 = vmatmul.mubr.bf16.gmra.mrb[0].mxu0 %v2408
    %v4461 = vpop.f32.mrb[0].mxu0
    %v4462 = vadd.f32 %v2724, %v4461
    %v4463 = vpop.f32.mrb[0].mxu0
    %v4464 = vadd.f32 %v2728, %v4463
    %v4465 = vpop.f32.mrb[0].mxu0
    %v4466 = vadd.f32 %v2724, %v4465
    %v4467 = vpop.f32.mrb[0].mxu0
    %v4468 = vadd.f32 %v2728, %v4467
    %4469 = vmatprep.mubr.bf16.mxu0 %v2417
    %4470 = vmatmul.mubr.bf16.gmra.mrb[0].mxu0 %v2416
    %v4471 = vpop.f32.mrb[0].mxu0
    %v4472 = vadd.f32 %v2724, %v4471
    %v4473 = vpop.f32.mrb[0].mxu0
    %v4474 = vadd.f32 %v2728, %v4473
    %v4475 = vpop.f32.mrb[0].mxu0
    %v4476 = vadd.f32 %v2724, %v4475
    %v4477 = vpop.f32.mrb[0].mxu0
    %v4478 = vadd.f32 %v2728, %v4477
    %4479 = vmatprep.mubr.bf16.mxu0 %v2425
    %4480 = vmatmul.mubr.bf16.gmra.mrb[0].mxu0 %v2424
    %v4481 = vpop.f32.mrb[0].mxu0
    %v4482 = vadd.f32 %v2724, %v4481
    %v4483 = vpop.f32.mrb[0].mxu0
    %v4484 = vadd.f32 %v2728, %v4483
    %v4485 = vpop.f32.mrb[0].mxu0
    %v4486 = vadd.f32 %v2724, %v4485
    %v4487 = vpop.f32.mrb[0].mxu0
    %v4488 = vadd.f32 %v2728, %v4487
    %4489 = vmatprep.mubr.bf16.mxu0 %v2433
    %4490 = vmatmul.mubr.bf16.gmra.mrb[0].mxu0 %v2432
    %v4491 = vpop.f32.mrb[0].mxu0
    %v4492 = vadd.f32 %v2724, %v4491
    %v4493 = vpop.f32.mrb[0].mxu0
    %v4494 = vadd.f32 %v2728, %v4493
    %v4495 = vpop.f32.mrb[0].mxu0
    %v4496 = vadd.f32 %v2724, %v4495
    %v4497 = vpop.f32.mrb[0].mxu0
    %v4498 = vadd.f32 %v2728, %v4497
    %4499 = vmatprep.mubr.bf16.mxu0 %v2441
    %4500 = vmatmul.mubr.bf16.gmra.mrb[0].mxu0 %v2440
    %v4501 = vpop.f32.mrb[0].mxu0
    %v4502 = vadd.f32 %v2724, %v4501
    %v4503 = vpop.f32.mrb[0].mxu0
    %v4504 = vadd.f32 %v2728, %v4503
    %v4505 = vpop.f32.mrb[0].mxu0
    %v4506 = vadd.f32 %v2724, %v4505
    %v4507 = vpop.f32.mrb[0].mxu0
    %v4508 = vadd.f32 %v2728, %v4507
    %4509 = vmatprep.mubr.bf16.mxu0 %v2449
    %4510 = vmatmul.mubr.bf16.gmra.mrb[0].mxu0 %v2448
    %v4511 = vpop.f32.mrb[0].mxu0
    %v4512 = vadd.f32 %v2724, %v4511
    %v4513 = vpop.f32.mrb[0].mxu0
    %v4514 = vadd.f32 %v2728, %v4513
    %v4515 = vpop.f32.mrb[0].mxu0
    %v4516 = vpop.f32.mrb[0].mxu0
    %4517 = vdwg.mxu0
    %4518 = vmatprep.subr.bf16.mxu0 %v3568
    %4519 = vmatpush1.bf16.msra.mxu0 %v3567
    %4520 = vmatprep.subr.bf16.mxu0 %v3572
    %4521 = vmatpush1.bf16.msra.mxu0 %v3571
    %4522 = vmatprep.subr.bf16.mxu0 %v3576
    %4523 = vmatpush1.bf16.msra.mxu0 %v3575
    %4524 = vmatprep.subr.bf16.mxu0 %v3580
    %4525 = vmatpush1.bf16.msra.mxu0 %v3579
    %4526 = vmatprep.subr.bf16.mxu0 %v3584
    %4527 = vmatpush1.bf16.msra.mxu0 %v3583
    %4528 = vmatprep.subr.bf16.mxu0 %v3588
    %4529 = vmatpush1.bf16.msra.mxu0 %v3587
    %4530 = vmatprep.subr.bf16.mxu0 %v3592
    %4531 = vmatpush1.bf16.msra.mxu0 %v3591
    %4532 = vmatprep.subr.bf16.mxu0 %v3596
    %4533 = vmatpush1.bf16.msra.mxu0 %v3595
    %4534 = vmatprep.subr.bf16.mxu0 %v3600
    %4535 = vmatpush1.bf16.msra.mxu0 %v3599
    %4536 = vmatprep.subr.bf16.mxu0 %v3604
    %4537 = vmatpush1.bf16.msra.mxu0 %v3603
    %4538 = vmatprep.subr.bf16.mxu0 %v3608
    %4539 = vmatpush1.bf16.msra.mxu0 %v3607
    %4540 = vmatprep.subr.bf16.mxu0 %v3612
    %4541 = vmatpush1.bf16.msra.mxu0 %v3611
    %4542 = vmatprep.subr.bf16.mxu0 %v3616
    %4543 = vmatpush1.bf16.msra.mxu0 %v3615
    %4544 = vmatprep.subr.bf16.mxu0 %v3620
    %4545 = vmatpush1.bf16.msra.mxu0 %v3619
    %4546 = vmatprep.subr.bf16.mxu0 %v3624
    %4547 = vmatpush1.bf16.msra.mxu0 %v3623
    %4548 = vmatprep.subr.bf16.mxu0 %v3628
    %4549 = vmatpush1.bf16.msra.mxu0 %v3627
    %4550 = vmatprep.mubr.bf16.mxu0 %v2403
    %4551 = vmatmul.mubr.bf16.gmra.mrb[0].mxu0 %v2402
    %v4552 = vpop.f32.mrb[0].mxu0
    %v4553 = vadd.f32 %v4452, %v4552
    %v4554 = vpop.f32.mrb[0].mxu0
    %v4555 = vadd.f32 %v4454, %v4554
    %v4556 = vpop.f32.mrb[0].mxu0
    %v4557 = vadd.f32 %v4456, %v4556
    %v4558 = vpop.f32.mrb[0].mxu0
    %v4559 = vadd.f32 %v4458, %v4558
    %4560 = vmatprep.mubr.bf16.mxu0 %v2411
    %4561 = vmatmul.mubr.bf16.gmra.mrb[0].mxu0 %v2410
    %v4562 = vpop.f32.mrb[0].mxu0
    %v4563 = vadd.f32 %v4462, %v4562
    %v4564 = vpop.f32.mrb[0].mxu0
    %v4565 = vadd.f32 %v4464, %v4564
    %v4566 = vpop.f32.mrb[0].mxu0
    %v4567 = vadd.f32 %v4466, %v4566
    %v4568 = vpop.f32.mrb[0].mxu0
    %v4569 = vadd.f32 %v4468, %v4568
    %4570 = vmatprep.mubr.bf16.mxu0 %v2419
    %4571 = vmatmul.mubr.bf16.gmra.mrb[0].mxu0 %v2418
    %v4572 = vpop.f32.mrb[0].mxu0
    %v4573 = vadd.f32 %v4472, %v4572
    %v4574 = vpop.f32.mrb[0].mxu0
    %v4575 = vadd.f32 %v4474, %v4574
    %v4576 = vpop.f32.mrb[0].mxu0
    %v4577 = vadd.f32 %v4476, %v4576
    %v4578 = vpop.f32.mrb[0].mxu0
    %v4579 = vadd.f32 %v4478, %v4578
    %4580 = vmatprep.mubr.bf16.mxu0 %v2427
    %4581 = vmatmul.mubr.bf16.gmra.mrb[0].mxu0 %v2426
    %v4582 = vpop.f32.mrb[0].mxu0
    %v4583 = vadd.f32 %v4482, %v4582
    %v4584 = vpop.f32.mrb[0].mxu0
    %v4585 = vadd.f32 %v4484, %v4584
    %v4586 = vpop.f32.mrb[0].mxu0
    %v4587 = vadd.f32 %v4486, %v4586
    %v4588 = vpop.f32.mrb[0].mxu0
    %v4589 = vadd.f32 %v4488, %v4588
    %4590 = vmatprep.mubr.bf16.mxu0 %v2435
    %4591 = vmatmul.mubr.bf16.gmra.mrb[0].mxu0 %v2434
    %v4592 = vpop.f32.mrb[0].mxu0
    %v4593 = vadd.f32 %v4492, %v4592
    %v4594 = vpop.f32.mrb[0].mxu0
    %v4595 = vadd.f32 %v4494, %v4594
    %v4596 = vpop.f32.mrb[0].mxu0
    %v4597 = vadd.f32 %v4496, %v4596
    %v4598 = vpop.f32.mrb[0].mxu0
    %v4599 = vadd.f32 %v4498, %v4598
    %4600 = vmatprep.mubr.bf16.mxu0 %v2443
    %4601 = vmatmul.mubr.bf16.gmra.mrb[0].mxu0 %v2442
    %v4602 = vpop.f32.mrb[0].mxu0
    %v4603 = vadd.f32 %v4502, %v4602
    %v4604 = vpop.f32.mrb[0].mxu0
    %v4605 = vadd.f32 %v4504, %v4604
    %v4606 = vpop.f32.mrb[0].mxu0
    %v4607 = vadd.f32 %v4506, %v4606
    %v4608 = vpop.f32.mrb[0].mxu0
    %v4609 = vadd.f32 %v4508, %v4608
    %4610 = vmatprep.mubr.bf16.mxu0 %v2451
    %4611 = vmatmul.mubr.bf16.gmra.mrb[0].mxu0 %v2450
    %v4612 = vpop.f32.mrb[0].mxu0
    %v4613 = vadd.f32 %v4512, %v4612
    %v4614 = vpop.f32.mrb[0].mxu0
    %v4615 = vadd.f32 %v4514, %v4614
    %v4616 = vpop.f32.mrb[0].mxu0
    %v4617 = vpop.f32.mrb[0].mxu0
    %4618 = vdwg.mxu0
    %4619 = vmatprep.subr.bf16.mxu0 %v3632
    %4620 = vmatpush1.bf16.msra.mxu0 %v3631
    %4621 = vmatprep.subr.bf16.mxu0 %v3636
    %4622 = vmatpush1.bf16.msra.mxu0 %v3635
    %4623 = vmatprep.subr.bf16.mxu0 %v3640
    %4624 = vmatpush1.bf16.msra.mxu0 %v3639
    %4625 = vmatprep.subr.bf16.mxu0 %v3644
    %4626 = vmatpush1.bf16.msra.mxu0 %v3643
    %4627 = vmatprep.subr.bf16.mxu0 %v3648
    %4628 = vmatpush1.bf16.msra.mxu0 %v3647
    %4629 = vmatprep.subr.bf16.mxu0 %v3652
    %4630 = vmatpush1.bf16.msra.mxu0 %v3651
    %4631 = vmatprep.subr.bf16.mxu0 %v3656
    %4632 = vmatpush1.bf16.msra.mxu0 %v3655
    %4633 = vmatprep.subr.bf16.mxu0 %v3660
    %4634 = vmatpush1.bf16.msra.mxu0 %v3659
    %4635 = vmatprep.subr.bf16.mxu0 %v3664
    %4636 = vmatpush1.bf16.msra.mxu0 %v3663
    %4637 = vmatprep.subr.bf16.mxu0 %v3668
    %4638 = vmatpush1.bf16.msra.mxu0 %v3667
    %4639 = vmatprep.subr.bf16.mxu0 %v3672
    %4640 = vmatpush1.bf16.msra.mxu0 %v3671
    %4641 = vmatprep.subr.bf16.mxu0 %v3676
    %4642 = vmatpush1.bf16.msra.mxu0 %v3675
    %4643 = vmatprep.subr.bf16.mxu0 %v3680
    %4644 = vmatpush1.bf16.msra.mxu0 %v3679
    %4645 = vmatprep.subr.bf16.mxu0 %v3684
    %4646 = vmatpush1.bf16.msra.mxu0 %v3683
    %4647 = vmatprep.subr.bf16.mxu0 %v3688
    %4648 = vmatpush1.bf16.msra.mxu0 %v3687
    %4649 = vmatprep.subr.bf16.mxu0 %v3692
    %4650 = vmatpush1.bf16.msra.mxu0 %v3691
    %4651 = vmatprep.mubr.bf16.mxu0 %v2405
    %4652 = vmatmul.mubr.bf16.gmra.mrb[0].mxu0 %v2404
    %v4653 = vpop.f32.mrb[0].mxu0
    %v4654 = vadd.f32 %v4553, %v4653
    %v4655 = vpop.f32.mrb[0].mxu0
    %v4656 = vadd.f32 %v4555, %v4655
    %v4657 = vpop.f32.mrb[0].mxu0
    %v4658 = vadd.f32 %v4557, %v4657
    %v4659 = vpop.f32.mrb[0].mxu0
    %v4660 = vadd.f32 %v4559, %v4659
    %4661 = vmatprep.mubr.bf16.mxu0 %v2413
    %4662 = vmatmul.mubr.bf16.gmra.mrb[0].mxu0 %v2412
    %v4663 = vpop.f32.mrb[0].mxu0
    %v4664 = vadd.f32 %v4563, %v4663
    %v4665 = vpop.f32.mrb[0].mxu0
    %v4666 = vadd.f32 %v4565, %v4665
    %v4667 = vpop.f32.mrb[0].mxu0
    %v4668 = vadd.f32 %v4567, %v4667
    %v4669 = vpop.f32.mrb[0].mxu0
    %v4670 = vadd.f32 %v4569, %v4669
    %4671 = vmatprep.mubr.bf16.mxu0 %v2421
    %4672 = vmatmul.mubr.bf16.gmra.mrb[0].mxu0 %v2420
    %v4673 = vpop.f32.mrb[0].mxu0
    %v4674 = vadd.f32 %v4573, %v4673
    %v4675 = vpop.f32.mrb[0].mxu0
    %v4676 = vadd.f32 %v4575, %v4675
    %v4677 = vpop.f32.mrb[0].mxu0
    %v4678 = vadd.f32 %v4577, %v4677
    %v4679 = vpop.f32.mrb[0].mxu0
    %v4680 = vadd.f32 %v4579, %v4679
    %4681 = vmatprep.mubr.bf16.mxu0 %v2429
    %4682 = vmatmul.mubr.bf16.gmra.mrb[0].mxu0 %v2428
    %v4683 = vpop.f32.mrb[0].mxu0
    %v4684 = vadd.f32 %v4583, %v4683
    %v4685 = vpop.f32.mrb[0].mxu0
    %v4686 = vadd.f32 %v4585, %v4685
    %v4687 = vpop.f32.mrb[0].mxu0
    %v4688 = vadd.f32 %v4587, %v4687
    %v4689 = vpop.f32.mrb[0].mxu0
    %v4690 = vadd.f32 %v4589, %v4689
    %4691 = vmatprep.mubr.bf16.mxu0 %v2437
    %4692 = vmatmul.mubr.bf16.gmra.mrb[0].mxu0 %v2436
    %v4693 = vpop.f32.mrb[0].mxu0
    %v4694 = vadd.f32 %v4593, %v4693
    %v4695 = vpop.f32.mrb[0].mxu0
    %v4696 = vadd.f32 %v4595, %v4695
    %v4697 = vpop.f32.mrb[0].mxu0
    %v4698 = vadd.f32 %v4597, %v4697
    %v4699 = vpop.f32.mrb[0].mxu0
    %v4700 = vadd.f32 %v4599, %v4699
    %4701 = vmatprep.mubr.bf16.mxu0 %v2445
    %4702 = vmatmul.mubr.bf16.gmra.mrb[0].mxu0 %v2444
    %v4703 = vpop.f32.mrb[0].mxu0
    %v4704 = vadd.f32 %v4603, %v4703
    %v4705 = vpop.f32.mrb[0].mxu0
    %v4706 = vadd.f32 %v4605, %v4705
    %v4707 = vpop.f32.mrb[0].mxu0
    %v4708 = vadd.f32 %v4607, %v4707
    %v4709 = vpop.f32.mrb[0].mxu0
    %v4710 = vadd.f32 %v4609, %v4709
    %4711 = vmatprep.mubr.bf16.mxu0 %v2453
    %4712 = vmatmul.mubr.bf16.gmra.mrb[0].mxu0 %v2452
    %v4713 = vpop.f32.mrb[0].mxu0
    %v4714 = vadd.f32 %v4613, %v4713
    %v4715 = vpop.f32.mrb[0].mxu0
    %v4716 = vadd.f32 %v4615, %v4715
    %v4717 = vpop.f32.mrb[0].mxu0
    %v4718 = vpop.f32.mrb[0].mxu0
    %4719 = vdwg.mxu0
    %4720 = vmatprep.subr.bf16.mxu0 %v3696
    %4721 = vmatpush1.bf16.msra.mxu0 %v3695
    %4722 = vmatprep.subr.bf16.mxu0 %v3700
    %4723 = vmatpush1.bf16.msra.mxu0 %v3699
    %4724 = vmatprep.subr.bf16.mxu0 %v3704
    %4725 = vmatpush1.bf16.msra.mxu0 %v3703
    %4726 = vmatprep.subr.bf16.mxu0 %v3708
    %4727 = vmatpush1.bf16.msra.mxu0 %v3707
    %4728 = vmatprep.subr.bf16.mxu0 %v3712
    %4729 = vmatpush1.bf16.msra.mxu0 %v3711
    %4730 = vmatprep.subr.bf16.mxu0 %v3716
    %4731 = vmatpush1.bf16.msra.mxu0 %v3715
    %4732 = vmatprep.subr.bf16.mxu0 %v3720
    %4733 = vmatpush1.bf16.msra.mxu0 %v3719
    %4734 = vmatprep.subr.bf16.mxu0 %v3724
    %4735 = vmatpush1.bf16.msra.mxu0 %v3723
    %4736 = vmatprep.subr.bf16.mxu0 %v3728
    %4737 = vmatpush1.bf16.msra.mxu0 %v3727
    %4738 = vmatprep.subr.bf16.mxu0 %v3732
    %4739 = vmatpush1.bf16.msra.mxu0 %v3731
    %4740 = vmatprep.subr.bf16.mxu0 %v3736
    %4741 = vmatpush1.bf16.msra.mxu0 %v3735
    %4742 = vmatprep.subr.bf16.mxu0 %v3740
    %4743 = vmatpush1.bf16.msra.mxu0 %v3739
    %4744 = vmatprep.subr.bf16.mxu0 %v3744
    %4745 = vmatpush1.bf16.msra.mxu0 %v3743
    %4746 = vmatprep.subr.bf16.mxu0 %v3748
    %4747 = vmatpush1.bf16.msra.mxu0 %v3747
    %4748 = vmatprep.subr.bf16.mxu0 %v3752
    %4749 = vmatpush1.bf16.msra.mxu0 %v3751
    %4750 = vmatprep.subr.bf16.mxu0 %v3756
    %4751 = vmatpush1.bf16.msra.mxu0 %v3755
    %4752 = vmatprep.mubr.bf16.mxu0 %v2407
    %4753 = vmatmul.mubr.bf16.gmra.mrb[0].mxu0 %v2406
    %v4754 = vpop.f32.mrb[0].mxu0
    %v4755 = vadd.f32 %v4654, %v4754
    %v4756 = vpop.f32.mrb[0].mxu0
    %v4757 = vadd.f32 %v4656, %v4756
    %v4758 = vpop.f32.mrb[0].mxu0
    %v4759 = vadd.f32 %v4658, %v4758
    %v4760 = vpop.f32.mrb[0].mxu0
    %v4761 = vadd.f32 %v4660, %v4760
    %4762 = vmatprep.mubr.bf16.mxu0 %v2415
    %4763 = vmatmul.mubr.bf16.gmra.mrb[0].mxu0 %v2414
    %v4764 = vpop.f32.mrb[0].mxu0
    %v4765 = vadd.f32 %v4664, %v4764
    %v4766 = vpop.f32.mrb[0].mxu0
    %v4767 = vadd.f32 %v4666, %v4766
    %v4768 = vpop.f32.mrb[0].mxu0
    %v4769 = vadd.f32 %v4668, %v4768
    %v4770 = vpop.f32.mrb[0].mxu0
    %v4771 = vadd.f32 %v4670, %v4770
    %4772 = vmatprep.mubr.bf16.mxu0 %v2423
    %4773 = vmatmul.mubr.bf16.gmra.mrb[0].mxu0 %v2422
    %v4774 = vpop.f32.mrb[0].mxu0
    %v4775 = vadd.f32 %v4674, %v4774
    %v4776 = vpop.f32.mrb[0].mxu0
    %v4777 = vadd.f32 %v4676, %v4776
    %v4778 = vpop.f32.mrb[0].mxu0
    %v4779 = vadd.f32 %v4678, %v4778
    %v4780 = vpop.f32.mrb[0].mxu0
    %v4781 = vadd.f32 %v4680, %v4780
    %4782 = vmatprep.mubr.bf16.mxu0 %v2431
    %4783 = vmatmul.mubr.bf16.gmra.mrb[0].mxu0 %v2430
    %v4784 = vpop.f32.mrb[0].mxu0
    %v4785 = vadd.f32 %v4684, %v4784
    %v4786 = vpop.f32.mrb[0].mxu0
    %v4787 = vadd.f32 %v4686, %v4786
    %v4788 = vpop.f32.mrb[0].mxu0
    %v4789 = vadd.f32 %v4688, %v4788
    %v4790 = vpop.f32.mrb[0].mxu0
    %v4791 = vadd.f32 %v4690, %v4790
    %4792 = vmatprep.mubr.bf16.mxu0 %v2439
    %4793 = vmatmul.mubr.bf16.gmra.mrb[0].mxu0 %v2438
    %v4794 = vpop.f32.mrb[0].mxu0
    %v4795 = vadd.f32 %v4694, %v4794
    %v4796 = vpop.f32.mrb[0].mxu0
    %v4797 = vadd.f32 %v4696, %v4796
    %v4798 = vpop.f32.mrb[0].mxu0
    %v4799 = vadd.f32 %v4698, %v4798
    %v4800 = vpop.f32.mrb[0].mxu0
    %v4801 = vadd.f32 %v4700, %v4800
    %4802 = vmatprep.mubr.bf16.mxu0 %v2447
    %4803 = vmatmul.mubr.bf16.gmra.mrb[0].mxu0 %v2446
    %v4804 = vpop.f32.mrb[0].mxu0
    %v4805 = vadd.f32 %v4704, %v4804
    %v4806 = vpop.f32.mrb[0].mxu0
    %v4807 = vadd.f32 %v4706, %v4806
    %v4808 = vpop.f32.mrb[0].mxu0
    %v4809 = vadd.f32 %v4708, %v4808
    %v4810 = vpop.f32.mrb[0].mxu0
    %v4811 = vadd.f32 %v4710, %v4810
    %4812 = vmatprep.mubr.bf16.mxu0 %v2455
    %4813 = vmatmul.mubr.bf16.gmra.mrb[0].mxu0 %v2454
    %v4814 = vpop.f32.mrb[0].mxu0
    %v4815 = vadd.f32 %v4714, %v4814
    %v4816 = vpop.f32.mrb[0].mxu0
    %v4817 = vadd.f32 %v4716, %v4816
    %v4818 = vpop.f32.mrb[0].mxu0
    %v4819 = vpop.f32.mrb[0].mxu0
    %4820 = vdwg.mxu0
    %v4821 = vmax.f32 %v4351, 0.0
    %v4822 = vmax.f32 %v4353, 0.0
    %v4823 = vmax.f32 %v4755, 0.0
    %v4824 = vmax.f32 %v4757, 0.0
    %v4825 = vmax.f32 %v4355, 0.0
    %v4826 = vmax.f32 %v4357, 0.0
    %v4827 = vmax.f32 %v4759, 0.0
    %v4828 = vmax.f32 %v4761, 0.0
    %v4829 = vmax.f32 %v4361, 0.0
    %v4830 = vmax.f32 %v4363, 0.0
    %v4831 = vmax.f32 %v4765, 0.0
    %v4832 = vmax.f32 %v4767, 0.0
    %v4833 = vmax.f32 %v4365, 0.0
    %v4834 = vmax.f32 %v4367, 0.0
    %v4835 = vmax.f32 %v4769, 0.0
    %v4836 = vmax.f32 %v4771, 0.0
    %v4837 = vmax.f32 %v4371, 0.0
    %v4838 = vmax.f32 %v4373, 0.0
    %v4839 = vmax.f32 %v4775, 0.0
    %v4840 = vmax.f32 %v4777, 0.0
    %v4841 = vmax.f32 %v4375, 0.0
    %v4842 = vmax.f32 %v4377, 0.0
    %v4843 = vmax.f32 %v4779, 0.0
    %v4844 = vmax.f32 %v4781, 0.0
    %v4845 = vmax.f32 %v4381, 0.0
    %v4846 = vmax.f32 %v4383, 0.0
    %v4847 = vmax.f32 %v4785, 0.0
    %v4848 = vmax.f32 %v4787, 0.0
    %v4849 = vmax.f32 %v4385, 0.0
    %v4850 = vmax.f32 %v4387, 0.0
    %v4851 = vmax.f32 %v4789, 0.0
    %v4852 = vmax.f32 %v4791, 0.0
    %v4853 = vmax.f32 %v4391, 0.0
    %v4854 = vmax.f32 %v4393, 0.0
    %v4855 = vmax.f32 %v4795, 0.0
    %v4856 = vmax.f32 %v4797, 0.0
    %v4857 = vmax.f32 %v4395, 0.0
    %v4858 = vmax.f32 %v4397, 0.0
    %v4859 = vmax.f32 %v4799, 0.0
    %v4860 = vmax.f32 %v4801, 0.0
    %v4861 = vmax.f32 %v4401, 0.0
    %v4862 = vmax.f32 %v4403, 0.0
    %v4863 = vmax.f32 %v4805, 0.0
    %v4864 = vmax.f32 %v4807, 0.0
    %v4865 = vmax.f32 %v4405, 0.0
    %v4866 = vmax.f32 %v4407, 0.0
    %v4867 = vmax.f32 %v4809, 0.0
    %v4868 = vmax.f32 %v4811, 0.0
    %v4869 = vmax.f32 %v4411, 0.0
    %v4870 = vmax.f32 %v4413, 0.0
    %v4871 = vmax.f32 %v4815, 0.0
    %v4872 = vmax.f32 %v4817, 0.0
    %v4874 = vlaneseq
    %v4875 = vshrl.u32 %v4874, 7
    %v4876 = vsub.s32 0, %v4875
    %v4877 = vrot.slane %v2397, %v4876
    %v4878 = vlaneseq
    %v4879 = vshrl.u32 %v4878, 7
    %v4880 = vsub.s32 1, %v4879
    %v4881 = vrot.slane %v2397, %v4880
    %v4882 = vlaneseq
    %v4883 = vshrl.u32 %v4882, 7
    %v4884 = vsub.s32 2, %v4883
    %v4885 = vrot.slane %v2397, %v4884
    %v4886 = vlaneseq
    %v4887 = vshrl.u32 %v4886, 7
    %v4888 = vsub.s32 3, %v4887
    %v4889 = vrot.slane %v2397, %v4888
    %v4894 = vmul.f32 %v4821, %v4877
    %v4895 = vmul.f32 %v4822, %v4881
    %v4896 = vmul.f32 %v4823, %v4885
    %v4897 = vmul.f32 %v4824, %v4889
    %v4898 = vmul.f32 %v4825, %v4877
    %v4899 = vmul.f32 %v4826, %v4881
    %v4900 = vmul.f32 %v4827, %v4885
    %v4901 = vmul.f32 %v4828, %v4889
    %v4902 = vmul.f32 %v4829, %v4877
    %v4903 = vmul.f32 %v4830, %v4881
    %v4904 = vmul.f32 %v4831, %v4885
    %v4905 = vmul.f32 %v4832, %v4889
    %v4906 = vmul.f32 %v4833, %v4877
    %v4907 = vmul.f32 %v4834, %v4881
    %v4908 = vmul.f32 %v4835, %v4885
    %v4909 = vmul.f32 %v4836, %v4889
    %v4910 = vmul.f32 %v4837, %v4877
    %v4911 = vmul.f32 %v4838, %v4881
    %v4912 = vmul.f32 %v4839, %v4885
    %v4913 = vmul.f32 %v4840, %v4889
    %v4914 = vmul.f32 %v4841, %v4877
    %v4915 = vmul.f32 %v4842, %v4881
    %v4916 = vmul.f32 %v4843, %v4885
    %v4917 = vmul.f32 %v4844, %v4889
    %v4918 = vmul.f32 %v4845, %v4877
    %v4919 = vmul.f32 %v4846, %v4881
    %v4920 = vmul.f32 %v4847, %v4885
    %v4921 = vmul.f32 %v4848, %v4889
    %v4922 = vmul.f32 %v4849, %v4877
    %v4923 = vmul.f32 %v4850, %v4881
    %v4924 = vmul.f32 %v4851, %v4885
    %v4925 = vmul.f32 %v4852, %v4889
    %v4926 = vmul.f32 %v4853, %v4877
    %v4927 = vmul.f32 %v4854, %v4881
    %v4928 = vmul.f32 %v4855, %v4885
    %v4929 = vmul.f32 %v4856, %v4889
    %v4930 = vmul.f32 %v4857, %v4877
    %v4931 = vmul.f32 %v4858, %v4881
    %v4932 = vmul.f32 %v4859, %v4885
    %v4933 = vmul.f32 %v4860, %v4889
    %v4934 = vmul.f32 %v4861, %v4877
    %v4935 = vmul.f32 %v4862, %v4881
    %v4936 = vmul.f32 %v4863, %v4885
    %v4937 = vmul.f32 %v4864, %v4889
    %v4938 = vmul.f32 %v4865, %v4877
    %v4939 = vmul.f32 %v4866, %v4881
    %v4940 = vmul.f32 %v4867, %v4885
    %v4941 = vmul.f32 %v4868, %v4889
    %v4942 = vmul.f32 %v4869, %v4877
    %v4943 = vmul.f32 %v4870, %v4881
    %v4944 = vmul.f32 %v4871, %v4885
    %v4945 = vmul.f32 %v4872, %v4889
    %v4947 = vlaneseq
    %v4948 = vshrl.u32 %v4947, 7
    %v4949 = vsub.s32 0, %v4948
    %v4950 = vrot.slane %v2399, %v4949
    %v4951 = vlaneseq
    %v4952 = vshrl.u32 %v4951, 7
    %v4953 = vsub.s32 1, %v4952
    %v4954 = vrot.slane %v2399, %v4953
    %v4955 = vlaneseq
    %v4956 = vshrl.u32 %v4955, 7
    %v4957 = vsub.s32 2, %v4956
    %v4958 = vrot.slane %v2399, %v4957
    %v4959 = vlaneseq
    %v4960 = vshrl.u32 %v4959, 7
    %v4961 = vsub.s32 3, %v4960
    %v4962 = vrot.slane %v2399, %v4961
    %v4967 = vadd.f32 %v4894, %v4950
    %v4968 = vadd.f32 %v4895, %v4954
    %v4969 = vadd.f32 %v4896, %v4958
    %v4970 = vadd.f32 %v4897, %v4962
    %v4971 = vadd.f32 %v4898, %v4950
    %v4972 = vadd.f32 %v4899, %v4954
    %v4973 = vadd.f32 %v4900, %v4958
    %v4974 = vadd.f32 %v4901, %v4962
    %v4975 = vadd.f32 %v4902, %v4950
    %v4976 = vadd.f32 %v4903, %v4954
    %v4977 = vadd.f32 %v4904, %v4958
    %v4978 = vadd.f32 %v4905, %v4962
    %v4979 = vadd.f32 %v4906, %v4950
    %v4980 = vadd.f32 %v4907, %v4954
    %v4981 = vadd.f32 %v4908, %v4958
    %v4982 = vadd.f32 %v4909, %v4962
    %v4983 = vadd.f32 %v4910, %v4950
    %v4984 = vadd.f32 %v4911, %v4954
    %v4985 = vadd.f32 %v4912, %v4958
    %v4986 = vadd.f32 %v4913, %v4962
    %v4987 = vadd.f32 %v4914, %v4950
    %v4988 = vadd.f32 %v4915, %v4954
    %v4989 = vadd.f32 %v4916, %v4958
    %v4990 = vadd.f32 %v4917, %v4962
    %v4991 = vadd.f32 %v4918, %v4950
    %v4992 = vadd.f32 %v4919, %v4954
    %v4993 = vadd.f32 %v4920, %v4958
    %v4994 = vadd.f32 %v4921, %v4962
    %v4995 = vadd.f32 %v4922, %v4950
    %v4996 = vadd.f32 %v4923, %v4954
    %v4997 = vadd.f32 %v4924, %v4958
    %v4998 = vadd.f32 %v4925, %v4962
    %v4999 = vadd.f32 %v4926, %v4950
    %v5000 = vadd.f32 %v4927, %v4954
    %v5001 = vadd.f32 %v4928, %v4958
    %v5002 = vadd.f32 %v4929, %v4962
    %v5003 = vadd.f32 %v4930, %v4950
    %v5004 = vadd.f32 %v4931, %v4954
    %v5005 = vadd.f32 %v4932, %v4958
    %v5006 = vadd.f32 %v4933, %v4962
    %v5007 = vadd.f32 %v4934, %v4950
    %v5008 = vadd.f32 %v4935, %v4954
    %v5009 = vadd.f32 %v4936, %v4958
    %v5010 = vadd.f32 %v4937, %v4962
    %v5011 = vadd.f32 %v4938, %v4950
    %v5012 = vadd.f32 %v4939, %v4954
    %v5013 = vadd.f32 %v4940, %v4958
    %v5014 = vadd.f32 %v4941, %v4962
    %v5015 = vadd.f32 %v4942, %v4950
    %v5016 = vadd.f32 %v4943, %v4954
    %v5017 = vadd.f32 %v4944, %v4958
    %v5018 = vadd.f32 %v4945, %v4962
    %v5019 = vadd.f32 %v4967, %v4968
    %v5020 = vadd.f32 %v5019, %v4969
    %v5021 = vadd.f32 %v5020, %v4970
    %5022 = vadd.xlane.f32.xlu0 %v5021
    %v5023 = vpop.xlane.xlu0 %5022
    %v5024 = vadd.f32 %v4971, %v4972
    %v5025 = vadd.f32 %v5024, %v4973
    %v5026 = vadd.f32 %v5025, %v4974
    %5027 = vadd.xlane.f32.xlu0 %v5026
    %v5028 = vpop.xlane.xlu0 %5027
    %v5029 = vadd.f32 %v4975, %v4976
    %v5030 = vadd.f32 %v5029, %v4977
    %v5031 = vadd.f32 %v5030, %v4978
    %5032 = vadd.xlane.f32.xlu0 %v5031
    %v5033 = vpop.xlane.xlu0 %5032
    %v5034 = vadd.f32 %v4979, %v4980
    %v5035 = vadd.f32 %v5034, %v4981
    %v5036 = vadd.f32 %v5035, %v4982
    %5037 = vadd.xlane.f32.xlu0 %v5036
    %v5038 = vpop.xlane.xlu0 %5037
    %v5039 = vadd.f32 %v4983, %v4984
    %v5040 = vadd.f32 %v5039, %v4985
    %v5041 = vadd.f32 %v5040, %v4986
    %5042 = vadd.xlane.f32.xlu0 %v5041
    %v5043 = vpop.xlane.xlu0 %5042
    %v5044 = vadd.f32 %v4987, %v4988
    %v5045 = vadd.f32 %v5044, %v4989
    %v5046 = vadd.f32 %v5045, %v4990
    %5047 = vadd.xlane.f32.xlu0 %v5046
    %v5048 = vpop.xlane.xlu0 %5047
    %v5049 = vadd.f32 %v4991, %v4992
    %v5050 = vadd.f32 %v5049, %v4993
    %v5051 = vadd.f32 %v5050, %v4994
    %5052 = vadd.xlane.f32.xlu0 %v5051
    %v5053 = vpop.xlane.xlu0 %5052
    %v5054 = vadd.f32 %v4995, %v4996
    %v5055 = vadd.f32 %v5054, %v4997
    %v5056 = vadd.f32 %v5055, %v4998
    %5057 = vadd.xlane.f32.xlu0 %v5056
    %v5058 = vpop.xlane.xlu0 %5057
    %v5059 = vadd.f32 %v4999, %v5000
    %v5060 = vadd.f32 %v5059, %v5001
    %v5061 = vadd.f32 %v5060, %v5002
    %5062 = vadd.xlane.f32.xlu0 %v5061
    %v5063 = vpop.xlane.xlu0 %5062
    %v5064 = vadd.f32 %v5003, %v5004
    %v5065 = vadd.f32 %v5064, %v5005
    %v5066 = vadd.f32 %v5065, %v5006
    %5067 = vadd.xlane.f32.xlu0 %v5066
    %v5068 = vpop.xlane.xlu0 %5067
    %v5069 = vadd.f32 %v5007, %v5008
    %v5070 = vadd.f32 %v5069, %v5009
    %v5071 = vadd.f32 %v5070, %v5010
    %5072 = vadd.xlane.f32.xlu0 %v5071
    %v5073 = vpop.xlane.xlu0 %5072
    %v5074 = vadd.f32 %v5011, %v5012
    %v5075 = vadd.f32 %v5074, %v5013
    %v5076 = vadd.f32 %v5075, %v5014
    %5077 = vadd.xlane.f32.xlu0 %v5076
    %v5078 = vpop.xlane.xlu0 %5077
    %v5079 = vadd.f32 %v5015, %v5016
    %v5080 = vadd.f32 %v5079, %v5017
    %v5081 = vadd.f32 %v5080, %v5018
    %5082 = vadd.xlane.f32.xlu0 %v5081
    %v5083 = vpop.xlane.xlu0 %5082
    %v5084 = vrcp.pop 512.0
    %v5085 = vmul.f32 %v5023, %v5084
    %v5086 = vmul.f32 %v5028, %v5084
    %v5087 = vmul.f32 %v5033, %v5084
    %v5088 = vmul.f32 %v5038, %v5084
    %v5089 = vmul.f32 %v5043, %v5084
    %v5090 = vmul.f32 %v5048, %v5084
    %v5091 = vmul.f32 %v5053, %v5084
    %v5092 = vmul.f32 %v5058, %v5084
    %v5093 = vmul.f32 %v5063, %v5084
    %v5094 = vmul.f32 %v5068, %v5084
    %v5095 = vmul.f32 %v5073, %v5084
    %v5096 = vmul.f32 %v5078, %v5084
    %v5097 = vmul.f32 %v5083, %v5084
    %v5098 = vsub.f32 %v4967, %v5085
    %v5099 = vsub.f32 %v4968, %v5085
    %v5100 = vsub.f32 %v4969, %v5085
    %v5101 = vsub.f32 %v4970, %v5085
    %v5102 = vsub.f32 %v4971, %v5086
    %v5103 = vsub.f32 %v4972, %v5086
    %v5104 = vsub.f32 %v4973, %v5086
    %v5105 = vsub.f32 %v4974, %v5086
    %v5106 = vsub.f32 %v4975, %v5087
    %v5107 = vsub.f32 %v4976, %v5087
    %v5108 = vsub.f32 %v4977, %v5087
    %v5109 = vsub.f32 %v4978, %v5087
    %v5110 = vsub.f32 %v4979, %v5088
    %v5111 = vsub.f32 %v4980, %v5088
    %v5112 = vsub.f32 %v4981, %v5088
    %v5113 = vsub.f32 %v4982, %v5088
    %v5114 = vsub.f32 %v4983, %v5089
    %v5115 = vsub.f32 %v4984, %v5089
    %v5116 = vsub.f32 %v4985, %v5089
    %v5117 = vsub.f32 %v4986, %v5089
    %v5118 = vsub.f32 %v4987, %v5090
    %v5119 = vsub.f32 %v4988, %v5090
    %v5120 = vsub.f32 %v4989, %v5090
    %v5121 = vsub.f32 %v4990, %v5090
    %v5122 = vsub.f32 %v4991, %v5091
    %v5123 = vsub.f32 %v4992, %v5091
    %v5124 = vsub.f32 %v4993, %v5091
    %v5125 = vsub.f32 %v4994, %v5091
    %v5126 = vsub.f32 %v4995, %v5092
    %v5127 = vsub.f32 %v4996, %v5092
    %v5128 = vsub.f32 %v4997, %v5092
    %v5129 = vsub.f32 %v4998, %v5092
    %v5130 = vsub.f32 %v4999, %v5093
    %v5131 = vsub.f32 %v5000, %v5093
    %v5132 = vsub.f32 %v5001, %v5093
    %v5133 = vsub.f32 %v5002, %v5093
    %v5134 = vsub.f32 %v5003, %v5094
    %v5135 = vsub.f32 %v5004, %v5094
    %v5136 = vsub.f32 %v5005, %v5094
    %v5137 = vsub.f32 %v5006, %v5094
    %v5138 = vsub.f32 %v5007, %v5095
    %v5139 = vsub.f32 %v5008, %v5095
    %v5140 = vsub.f32 %v5009, %v5095
    %v5141 = vsub.f32 %v5010, %v5095
    %v5142 = vsub.f32 %v5011, %v5096
    %v5143 = vsub.f32 %v5012, %v5096
    %v5144 = vsub.f32 %v5013, %v5096
    %v5145 = vsub.f32 %v5014, %v5096
    %v5146 = vsub.f32 %v5015, %v5097
    %v5147 = vsub.f32 %v5016, %v5097
    %v5148 = vsub.f32 %v5017, %v5097
    %v5149 = vsub.f32 %v5018, %v5097
    %v5150 = vmul.f32 %v5098, %v5098
    %v5151 = vmul.f32 %v5099, %v5099
    %v5152 = vmul.f32 %v5100, %v5100
    %v5153 = vmul.f32 %v5101, %v5101
    %v5154 = vmul.f32 %v5102, %v5102
    %v5155 = vmul.f32 %v5103, %v5103
    %v5156 = vmul.f32 %v5104, %v5104
    %v5157 = vmul.f32 %v5105, %v5105
    %v5158 = vmul.f32 %v5106, %v5106
    %v5159 = vmul.f32 %v5107, %v5107
    %v5160 = vmul.f32 %v5108, %v5108
    %v5161 = vmul.f32 %v5109, %v5109
    %v5162 = vmul.f32 %v5110, %v5110
    %v5163 = vmul.f32 %v5111, %v5111
    %v5164 = vmul.f32 %v5112, %v5112
    %v5165 = vmul.f32 %v5113, %v5113
    %v5166 = vmul.f32 %v5114, %v5114
    %v5167 = vmul.f32 %v5115, %v5115
    %v5168 = vmul.f32 %v5116, %v5116
    %v5169 = vmul.f32 %v5117, %v5117
    %v5170 = vmul.f32 %v5118, %v5118
    %v5171 = vmul.f32 %v5119, %v5119
    %v5172 = vmul.f32 %v5120, %v5120
    %v5173 = vmul.f32 %v5121, %v5121
    %v5174 = vmul.f32 %v5122, %v5122
    %v5175 = vmul.f32 %v5123, %v5123
    %v5176 = vmul.f32 %v5124, %v5124
    %v5177 = vmul.f32 %v5125, %v5125
    %v5178 = vmul.f32 %v5126, %v5126
    %v5179 = vmul.f32 %v5127, %v5127
    %v5180 = vmul.f32 %v5128, %v5128
    %v5181 = vmul.f32 %v5129, %v5129
    %v5182 = vmul.f32 %v5130, %v5130
    %v5183 = vmul.f32 %v5131, %v5131
    %v5184 = vmul.f32 %v5132, %v5132
    %v5185 = vmul.f32 %v5133, %v5133
    %v5186 = vmul.f32 %v5134, %v5134
    %v5187 = vmul.f32 %v5135, %v5135
    %v5188 = vmul.f32 %v5136, %v5136
    %v5189 = vmul.f32 %v5137, %v5137
    %v5190 = vmul.f32 %v5138, %v5138
    %v5191 = vmul.f32 %v5139, %v5139
    %v5192 = vmul.f32 %v5140, %v5140
    %v5193 = vmul.f32 %v5141, %v5141
    %v5194 = vmul.f32 %v5142, %v5142
    %v5195 = vmul.f32 %v5143, %v5143
    %v5196 = vmul.f32 %v5144, %v5144
    %v5197 = vmul.f32 %v5145, %v5145
    %v5198 = vmul.f32 %v5146, %v5146
    %v5199 = vmul.f32 %v5147, %v5147
    %v5200 = vmul.f32 %v5148, %v5148
    %v5201 = vmul.f32 %v5149, %v5149
    %v5202 = vadd.f32 %v5150, %v5151
    %v5203 = vadd.f32 %v5202, %v5152
    %v5204 = vadd.f32 %v5203, %v5153
    %5205 = vadd.xlane.f32.xlu0 %v5204
    %v5206 = vpop.xlane.xlu0 %5205
    %v5207 = vadd.f32 %v5154, %v5155
    %v5208 = vadd.f32 %v5207, %v5156
    %v5209 = vadd.f32 %v5208, %v5157
    %5210 = vadd.xlane.f32.xlu0 %v5209
    %v5211 = vpop.xlane.xlu0 %5210
    %v5212 = vadd.f32 %v5158, %v5159
    %v5213 = vadd.f32 %v5212, %v5160
    %v5214 = vadd.f32 %v5213, %v5161
    %5215 = vadd.xlane.f32.xlu0 %v5214
    %v5216 = vpop.xlane.xlu0 %5215
    %v5217 = vadd.f32 %v5162, %v5163
    %v5218 = vadd.f32 %v5217, %v5164
    %v5219 = vadd.f32 %v5218, %v5165
    %5220 = vadd.xlane.f32.xlu0 %v5219
    %v5221 = vpop.xlane.xlu0 %5220
    %v5222 = vadd.f32 %v5166, %v5167
    %v5223 = vadd.f32 %v5222, %v5168
    %v5224 = vadd.f32 %v5223, %v5169
    %5225 = vadd.xlane.f32.xlu0 %v5224
    %v5226 = vpop.xlane.xlu0 %5225
    %v5227 = vadd.f32 %v5170, %v5171
    %v5228 = vadd.f32 %v5227, %v5172
    %v5229 = vadd.f32 %v5228, %v5173
    %5230 = vadd.xlane.f32.xlu0 %v5229
    %v5231 = vpop.xlane.xlu0 %5230
    %v5232 = vadd.f32 %v5174, %v5175
    %v5233 = vadd.f32 %v5232, %v5176
    %v5234 = vadd.f32 %v5233, %v5177
    %5235 = vadd.xlane.f32.xlu0 %v5234
    %v5236 = vpop.xlane.xlu0 %5235
    %v5237 = vadd.f32 %v5178, %v5179
    %v5238 = vadd.f32 %v5237, %v5180
    %v5239 = vadd.f32 %v5238, %v5181
    %5240 = vadd.xlane.f32.xlu0 %v5239
    %v5241 = vpop.xlane.xlu0 %5240
    %v5242 = vadd.f32 %v5182, %v5183
    %v5243 = vadd.f32 %v5242, %v5184
    %v5244 = vadd.f32 %v5243, %v5185
    %5245 = vadd.xlane.f32.xlu0 %v5244
    %v5246 = vpop.xlane.xlu0 %5245
    %v5247 = vadd.f32 %v5186, %v5187
    %v5248 = vadd.f32 %v5247, %v5188
    %v5249 = vadd.f32 %v5248, %v5189
    %5250 = vadd.xlane.f32.xlu0 %v5249
    %v5251 = vpop.xlane.xlu0 %5250
    %v5252 = vadd.f32 %v5190, %v5191
    %v5253 = vadd.f32 %v5252, %v5192
    %v5254 = vadd.f32 %v5253, %v5193
    %5255 = vadd.xlane.f32.xlu0 %v5254
    %v5256 = vpop.xlane.xlu0 %5255
    %v5257 = vadd.f32 %v5194, %v5195
    %v5258 = vadd.f32 %v5257, %v5196
    %v5259 = vadd.f32 %v5258, %v5197
    %5260 = vadd.xlane.f32.xlu0 %v5259
    %v5261 = vpop.xlane.xlu0 %5260
    %v5262 = vadd.f32 %v5198, %v5199
    %v5263 = vadd.f32 %v5262, %v5200
    %v5264 = vadd.f32 %v5263, %v5201
    %5265 = vadd.xlane.f32.xlu0 %v5264
    %v5266 = vpop.xlane.xlu0 %5265
    %v5267 = vmul.f32 %v5206, %v5084
    %v5268 = vmul.f32 %v5211, %v5084
    %v5269 = vmul.f32 %v5216, %v5084
    %v5270 = vmul.f32 %v5221, %v5084
    %v5271 = vmul.f32 %v5226, %v5084
    %v5272 = vmul.f32 %v5231, %v5084
    %v5273 = vmul.f32 %v5236, %v5084
    %v5274 = vmul.f32 %v5241, %v5084
    %v5275 = vmul.f32 %v5246, %v5084
    %v5276 = vmul.f32 %v5251, %v5084
    %v5277 = vmul.f32 %v5256, %v5084
    %v5278 = vmul.f32 %v5261, %v5084
    %v5279 = vmul.f32 %v5266, %v5084
    %v5280 = vadd.f32 %v5267, 1e-05
    %v5281 = vadd.f32 %v5268, 1e-05
    %v5282 = vadd.f32 %v5269, 1e-05
    %v5283 = vadd.f32 %v5270, 1e-05
    %v5284 = vadd.f32 %v5271, 1e-05
    %v5285 = vadd.f32 %v5272, 1e-05
    %v5286 = vadd.f32 %v5273, 1e-05
    %v5287 = vadd.f32 %v5274, 1e-05
    %v5288 = vadd.f32 %v5275, 1e-05
    %v5289 = vadd.f32 %v5276, 1e-05
    %v5290 = vadd.f32 %v5277, 1e-05
    %v5291 = vadd.f32 %v5278, 1e-05
    %v5292 = vadd.f32 %v5279, 1e-05
    %v5293 = vrsqrt.pop %v5280
    %v5294 = vrsqrt.pop %v5281
    %v5295 = vrsqrt.pop %v5282
    %v5296 = vrsqrt.pop %v5283
    %v5297 = vrsqrt.pop %v5284
    %v5298 = vrsqrt.pop %v5285
    %v5299 = vrsqrt.pop %v5286
    %v5300 = vrsqrt.pop %v5287
    %v5301 = vrsqrt.pop %v5288
    %v5302 = vrsqrt.pop %v5289
    %v5303 = vrsqrt.pop %v5290
    %v5304 = vrsqrt.pop %v5291
    %v5305 = vrsqrt.pop %v5292
    %v5306 = vmul.f32 %v5098, %v5293
    %v5307 = vmul.f32 %v5099, %v5293
    %v5308 = vmul.f32 %v5100, %v5293
    %v5309 = vmul.f32 %v5101, %v5293
    %v5310 = vmul.f32 %v5102, %v5294
    %v5311 = vmul.f32 %v5103, %v5294
    %v5312 = vmul.f32 %v5104, %v5294
    %v5313 = vmul.f32 %v5105, %v5294
    %v5314 = vmul.f32 %v5106, %v5295
    %v5315 = vmul.f32 %v5107, %v5295
    %v5316 = vmul.f32 %v5108, %v5295
    %v5317 = vmul.f32 %v5109, %v5295
    %v5318 = vmul.f32 %v5110, %v5296
    %v5319 = vmul.f32 %v5111, %v5296
    %v5320 = vmul.f32 %v5112, %v5296
    %v5321 = vmul.f32 %v5113, %v5296
    %v5322 = vmul.f32 %v5114, %v5297
    %v5323 = vmul.f32 %v5115, %v5297
    %v5324 = vmul.f32 %v5116, %v5297
    %v5325 = vmul.f32 %v5117, %v5297
    %v5326 = vmul.f32 %v5118, %v5298
    %v5327 = vmul.f32 %v5119, %v5298
    %v5328 = vmul.f32 %v5120, %v5298
    %v5329 = vmul.f32 %v5121, %v5298
    %v5330 = vmul.f32 %v5122, %v5299
    %v5331 = vmul.f32 %v5123, %v5299
    %v5332 = vmul.f32 %v5124, %v5299
    %v5333 = vmul.f32 %v5125, %v5299
    %v5334 = vmul.f32 %v5126, %v5300
    %v5335 = vmul.f32 %v5127, %v5300
    %v5336 = vmul.f32 %v5128, %v5300
    %v5337 = vmul.f32 %v5129, %v5300
    %v5338 = vmul.f32 %v5130, %v5301
    %v5339 = vmul.f32 %v5131, %v5301
    %v5340 = vmul.f32 %v5132, %v5301
    %v5341 = vmul.f32 %v5133, %v5301
    %v5342 = vmul.f32 %v5134, %v5302
    %v5343 = vmul.f32 %v5135, %v5302
    %v5344 = vmul.f32 %v5136, %v5302
    %v5345 = vmul.f32 %v5137, %v5302
    %v5346 = vmul.f32 %v5138, %v5303
    %v5347 = vmul.f32 %v5139, %v5303
    %v5348 = vmul.f32 %v5140, %v5303
    %v5349 = vmul.f32 %v5141, %v5303
    %v5350 = vmul.f32 %v5142, %v5304
    %v5351 = vmul.f32 %v5143, %v5304
    %v5352 = vmul.f32 %v5144, %v5304
    %v5353 = vmul.f32 %v5145, %v5304
    %v5354 = vmul.f32 %v5146, %v5305
    %v5355 = vmul.f32 %v5147, %v5305
    %v5356 = vmul.f32 %v5148, %v5305
    %v5357 = vmul.f32 %v5149, %v5305
    %v5358 = vld [vmem:[%s6] ss:$4 sm:$0x3]
    %s5359 = scalar_lea.vmem %s6, 1
    %v5360 = vld [vmem:[%s5359] ss:$4 sm:$0x3]
    %s5361 = scalar_lea.vmem %s6, 2
    %v5362 = vld [vmem:[%s5361] ss:$4 sm:$0x3]
    %v5363 = vpack.c.bf16 %v5310, %v5306
    %v5364 = vpack.c.bf16 %v5311, %v5307
    %v5365 = vpack.c.bf16 %v5312, %v5308
    %v5366 = vpack.c.bf16 %v5313, %v5309
    %v5367 = vpack.c.bf16 %v5318, %v5314
    %v5368 = vpack.c.bf16 %v5319, %v5315
    %v5369 = vpack.c.bf16 %v5320, %v5316
    %v5370 = vpack.c.bf16 %v5321, %v5317
    %v5371 = vpack.c.bf16 %v5326, %v5322
    %v5372 = vpack.c.bf16 %v5327, %v5323
    %v5373 = vpack.c.bf16 %v5328, %v5324
    %v5374 = vpack.c.bf16 %v5329, %v5325
    %v5375 = vpack.c.bf16 %v5334, %v5330
    %v5376 = vpack.c.bf16 %v5335, %v5331
    %v5377 = vpack.c.bf16 %v5336, %v5332
    %v5378 = vpack.c.bf16 %v5337, %v5333
    %v5379 = vpack.c.bf16 %v5342, %v5338
    %v5380 = vpack.c.bf16 %v5343, %v5339
    %v5381 = vpack.c.bf16 %v5344, %v5340
    %v5382 = vpack.c.bf16 %v5345, %v5341
    %v5383 = vpack.c.bf16 %v5350, %v5346
    %v5384 = vpack.c.bf16 %v5351, %v5347
    %v5385 = vpack.c.bf16 %v5352, %v5348
    %v5386 = vpack.c.bf16 %v5353, %v5349
    %v5387 = vpack.c.bf16 %v5354, %v5354
    %v5388 = vpack.c.bf16 %v5355, %v5355
    %v5389 = vpack.c.bf16 %v5356, %v5356
    %v5390 = vpack.c.bf16 %v5357, %v5357
    %v5391 = vld [vmem:[#allocation11] sm:$0xff]
    %v5392 = vld [vmem:[#allocation11 + $0x8] sm:$0xff]
    %v5393 = vld [vmem:[#allocation11 + $0x10] sm:$0xff]
    %v5394 = vld [vmem:[#allocation11 + $0x18] sm:$0xff]
    %v5395 = vld [vmem:[#allocation11 + $0x20] sm:$0xff]
    %v5396 = vld [vmem:[#allocation11 + $0x28] sm:$0xff]
    %v5397 = vld [vmem:[#allocation11 + $0x30] sm:$0xff]
    %v5398 = vld [vmem:[#allocation11 + $0x38] sm:$0xff]
    %v5399 = vld [vmem:[#allocation11 + $0x40] sm:$0xff]
    %v5400 = vld [vmem:[#allocation11 + $0x48] sm:$0xff]
    %v5401 = vld [vmem:[#allocation11 + $0x50] sm:$0xff]
    %v5402 = vld [vmem:[#allocation11 + $0x58] sm:$0xff]
    %v5403 = vld [vmem:[#allocation11 + $0x60] sm:$0xff]
    %v5404 = vld [vmem:[#allocation11 + $0x68] sm:$0xff]
    %v5405 = vld [vmem:[#allocation11 + $0x70] sm:$0xff]
    %v5406 = vld [vmem:[#allocation11 + $0x78] sm:$0xff]
    %v5407 = vld [vmem:[#allocation11 + $0x80] sm:$0xff]
    %v5408 = vld [vmem:[#allocation11 + $0x88] sm:$0xff]
    %v5409 = vld [vmem:[#allocation11 + $0x90] sm:$0xff]
    %v5410 = vld [vmem:[#allocation11 + $0x98] sm:$0xff]
    %v5411 = vld [vmem:[#allocation11 + $0xa0] sm:$0xff]
    %v5412 = vld [vmem:[#allocation11 + $0xa8] sm:$0xff]
    %v5413 = vld [vmem:[#allocation11 + $0xb0] sm:$0xff]
    %v5414 = vld [vmem:[#allocation11 + $0xb8] sm:$0xff]
    %v5415 = vld [vmem:[#allocation11 + $0xc0] sm:$0xff]
    %v5416 = vld [vmem:[#allocation11 + $0xc8] sm:$0xff]
    %v5417 = vld [vmem:[#allocation11 + $0xd0] sm:$0xff]
    %v5418 = vld [vmem:[#allocation11 + $0xd8] sm:$0xff]
    %v5419 = vld [vmem:[#allocation11 + $0xe0] sm:$0xff]
    %v5420 = vld [vmem:[#allocation11 + $0xe8] sm:$0xff]
    %v5421 = vld [vmem:[#allocation11 + $0xf0] sm:$0xff]
    %v5422 = vld [vmem:[#allocation11 + $0xf8] sm:$0xff]
    %v5423 = vld [vmem:[#allocation11 + $0x100] sm:$0xff]
    %v5424 = vld [vmem:[#allocation11 + $0x108] sm:$0xff]
    %v5425 = vld [vmem:[#allocation11 + $0x110] sm:$0xff]
    %v5426 = vld [vmem:[#allocation11 + $0x118] sm:$0xff]
    %v5427 = vld [vmem:[#allocation11 + $0x120] sm:$0xff]
    %v5428 = vld [vmem:[#allocation11 + $0x128] sm:$0xff]
    %v5429 = vld [vmem:[#allocation11 + $0x130] sm:$0xff]
    %v5430 = vld [vmem:[#allocation11 + $0x138] sm:$0xff]
    %v5431 = vld [vmem:[#allocation11 + $0x140] sm:$0xff]
    %v5432 = vld [vmem:[#allocation11 + $0x148] sm:$0xff]
    %v5433 = vld [vmem:[#allocation11 + $0x150] sm:$0xff]
    %v5434 = vld [vmem:[#allocation11 + $0x158] sm:$0xff]
    %v5435 = vld [vmem:[#allocation11 + $0x160] sm:$0xff]
    %v5436 = vld [vmem:[#allocation11 + $0x168] sm:$0xff]
    %v5437 = vld [vmem:[#allocation11 + $0x170] sm:$0xff]
    %v5438 = vld [vmem:[#allocation11 + $0x178] sm:$0xff]
    %v5439 = vld [vmem:[#allocation11 + $0x180] sm:$0xff]
    %v5440 = vld [vmem:[#allocation11 + $0x188] sm:$0xff]
    %v5441 = vld [vmem:[#allocation11 + $0x190] sm:$0xff]
    %v5442 = vld [vmem:[#allocation11 + $0x198] sm:$0xff]
    %v5443 = vld [vmem:[#allocation11 + $0x1a0] sm:$0xff]
    %v5444 = vld [vmem:[#allocation11 + $0x1a8] sm:$0xff]
    %v5445 = vld [vmem:[#allocation11 + $0x1b0] sm:$0xff]
    %v5446 = vld [vmem:[#allocation11 + $0x1b8] sm:$0xff]
    %v5447 = vld [vmem:[#allocation11 + $0x1c0] sm:$0xff]
    %v5448 = vld [vmem:[#allocation11 + $0x1c8] sm:$0xff]
    %v5449 = vld [vmem:[#allocation11 + $0x1d0] sm:$0xff]
    %v5450 = vld [vmem:[#allocation11 + $0x1d8] sm:$0xff]
    %v5451 = vld [vmem:[#allocation11 + $0x1e0] sm:$0xff]
    %v5452 = vld [vmem:[#allocation11 + $0x1e8] sm:$0xff]
    %v5453 = vld [vmem:[#allocation11 + $0x1f0] sm:$0xff]
    %v5454 = vld [vmem:[#allocation11 + $0x1f8] sm:$0xff]
    %v5456 = vlaneseq
    %v5457 = vshrl.u32 %v5456, 7
    %v5458 = vsub.s32 0, %v5457
    %v5459 = vrot.slane %v5358, %v5458
    %v5460 = vlaneseq
    %v5461 = vshrl.u32 %v5460, 7
    %v5462 = vsub.s32 1, %v5461
    %v5463 = vrot.slane %v5358, %v5462
    %v5530 = vunpack.c.l.b16 %v5391
    %v5531 = vunpack.c.h.b16 %v5391
    %v5532 = vunpack.c.l.b16 %v5392
    %v5533 = vunpack.c.h.b16 %v5392
    %v5534 = vunpack.c.l.b16 %v5393
    %v5535 = vunpack.c.h.b16 %v5393
    %v5536 = vunpack.c.l.b16 %v5394
    %v5537 = vunpack.c.h.b16 %v5394
    %v5538 = vunpack.c.l.b16 %v5395
    %v5539 = vunpack.c.h.b16 %v5395
    %v5540 = vunpack.c.l.b16 %v5396
    %v5541 = vunpack.c.h.b16 %v5396
    %v5542 = vunpack.c.l.b16 %v5397
    %v5543 = vunpack.c.h.b16 %v5397
    %v5544 = vunpack.c.l.b16 %v5398
    %v5545 = vunpack.c.h.b16 %v5398
    %v5546 = vunpack.c.l.b16 %v5399
    %v5547 = vunpack.c.h.b16 %v5399
    %v5548 = vunpack.c.l.b16 %v5400
    %v5549 = vunpack.c.h.b16 %v5400
    %v5550 = vunpack.c.l.b16 %v5401
    %v5551 = vunpack.c.h.b16 %v5401
    %v5552 = vunpack.c.l.b16 %v5402
    %v5553 = vunpack.c.h.b16 %v5402
    %v5554 = vunpack.c.l.b16 %v5403
    %v5555 = vunpack.c.h.b16 %v5403
    %v5556 = vunpack.c.l.b16 %v5404
    %v5557 = vunpack.c.h.b16 %v5404
    %v5558 = vunpack.c.l.b16 %v5405
    %v5559 = vunpack.c.h.b16 %v5405
    %v5560 = vunpack.c.l.b16 %v5406
    %v5561 = vunpack.c.h.b16 %v5406
    %v5562 = vunpack.c.l.b16 %v5407
    %v5563 = vunpack.c.h.b16 %v5407
    %v5564 = vunpack.c.l.b16 %v5408
    %v5565 = vunpack.c.h.b16 %v5408
    %v5566 = vunpack.c.l.b16 %v5409
    %v5567 = vunpack.c.h.b16 %v5409
    %v5568 = vunpack.c.l.b16 %v5410
    %v5569 = vunpack.c.h.b16 %v5410
    %v5570 = vunpack.c.l.b16 %v5411
    %v5571 = vunpack.c.h.b16 %v5411
    %v5572 = vunpack.c.l.b16 %v5412
    %v5573 = vunpack.c.h.b16 %v5412
    %v5574 = vunpack.c.l.b16 %v5413
    %v5575 = vunpack.c.h.b16 %v5413
    %v5576 = vunpack.c.l.b16 %v5414
    %v5577 = vunpack.c.h.b16 %v5414
    %v5578 = vunpack.c.l.b16 %v5415
    %v5579 = vunpack.c.h.b16 %v5415
    %v5580 = vunpack.c.l.b16 %v5416
    %v5581 = vunpack.c.h.b16 %v5416
    %v5582 = vunpack.c.l.b16 %v5417
    %v5583 = vunpack.c.h.b16 %v5417
    %v5584 = vunpack.c.l.b16 %v5418
    %v5585 = vunpack.c.h.b16 %v5418
    %v5586 = vunpack.c.l.b16 %v5419
    %v5587 = vunpack.c.h.b16 %v5419
    %v5588 = vunpack.c.l.b16 %v5420
    %v5589 = vunpack.c.h.b16 %v5420
    %v5590 = vunpack.c.l.b16 %v5421
    %v5591 = vunpack.c.h.b16 %v5421
    %v5592 = vunpack.c.l.b16 %v5422
    %v5593 = vunpack.c.h.b16 %v5422
    %v5594 = vunpack.c.l.b16 %v5423
    %v5595 = vunpack.c.h.b16 %v5423
    %v5596 = vunpack.c.l.b16 %v5424
    %v5597 = vunpack.c.h.b16 %v5424
    %v5598 = vunpack.c.l.b16 %v5425
    %v5599 = vunpack.c.h.b16 %v5425
    %v5600 = vunpack.c.l.b16 %v5426
    %v5601 = vunpack.c.h.b16 %v5426
    %v5602 = vunpack.c.l.b16 %v5427
    %v5603 = vunpack.c.h.b16 %v5427
    %v5604 = vunpack.c.l.b16 %v5428
    %v5605 = vunpack.c.h.b16 %v5428
    %v5606 = vunpack.c.l.b16 %v5429
    %v5607 = vunpack.c.h.b16 %v5429
    %v5608 = vunpack.c.l.b16 %v5430
    %v5609 = vunpack.c.h.b16 %v5430
    %v5610 = vunpack.c.l.b16 %v5431
    %v5611 = vunpack.c.h.b16 %v5431
    %v5612 = vunpack.c.l.b16 %v5432
    %v5613 = vunpack.c.h.b16 %v5432
    %v5614 = vunpack.c.l.b16 %v5433
    %v5615 = vunpack.c.h.b16 %v5433
    %v5616 = vunpack.c.l.b16 %v5434
    %v5617 = vunpack.c.h.b16 %v5434
    %v5618 = vunpack.c.l.b16 %v5435
    %v5619 = vunpack.c.h.b16 %v5435
    %v5620 = vunpack.c.l.b16 %v5436
    %v5621 = vunpack.c.h.b16 %v5436
    %v5622 = vunpack.c.l.b16 %v5437
    %v5623 = vunpack.c.h.b16 %v5437
    %v5624 = vunpack.c.l.b16 %v5438
    %v5625 = vunpack.c.h.b16 %v5438
    %v5626 = vunpack.c.l.b16 %v5439
    %v5627 = vunpack.c.h.b16 %v5439
    %v5628 = vunpack.c.l.b16 %v5440
    %v5629 = vunpack.c.h.b16 %v5440
    %v5630 = vunpack.c.l.b16 %v5441
    %v5631 = vunpack.c.h.b16 %v5441
    %v5632 = vunpack.c.l.b16 %v5442
    %v5633 = vunpack.c.h.b16 %v5442
    %v5634 = vunpack.c.l.b16 %v5443
    %v5635 = vunpack.c.h.b16 %v5443
    %v5636 = vunpack.c.l.b16 %v5444
    %v5637 = vunpack.c.h.b16 %v5444
    %v5638 = vunpack.c.l.b16 %v5445
    %v5639 = vunpack.c.h.b16 %v5445
    %v5640 = vunpack.c.l.b16 %v5446
    %v5641 = vunpack.c.h.b16 %v5446
    %v5642 = vunpack.c.l.b16 %v5447
    %v5643 = vunpack.c.h.b16 %v5447
    %v5644 = vunpack.c.l.b16 %v5448
    %v5645 = vunpack.c.h.b16 %v5448
    %v5646 = vunpack.c.l.b16 %v5449
    %v5647 = vunpack.c.h.b16 %v5449
    %v5648 = vunpack.c.l.b16 %v5450
    %v5649 = vunpack.c.h.b16 %v5450
    %v5650 = vunpack.c.l.b16 %v5451
    %v5651 = vunpack.c.h.b16 %v5451
    %v5652 = vunpack.c.l.b16 %v5452
    %v5653 = vunpack.c.h.b16 %v5452
    %v5654 = vunpack.c.l.b16 %v5453
    %v5655 = vunpack.c.h.b16 %v5453
    %v5656 = vunpack.c.l.b16 %v5454
    %v5657 = vunpack.c.h.b16 %v5454
    %v5658 = vpack.c.b16 %v5532, %v5530
    %v5659 = vpack.c.b16 %v5533, %v5531
    %v5660 = vpack.c.b16 %v5536, %v5534
    %v5661 = vpack.c.b16 %v5537, %v5535
    %v5662 = vpack.c.b16 %v5540, %v5538
    %v5663 = vpack.c.b16 %v5541, %v5539
    %v5664 = vpack.c.b16 %v5544, %v5542
    %v5665 = vpack.c.b16 %v5545, %v5543
    %v5666 = vpack.c.b16 %v5548, %v5546
    %v5667 = vpack.c.b16 %v5549, %v5547
    %v5668 = vpack.c.b16 %v5552, %v5550
    %v5669 = vpack.c.b16 %v5553, %v5551
    %v5670 = vpack.c.b16 %v5556, %v5554
    %v5671 = vpack.c.b16 %v5557, %v5555
    %v5672 = vpack.c.b16 %v5560, %v5558
    %v5673 = vpack.c.b16 %v5561, %v5559
    %v5674 = vpack.c.b16 %v5564, %v5562
    %v5675 = vpack.c.b16 %v5565, %v5563
    %v5676 = vpack.c.b16 %v5568, %v5566
    %v5677 = vpack.c.b16 %v5569, %v5567
    %v5678 = vpack.c.b16 %v5572, %v5570
    %v5679 = vpack.c.b16 %v5573, %v5571
    %v5680 = vpack.c.b16 %v5576, %v5574
    %v5681 = vpack.c.b16 %v5577, %v5575
    %v5682 = vpack.c.b16 %v5580, %v5578
    %v5683 = vpack.c.b16 %v5581, %v5579
    %v5684 = vpack.c.b16 %v5584, %v5582
    %v5685 = vpack.c.b16 %v5585, %v5583
    %v5686 = vpack.c.b16 %v5588, %v5586
    %v5687 = vpack.c.b16 %v5589, %v5587
    %v5688 = vpack.c.b16 %v5592, %v5590
    %v5689 = vpack.c.b16 %v5593, %v5591
    %v5690 = vpack.c.b16 %v5596, %v5594
    %v5691 = vpack.c.b16 %v5597, %v5595
    %v5692 = vpack.c.b16 %v5600, %v5598
    %v5693 = vpack.c.b16 %v5601, %v5599
    %v5694 = vpack.c.b16 %v5604, %v5602
    %v5695 = vpack.c.b16 %v5605, %v5603
    %v5696 = vpack.c.b16 %v5608, %v5606
    %v5697 = vpack.c.b16 %v5609, %v5607
    %v5698 = vpack.c.b16 %v5612, %v5610
    %v5699 = vpack.c.b16 %v5613, %v5611
    %v5700 = vpack.c.b16 %v5616, %v5614
    %v5701 = vpack.c.b16 %v5617, %v5615
    %v5702 = vpack.c.b16 %v5620, %v5618
    %v5703 = vpack.c.b16 %v5621, %v5619
    %v5704 = vpack.c.b16 %v5624, %v5622
    %v5705 = vpack.c.b16 %v5625, %v5623
    %v5706 = vpack.c.b16 %v5628, %v5626
    %v5707 = vpack.c.b16 %v5629, %v5627
    %v5708 = vpack.c.b16 %v5632, %v5630
    %v5709 = vpack.c.b16 %v5633, %v5631
    %v5710 = vpack.c.b16 %v5636, %v5634
    %v5711 = vpack.c.b16 %v5637, %v5635
    %v5712 = vpack.c.b16 %v5640, %v5638
    %v5713 = vpack.c.b16 %v5641, %v5639
    %v5714 = vpack.c.b16 %v5644, %v5642
    %v5715 = vpack.c.b16 %v5645, %v5643
    %v5716 = vpack.c.b16 %v5648, %v5646
    %v5717 = vpack.c.b16 %v5649, %v5647
    %v5718 = vpack.c.b16 %v5652, %v5650
    %v5719 = vpack.c.b16 %v5653, %v5651
    %v5720 = vpack.c.b16 %v5656, %v5654
    %v5721 = vpack.c.b16 %v5657, %v5655
    %5786 = vmatprep.subr.bf16.mxu0 %v5659
    %5787 = vmatpush1.bf16.msra.mxu0 %v5658
    %5788 = vmatprep.subr.bf16.mxu0 %v5661
    %5789 = vmatpush1.bf16.msra.mxu0 %v5660
    %5790 = vmatprep.subr.bf16.mxu0 %v5663
    %5791 = vmatpush1.bf16.msra.mxu0 %v5662
    %5792 = vmatprep.subr.bf16.mxu0 %v5665
    %5793 = vmatpush1.bf16.msra.mxu0 %v5664
    %5794 = vmatprep.subr.bf16.mxu0 %v5667
    %5795 = vmatpush1.bf16.msra.mxu0 %v5666
    %5796 = vmatprep.subr.bf16.mxu0 %v5669
    %5797 = vmatpush1.bf16.msra.mxu0 %v5668
    %5798 = vmatprep.subr.bf16.mxu0 %v5671
    %5799 = vmatpush1.bf16.msra.mxu0 %v5670
    %5800 = vmatprep.subr.bf16.mxu0 %v5673
    %5801 = vmatpush1.bf16.msra.mxu0 %v5672
    %5802 = vmatprep.subr.bf16.mxu0 %v5675
    %5803 = vmatpush1.bf16.msra.mxu0 %v5674
    %5804 = vmatprep.subr.bf16.mxu0 %v5677
    %5805 = vmatpush1.bf16.msra.mxu0 %v5676
    %5806 = vmatprep.subr.bf16.mxu0 %v5679
    %5807 = vmatpush1.bf16.msra.mxu0 %v5678
    %5808 = vmatprep.subr.bf16.mxu0 %v5681
    %5809 = vmatpush1.bf16.msra.mxu0 %v5680
    %5810 = vmatprep.subr.bf16.mxu0 %v5683
    %5811 = vmatpush1.bf16.msra.mxu0 %v5682
    %5812 = vmatprep.subr.bf16.mxu0 %v5685
    %5813 = vmatpush1.bf16.msra.mxu0 %v5684
    %5814 = vmatprep.subr.bf16.mxu0 %v5687
    %5815 = vmatpush1.bf16.msra.mxu0 %v5686
    %5816 = vmatprep.subr.bf16.mxu0 %v5689
    %5817 = vmatpush1.bf16.msra.mxu0 %v5688
    %5818 = vmatprep.mubr.bf16.mxu0 %v5364
    %5819 = vmatmul.mubr.bf16.gmra.mrb[0].mxu0 %v5363
    %v5820 = vpop.f32.mrb[0].mxu0
    %v5821 = vadd.f32 %v5459, %v5820
    %v5822 = vpop.f32.mrb[0].mxu0
    %v5823 = vadd.f32 %v5463, %v5822
    %v5824 = vpop.f32.mrb[0].mxu0
    %v5825 = vadd.f32 %v5459, %v5824
    %v5826 = vpop.f32.mrb[0].mxu0
    %v5827 = vadd.f32 %v5463, %v5826
    %5828 = vmatprep.mubr.bf16.mxu0 %v5368
    %5829 = vmatmul.mubr.bf16.gmra.mrb[0].mxu0 %v5367
    %v5830 = vpop.f32.mrb[0].mxu0
    %v5831 = vadd.f32 %v5459, %v5830
    %v5832 = vpop.f32.mrb[0].mxu0
    %v5833 = vadd.f32 %v5463, %v5832
    %v5834 = vpop.f32.mrb[0].mxu0
    %v5835 = vadd.f32 %v5459, %v5834
    %v5836 = vpop.f32.mrb[0].mxu0
    %v5837 = vadd.f32 %v5463, %v5836
    %5838 = vmatprep.mubr.bf16.mxu0 %v5372
    %5839 = vmatmul.mubr.bf16.gmra.mrb[0].mxu0 %v5371
    %v5840 = vpop.f32.mrb[0].mxu0
    %v5841 = vadd.f32 %v5459, %v5840
    %v5842 = vpop.f32.mrb[0].mxu0
    %v5843 = vadd.f32 %v5463, %v5842
    %v5844 = vpop.f32.mrb[0].mxu0
    %v5845 = vadd.f32 %v5459, %v5844
    %v5846 = vpop.f32.mrb[0].mxu0
    %v5847 = vadd.f32 %v5463, %v5846
    %5848 = vmatprep.mubr.bf16.mxu0 %v5376
    %5849 = vmatmul.mubr.bf16.gmra.mrb[0].mxu0 %v5375
    %v5850 = vpop.f32.mrb[0].mxu0
    %v5851 = vadd.f32 %v5459, %v5850
    %v5852 = vpop.f32.mrb[0].mxu0
    %v5853 = vadd.f32 %v5463, %v5852
    %v5854 = vpop.f32.mrb[0].mxu0
    %v5855 = vadd.f32 %v5459, %v5854
    %v5856 = vpop.f32.mrb[0].mxu0
    %v5857 = vadd.f32 %v5463, %v5856
    %5858 = vmatprep.mubr.bf16.mxu0 %v5380
    %5859 = vmatmul.mubr.bf16.gmra.mrb[0].mxu0 %v5379
    %v5860 = vpop.f32.mrb[0].mxu0
    %v5861 = vadd.f32 %v5459, %v5860
    %v5862 = vpop.f32.mrb[0].mxu0
    %v5863 = vadd.f32 %v5463, %v5862
    %v5864 = vpop.f32.mrb[0].mxu0
    %v5865 = vadd.f32 %v5459, %v5864
    %v5866 = vpop.f32.mrb[0].mxu0
    %v5867 = vadd.f32 %v5463, %v5866
    %5868 = vmatprep.mubr.bf16.mxu0 %v5384
    %5869 = vmatmul.mubr.bf16.gmra.mrb[0].mxu0 %v5383
    %v5870 = vpop.f32.mrb[0].mxu0
    %v5871 = vadd.f32 %v5459, %v5870
    %v5872 = vpop.f32.mrb[0].mxu0
    %v5873 = vadd.f32 %v5463, %v5872
    %v5874 = vpop.f32.mrb[0].mxu0
    %v5875 = vadd.f32 %v5459, %v5874
    %v5876 = vpop.f32.mrb[0].mxu0
    %v5877 = vadd.f32 %v5463, %v5876
    %5878 = vmatprep.mubr.bf16.mxu0 %v5388
    %5879 = vmatmul.mubr.bf16.gmra.mrb[0].mxu0 %v5387
    %v5880 = vpop.f32.mrb[0].mxu0
    %v5881 = vadd.f32 %v5459, %v5880
    %v5882 = vpop.f32.mrb[0].mxu0
    %v5883 = vadd.f32 %v5463, %v5882
    %v5884 = vpop.f32.mrb[0].mxu0
    %v5885 = vpop.f32.mrb[0].mxu0
    %5886 = vdwg.mxu0
    %5887 = vmatprep.subr.bf16.mxu0 %v5691
    %5888 = vmatpush1.bf16.msra.mxu0 %v5690
    %5889 = vmatprep.subr.bf16.mxu0 %v5693
    %5890 = vmatpush1.bf16.msra.mxu0 %v5692
    %5891 = vmatprep.subr.bf16.mxu0 %v5695
    %5892 = vmatpush1.bf16.msra.mxu0 %v5694
    %5893 = vmatprep.subr.bf16.mxu0 %v5697
    %5894 = vmatpush1.bf16.msra.mxu0 %v5696
    %5895 = vmatprep.subr.bf16.mxu0 %v5699
    %5896 = vmatpush1.bf16.msra.mxu0 %v5698
    %5897 = vmatprep.subr.bf16.mxu0 %v5701
    %5898 = vmatpush1.bf16.msra.mxu0 %v5700
    %5899 = vmatprep.subr.bf16.mxu0 %v5703
    %5900 = vmatpush1.bf16.msra.mxu0 %v5702
    %5901 = vmatprep.subr.bf16.mxu0 %v5705
    %5902 = vmatpush1.bf16.msra.mxu0 %v5704
    %5903 = vmatprep.subr.bf16.mxu0 %v5707
    %5904 = vmatpush1.bf16.msra.mxu0 %v5706
    %5905 = vmatprep.subr.bf16.mxu0 %v5709
    %5906 = vmatpush1.bf16.msra.mxu0 %v5708
    %5907 = vmatprep.subr.bf16.mxu0 %v5711
    %5908 = vmatpush1.bf16.msra.mxu0 %v5710
    %5909 = vmatprep.subr.bf16.mxu0 %v5713
    %5910 = vmatpush1.bf16.msra.mxu0 %v5712
    %5911 = vmatprep.subr.bf16.mxu0 %v5715
    %5912 = vmatpush1.bf16.msra.mxu0 %v5714
    %5913 = vmatprep.subr.bf16.mxu0 %v5717
    %5914 = vmatpush1.bf16.msra.mxu0 %v5716
    %5915 = vmatprep.subr.bf16.mxu0 %v5719
    %5916 = vmatpush1.bf16.msra.mxu0 %v5718
    %5917 = vmatprep.subr.bf16.mxu0 %v5721
    %5918 = vmatpush1.bf16.msra.mxu0 %v5720
    %5919 = vmatprep.mubr.bf16.mxu0 %v5366
    %5920 = vmatmul.mubr.bf16.gmra.mrb[0].mxu0 %v5365
    %v5921 = vpop.f32.mrb[0].mxu0
    %v5922 = vadd.f32 %v5821, %v5921
    %v5923 = vpop.f32.mrb[0].mxu0
    %v5924 = vadd.f32 %v5823, %v5923
    %v5925 = vpop.f32.mrb[0].mxu0
    %v5926 = vadd.f32 %v5825, %v5925
    %v5927 = vpop.f32.mrb[0].mxu0
    %v5928 = vadd.f32 %v5827, %v5927
    %5929 = vmatprep.mubr.bf16.mxu0 %v5370
    %5930 = vmatmul.mubr.bf16.gmra.mrb[0].mxu0 %v5369
    %v5931 = vpop.f32.mrb[0].mxu0
    %v5932 = vadd.f32 %v5831, %v5931
    %v5933 = vpop.f32.mrb[0].mxu0
    %v5934 = vadd.f32 %v5833, %v5933
    %v5935 = vpop.f32.mrb[0].mxu0
    %v5936 = vadd.f32 %v5835, %v5935
    %v5937 = vpop.f32.mrb[0].mxu0
    %v5938 = vadd.f32 %v5837, %v5937
    %5939 = vmatprep.mubr.bf16.mxu0 %v5374
    %5940 = vmatmul.mubr.bf16.gmra.mrb[0].mxu0 %v5373
    %v5941 = vpop.f32.mrb[0].mxu0
    %v5942 = vadd.f32 %v5841, %v5941
    %v5943 = vpop.f32.mrb[0].mxu0
    %v5944 = vadd.f32 %v5843, %v5943
    %v5945 = vpop.f32.mrb[0].mxu0
    %v5946 = vadd.f32 %v5845, %v5945
    %v5947 = vpop.f32.mrb[0].mxu0
    %v5948 = vadd.f32 %v5847, %v5947
    %5949 = vmatprep.mubr.bf16.mxu0 %v5378
    %5950 = vmatmul.mubr.bf16.gmra.mrb[0].mxu0 %v5377
    %v5951 = vpop.f32.mrb[0].mxu0
    %v5952 = vadd.f32 %v5851, %v5951
    %v5953 = vpop.f32.mrb[0].mxu0
    %v5954 = vadd.f32 %v5853, %v5953
    %v5955 = vpop.f32.mrb[0].mxu0
    %v5956 = vadd.f32 %v5855, %v5955
    %v5957 = vpop.f32.mrb[0].mxu0
    %v5958 = vadd.f32 %v5857, %v5957
    %5959 = vmatprep.mubr.bf16.mxu0 %v5382
    %5960 = vmatmul.mubr.bf16.gmra.mrb[0].mxu0 %v5381
    %v5961 = vpop.f32.mrb[0].mxu0
    %v5962 = vadd.f32 %v5861, %v5961
    %v5963 = vpop.f32.mrb[0].mxu0
    %v5964 = vadd.f32 %v5863, %v5963
    %v5965 = vpop.f32.mrb[0].mxu0
    %v5966 = vadd.f32 %v5865, %v5965
    %v5967 = vpop.f32.mrb[0].mxu0
    %v5968 = vadd.f32 %v5867, %v5967
    %5969 = vmatprep.mubr.bf16.mxu0 %v5386
    %5970 = vmatmul.mubr.bf16.gmra.mrb[0].mxu0 %v5385
    %v5971 = vpop.f32.mrb[0].mxu0
    %v5972 = vadd.f32 %v5871, %v5971
    %v5973 = vpop.f32.mrb[0].mxu0
    %v5974 = vadd.f32 %v5873, %v5973
    %v5975 = vpop.f32.mrb[0].mxu0
    %v5976 = vadd.f32 %v5875, %v5975
    %v5977 = vpop.f32.mrb[0].mxu0
    %v5978 = vadd.f32 %v5877, %v5977
    %5979 = vmatprep.mubr.bf16.mxu0 %v5390
    %5980 = vmatmul.mubr.bf16.gmra.mrb[0].mxu0 %v5389
    %v5981 = vpop.f32.mrb[0].mxu0
    %v5982 = vadd.f32 %v5881, %v5981
    %v5983 = vpop.f32.mrb[0].mxu0
    %v5984 = vadd.f32 %v5883, %v5983
    %v5985 = vpop.f32.mrb[0].mxu0
    %v5986 = vpop.f32.mrb[0].mxu0
    %5987 = vdwg.mxu0
    %v5988 = vmax.f32 %v5922, 0.0
    %v5989 = vmax.f32 %v5924, 0.0
    %v5990 = vmax.f32 %v5926, 0.0
    %v5991 = vmax.f32 %v5928, 0.0
    %v5992 = vmax.f32 %v5932, 0.0
    %v5993 = vmax.f32 %v5934, 0.0
    %v5994 = vmax.f32 %v5936, 0.0
    %v5995 = vmax.f32 %v5938, 0.0
    %v5996 = vmax.f32 %v5942, 0.0
    %v5997 = vmax.f32 %v5944, 0.0
    %v5998 = vmax.f32 %v5946, 0.0
    %v5999 = vmax.f32 %v5948, 0.0
    %v6000 = vmax.f32 %v5952, 0.0
    %v6001 = vmax.f32 %v5954, 0.0
    %v6002 = vmax.f32 %v5956, 0.0
    %v6003 = vmax.f32 %v5958, 0.0
    %v6004 = vmax.f32 %v5962, 0.0
    %v6005 = vmax.f32 %v5964, 0.0
    %v6006 = vmax.f32 %v5966, 0.0
    %v6007 = vmax.f32 %v5968, 0.0
    %v6008 = vmax.f32 %v5972, 0.0
    %v6009 = vmax.f32 %v5974, 0.0
    %v6010 = vmax.f32 %v5976, 0.0
    %v6011 = vmax.f32 %v5978, 0.0
    %v6012 = vmax.f32 %v5982, 0.0
    %v6013 = vmax.f32 %v5984, 0.0
    %v6015 = vlaneseq
    %v6016 = vshrl.u32 %v6015, 7
    %v6017 = vsub.s32 0, %v6016
    %v6018 = vrot.slane %v5360, %v6017
    %v6019 = vlaneseq
    %v6020 = vshrl.u32 %v6019, 7
    %v6021 = vsub.s32 1, %v6020
    %v6022 = vrot.slane %v5360, %v6021
    %v6025 = vmul.f32 %v5988, %v6018
    %v6026 = vmul.f32 %v5989, %v6022
    %v6027 = vmul.f32 %v5990, %v6018
    %v6028 = vmul.f32 %v5991, %v6022
    %v6029 = vmul.f32 %v5992, %v6018
    %v6030 = vmul.f32 %v5993, %v6022
    %v6031 = vmul.f32 %v5994, %v6018
    %v6032 = vmul.f32 %v5995, %v6022
    %v6033 = vmul.f32 %v5996, %v6018
    %v6034 = vmul.f32 %v5997, %v6022
    %v6035 = vmul.f32 %v5998, %v6018
    %v6036 = vmul.f32 %v5999, %v6022
    %v6037 = vmul.f32 %v6000, %v6018
    %v6038 = vmul.f32 %v6001, %v6022
    %v6039 = vmul.f32 %v6002, %v6018
    %v6040 = vmul.f32 %v6003, %v6022
    %v6041 = vmul.f32 %v6004, %v6018
    %v6042 = vmul.f32 %v6005, %v6022
    %v6043 = vmul.f32 %v6006, %v6018
    %v6044 = vmul.f32 %v6007, %v6022
    %v6045 = vmul.f32 %v6008, %v6018
    %v6046 = vmul.f32 %v6009, %v6022
    %v6047 = vmul.f32 %v6010, %v6018
    %v6048 = vmul.f32 %v6011, %v6022
    %v6049 = vmul.f32 %v6012, %v6018
    %v6050 = vmul.f32 %v6013, %v6022
    %v6052 = vlaneseq
    %v6053 = vshrl.u32 %v6052, 7
    %v6054 = vsub.s32 0, %v6053
    %v6055 = vrot.slane %v5362, %v6054
    %v6056 = vlaneseq
    %v6057 = vshrl.u32 %v6056, 7
    %v6058 = vsub.s32 1, %v6057
    %v6059 = vrot.slane %v5362, %v6058
    %v6062 = vadd.f32 %v6025, %v6055
    %v6063 = vadd.f32 %v6026, %v6059
    %v6064 = vadd.f32 %v6027, %v6055
    %v6065 = vadd.f32 %v6028, %v6059
    %v6066 = vadd.f32 %v6029, %v6055
    %v6067 = vadd.f32 %v6030, %v6059
    %v6068 = vadd.f32 %v6031, %v6055
    %v6069 = vadd.f32 %v6032, %v6059
    %v6070 = vadd.f32 %v6033, %v6055
    %v6071 = vadd.f32 %v6034, %v6059
    %v6072 = vadd.f32 %v6035, %v6055
    %v6073 = vadd.f32 %v6036, %v6059
    %v6074 = vadd.f32 %v6037, %v6055
    %v6075 = vadd.f32 %v6038, %v6059
    %v6076 = vadd.f32 %v6039, %v6055
    %v6077 = vadd.f32 %v6040, %v6059
    %v6078 = vadd.f32 %v6041, %v6055
    %v6079 = vadd.f32 %v6042, %v6059
    %v6080 = vadd.f32 %v6043, %v6055
    %v6081 = vadd.f32 %v6044, %v6059
    %v6082 = vadd.f32 %v6045, %v6055
    %v6083 = vadd.f32 %v6046, %v6059
    %v6084 = vadd.f32 %v6047, %v6055
    %v6085 = vadd.f32 %v6048, %v6059
    %v6086 = vadd.f32 %v6049, %v6055
    %v6087 = vadd.f32 %v6050, %v6059
    %v6088 = vadd.f32 %v6062, %v6063
    %6089 = vadd.xlane.f32.xlu0 %v6088
    %v6090 = vpop.xlane.xlu0 %6089
    %v6091 = vadd.f32 %v6064, %v6065
    %6092 = vadd.xlane.f32.xlu0 %v6091
    %v6093 = vpop.xlane.xlu0 %6092
    %v6094 = vadd.f32 %v6066, %v6067
    %6095 = vadd.xlane.f32.xlu0 %v6094
    %v6096 = vpop.xlane.xlu0 %6095
    %v6097 = vadd.f32 %v6068, %v6069
    %6098 = vadd.xlane.f32.xlu0 %v6097
    %v6099 = vpop.xlane.xlu0 %6098
    %v6100 = vadd.f32 %v6070, %v6071
    %6101 = vadd.xlane.f32.xlu0 %v6100
    %v6102 = vpop.xlane.xlu0 %6101
    %v6103 = vadd.f32 %v6072, %v6073
    %6104 = vadd.xlane.f32.xlu0 %v6103
    %v6105 = vpop.xlane.xlu0 %6104
    %v6106 = vadd.f32 %v6074, %v6075
    %6107 = vadd.xlane.f32.xlu0 %v6106
    %v6108 = vpop.xlane.xlu0 %6107
    %v6109 = vadd.f32 %v6076, %v6077
    %6110 = vadd.xlane.f32.xlu0 %v6109
    %v6111 = vpop.xlane.xlu0 %6110
    %v6112 = vadd.f32 %v6078, %v6079
    %6113 = vadd.xlane.f32.xlu0 %v6112
    %v6114 = vpop.xlane.xlu0 %6113
    %v6115 = vadd.f32 %v6080, %v6081
    %6116 = vadd.xlane.f32.xlu0 %v6115
    %v6117 = vpop.xlane.xlu0 %6116
    %v6118 = vadd.f32 %v6082, %v6083
    %6119 = vadd.xlane.f32.xlu0 %v6118
    %v6120 = vpop.xlane.xlu0 %6119
    %v6121 = vadd.f32 %v6084, %v6085
    %6122 = vadd.xlane.f32.xlu0 %v6121
    %v6123 = vpop.xlane.xlu0 %6122
    %v6124 = vadd.f32 %v6086, %v6087
    %6125 = vadd.xlane.f32.xlu0 %v6124
    %v6126 = vpop.xlane.xlu0 %6125
    %v6127 = vrcp.pop 256.0
    %v6128 = vmul.f32 %v6090, %v6127
    %v6129 = vmul.f32 %v6093, %v6127
    %v6130 = vmul.f32 %v6096, %v6127
    %v6131 = vmul.f32 %v6099, %v6127
    %v6132 = vmul.f32 %v6102, %v6127
    %v6133 = vmul.f32 %v6105, %v6127
    %v6134 = vmul.f32 %v6108, %v6127
    %v6135 = vmul.f32 %v6111, %v6127
    %v6136 = vmul.f32 %v6114, %v6127
    %v6137 = vmul.f32 %v6117, %v6127
    %v6138 = vmul.f32 %v6120, %v6127
    %v6139 = vmul.f32 %v6123, %v6127
    %v6140 = vmul.f32 %v6126, %v6127
    %v6141 = vsub.f32 %v6062, %v6128
    %v6142 = vsub.f32 %v6063, %v6128
    %v6143 = vsub.f32 %v6064, %v6129
    %v6144 = vsub.f32 %v6065, %v6129
    %v6145 = vsub.f32 %v6066, %v6130
    %v6146 = vsub.f32 %v6067, %v6130
    %v6147 = vsub.f32 %v6068, %v6131
    %v6148 = vsub.f32 %v6069, %v6131
    %v6149 = vsub.f32 %v6070, %v6132
    %v6150 = vsub.f32 %v6071, %v6132
    %v6151 = vsub.f32 %v6072, %v6133
    %v6152 = vsub.f32 %v6073, %v6133
    %v6153 = vsub.f32 %v6074, %v6134
    %v6154 = vsub.f32 %v6075, %v6134
    %v6155 = vsub.f32 %v6076, %v6135
    %v6156 = vsub.f32 %v6077, %v6135
    %v6157 = vsub.f32 %v6078, %v6136
    %v6158 = vsub.f32 %v6079, %v6136
    %v6159 = vsub.f32 %v6080, %v6137
    %v6160 = vsub.f32 %v6081, %v6137
    %v6161 = vsub.f32 %v6082, %v6138
    %v6162 = vsub.f32 %v6083, %v6138
    %v6163 = vsub.f32 %v6084, %v6139
    %v6164 = vsub.f32 %v6085, %v6139
    %v6165 = vsub.f32 %v6086, %v6140
    %v6166 = vsub.f32 %v6087, %v6140
    %v6167 = vmul.f32 %v6141, %v6141
    %v6168 = vmul.f32 %v6142, %v6142
    %v6169 = vmul.f32 %v6143, %v6143
    %v6170 = vmul.f32 %v6144, %v6144
    %v6171 = vmul.f32 %v6145, %v6145
    %v6172 = vmul.f32 %v6146, %v6146
    %v6173 = vmul.f32 %v6147, %v6147
    %v6174 = vmul.f32 %v6148, %v6148
    %v6175 = vmul.f32 %v6149, %v6149
    %v6176 = vmul.f32 %v6150, %v6150
    %v6177 = vmul.f32 %v6151, %v6151
    %v6178 = vmul.f32 %v6152, %v6152
    %v6179 = vmul.f32 %v6153, %v6153
    %v6180 = vmul.f32 %v6154, %v6154
    %v6181 = vmul.f32 %v6155, %v6155
    %v6182 = vmul.f32 %v6156, %v6156
    %v6183 = vmul.f32 %v6157, %v6157
    %v6184 = vmul.f32 %v6158, %v6158
    %v6185 = vmul.f32 %v6159, %v6159
    %v6186 = vmul.f32 %v6160, %v6160
    %v6187 = vmul.f32 %v6161, %v6161
    %v6188 = vmul.f32 %v6162, %v6162
    %v6189 = vmul.f32 %v6163, %v6163
    %v6190 = vmul.f32 %v6164, %v6164
    %v6191 = vmul.f32 %v6165, %v6165
    %v6192 = vmul.f32 %v6166, %v6166
    %v6193 = vadd.f32 %v6167, %v6168
    %6194 = vadd.xlane.f32.xlu0 %v6193
    %v6195 = vpop.xlane.xlu0 %6194
    %v6196 = vadd.f32 %v6169, %v6170
    %6197 = vadd.xlane.f32.xlu0 %v6196
    %v6198 = vpop.xlane.xlu0 %6197
    %v6199 = vadd.f32 %v6171, %v6172
    %6200 = vadd.xlane.f32.xlu0 %v6199
    %v6201 = vpop.xlane.xlu0 %6200
    %v6202 = vadd.f32 %v6173, %v6174
    %6203 = vadd.xlane.f32.xlu0 %v6202
    %v6204 = vpop.xlane.xlu0 %6203
    %v6205 = vadd.f32 %v6175, %v6176
    %6206 = vadd.xlane.f32.xlu0 %v6205
    %v6207 = vpop.xlane.xlu0 %6206
    %v6208 = vadd.f32 %v6177, %v6178
    %6209 = vadd.xlane.f32.xlu0 %v6208
    %v6210 = vpop.xlane.xlu0 %6209
    %v6211 = vadd.f32 %v6179, %v6180
    %6212 = vadd.xlane.f32.xlu0 %v6211
    %v6213 = vpop.xlane.xlu0 %6212
    %v6214 = vadd.f32 %v6181, %v6182
    %6215 = vadd.xlane.f32.xlu0 %v6214
    %v6216 = vpop.xlane.xlu0 %6215
    %v6217 = vadd.f32 %v6183, %v6184
    %6218 = vadd.xlane.f32.xlu0 %v6217
    %v6219 = vpop.xlane.xlu0 %6218
    %v6220 = vadd.f32 %v6185, %v6186
    %6221 = vadd.xlane.f32.xlu0 %v6220
    %v6222 = vpop.xlane.xlu0 %6221
    %v6223 = vadd.f32 %v6187, %v6188
    %6224 = vadd.xlane.f32.xlu0 %v6223
    %v6225 = vpop.xlane.xlu0 %6224
    %v6226 = vadd.f32 %v6189, %v6190
    %6227 = vadd.xlane.f32.xlu0 %v6226
    %v6228 = vpop.xlane.xlu0 %6227
    %v6229 = vadd.f32 %v6191, %v6192
    %6230 = vadd.xlane.f32.xlu0 %v6229
    %v6231 = vpop.xlane.xlu0 %6230
    %v6232 = vmul.f32 %v6195, %v6127
    %v6233 = vmul.f32 %v6198, %v6127
    %v6234 = vmul.f32 %v6201, %v6127
    %v6235 = vmul.f32 %v6204, %v6127
    %v6236 = vmul.f32 %v6207, %v6127
    %v6237 = vmul.f32 %v6210, %v6127
    %v6238 = vmul.f32 %v6213, %v6127
    %v6239 = vmul.f32 %v6216, %v6127
    %v6240 = vmul.f32 %v6219, %v6127
    %v6241 = vmul.f32 %v6222, %v6127
    %v6242 = vmul.f32 %v6225, %v6127
    %v6243 = vmul.f32 %v6228, %v6127
    %v6244 = vmul.f32 %v6231, %v6127
    %v6245 = vadd.f32 %v6232, 1e-05
    %v6246 = vadd.f32 %v6233, 1e-05
    %v6247 = vadd.f32 %v6234, 1e-05
    %v6248 = vadd.f32 %v6235, 1e-05
    %v6249 = vadd.f32 %v6236, 1e-05
    %v6250 = vadd.f32 %v6237, 1e-05
    %v6251 = vadd.f32 %v6238, 1e-05
    %v6252 = vadd.f32 %v6239, 1e-05
    %v6253 = vadd.f32 %v6240, 1e-05
    %v6254 = vadd.f32 %v6241, 1e-05
    %v6255 = vadd.f32 %v6242, 1e-05
    %v6256 = vadd.f32 %v6243, 1e-05
    %v6257 = vadd.f32 %v6244, 1e-05
    %v6258 = vrsqrt.pop %v6245
    %v6259 = vrsqrt.pop %v6246
    %v6260 = vrsqrt.pop %v6247
    %v6261 = vrsqrt.pop %v6248
    %v6262 = vrsqrt.pop %v6249
    %v6263 = vrsqrt.pop %v6250
    %v6264 = vrsqrt.pop %v6251
    %v6265 = vrsqrt.pop %v6252
    %v6266 = vrsqrt.pop %v6253
    %v6267 = vrsqrt.pop %v6254
    %v6268 = vrsqrt.pop %v6255
    %v6269 = vrsqrt.pop %v6256
    %v6270 = vrsqrt.pop %v6257
    %v6271 = vmul.f32 %v6141, %v6258
    %v6272 = vmul.f32 %v6142, %v6258
    %v6273 = vmul.f32 %v6143, %v6259
    %v6274 = vmul.f32 %v6144, %v6259
    %v6275 = vmul.f32 %v6145, %v6260
    %v6276 = vmul.f32 %v6146, %v6260
    %v6277 = vmul.f32 %v6147, %v6261
    %v6278 = vmul.f32 %v6148, %v6261
    %v6279 = vmul.f32 %v6149, %v6262
    %v6280 = vmul.f32 %v6150, %v6262
    %v6281 = vmul.f32 %v6151, %v6263
    %v6282 = vmul.f32 %v6152, %v6263
    %v6283 = vmul.f32 %v6153, %v6264
    %v6284 = vmul.f32 %v6154, %v6264
    %v6285 = vmul.f32 %v6155, %v6265
    %v6286 = vmul.f32 %v6156, %v6265
    %v6287 = vmul.f32 %v6157, %v6266
    %v6288 = vmul.f32 %v6158, %v6266
    %v6289 = vmul.f32 %v6159, %v6267
    %v6290 = vmul.f32 %v6160, %v6267
    %v6291 = vmul.f32 %v6161, %v6268
    %v6292 = vmul.f32 %v6162, %v6268
    %v6293 = vmul.f32 %v6163, %v6269
    %v6294 = vmul.f32 %v6164, %v6269
    %v6295 = vmul.f32 %v6165, %v6270
    %v6296 = vmul.f32 %v6166, %v6270
    %v6297 = vpack.c.bf16 %v6273, %v6271
    %v6298 = vpack.c.bf16 %v6274, %v6272
    %v6299 = vpack.c.bf16 %v6277, %v6275
    %v6300 = vpack.c.bf16 %v6278, %v6276
    %v6301 = vpack.c.bf16 %v6281, %v6279
    %v6302 = vpack.c.bf16 %v6282, %v6280
    %v6303 = vpack.c.bf16 %v6285, %v6283
    %v6304 = vpack.c.bf16 %v6286, %v6284
    %v6305 = vpack.c.bf16 %v6289, %v6287
    %v6306 = vpack.c.bf16 %v6290, %v6288
    %v6307 = vpack.c.bf16 %v6293, %v6291
    %v6308 = vpack.c.bf16 %v6294, %v6292
    %v6309 = vpack.c.bf16 %v6295, %v6295
    %v6310 = vpack.c.bf16 %v6296, %v6296
    %v6311 = vld [vmem:[#allocation13] sm:$0xff]
    %v6312 = vld [vmem:[#allocation13 + $0x8] sm:$0xff]
    %v6313 = vld [vmem:[#allocation13 + $0x10] sm:$0xff]
    %v6314 = vld [vmem:[#allocation13 + $0x18] sm:$0xff]
    %v6315 = vld [vmem:[#allocation13 + $0x20] sm:$0xff]
    %v6316 = vld [vmem:[#allocation13 + $0x28] sm:$0xff]
    %v6317 = vld [vmem:[#allocation13 + $0x30] sm:$0xff]
    %v6318 = vld [vmem:[#allocation13 + $0x38] sm:$0xff]
    %v6319 = vld [vmem:[#allocation13 + $0x40] sm:$0xff]
    %v6320 = vld [vmem:[#allocation13 + $0x48] sm:$0xff]
    %v6321 = vld [vmem:[#allocation13 + $0x50] sm:$0xff]
    %v6322 = vld [vmem:[#allocation13 + $0x58] sm:$0xff]
    %v6323 = vld [vmem:[#allocation13 + $0x60] sm:$0xff]
    %v6324 = vld [vmem:[#allocation13 + $0x68] sm:$0xff]
    %v6325 = vld [vmem:[#allocation13 + $0x70] sm:$0xff]
    %v6326 = vld [vmem:[#allocation13 + $0x78] sm:$0xff]
    %v6327 = vld [vmem:[#allocation13 + $0x80] sm:$0xff]
    %v6328 = vld [vmem:[#allocation13 + $0x88] sm:$0xff]
    %v6329 = vld [vmem:[#allocation13 + $0x90] sm:$0xff]
    %v6330 = vld [vmem:[#allocation13 + $0x98] sm:$0xff]
    %v6331 = vld [vmem:[#allocation13 + $0xa0] sm:$0xff]
    %v6332 = vld [vmem:[#allocation13 + $0xa8] sm:$0xff]
    %v6333 = vld [vmem:[#allocation13 + $0xb0] sm:$0xff]
    %v6334 = vld [vmem:[#allocation13 + $0xb8] sm:$0xff]
    %v6335 = vld [vmem:[#allocation13 + $0xc0] sm:$0xff]
    %v6336 = vld [vmem:[#allocation13 + $0xc8] sm:$0xff]
    %v6337 = vld [vmem:[#allocation13 + $0xd0] sm:$0xff]
    %v6338 = vld [vmem:[#allocation13 + $0xd8] sm:$0xff]
    %v6339 = vld [vmem:[#allocation13 + $0xe0] sm:$0xff]
    %v6340 = vld [vmem:[#allocation13 + $0xe8] sm:$0xff]
    %v6341 = vld [vmem:[#allocation13 + $0xf0] sm:$0xff]
    %v6342 = vld [vmem:[#allocation13 + $0xf8] sm:$0xff]
    %v6343 = vld [vmem:[%s8] sm:$0x3]
    %v6345 = vlaneseq
    %v6346 = vshrl.u32 %v6345, 7
    %v6347 = vsub.s32 0, %v6346
    %v6348 = vrot.slane %v6343, %v6347
    %v6349 = vlaneseq
    %v6350 = vshrl.u32 %v6349, 7
    %v6351 = vsub.s32 1, %v6350
    %v6352 = vrot.slane %v6343, %v6351
    %v6387 = vunpack.c.l.b16 %v6311
    %v6388 = vunpack.c.h.b16 %v6311
    %v6389 = vunpack.c.l.b16 %v6312
    %v6390 = vunpack.c.h.b16 %v6312
    %v6391 = vunpack.c.l.b16 %v6313
    %v6392 = vunpack.c.h.b16 %v6313
    %v6393 = vunpack.c.l.b16 %v6314
    %v6394 = vunpack.c.h.b16 %v6314
    %v6395 = vunpack.c.l.b16 %v6315
    %v6396 = vunpack.c.h.b16 %v6315
    %v6397 = vunpack.c.l.b16 %v6316
    %v6398 = vunpack.c.h.b16 %v6316
    %v6399 = vunpack.c.l.b16 %v6317
    %v6400 = vunpack.c.h.b16 %v6317
    %v6401 = vunpack.c.l.b16 %v6318
    %v6402 = vunpack.c.h.b16 %v6318
    %v6403 = vunpack.c.l.b16 %v6319
    %v6404 = vunpack.c.h.b16 %v6319
    %v6405 = vunpack.c.l.b16 %v6320
    %v6406 = vunpack.c.h.b16 %v6320
    %v6407 = vunpack.c.l.b16 %v6321
    %v6408 = vunpack.c.h.b16 %v6321
    %v6409 = vunpack.c.l.b16 %v6322
    %v6410 = vunpack.c.h.b16 %v6322
    %v6411 = vunpack.c.l.b16 %v6323
    %v6412 = vunpack.c.h.b16 %v6323
    %v6413 = vunpack.c.l.b16 %v6324
    %v6414 = vunpack.c.h.b16 %v6324
    %v6415 = vunpack.c.l.b16 %v6325
    %v6416 = vunpack.c.h.b16 %v6325
    %v6417 = vunpack.c.l.b16 %v6326
    %v6418 = vunpack.c.h.b16 %v6326
    %v6419 = vunpack.c.l.b16 %v6327
    %v6420 = vunpack.c.h.b16 %v6327
    %v6421 = vunpack.c.l.b16 %v6328
    %v6422 = vunpack.c.h.b16 %v6328
    %v6423 = vunpack.c.l.b16 %v6329
    %v6424 = vunpack.c.h.b16 %v6329
    %v6425 = vunpack.c.l.b16 %v6330
    %v6426 = vunpack.c.h.b16 %v6330
    %v6427 = vunpack.c.l.b16 %v6331
    %v6428 = vunpack.c.h.b16 %v6331
    %v6429 = vunpack.c.l.b16 %v6332
    %v6430 = vunpack.c.h.b16 %v6332
    %v6431 = vunpack.c.l.b16 %v6333
    %v6432 = vunpack.c.h.b16 %v6333
    %v6433 = vunpack.c.l.b16 %v6334
    %v6434 = vunpack.c.h.b16 %v6334
    %v6435 = vunpack.c.l.b16 %v6335
    %v6436 = vunpack.c.h.b16 %v6335
    %v6437 = vunpack.c.l.b16 %v6336
    %v6438 = vunpack.c.h.b16 %v6336
    %v6439 = vunpack.c.l.b16 %v6337
    %v6440 = vunpack.c.h.b16 %v6337
    %v6441 = vunpack.c.l.b16 %v6338
    %v6442 = vunpack.c.h.b16 %v6338
    %v6443 = vunpack.c.l.b16 %v6339
    %v6444 = vunpack.c.h.b16 %v6339
    %v6445 = vunpack.c.l.b16 %v6340
    %v6446 = vunpack.c.h.b16 %v6340
    %v6447 = vunpack.c.l.b16 %v6341
    %v6448 = vunpack.c.h.b16 %v6341
    %v6449 = vunpack.c.l.b16 %v6342
    %v6450 = vunpack.c.h.b16 %v6342
    %v6451 = vpack.c.b16 %v6389, %v6387
    %v6452 = vpack.c.b16 %v6390, %v6388
    %v6453 = vpack.c.b16 %v6393, %v6391
    %v6454 = vpack.c.b16 %v6394, %v6392
    %v6455 = vpack.c.b16 %v6397, %v6395
    %v6456 = vpack.c.b16 %v6398, %v6396
    %v6457 = vpack.c.b16 %v6401, %v6399
    %v6458 = vpack.c.b16 %v6402, %v6400
    %v6459 = vpack.c.b16 %v6405, %v6403
    %v6460 = vpack.c.b16 %v6406, %v6404
    %v6461 = vpack.c.b16 %v6409, %v6407
    %v6462 = vpack.c.b16 %v6410, %v6408
    %v6463 = vpack.c.b16 %v6413, %v6411
    %v6464 = vpack.c.b16 %v6414, %v6412
    %v6465 = vpack.c.b16 %v6417, %v6415
    %v6466 = vpack.c.b16 %v6418, %v6416
    %v6467 = vpack.c.b16 %v6421, %v6419
    %v6468 = vpack.c.b16 %v6422, %v6420
    %v6469 = vpack.c.b16 %v6425, %v6423
    %v6470 = vpack.c.b16 %v6426, %v6424
    %v6471 = vpack.c.b16 %v6429, %v6427
    %v6472 = vpack.c.b16 %v6430, %v6428
    %v6473 = vpack.c.b16 %v6433, %v6431
    %v6474 = vpack.c.b16 %v6434, %v6432
    %v6475 = vpack.c.b16 %v6437, %v6435
    %v6476 = vpack.c.b16 %v6438, %v6436
    %v6477 = vpack.c.b16 %v6441, %v6439
    %v6478 = vpack.c.b16 %v6442, %v6440
    %v6479 = vpack.c.b16 %v6445, %v6443
    %v6480 = vpack.c.b16 %v6446, %v6444
    %v6481 = vpack.c.b16 %v6449, %v6447
    %v6482 = vpack.c.b16 %v6450, %v6448
    %6515 = vmatprep.subr.bf16.mxu0 %v6452
    %6516 = vmatpush1.bf16.msra.mxu0 %v6451
    %6517 = vmatprep.subr.bf16.mxu0 %v6454
    %6518 = vmatpush1.bf16.msra.mxu0 %v6453
    %6519 = vmatprep.subr.bf16.mxu0 %v6456
    %6520 = vmatpush1.bf16.msra.mxu0 %v6455
    %6521 = vmatprep.subr.bf16.mxu0 %v6458
    %6522 = vmatpush1.bf16.msra.mxu0 %v6457
    %6523 = vmatprep.subr.bf16.mxu0 %v6460
    %6524 = vmatpush1.bf16.msra.mxu0 %v6459
    %6525 = vmatprep.subr.bf16.mxu0 %v6462
    %6526 = vmatpush1.bf16.msra.mxu0 %v6461
    %6527 = vmatprep.subr.bf16.mxu0 %v6464
    %6528 = vmatpush1.bf16.msra.mxu0 %v6463
    %6529 = vmatprep.subr.bf16.mxu0 %v6466
    %6530 = vmatpush1.bf16.msra.mxu0 %v6465
    %6531 = vmatprep.subr.bf16.mxu0 %v6468
    %6532 = vmatpush1.bf16.msra.mxu0 %v6467
    %6533 = vmatprep.subr.bf16.mxu0 %v6470
    %6534 = vmatpush1.bf16.msra.mxu0 %v6469
    %6535 = vmatprep.subr.bf16.mxu0 %v6472
    %6536 = vmatpush1.bf16.msra.mxu0 %v6471
    %6537 = vmatprep.subr.bf16.mxu0 %v6474
    %6538 = vmatpush1.bf16.msra.mxu0 %v6473
    %6539 = vmatprep.subr.bf16.mxu0 %v6476
    %6540 = vmatpush1.bf16.msra.mxu0 %v6475
    %6541 = vmatprep.subr.bf16.mxu0 %v6478
    %6542 = vmatpush1.bf16.msra.mxu0 %v6477
    %6543 = vmatprep.subr.bf16.mxu0 %v6480
    %6544 = vmatpush1.bf16.msra.mxu0 %v6479
    %6545 = vmatprep.subr.bf16.mxu0 %v6482
    %6546 = vmatpush1.bf16.msra.mxu0 %v6481
    %6547 = vmatprep.mubr.bf16.mxu0 %v6298
    %6548 = vmatmul.mubr.bf16.gmra.mrb[0].mxu0 %v6297
    %v6549 = vpop.f32.mrb[0].mxu0
    %v6550 = vadd.f32 %v6348, %v6549
    %v6551 = vpop.f32.mrb[0].mxu0
    %v6552 = vadd.f32 %v6352, %v6551
    %v6553 = vpop.f32.mrb[0].mxu0
    %v6554 = vadd.f32 %v6348, %v6553
    %v6555 = vpop.f32.mrb[0].mxu0
    %v6556 = vadd.f32 %v6352, %v6555
    %6557 = vmatprep.mubr.bf16.mxu0 %v6300
    %6558 = vmatmul.mubr.bf16.gmra.mrb[0].mxu0 %v6299
    %v6559 = vpop.f32.mrb[0].mxu0
    %v6560 = vadd.f32 %v6348, %v6559
    %v6561 = vpop.f32.mrb[0].mxu0
    %v6562 = vadd.f32 %v6352, %v6561
    %v6563 = vpop.f32.mrb[0].mxu0
    %v6564 = vadd.f32 %v6348, %v6563
    %v6565 = vpop.f32.mrb[0].mxu0
    %v6566 = vadd.f32 %v6352, %v6565
    %6567 = vmatprep.mubr.bf16.mxu0 %v6302
    %6568 = vmatmul.mubr.bf16.gmra.mrb[0].mxu0 %v6301
    %v6569 = vpop.f32.mrb[0].mxu0
    %v6570 = vadd.f32 %v6348, %v6569
    %v6571 = vpop.f32.mrb[0].mxu0
    %v6572 = vadd.f32 %v6352, %v6571
    %v6573 = vpop.f32.mrb[0].mxu0
    %v6574 = vadd.f32 %v6348, %v6573
    %v6575 = vpop.f32.mrb[0].mxu0
    %v6576 = vadd.f32 %v6352, %v6575
    %6577 = vmatprep.mubr.bf16.mxu0 %v6304
    %6578 = vmatmul.mubr.bf16.gmra.mrb[0].mxu0 %v6303
    %v6579 = vpop.f32.mrb[0].mxu0
    %v6580 = vadd.f32 %v6348, %v6579
    %v6581 = vpop.f32.mrb[0].mxu0
    %v6582 = vadd.f32 %v6352, %v6581
    %v6583 = vpop.f32.mrb[0].mxu0
    %v6584 = vadd.f32 %v6348, %v6583
    %v6585 = vpop.f32.mrb[0].mxu0
    %v6586 = vadd.f32 %v6352, %v6585
    %6587 = vmatprep.mubr.bf16.mxu0 %v6306
    %6588 = vmatmul.mubr.bf16.gmra.mrb[0].mxu0 %v6305
    %v6589 = vpop.f32.mrb[0].mxu0
    %v6590 = vadd.f32 %v6348, %v6589
    %v6591 = vpop.f32.mrb[0].mxu0
    %v6592 = vadd.f32 %v6352, %v6591
    %v6593 = vpop.f32.mrb[0].mxu0
    %v6594 = vadd.f32 %v6348, %v6593
    %v6595 = vpop.f32.mrb[0].mxu0
    %v6596 = vadd.f32 %v6352, %v6595
    %6597 = vmatprep.mubr.bf16.mxu0 %v6308
    %6598 = vmatmul.mubr.bf16.gmra.mrb[0].mxu0 %v6307
    %v6599 = vpop.f32.mrb[0].mxu0
    %v6600 = vadd.f32 %v6348, %v6599
    %v6601 = vpop.f32.mrb[0].mxu0
    %v6602 = vadd.f32 %v6352, %v6601
    %v6603 = vpop.f32.mrb[0].mxu0
    %v6604 = vadd.f32 %v6348, %v6603
    %v6605 = vpop.f32.mrb[0].mxu0
    %v6606 = vadd.f32 %v6352, %v6605
    %6607 = vmatprep.mubr.bf16.mxu0 %v6310
    %6608 = vmatmul.mubr.bf16.gmra.mrb[0].mxu0 %v6309
    %v6609 = vpop.f32.mrb[0].mxu0
    %v6610 = vadd.f32 %v6348, %v6609
    %v6611 = vpop.f32.mrb[0].mxu0
    %v6612 = vadd.f32 %v6352, %v6611
    %v6613 = vpop.f32.mrb[0].mxu0
    %v6614 = vpop.f32.mrb[0].mxu0
    %6615 = vdwg.mxu0
    %v6616 = vmax.f32 %v6550, 0.0
    %v6617 = vmax.f32 %v6552, 0.0
    %v6618 = vmax.f32 %v6554, 0.0
    %v6619 = vmax.f32 %v6556, 0.0
    %v6620 = vmax.f32 %v6560, 0.0
    %v6621 = vmax.f32 %v6562, 0.0
    %v6622 = vmax.f32 %v6564, 0.0
    %v6623 = vmax.f32 %v6566, 0.0
    %v6624 = vmax.f32 %v6570, 0.0
    %v6625 = vmax.f32 %v6572, 0.0
    %v6626 = vmax.f32 %v6574, 0.0
    %v6627 = vmax.f32 %v6576, 0.0
    %v6628 = vmax.f32 %v6580, 0.0
    %v6629 = vmax.f32 %v6582, 0.0
    %v6630 = vmax.f32 %v6584, 0.0
    %v6631 = vmax.f32 %v6586, 0.0
    %v6632 = vmax.f32 %v6590, 0.0
    %v6633 = vmax.f32 %v6592, 0.0
    %v6634 = vmax.f32 %v6594, 0.0
    %v6635 = vmax.f32 %v6596, 0.0
    %v6636 = vmax.f32 %v6600, 0.0
    %v6637 = vmax.f32 %v6602, 0.0
    %v6638 = vmax.f32 %v6604, 0.0
    %v6639 = vmax.f32 %v6606, 0.0
    %v6640 = vmax.f32 %v6610, 0.0
    %v6641 = vmax.f32 %v6612, 0.0
    %v6642 = vpack.c.bf16 %v6618, %v6616
    %v6643 = vpack.c.bf16 %v6619, %v6617
    %v6644 = vpack.c.bf16 %v6622, %v6620
    %v6645 = vpack.c.bf16 %v6623, %v6621
    %v6646 = vpack.c.bf16 %v6626, %v6624
    %v6647 = vpack.c.bf16 %v6627, %v6625
    %v6648 = vpack.c.bf16 %v6630, %v6628
    %v6649 = vpack.c.bf16 %v6631, %v6629
    %v6650 = vpack.c.bf16 %v6634, %v6632
    %v6651 = vpack.c.bf16 %v6635, %v6633
    %v6652 = vpack.c.bf16 %v6638, %v6636
    %v6653 = vpack.c.bf16 %v6639, %v6637
    %v6654 = vpack.c.bf16 %v6640, %v6640
    %v6655 = vpack.c.bf16 %v6641, %v6641
    %v6656 = vld [vmem:[#allocation14] sm:$0xff]
    %v6657 = vld [vmem:[#allocation14 + $0x8] sm:$0xff]
    %v6658 = vld [vmem:[#allocation14 + $0x10] sm:$0xff]
    %v6659 = vld [vmem:[#allocation14 + $0x18] sm:$0xff]
    %v6660 = vld [vmem:[#allocation14 + $0x20] sm:$0xff]
    %v6661 = vld [vmem:[#allocation14 + $0x28] sm:$0xff]
    %v6662 = vld [vmem:[#allocation14 + $0x30] sm:$0xff]
    %v6663 = vld [vmem:[#allocation14 + $0x38] sm:$0xff]
    %v6664 = vld [vmem:[#allocation14 + $0x40] sm:$0xff]
    %v6665 = vld [vmem:[#allocation14 + $0x48] sm:$0xff]
    %v6666 = vld [vmem:[#allocation14 + $0x50] sm:$0xff]
    %v6667 = vld [vmem:[#allocation14 + $0x58] sm:$0xff]
    %v6668 = vld [vmem:[#allocation14 + $0x60] sm:$0xff]
    %v6669 = vld [vmem:[#allocation14 + $0x68] sm:$0xff]
    %v6670 = vld [vmem:[#allocation14 + $0x70] sm:$0xff]
    %v6671 = vld [vmem:[#allocation14 + $0x78] sm:$0xff]
    %v6672 = vld [vmem:[#allocation14 + $0x80] sm:$0xff]
    %v6673 = vld [vmem:[#allocation14 + $0x88] sm:$0xff]
    %v6674 = vld [vmem:[#allocation14 + $0x90] sm:$0xff]
    %v6675 = vld [vmem:[#allocation14 + $0x98] sm:$0xff]
    %v6676 = vld [vmem:[#allocation14 + $0xa0] sm:$0xff]
    %v6677 = vld [vmem:[#allocation14 + $0xa8] sm:$0xff]
    %v6678 = vld [vmem:[#allocation14 + $0xb0] sm:$0xff]
    %v6679 = vld [vmem:[#allocation14 + $0xb8] sm:$0xff]
    %v6680 = vld [vmem:[#allocation14 + $0xc0] sm:$0xff]
    %v6681 = vld [vmem:[#allocation14 + $0xc8] sm:$0xff]
    %v6682 = vld [vmem:[#allocation14 + $0xd0] sm:$0xff]
    %v6683 = vld [vmem:[#allocation14 + $0xd8] sm:$0xff]
    %v6684 = vld [vmem:[#allocation14 + $0xe0] sm:$0xff]
    %v6685 = vld [vmem:[#allocation14 + $0xe8] sm:$0xff]
    %v6686 = vld [vmem:[#allocation14 + $0xf0] sm:$0xff]
    %v6687 = vld [vmem:[#allocation14 + $0xf8] sm:$0xff]
    %v6688 = vld [vmem:[%s10] sm:$0x3]
    %v6690 = vlaneseq
    %v6691 = vshrl.u32 %v6690, 7
    %v6692 = vsub.s32 0, %v6691
    %v6693 = vrot.slane %v6688, %v6692
    %v6694 = vlaneseq
    %v6695 = vshrl.u32 %v6694, 7
    %v6696 = vsub.s32 1, %v6695
    %v6697 = vrot.slane %v6688, %v6696
    %v6732 = vunpack.c.l.b16 %v6656
    %v6733 = vunpack.c.h.b16 %v6656
    %v6734 = vunpack.c.l.b16 %v6657
    %v6735 = vunpack.c.h.b16 %v6657
    %v6736 = vunpack.c.l.b16 %v6658
    %v6737 = vunpack.c.h.b16 %v6658
    %v6738 = vunpack.c.l.b16 %v6659
    %v6739 = vunpack.c.h.b16 %v6659
    %v6740 = vunpack.c.l.b16 %v6660
    %v6741 = vunpack.c.h.b16 %v6660
    %v6742 = vunpack.c.l.b16 %v6661
    %v6743 = vunpack.c.h.b16 %v6661
    %v6744 = vunpack.c.l.b16 %v6662
    %v6745 = vunpack.c.h.b16 %v6662
    %v6746 = vunpack.c.l.b16 %v6663
    %v6747 = vunpack.c.h.b16 %v6663
    %v6748 = vunpack.c.l.b16 %v6664
    %v6749 = vunpack.c.h.b16 %v6664
    %v6750 = vunpack.c.l.b16 %v6665
    %v6751 = vunpack.c.h.b16 %v6665
    %v6752 = vunpack.c.l.b16 %v6666
    %v6753 = vunpack.c.h.b16 %v6666
    %v6754 = vunpack.c.l.b16 %v6667
    %v6755 = vunpack.c.h.b16 %v6667
    %v6756 = vunpack.c.l.b16 %v6668
    %v6757 = vunpack.c.h.b16 %v6668
    %v6758 = vunpack.c.l.b16 %v6669
    %v6759 = vunpack.c.h.b16 %v6669
    %v6760 = vunpack.c.l.b16 %v6670
    %v6761 = vunpack.c.h.b16 %v6670
    %v6762 = vunpack.c.l.b16 %v6671
    %v6763 = vunpack.c.h.b16 %v6671
    %v6764 = vunpack.c.l.b16 %v6672
    %v6765 = vunpack.c.h.b16 %v6672
    %v6766 = vunpack.c.l.b16 %v6673
    %v6767 = vunpack.c.h.b16 %v6673
    %v6768 = vunpack.c.l.b16 %v6674
    %v6769 = vunpack.c.h.b16 %v6674
    %v6770 = vunpack.c.l.b16 %v6675
    %v6771 = vunpack.c.h.b16 %v6675
    %v6772 = vunpack.c.l.b16 %v6676
    %v6773 = vunpack.c.h.b16 %v6676
    %v6774 = vunpack.c.l.b16 %v6677
    %v6775 = vunpack.c.h.b16 %v6677
    %v6776 = vunpack.c.l.b16 %v6678
    %v6777 = vunpack.c.h.b16 %v6678
    %v6778 = vunpack.c.l.b16 %v6679
    %v6779 = vunpack.c.h.b16 %v6679
    %v6780 = vunpack.c.l.b16 %v6680
    %v6781 = vunpack.c.h.b16 %v6680
    %v6782 = vunpack.c.l.b16 %v6681
    %v6783 = vunpack.c.h.b16 %v6681
    %v6784 = vunpack.c.l.b16 %v6682
    %v6785 = vunpack.c.h.b16 %v6682
    %v6786 = vunpack.c.l.b16 %v6683
    %v6787 = vunpack.c.h.b16 %v6683
    %v6788 = vunpack.c.l.b16 %v6684
    %v6789 = vunpack.c.h.b16 %v6684
    %v6790 = vunpack.c.l.b16 %v6685
    %v6791 = vunpack.c.h.b16 %v6685
    %v6792 = vunpack.c.l.b16 %v6686
    %v6793 = vunpack.c.h.b16 %v6686
    %v6794 = vunpack.c.l.b16 %v6687
    %v6795 = vunpack.c.h.b16 %v6687
    %v6796 = vpack.c.b16 %v6734, %v6732
    %v6797 = vpack.c.b16 %v6735, %v6733
    %v6798 = vpack.c.b16 %v6738, %v6736
    %v6799 = vpack.c.b16 %v6739, %v6737
    %v6800 = vpack.c.b16 %v6742, %v6740
    %v6801 = vpack.c.b16 %v6743, %v6741
    %v6802 = vpack.c.b16 %v6746, %v6744
    %v6803 = vpack.c.b16 %v6747, %v6745
    %v6804 = vpack.c.b16 %v6750, %v6748
    %v6805 = vpack.c.b16 %v6751, %v6749
    %v6806 = vpack.c.b16 %v6754, %v6752
    %v6807 = vpack.c.b16 %v6755, %v6753
    %v6808 = vpack.c.b16 %v6758, %v6756
    %v6809 = vpack.c.b16 %v6759, %v6757
    %v6810 = vpack.c.b16 %v6762, %v6760
    %v6811 = vpack.c.b16 %v6763, %v6761
    %v6812 = vpack.c.b16 %v6766, %v6764
    %v6813 = vpack.c.b16 %v6767, %v6765
    %v6814 = vpack.c.b16 %v6770, %v6768
    %v6815 = vpack.c.b16 %v6771, %v6769
    %v6816 = vpack.c.b16 %v6774, %v6772
    %v6817 = vpack.c.b16 %v6775, %v6773
    %v6818 = vpack.c.b16 %v6778, %v6776
    %v6819 = vpack.c.b16 %v6779, %v6777
    %v6820 = vpack.c.b16 %v6782, %v6780
    %v6821 = vpack.c.b16 %v6783, %v6781
    %v6822 = vpack.c.b16 %v6786, %v6784
    %v6823 = vpack.c.b16 %v6787, %v6785
    %v6824 = vpack.c.b16 %v6790, %v6788
    %v6825 = vpack.c.b16 %v6791, %v6789
    %v6826 = vpack.c.b16 %v6794, %v6792
    %v6827 = vpack.c.b16 %v6795, %v6793
    %6860 = vmatprep.subr.bf16.mxu0 %v6797
    %6861 = vmatpush1.bf16.msra.mxu0 %v6796
    %6862 = vmatprep.subr.bf16.mxu0 %v6799
    %6863 = vmatpush1.bf16.msra.mxu0 %v6798
    %6864 = vmatprep.subr.bf16.mxu0 %v6801
    %6865 = vmatpush1.bf16.msra.mxu0 %v6800
    %6866 = vmatprep.subr.bf16.mxu0 %v6803
    %6867 = vmatpush1.bf16.msra.mxu0 %v6802
    %6868 = vmatprep.subr.bf16.mxu0 %v6805
    %6869 = vmatpush1.bf16.msra.mxu0 %v6804
    %6870 = vmatprep.subr.bf16.mxu0 %v6807
    %6871 = vmatpush1.bf16.msra.mxu0 %v6806
    %6872 = vmatprep.subr.bf16.mxu0 %v6809
    %6873 = vmatpush1.bf16.msra.mxu0 %v6808
    %6874 = vmatprep.subr.bf16.mxu0 %v6811
    %6875 = vmatpush1.bf16.msra.mxu0 %v6810
    %6876 = vmatprep.subr.bf16.mxu0 %v6813
    %6877 = vmatpush1.bf16.msra.mxu0 %v6812
    %6878 = vmatprep.subr.bf16.mxu0 %v6815
    %6879 = vmatpush1.bf16.msra.mxu0 %v6814
    %6880 = vmatprep.subr.bf16.mxu0 %v6817
    %6881 = vmatpush1.bf16.msra.mxu0 %v6816
    %6882 = vmatprep.subr.bf16.mxu0 %v6819
    %6883 = vmatpush1.bf16.msra.mxu0 %v6818
    %6884 = vmatprep.subr.bf16.mxu0 %v6821
    %6885 = vmatpush1.bf16.msra.mxu0 %v6820
    %6886 = vmatprep.subr.bf16.mxu0 %v6823
    %6887 = vmatpush1.bf16.msra.mxu0 %v6822
    %6888 = vmatprep.subr.bf16.mxu0 %v6825
    %6889 = vmatpush1.bf16.msra.mxu0 %v6824
    %6890 = vmatprep.subr.bf16.mxu0 %v6827
    %6891 = vmatpush1.bf16.msra.mxu0 %v6826
    %6892 = vmatprep.mubr.bf16.mxu0 %v6643
    %6893 = vmatmul.mubr.bf16.gmra.mrb[0].mxu0 %v6642
    %v6894 = vpop.f32.mrb[0].mxu0
    %v6895 = vadd.f32 %v6693, %v6894
    %v6896 = vpop.f32.mrb[0].mxu0
    %v6897 = vadd.f32 %v6697, %v6896
    %v6898 = vpop.f32.mrb[0].mxu0
    %v6899 = vadd.f32 %v6693, %v6898
    %v6900 = vpop.f32.mrb[0].mxu0
    %v6901 = vadd.f32 %v6697, %v6900
    %6902 = vmatprep.mubr.bf16.mxu0 %v6645
    %6903 = vmatmul.mubr.bf16.gmra.mrb[0].mxu0 %v6644
    %v6904 = vpop.f32.mrb[0].mxu0
    %v6905 = vadd.f32 %v6693, %v6904
    %v6906 = vpop.f32.mrb[0].mxu0
    %v6907 = vadd.f32 %v6697, %v6906
    %v6908 = vpop.f32.mrb[0].mxu0
    %v6909 = vadd.f32 %v6693, %v6908
    %v6910 = vpop.f32.mrb[0].mxu0
    %v6911 = vadd.f32 %v6697, %v6910
    %6912 = vmatprep.mubr.bf16.mxu0 %v6647
    %6913 = vmatmul.mubr.bf16.gmra.mrb[0].mxu0 %v6646
    %v6914 = vpop.f32.mrb[0].mxu0
    %v6915 = vadd.f32 %v6693, %v6914
    %v6916 = vpop.f32.mrb[0].mxu0
    %v6917 = vadd.f32 %v6697, %v6916
    %v6918 = vpop.f32.mrb[0].mxu0
    %v6919 = vadd.f32 %v6693, %v6918
    %v6920 = vpop.f32.mrb[0].mxu0
    %v6921 = vadd.f32 %v6697, %v6920
    %6922 = vmatprep.mubr.bf16.mxu0 %v6649
    %6923 = vmatmul.mubr.bf16.gmra.mrb[0].mxu0 %v6648
    %v6924 = vpop.f32.mrb[0].mxu0
    %v6925 = vadd.f32 %v6693, %v6924
    %v6926 = vpop.f32.mrb[0].mxu0
    %v6927 = vadd.f32 %v6697, %v6926
    %v6928 = vpop.f32.mrb[0].mxu0
    %v6929 = vadd.f32 %v6693, %v6928
    %v6930 = vpop.f32.mrb[0].mxu0
    %v6931 = vadd.f32 %v6697, %v6930
    %6932 = vmatprep.mubr.bf16.mxu0 %v6651
    %6933 = vmatmul.mubr.bf16.gmra.mrb[0].mxu0 %v6650
    %v6934 = vpop.f32.mrb[0].mxu0
    %v6935 = vadd.f32 %v6693, %v6934
    %v6936 = vpop.f32.mrb[0].mxu0
    %v6937 = vadd.f32 %v6697, %v6936
    %v6938 = vpop.f32.mrb[0].mxu0
    %v6939 = vadd.f32 %v6693, %v6938
    %v6940 = vpop.f32.mrb[0].mxu0
    %v6941 = vadd.f32 %v6697, %v6940
    %6942 = vmatprep.mubr.bf16.mxu0 %v6653
    %6943 = vmatmul.mubr.bf16.gmra.mrb[0].mxu0 %v6652
    %v6944 = vpop.f32.mrb[0].mxu0
    %v6945 = vadd.f32 %v6693, %v6944
    %v6946 = vpop.f32.mrb[0].mxu0
    %v6947 = vadd.f32 %v6697, %v6946
    %v6948 = vpop.f32.mrb[0].mxu0
    %v6949 = vadd.f32 %v6693, %v6948
    %v6950 = vpop.f32.mrb[0].mxu0
    %v6951 = vadd.f32 %v6697, %v6950
    %6952 = vmatprep.mubr.bf16.mxu0 %v6655
    %6953 = vmatmul.mubr.bf16.gmra.mrb[0].mxu0 %v6654
    %v6954 = vpop.f32.mrb[0].mxu0
    %v6955 = vadd.f32 %v6693, %v6954
    %v6956 = vpop.f32.mrb[0].mxu0
    %v6957 = vadd.f32 %v6697, %v6956
    %v6958 = vpop.f32.mrb[0].mxu0
    %v6959 = vpop.f32.mrb[0].mxu0
    %6960 = vdwg.mxu0
    %6961 = vst [vmem:[#allocation16] sm:$0xff] %v6895
    %6962 = vst [vmem:[#allocation16 + $0x8] sm:$0xff] %v6897
    %6963 = vst [vmem:[#allocation16 + $0x10] sm:$0xff] %v6899
    %6964 = vst [vmem:[#allocation16 + $0x18] sm:$0xff] %v6901
    %6965 = vst [vmem:[#allocation16 + $0x20] sm:$0xff] %v6905
    %6966 = vst [vmem:[#allocation16 + $0x28] sm:$0xff] %v6907
    %6967 = vst [vmem:[#allocation16 + $0x30] sm:$0xff] %v6909
    %6968 = vst [vmem:[#allocation16 + $0x38] sm:$0xff] %v6911
    %6969 = vst [vmem:[#allocation16 + $0x40] sm:$0xff] %v6915
    %6970 = vst [vmem:[#allocation16 + $0x48] sm:$0xff] %v6917
    %6971 = vst [vmem:[#allocation16 + $0x50] sm:$0xff] %v6919
    %6972 = vst [vmem:[#allocation16 + $0x58] sm:$0xff] %v6921
    %6973 = vst [vmem:[#allocation16 + $0x60] sm:$0xff] %v6925
    %6974 = vst [vmem:[#allocation16 + $0x68] sm:$0xff] %v6927
    %6975 = vst [vmem:[#allocation16 + $0x70] sm:$0xff] %v6929
    %6976 = vst [vmem:[#allocation16 + $0x78] sm:$0xff] %v6931
    %6977 = vst [vmem:[#allocation16 + $0x80] sm:$0xff] %v6935
    %6978 = vst [vmem:[#allocation16 + $0x88] sm:$0xff] %v6937
    %6979 = vst [vmem:[#allocation16 + $0x90] sm:$0xff] %v6939
    %6980 = vst [vmem:[#allocation16 + $0x98] sm:$0xff] %v6941
    %6981 = vst [vmem:[#allocation16 + $0xa0] sm:$0xff] %v6945
    %6982 = vst [vmem:[#allocation16 + $0xa8] sm:$0xff] %v6947
    %6983 = vst [vmem:[#allocation16 + $0xb0] sm:$0xff] %v6949
    %6984 = vst [vmem:[#allocation16 + $0xb8] sm:$0xff] %v6951
    %6985 = vst [vmem:[#allocation16 + $0xc0] sm:$0xff] %v6955
    %6986 = vst [vmem:[#allocation16 + $0xc8] sm:$0xff] %v6957
    // Predicated region
    $region78: #{tpu_custom_call.1} parent=1 // pred_check
      _
    $region79: #{tpu_custom_call.1} parent=1 // pred_check_branch
      %6988 = sbr.rel (0) target = $region81
    $region80: #{tpu_custom_call.1} parent=1 // pred_region
      %s6990 = ssub.s32 3328, 3328
      %6991 = vsyncadd [#allocation4], %s6990
      %s6992 = sshll.u32 [#allocation16], 4
      %s6993 = int_to_ptr.vmem [resolvable:$true] %s6992
      %6998 = dma.vmem_to_hbm [thread:$0]  %s6993, 3328, %s11, [#allocation4], 256, 256, 16
    $region81: #{tpu_custom_call.1} parent=1 // pred_fallthru
      _
    // Predicated region
    $region82: #{tpu_custom_call.1} parent=1 // pred_check
      _
    $region83: #{tpu_custom_call.1} parent=1 // pred_check_branch
      %7000 = sbr.rel (0) target = $region85
    $region84: #{tpu_custom_call.1} parent=1 // pred_region
      %7001 = dma.done [#allocation4], 3328
    $region85: #{tpu_custom_call.1} parent=1 // pred_fallthru
      _
    %7002 = vsyncpa [#allocation3], 1
    %7003 = vsyncpa [#allocation6], 1
    %7004 = vsyncpa [#allocation9], 1
    %7005 = vsyncpa [#allocation12], 1
    %7006 = vsyncpa [#allocation15], 1
    %7007 = vsyncpa [#allocation4], 1

</llo_original>
